<compile_context>
chip_gen: v7x
topology: tpu7x:2x2x1
jax: 0.10.0
libtpu: 0.0.40
codegen_flags: <defaults>
</compile_context>

<pallas_src>
import jax
import jax.numpy as jnp
from jax.experimental import pallas as pl
from jax.experimental.pallas import tpu as pltpu

_EPS = 1e-5
_LANES = 128


def _round_up(x, m):
    return (x + m - 1) // m * m


def _pick_row_block(H, W, target_m):
    """Largest divisor of H such that rows*W <= target_m (MXU M dimension)."""
    target_rows = max(1, target_m // max(W, 1))
    rb = 1
    for d in range(1, H + 1):
        if H % d == 0 and d <= target_rows:
            rb = d
    return rb


# ---------------------------------------------------------------------------
# In-kernel helpers (traced inside the Pallas body; all shapes static).
# ---------------------------------------------------------------------------
def _write_reflect_pad(pad_ref, img):
    """Write ReflectionPad2d(1)(img) into pad_ref, an (H+2, W+2, C) scratch.

    Direct slice-stores (no concatenate); the single cast to pad_ref.dtype
    (bf16 on the MXU path) happens here.
    """
    H, W, _ = img.shape
    img = img.astype(pad_ref.dtype)
    pad_ref[1:H + 1, 1:W + 1, :] = img                       # interior
    pad_ref[0:1, 1:W + 1, :] = img[1:2]                      # top reflect (row 1)
    pad_ref[H + 1:H + 2, 1:W + 1, :] = img[H - 2:H - 1]      # bottom reflect
    # Left/right columns read back the already-written rows so the corners get
    # the reflect-of-reflect value (matches PyTorch ReflectionPad2d).
    pad_ref[:, 0:1, :] = pad_ref[:, 2:3, :]                  # left  = img col 1
    pad_ref[:, W + 1:W + 2, :] = pad_ref[:, W - 1:W, :]      # right = img col W-2


def _conv_rows(rows, w_ref):
    """3x3 valid conv on `rows` ((hh+2, W+2, C), MXU dtype) -> (hh, W, Cout) f32.

    im2col option (a): lane-concat the 3 kh taps (leading-dim slices, free),
    then 3 accumulating MXU dots over the kw shifts (K = 3*C each).
    w_ref is a (3, 3*C, Cout) ref ordered [kw, kh*C + ci, co].
    """
    hh = rows.shape[0] - 2
    W = rows.shape[1] - 2
    C = rows.shape[2]
    Cout = w_ref.shape[-1]
    stack = jnp.concatenate(
        [rows[0:hh], rows[1:hh + 1], rows[2:hh + 2]], axis=-1)   # (hh, W+2, 3C)
    acc = None
    for kw in range(3):
        patch = stack[:, kw:kw + W, :].reshape(hh * W, 3 * C)
        part = jnp.dot(patch, w_ref[kw], preferred_element_type=jnp.float32)
        acc = part if acc is None else acc + part
    return acc.reshape(hh, W, Cout)


def _conv3x3_into(pad_ref, w_ref, out_ref, row_block):
    """out_ref[h,w,:] = sum_{kh,kw,ci} pad[h+kh, w+kw, ci] * W[kh,kw,ci,:] (no bias)."""
    H = pad_ref.shape[0] - 2
    n_blocks = H // row_block                      # wrapper guarantees divisibility
    if n_blocks <= 8:
        # Small trip count: static unroll is fine and keeps aligned vlds.
        for bi in range(n_blocks):
            h0 = bi * row_block
            out_ref[h0:h0 + row_block] = _conv_rows(
                pad_ref[h0:h0 + row_block + 2], w_ref)
    else:
        # Large H: bounded vreg pressure / bundle stream via fori_loop.
        def body(bi, carry):
            h0 = pl.multiple_of(bi * row_block, row_block)
            out_ref[pl.ds(h0, row_block)] = _conv_rows(
                pad_ref[pl.ds(h0, row_block + 2)], w_ref)
            return carry

        jax.lax.fori_loop(0, n_blocks, body, 0)


def _inorm_scale_shift(y):
    """Per-channel (scale, shift) for InstanceNorm2d(affine=False, eps=1e-5).

    Two-pass variance (sum, then sum of centered squares) to avoid the
    E[y^2]-mean^2 cancellation issue.
    """
    n = y.shape[0] * y.shape[1]
    mean = jnp.sum(y, axis=(0, 1), keepdims=True) * (1.0 / n)
    var = jnp.sum((y - mean) * (y - mean), axis=(0, 1), keepdims=True) * (1.0 / n)
    scale = jax.lax.rsqrt(var + _EPS)
    return scale, -mean * scale


# ---------------------------------------------------------------------------
# Pallas kernel: one batch element per grid step.
# ---------------------------------------------------------------------------
def _make_kernel(row_block):
    def kernel(x_ref, w1_ref, w2_ref, o_ref, pad_ref, y_ref):
        # conv1 (bias dropped: cancelled by InstanceNorm mean subtraction)
        _write_reflect_pad(pad_ref, x_ref[0])
        _conv3x3_into(pad_ref, w1_ref, y_ref, row_block)
        # InstanceNorm + ReLU, fused into staging of conv2's padded input
        sc1, sh1 = _inorm_scale_shift(y_ref[...])
        _write_reflect_pad(pad_ref, jnp.maximum(y_ref[...] * sc1 + sh1, 0.0))
        # conv2
        _conv3x3_into(pad_ref, w2_ref, y_ref, row_block)
        # InstanceNorm + residual add, fused into the output store
        sc2, sh2 = _inorm_scale_shift(y_ref[...])
        o_ref[0] = (x_ref[0].astype(jnp.float32)
                    + y_ref[...] * sc2 + sh2).astype(o_ref.dtype)

    return kernel


# ---------------------------------------------------------------------------
# Wrappers.
# ---------------------------------------------------------------------------
def _prep_weight(w_oihw, Cp, mxu_dtype):
    """OIHW -> (KW, KH*Cp, Cp), ordered [kw, kh*Cp + ci, co], zero-padded channels."""
    Cout, Cin, KH, KW = w_oihw.shape
    w = jnp.transpose(w_oihw, (3, 2, 1, 0))                # -> (KW, KH, Cin, Cout)
    if Cin != Cp or Cout != Cp:
        w = jnp.pad(w, ((0, 0), (0, 0), (0, Cp - Cin), (0, Cp - Cout)))
    return w.reshape(KW, KH * Cp, Cp).astype(mxu_dtype)


def _vmem_limit_bytes(H, W, Cp, in_itemsize, mxu_itemsize):
    """Per-generation VMEM limit computed from actual buffer sizes."""
    io_blk = H * W * Cp * in_itemsize                       # one x / out block
    w_blk = 9 * Cp * Cp * mxu_itemsize                      # one conv weight
    pad_scratch = (H + 2) * (W + 2) * Cp * mxu_itemsize
    y_scratch = H * W * Cp * 4
    # x + out double-buffered, 2 weights (assume double-buffered, conservative),
    # scratches, plus 25% + 8 MiB headroom for im2col / normalization temps.
    need = 2 * io_blk + 2 * io_blk + 2 * 2 * w_blk + pad_scratch + y_scratch
    need = int(need * 1.25) + (8 << 20)
    try:
        cap = int(pltpu.get_tpu_info().vmem_capacity_bytes)  # 64 MiB v7x, 128 MiB v5e/v6e
    except Exception:  # pragma: no cover - info query unavailable
        cap = 128 << 20
    return max(32 << 20, min(need, cap - (8 << 20)))


def resnet_block_nhwc(x_nhwc, w1_oihw, b1, w2_oihw, b2, *,
                      mxu_dtype=jnp.bfloat16, mxu_m_target=256, row_block=None):
    """ResnetBlock forward on NHWC input (kernel-native, lane-dense layout).

    b1/b2 are accepted for PyTorch parity but unused: a per-channel conv bias
    added immediately before InstanceNorm2d(affine=False) is exactly cancelled
    by the mean subtraction, so the result is identical without it.
    Use mxu_dtype=jnp.float32 for exact-f32 semantics (bf16 MXU feed default).
    """
    del b1, b2
    N, H, W, C = x_nhwc.shape
    Cp = _round_up(C, _LANES)                               # lane-dense channel dim

    xp = x_nhwc if Cp == C else jnp.pad(
        x_nhwc, ((0, 0), (0, 0), (0, 0), (0, Cp - C)))
    w1p = _prep_weight(w1_oihw, Cp, mxu_dtype)
    w2p = _prep_weight(w2_oihw, Cp, mxu_dtype)

    # row_block so rows*W ~= mxu_m_target (256-wide MXU on v6e/v7x; pass 128
    # for v5e) and row_block divides H.
    rb = row_block if row_block is not None else _pick_row_block(H, W, mxu_m_target)
    rb = max(1, min(rb, H))
    if H % rb != 0:
        rb = _pick_row_block(H, W, rb * W)

    in_itemsize = jnp.dtype(x_nhwc.dtype).itemsize
    mxu_itemsize = jnp.dtype(mxu_dtype).itemsize
    vmem_limit = _vmem_limit_bytes(H, W, Cp, in_itemsize, mxu_itemsize)

    w_bytes = 2 * int(w1p.size) * mxu_itemsize
    cost = pl.CostEstimate(
        flops=int(2 * 2 * N * H * W * 9 * Cp * Cp),
        transcendentals=int(2 * N * Cp),
        bytes_accessed=int(2 * N * H * W * Cp * in_itemsize + w_bytes),
    )

    def build(weight_pipeline_mode):
        w_kwargs = ({} if weight_pipeline_mode is None
                    else {"pipeline_mode": weight_pipeline_mode})
        w_spec = pl.BlockSpec((3, 3 * Cp, Cp), lambda n: (0, 0, 0), **w_kwargs)
        return pl.pallas_call(
            _make_kernel(rb),
            out_shape=jax.ShapeDtypeStruct((N, H, W, Cp), x_nhwc.dtype),
            grid_spec=pltpu.PrefetchScalarGridSpec(
                num_scalar_prefetch=0,
                grid=(N,),
                in_specs=[
                    pl.BlockSpec((1, H, W, Cp), lambda n: (n, 0, 0, 0)),
                    w_spec,
                    w_spec,
                ],
                out_specs=pl.BlockSpec((1, H, W, Cp), lambda n: (n, 0, 0, 0)),
                scratch_shapes=[
                    pltpu.VMEM((H + 2, W + 2, Cp), mxu_dtype),   # padded image (bf16)
                    pltpu.VMEM((H, W, Cp), jnp.float32),         # conv output (f32)
                ],
            ),
            compiler_params=pltpu.CompilerParams(
                dimension_semantics=("parallel",),
                vmem_limit_bytes=vmem_limit,
            ),
            cost_estimate=cost,
        )

    try:
        # Weights have a constant index_map: single-buffer them to save VMEM.
        out = build(pl.Buffered(1))(xp, w1p, w2p)
    except Exception:
        # Fallback for JAX versions that reject single-buffered pipeline_mode.
        out = build(None)(xp, w1p, w2p)

    return out if Cp == C else out[..., :C]


def resnet_block(x_nchw, w1_oihw, b1, w2_oihw, b2, **kwargs):
    """PyTorch-parity NCHW wrapper.  For best performance keep the network
    NHWC end-to-end and call resnet_block_nhwc directly (the two transposes
    below are full HBM read+write passes)."""
    x = jnp.transpose(x_nchw, (0, 2, 3, 1))
    out = resnet_block_nhwc(x, w1_oihw, b1, w2_oihw, b2, **kwargs)
    return jnp.transpose(out, (0, 3, 1, 2))


# ---------------------------------------------------------------------------
# Pure-JAX reference (PyTorch semantics, NCHW, f32, biases included).
# ---------------------------------------------------------------------------
def _ref_forward(x, w1, b1, w2, b2):
    def refl_pad(a):
        return jnp.pad(a, ((0, 0), (0, 0), (1, 1), (1, 1)), mode="reflect")

    def conv(a, w, b):
        y = jax.lax.conv_general_dilated(
            a, w, (1, 1), "VALID",
            dimension_numbers=("NCHW", "OIHW", "NCHW"))
        return y + b[None, :, None, None]

    def inorm(a):
        mean = jnp.mean(a, axis=(2, 3), keepdims=True)
        var = jnp.mean((a - mean) ** 2, axis=(2, 3), keepdims=True)
        return (a - mean) * jax.lax.rsqrt(var + _EPS)

    h = inorm(conv(refl_pad(x), w1, b1))
    h = jnp.maximum(h, 0.0)
    h = inorm(conv(refl_pad(h), w2, b2))
    return x + h


if __name__ == "__main__":
    key = jax.random.PRNGKey(0)
    k_x, k_w1, k_b1, k_w2, k_b2 = jax.random.split(key, 5)

    N, C, H, W = 2, 4, 16, 16
    x = jax.random.normal(k_x, (N, C, H, W), dtype=jnp.float32)
    # Conv2d(dim, dim, kernel_size=3) weights, OIHW like PyTorch.
    w1 = jax.random.normal(k_w1, (C, C, 3, 3), dtype=jnp.float32) * 0.1
    b1 = jax.random.normal(k_b1, (C,), dtype=jnp.float32) * 0.1
    w2 = jax.random.normal(k_w2, (C, C, 3, 3), dtype=jnp.float32) * 0.1
    b2 = jax.random.normal(k_b2, (C,), dtype=jnp.float32) * 0.1

    ref = jax.block_until_ready(_ref_forward(x, w1, b1, w2, b2))

    # Exact-semantics check with f32 MXU feed (biases are mathematically
    # cancelled by InstanceNorm(affine=False), so the bias-free kernel matches).
    out_f32 = jax.block_until_ready(
        resnet_block(x, w1, b1, w2, b2, mxu_dtype=jnp.float32))
    assert out_f32.shape == (N, C, H, W)
    err_f32 = float(jnp.max(jnp.abs(out_f32 - ref)))
    assert err_f32 < 2e-4, f"f32 mismatch vs JAX reference: {err_f32}"

    # Production bf16-MXU path (f32 accumulation), looser tolerance.
    out_bf16 = jax.block_until_ready(
        resnet_block(x, w1, b1, w2, b2, mxu_dtype=jnp.bfloat16))
    assert out_bf16.shape == (N, C, H, W)
    err_bf16 = float(jnp.max(jnp.abs(out_bf16 - ref)))
    assert err_bf16 < 1e-1, f"bf16 mismatch vs JAX reference: {err_bf16}"

    print("KERNEL_OK")
</pallas_src>

<mosaic_0001>
module attributes {stable_mosaic.version = 11 : i64} {
  func.func @kernel(%arg0: i32, %arg1: memref<1x16x16x128xf32, #tpu.memory_space<vmem>>, %arg2: memref<3x384x128xf32, #tpu.memory_space<vmem>>, %arg3: memref<3x384x128xf32, #tpu.memory_space<vmem>>, %arg4: memref<1x16x16x128xf32, #tpu.memory_space<vmem>>, %arg5: memref<18x18x128xf32, #tpu.memory_space<vmem>>, %arg6: memref<16x16x128xf32, #tpu.memory_space<vmem>>) attributes {dimension_semantics = [#tpu.dimension_semantics<parallel>], iteration_bounds = array<i64: 2>, scalar_prefetch = 0 : i64, scratch_operands = 2 : i64, tpu.core_type = #tpu.core_type<tc>, window_params = [{transform_indices = @transform_0, window_bounds = array<i64: 1, 16, 16, 128>}, {pipeline_mode = #tpu.pipeline_mode<synchronous>, transform_indices = @transform_1, window_bounds = array<i64: 3, 384, 128>}, {pipeline_mode = #tpu.pipeline_mode<synchronous>, transform_indices = @transform_2, window_bounds = array<i64: 3, 384, 128>}, {transform_indices = @transform_3, window_bounds = array<i64: 1, 16, 16, 128>}]} {
    %c0 = arith.constant 0 : index
    %c0_0 = arith.constant 0 : index
    %c0_1 = arith.constant 0 : index
    %c0_2 = arith.constant 0 : index
    %0 = vector.load %arg1[%c0, %c0_0, %c0_1, %c0_2] : memref<1x16x16x128xf32, #tpu.memory_space<vmem>>, vector<1x16x16x128xf32>
    %1 = vector.shape_cast %0 : vector<1x16x16x128xf32> to vector<16x16x128xf32>
    %c1 = arith.constant 1 : index
    %c1_3 = arith.constant 1 : index
    %c0_4 = arith.constant 0 : index
    %2 = vector.load %arg5[%c1, %c1_3, %c0_4] : memref<18x18x128xf32, #tpu.memory_space<vmem>>, vector<16x16x128xf32>
    tpu.vector_store %arg5[%c1, %c1_3, %c0_4], %1 {strides = array<i32>} : memref<18x18x128xf32, #tpu.memory_space<vmem>>, vector<16x16x128xf32>,
    %3 = vector.extract_strided_slice %1 {offsets = [1, 0, 0], sizes = [1, 16, 128], strides = [1, 1, 1]} : vector<16x16x128xf32> to vector<1x16x128xf32>
    %c0_5 = arith.constant 0 : index
    %c1_6 = arith.constant 1 : index
    %c0_7 = arith.constant 0 : index
    %4 = vector.load %arg5[%c0_5, %c1_6, %c0_7] : memref<18x18x128xf32, #tpu.memory_space<vmem>>, vector<1x16x128xf32>
    tpu.vector_store %arg5[%c0_5, %c1_6, %c0_7], %3 {strides = array<i32>} : memref<18x18x128xf32, #tpu.memory_space<vmem>>, vector<1x16x128xf32>,
    %5 = vector.extract_strided_slice %1 {offsets = [14, 0, 0], sizes = [1, 16, 128], strides = [1, 1, 1]} : vector<16x16x128xf32> to vector<1x16x128xf32>
    %c17 = arith.constant 17 : index
    %c1_8 = arith.constant 1 : index
    %c0_9 = arith.constant 0 : index
    %6 = vector.load %arg5[%c17, %c1_8, %c0_9] : memref<18x18x128xf32, #tpu.memory_space<vmem>>, vector<1x16x128xf32>
    tpu.vector_store %arg5[%c17, %c1_8, %c0_9], %5 {strides = array<i32>} : memref<18x18x128xf32, #tpu.memory_space<vmem>>, vector<1x16x128xf32>,
    %c0_10 = arith.constant 0 : index
    %c2 = arith.constant 2 : index
    %c0_11 = arith.constant 0 : index
    %7 = vector.load %arg5[%c0_10, %c2, %c0_11] : memref<18x18x128xf32, #tpu.memory_space<vmem>>, vector<18x1x128xf32>
    %c0_12 = arith.constant 0 : index
    %c0_13 = arith.constant 0 : index
    %c0_14 = arith.constant 0 : index
    %8 = vector.load %arg5[%c0_12, %c0_13, %c0_14] : memref<18x18x128xf32, #tpu.memory_space<vmem>>, vector<18x1x128xf32>
    tpu.vector_store %arg5[%c0_12, %c0_13, %c0_14], %7 {strides = array<i32>} : memref<18x18x128xf32, #tpu.memory_space<vmem>>, vector<18x1x128xf32>,
    %c0_15 = arith.constant 0 : index
    %c15 = arith.constant 15 : index
    %c0_16 = arith.constant 0 : index
    %9 = vector.load %arg5[%c0_15, %c15, %c0_16] : memref<18x18x128xf32, #tpu.memory_space<vmem>>, vector<18x1x128xf32>
    %c0_17 = arith.constant 0 : index
    %c17_18 = arith.constant 17 : index
    %c0_19 = arith.constant 0 : index
    %10 = vector.load %arg5[%c0_17, %c17_18, %c0_19] : memref<18x18x128xf32, #tpu.memory_space<vmem>>, vector<18x1x128xf32>
    tpu.vector_store %arg5[%c0_17, %c17_18, %c0_19], %9 {strides = array<i32>} : memref<18x18x128xf32, #tpu.memory_space<vmem>>, vector<18x1x128xf32>,
    %c0_20 = arith.constant 0 : index
    %c0_21 = arith.constant 0 : index
    %c0_22 = arith.constant 0 : index
    %11 = vector.load %arg5[%c0_20, %c0_21, %c0_22] : memref<18x18x128xf32, #tpu.memory_space<vmem>>, vector<18x18x128xf32>
    %12 = vector.extract_strided_slice %11 {offsets = [0, 0, 0], sizes = [16, 18, 128], strides = [1, 1, 1]} : vector<18x18x128xf32> to vector<16x18x128xf32>
    %13 = vector.extract_strided_slice %11 {offsets = [1, 0, 0], sizes = [16, 18, 128], strides = [1, 1, 1]} : vector<18x18x128xf32> to vector<16x18x128xf32>
    %14 = vector.extract_strided_slice %11 {offsets = [2, 0, 0], sizes = [16, 18, 128], strides = [1, 1, 1]} : vector<18x18x128xf32> to vector<16x18x128xf32>
    %15 = tpu.concatenate %12, %13, %14 in 2 : vector<16x18x128xf32>, vector<16x18x128xf32>, vector<16x18x128xf32> -> vector<16x18x384xf32>
    %16 = vector.extract_strided_slice %15 {offsets = [0, 0, 0], sizes = [16, 16, 384], strides = [1, 1, 1]} : vector<16x18x384xf32> to vector<16x16x384xf32>
    %17 = vector.shape_cast %16 : vector<16x16x384xf32> to vector<256x384xf32>
    %c0_23 = arith.constant 0 : index
    %c0_24 = arith.constant 0 : index
    %c0_25 = arith.constant 0 : index
    %18 = vector.load %arg2[%c0_23, %c0_24, %c0_25] : memref<3x384x128xf32, #tpu.memory_space<vmem>>, vector<1x384x128xf32>
    %19 = vector.shape_cast %18 : vector<1x384x128xf32> to vector<384x128xf32>
    %cst = arith.constant dense<0.000000e+00> : vector<256x128xf32>
    %20 = tpu.matmul %17, %19, %cst {dimension_numbers = #tpu.dot_dimension_numbers<[1], [0], [0], [1], [0, 0, 1, 1], [], []>} : vector<256x384xf32>, vector<384x128xf32>, vector<256x128xf32> -> vector<256x128xf32>
    %21 = vector.extract_strided_slice %15 {offsets = [0, 1, 0], sizes = [16, 16, 384], strides = [1, 1, 1]} : vector<16x18x384xf32> to vector<16x16x384xf32>
    %22 = vector.shape_cast %21 : vector<16x16x384xf32> to vector<256x384xf32>
    %c1_26 = arith.constant 1 : index
    %c0_27 = arith.constant 0 : index
    %c0_28 = arith.constant 0 : index
    %23 = vector.load %arg2[%c1_26, %c0_27, %c0_28] : memref<3x384x128xf32, #tpu.memory_space<vmem>>, vector<1x384x128xf32>
    %24 = vector.shape_cast %23 : vector<1x384x128xf32> to vector<384x128xf32>
    %cst_29 = arith.constant dense<0.000000e+00> : vector<256x128xf32>
    %25 = tpu.matmul %22, %24, %cst_29 {dimension_numbers = #tpu.dot_dimension_numbers<[1], [0], [0], [1], [0, 0, 1, 1], [], []>} : vector<256x384xf32>, vector<384x128xf32>, vector<256x128xf32> -> vector<256x128xf32>
    %26 = arith.addf %20, %25 : vector<256x128xf32>
    %27 = vector.extract_strided_slice %15 {offsets = [0, 2, 0], sizes = [16, 16, 384], strides = [1, 1, 1]} : vector<16x18x384xf32> to vector<16x16x384xf32>
    %28 = vector.shape_cast %27 : vector<16x16x384xf32> to vector<256x384xf32>
    %c2_30 = arith.constant 2 : index
    %c0_31 = arith.constant 0 : index
    %c0_32 = arith.constant 0 : index
    %29 = vector.load %arg2[%c2_30, %c0_31, %c0_32] : memref<3x384x128xf32, #tpu.memory_space<vmem>>, vector<1x384x128xf32>
    %30 = vector.shape_cast %29 : vector<1x384x128xf32> to vector<384x128xf32>
    %cst_33 = arith.constant dense<0.000000e+00> : vector<256x128xf32>
    %31 = tpu.matmul %28, %30, %cst_33 {dimension_numbers = #tpu.dot_dimension_numbers<[1], [0], [0], [1], [0, 0, 1, 1], [], []>} : vector<256x384xf32>, vector<384x128xf32>, vector<256x128xf32> -> vector<256x128xf32>
    %32 = arith.addf %26, %31 : vector<256x128xf32>
    %33 = vector.shape_cast %32 : vector<256x128xf32> to vector<16x16x128xf32>
    %c0_34 = arith.constant 0 : index
    %c0_35 = arith.constant 0 : index
    %c0_36 = arith.constant 0 : index
    %34 = vector.load %arg6[%c0_34, %c0_35, %c0_36] : memref<16x16x128xf32, #tpu.memory_space<vmem>>, vector<16x16x128xf32>
    tpu.vector_store %arg6[%c0_34, %c0_35, %c0_36], %33 {strides = array<i32>} : memref<16x16x128xf32, #tpu.memory_space<vmem>>, vector<16x16x128xf32>,
    %c0_37 = arith.constant 0 : index
    %c0_38 = arith.constant 0 : index
    %c0_39 = arith.constant 0 : index
    %35 = vector.load %arg6[%c0_37, %c0_38, %c0_39] : memref<16x16x128xf32, #tpu.memory_space<vmem>>, vector<16x16x128xf32>
    %cst_40 = arith.constant dense<0.000000e+00> : vector<128xf32>
    %36 = vector.multi_reduction <add>, %35, %cst_40 [0, 1] : vector<16x16x128xf32> to vector<128xf32>
    %37 = vector.shape_cast %36 : vector<128xf32> to vector<1x1x128xf32>
    %cst_41 = arith.constant 3.906250e-03 : f32
    %38 = vector.broadcast %cst_41 : f32 to vector<1x1x128xf32>
    %39 = arith.mulf %37, %38 : vector<1x1x128xf32>
    %40 = vector.broadcast %39 : vector<1x1x128xf32> to vector<16x16x128xf32>
    %41 = arith.subf %35, %40 : vector<16x16x128xf32>
    %42 = vector.broadcast %39 : vector<1x1x128xf32> to vector<16x16x128xf32>
    %43 = arith.subf %35, %42 : vector<16x16x128xf32>
    %44 = arith.mulf %41, %43 : vector<16x16x128xf32>
    %cst_42 = arith.constant dense<0.000000e+00> : vector<128xf32>
    %45 = vector.multi_reduction <add>, %44, %cst_42 [0, 1] : vector<16x16x128xf32> to vector<128xf32>
    %46 = vector.shape_cast %45 : vector<128xf32> to vector<1x1x128xf32>
    %cst_43 = arith.constant 3.906250e-03 : f32
    %47 = vector.broadcast %cst_43 : f32 to vector<1x1x128xf32>
    %48 = arith.mulf %46, %47 : vector<1x1x128xf32>
    %cst_44 = arith.constant 9.99999974E-6 : f32
    %49 = vector.broadcast %cst_44 : f32 to vector<1x1x128xf32>
    %50 = arith.addf %48, %49 : vector<1x1x128xf32>
    %51 = math.rsqrt %50 : vector<1x1x128xf32>
    %cst_45 = arith.constant 0.000000e+00 : f32
    %52 = vector.broadcast %cst_45 : f32 to vector<1x1x128xf32>
    %53 = arith.subf %52, %39 : vector<1x1x128xf32>
    %54 = arith.mulf %53, %51 : vector<1x1x128xf32>
    %c0_46 = arith.constant 0 : index
    %c0_47 = arith.constant 0 : index
    %c0_48 = arith.constant 0 : index
    %55 = vector.load %arg6[%c0_46, %c0_47, %c0_48] : memref<16x16x128xf32, #tpu.memory_space<vmem>>, vector<16x16x128xf32>
    %56 = vector.broadcast %51 : vector<1x1x128xf32> to vector<16x16x128xf32>
    %57 = arith.mulf %55, %56 : vector<16x16x128xf32>
    %58 = vector.broadcast %54 : vector<1x1x128xf32> to vector<16x16x128xf32>
    %59 = arith.addf %57, %58 : vector<16x16x128xf32>
    %cst_49 = arith.constant 0.000000e+00 : f32
    %60 = vector.broadcast %cst_49 : f32 to vector<16x16x128xf32>
    %61 = arith.maximumf %59, %60 : vector<16x16x128xf32>
    %c1_50 = arith.constant 1 : index
    %c1_51 = arith.constant 1 : index
    %c0_52 = arith.constant 0 : index
    %62 = vector.load %arg5[%c1_50, %c1_51, %c0_52] : memref<18x18x128xf32, #tpu.memory_space<vmem>>, vector<16x16x128xf32>
    tpu.vector_store %arg5[%c1_50, %c1_51, %c0_52], %61 {strides = array<i32>} : memref<18x18x128xf32, #tpu.memory_space<vmem>>, vector<16x16x128xf32>,
    %63 = vector.extract_strided_slice %61 {offsets = [1, 0, 0], sizes = [1, 16, 128], strides = [1, 1, 1]} : vector<16x16x128xf32> to vector<1x16x128xf32>
    %c0_53 = arith.constant 0 : index
    %c1_54 = arith.constant 1 : index
    %c0_55 = arith.constant 0 : index
    %64 = vector.load %arg5[%c0_53, %c1_54, %c0_55] : memref<18x18x128xf32, #tpu.memory_space<vmem>>, vector<1x16x128xf32>
    tpu.vector_store %arg5[%c0_53, %c1_54, %c0_55], %63 {strides = array<i32>} : memref<18x18x128xf32, #tpu.memory_space<vmem>>, vector<1x16x128xf32>,
    %65 = vector.extract_strided_slice %61 {offsets = [14, 0, 0], sizes = [1, 16, 128], strides = [1, 1, 1]} : vector<16x16x128xf32> to vector<1x16x128xf32>
    %c17_56 = arith.constant 17 : index
    %c1_57 = arith.constant 1 : index
    %c0_58 = arith.constant 0 : index
    %66 = vector.load %arg5[%c17_56, %c1_57, %c0_58] : memref<18x18x128xf32, #tpu.memory_space<vmem>>, vector<1x16x128xf32>
    tpu.vector_store %arg5[%c17_56, %c1_57, %c0_58], %65 {strides = array<i32>} : memref<18x18x128xf32, #tpu.memory_space<vmem>>, vector<1x16x128xf32>,
    %c0_59 = arith.constant 0 : index
    %c2_60 = arith.constant 2 : index
    %c0_61 = arith.constant 0 : index
    %67 = vector.load %arg5[%c0_59, %c2_60, %c0_61] : memref<18x18x128xf32, #tpu.memory_space<vmem>>, vector<18x1x128xf32>
    %c0_62 = arith.constant 0 : index
    %c0_63 = arith.constant 0 : index
    %c0_64 = arith.constant 0 : index
    %68 = vector.load %arg5[%c0_62, %c0_63, %c0_64] : memref<18x18x128xf32, #tpu.memory_space<vmem>>, vector<18x1x128xf32>
    tpu.vector_store %arg5[%c0_62, %c0_63, %c0_64], %67 {strides = array<i32>} : memref<18x18x128xf32, #tpu.memory_space<vmem>>, vector<18x1x128xf32>,
    %c0_65 = arith.constant 0 : index
    %c15_66 = arith.constant 15 : index
    %c0_67 = arith.constant 0 : index
    %69 = vector.load %arg5[%c0_65, %c15_66, %c0_67] : memref<18x18x128xf32, #tpu.memory_space<vmem>>, vector<18x1x128xf32>
    %c0_68 = arith.constant 0 : index
    %c17_69 = arith.constant 17 : index
    %c0_70 = arith.constant 0 : index
    %70 = vector.load %arg5[%c0_68, %c17_69, %c0_70] : memref<18x18x128xf32, #tpu.memory_space<vmem>>, vector<18x1x128xf32>
    tpu.vector_store %arg5[%c0_68, %c17_69, %c0_70], %69 {strides = array<i32>} : memref<18x18x128xf32, #tpu.memory_space<vmem>>, vector<18x1x128xf32>,
    %c0_71 = arith.constant 0 : index
    %c0_72 = arith.constant 0 : index
    %c0_73 = arith.constant 0 : index
    %71 = vector.load %arg5[%c0_71, %c0_72, %c0_73] : memref<18x18x128xf32, #tpu.memory_space<vmem>>, vector<18x18x128xf32>
    %72 = vector.extract_strided_slice %71 {offsets = [0, 0, 0], sizes = [16, 18, 128], strides = [1, 1, 1]} : vector<18x18x128xf32> to vector<16x18x128xf32>
    %73 = vector.extract_strided_slice %71 {offsets = [1, 0, 0], sizes = [16, 18, 128], strides = [1, 1, 1]} : vector<18x18x128xf32> to vector<16x18x128xf32>
    %74 = vector.extract_strided_slice %71 {offsets = [2, 0, 0], sizes = [16, 18, 128], strides = [1, 1, 1]} : vector<18x18x128xf32> to vector<16x18x128xf32>
    %75 = tpu.concatenate %72, %73, %74 in 2 : vector<16x18x128xf32>, vector<16x18x128xf32>, vector<16x18x128xf32> -> vector<16x18x384xf32>
    %76 = vector.extract_strided_slice %75 {offsets = [0, 0, 0], sizes = [16, 16, 384], strides = [1, 1, 1]} : vector<16x18x384xf32> to vector<16x16x384xf32>
    %77 = vector.shape_cast %76 : vector<16x16x384xf32> to vector<256x384xf32>
    %c0_74 = arith.constant 0 : index
    %c0_75 = arith.constant 0 : index
    %c0_76 = arith.constant 0 : index
    %78 = vector.load %arg3[%c0_74, %c0_75, %c0_76] : memref<3x384x128xf32, #tpu.memory_space<vmem>>, vector<1x384x128xf32>
    %79 = vector.shape_cast %78 : vector<1x384x128xf32> to vector<384x128xf32>
    %cst_77 = arith.constant dense<0.000000e+00> : vector<256x128xf32>
    %80 = tpu.matmul %77, %79, %cst_77 {dimension_numbers = #tpu.dot_dimension_numbers<[1], [0], [0], [1], [0, 0, 1, 1], [], []>} : vector<256x384xf32>, vector<384x128xf32>, vector<256x128xf32> -> vector<256x128xf32>
    %81 = vector.extract_strided_slice %75 {offsets = [0, 1, 0], sizes = [16, 16, 384], strides = [1, 1, 1]} : vector<16x18x384xf32> to vector<16x16x384xf32>
    %82 = vector.shape_cast %81 : vector<16x16x384xf32> to vector<256x384xf32>
    %c1_78 = arith.constant 1 : index
    %c0_79 = arith.constant 0 : index
    %c0_80 = arith.constant 0 : index
    %83 = vector.load %arg3[%c1_78, %c0_79, %c0_80] : memref<3x384x128xf32, #tpu.memory_space<vmem>>, vector<1x384x128xf32>
    %84 = vector.shape_cast %83 : vector<1x384x128xf32> to vector<384x128xf32>
    %cst_81 = arith.constant dense<0.000000e+00> : vector<256x128xf32>
    %85 = tpu.matmul %82, %84, %cst_81 {dimension_numbers = #tpu.dot_dimension_numbers<[1], [0], [0], [1], [0, 0, 1, 1], [], []>} : vector<256x384xf32>, vector<384x128xf32>, vector<256x128xf32> -> vector<256x128xf32>
    %86 = arith.addf %80, %85 : vector<256x128xf32>
    %87 = vector.extract_strided_slice %75 {offsets = [0, 2, 0], sizes = [16, 16, 384], strides = [1, 1, 1]} : vector<16x18x384xf32> to vector<16x16x384xf32>
    %88 = vector.shape_cast %87 : vector<16x16x384xf32> to vector<256x384xf32>
    %c2_82 = arith.constant 2 : index
    %c0_83 = arith.constant 0 : index
    %c0_84 = arith.constant 0 : index
    %89 = vector.load %arg3[%c2_82, %c0_83, %c0_84] : memref<3x384x128xf32, #tpu.memory_space<vmem>>, vector<1x384x128xf32>
    %90 = vector.shape_cast %89 : vector<1x384x128xf32> to vector<384x128xf32>
    %cst_85 = arith.constant dense<0.000000e+00> : vector<256x128xf32>
    %91 = tpu.matmul %88, %90, %cst_85 {dimension_numbers = #tpu.dot_dimension_numbers<[1], [0], [0], [1], [0, 0, 1, 1], [], []>} : vector<256x384xf32>, vector<384x128xf32>, vector<256x128xf32> -> vector<256x128xf32>
    %92 = arith.addf %86, %91 : vector<256x128xf32>
    %93 = vector.shape_cast %92 : vector<256x128xf32> to vector<16x16x128xf32>
    %c0_86 = arith.constant 0 : index
    %c0_87 = arith.constant 0 : index
    %c0_88 = arith.constant 0 : index
    %94 = vector.load %arg6[%c0_86, %c0_87, %c0_88] : memref<16x16x128xf32, #tpu.memory_space<vmem>>, vector<16x16x128xf32>
    tpu.vector_store %arg6[%c0_86, %c0_87, %c0_88], %93 {strides = array<i32>} : memref<16x16x128xf32, #tpu.memory_space<vmem>>, vector<16x16x128xf32>,
    %c0_89 = arith.constant 0 : index
    %c0_90 = arith.constant 0 : index
    %c0_91 = arith.constant 0 : index
    %95 = vector.load %arg6[%c0_89, %c0_90, %c0_91] : memref<16x16x128xf32, #tpu.memory_space<vmem>>, vector<16x16x128xf32>
    %cst_92 = arith.constant dense<0.000000e+00> : vector<128xf32>
    %96 = vector.multi_reduction <add>, %95, %cst_92 [0, 1] : vector<16x16x128xf32> to vector<128xf32>
    %97 = vector.shape_cast %96 : vector<128xf32> to vector<1x1x128xf32>
    %cst_93 = arith.constant 3.906250e-03 : f32
    %98 = vector.broadcast %cst_93 : f32 to vector<1x1x128xf32>
    %99 = arith.mulf %97, %98 : vector<1x1x128xf32>
    %100 = vector.broadcast %99 : vector<1x1x128xf32> to vector<16x16x128xf32>
    %101 = arith.subf %95, %100 : vector<16x16x128xf32>
    %102 = vector.broadcast %99 : vector<1x1x128xf32> to vector<16x16x128xf32>
    %103 = arith.subf %95, %102 : vector<16x16x128xf32>
    %104 = arith.mulf %101, %103 : vector<16x16x128xf32>
    %cst_94 = arith.constant dense<0.000000e+00> : vector<128xf32>
    %105 = vector.multi_reduction <add>, %104, %cst_94 [0, 1] : vector<16x16x128xf32> to vector<128xf32>
    %106 = vector.shape_cast %105 : vector<128xf32> to vector<1x1x128xf32>
    %cst_95 = arith.constant 3.906250e-03 : f32
    %107 = vector.broadcast %cst_95 : f32 to vector<1x1x128xf32>
    %108 = arith.mulf %106, %107 : vector<1x1x128xf32>
    %cst_96 = arith.constant 9.99999974E-6 : f32
    %109 = vector.broadcast %cst_96 : f32 to vector<1x1x128xf32>
    %110 = arith.addf %108, %109 : vector<1x1x128xf32>
    %111 = math.rsqrt %110 : vector<1x1x128xf32>
    %cst_97 = arith.constant 0.000000e+00 : f32
    %112 = vector.broadcast %cst_97 : f32 to vector<1x1x128xf32>
    %113 = arith.subf %112, %99 : vector<1x1x128xf32>
    %114 = arith.mulf %113, %111 : vector<1x1x128xf32>
    %c0_98 = arith.constant 0 : index
    %c0_99 = arith.constant 0 : index
    %c0_100 = arith.constant 0 : index
    %c0_101 = arith.constant 0 : index
    %115 = vector.load %arg1[%c0_98, %c0_99, %c0_100, %c0_101] : memref<1x16x16x128xf32, #tpu.memory_space<vmem>>, vector<1x16x16x128xf32>
    %116 = vector.shape_cast %115 : vector<1x16x16x128xf32> to vector<16x16x128xf32>
    %c0_102 = arith.constant 0 : index
    %c0_103 = arith.constant 0 : index
    %c0_104 = arith.constant 0 : index
    %117 = vector.load %arg6[%c0_102, %c0_103, %c0_104] : memref<16x16x128xf32, #tpu.memory_space<vmem>>, vector<16x16x128xf32>
    %118 = vector.broadcast %111 : vector<1x1x128xf32> to vector<16x16x128xf32>
    %119 = arith.mulf %117, %118 : vector<16x16x128xf32>
    %120 = arith.addf %116, %119 : vector<16x16x128xf32>
    %121 = vector.broadcast %114 : vector<1x1x128xf32> to vector<16x16x128xf32>
    %122 = arith.addf %120, %121 : vector<16x16x128xf32>
    %c0_105 = arith.constant 0 : index
    %c0_106 = arith.constant 0 : index
    %c0_107 = arith.constant 0 : index
    %c0_108 = arith.constant 0 : index
    %123 = vector.load %arg4[%c0_105, %c0_106, %c0_107, %c0_108] : memref<1x16x16x128xf32, #tpu.memory_space<vmem>>, vector<1x16x16x128xf32>
    %124 = vector.shape_cast %123 : vector<1x16x16x128xf32> to vector<16x16x128xf32>
    %125 = vector.shape_cast %122 : vector<16x16x128xf32> to vector<1x16x16x128xf32>
    tpu.vector_store %arg4[%c0_105, %c0_106, %c0_107, %c0_108], %125 {strides = array<i32>} : memref<1x16x16x128xf32, #tpu.memory_space<vmem>>, vector<1x16x16x128xf32>,
    return
  }
  func.func @transform_0(%arg0: i32) -> (i32, i32, i32, i32) {
    %c0_i32 = arith.constant 0 : i32
    %c0_i32_0 = arith.constant 0 : i32
    %c0_i32_1 = arith.constant 0 : i32
    %c0_i32_2 = arith.constant 0 : i32
    return %arg0, %c0_i32, %c0_i32_0, %c0_i32_1 : i32, i32, i32, i32
  }
  func.func @transform_1(%arg0: i32) -> (i32, i32, i32) {
    %c0_i32 = arith.constant 0 : i32
    %c0_i32_0 = arith.constant 0 : i32
    %c0_i32_1 = arith.constant 0 : i32
    %c0_i32_2 = arith.constant 0 : i32
    return %c0_i32, %c0_i32_0, %c0_i32_1 : i32, i32, i32
  }
  func.func @transform_2(%arg0: i32) -> (i32, i32, i32) {
    %c0_i32 = arith.constant 0 : i32
    %c0_i32_0 = arith.constant 0 : i32
    %c0_i32_1 = arith.constant 0 : i32
    %c0_i32_2 = arith.constant 0 : i32
    return %c0_i32, %c0_i32_0, %c0_i32_1 : i32, i32, i32
  }
  func.func @transform_3(%arg0: i32) -> (i32, i32, i32, i32) {
    %c0_i32 = arith.constant 0 : i32
    %c0_i32_0 = arith.constant 0 : i32
    %c0_i32_1 = arith.constant 0 : i32
    %c0_i32_2 = arith.constant 0 : i32
    return %arg0, %c0_i32, %c0_i32_0, %c0_i32_1 : i32, i32, i32, i32
  }
}

module attributes {stable_mosaic.version = 11 : i64} {
  func.func @kernel(%arg0: i32, %arg1: memref<1x16x16x128xf32, #tpu.memory_space<vmem>>, %arg2: memref<3x384x128xf32, #tpu.memory_space<vmem>>, %arg3: memref<3x384x128xf32, #tpu.memory_space<vmem>>, %arg4: memref<1x16x16x128xf32, #tpu.memory_space<vmem>>, %arg5: memref<18x18x128xf32, #tpu.memory_space<vmem>>, %arg6: memref<16x16x128xf32, #tpu.memory_space<vmem>>) attributes {dimension_semantics = [#tpu.dimension_semantics<parallel>], iteration_bounds = array<i64: 2>, scalar_prefetch = 0 : i64, scratch_operands = 2 : i64, tpu.core_type = #tpu.core_type<tc>, window_params = [{transform_indices = @transform_0, window_bounds = array<i64: 1, 16, 16, 128>}, {pipeline_mode = #tpu.pipeline_mode<synchronous>, transform_indices = @transform_1, window_bounds = array<i64: 3, 384, 128>}, {pipeline_mode = #tpu.pipeline_mode<synchronous>, transform_indices = @transform_2, window_bounds = array<i64: 3, 384, 128>}, {transform_indices = @transform_3, window_bounds = array<i64: 1, 16, 16, 128>}]} {
    %c0 = arith.constant 0 : index
    %c0_0 = arith.constant 0 : index
    %c0_1 = arith.constant 0 : index
    %c0_2 = arith.constant 0 : index
    %0 = vector.load %arg1[%c0, %c0_0, %c0_1, %c0_2] : memref<1x16x16x128xf32, #tpu.memory_space<vmem>>, vector<1x16x16x128xf32>
    %1 = vector.shape_cast %0 : vector<1x16x16x128xf32> to vector<16x16x128xf32>
    %c1 = arith.constant 1 : index
    %c1_3 = arith.constant 1 : index
    %c0_4 = arith.constant 0 : index
    %2 = vector.load %arg5[%c1, %c1_3, %c0_4] : memref<18x18x128xf32, #tpu.memory_space<vmem>>, vector<16x16x128xf32>
    tpu.vector_store %arg5[%c1, %c1_3, %c0_4], %1 {strides = array<i32>} : memref<18x18x128xf32, #tpu.memory_space<vmem>>, vector<16x16x128xf32>,
    %3 = vector.extract_strided_slice %1 {offsets = [1, 0, 0], sizes = [1, 16, 128], strides = [1, 1, 1]} : vector<16x16x128xf32> to vector<1x16x128xf32>
    %c0_5 = arith.constant 0 : index
    %c1_6 = arith.constant 1 : index
    %c0_7 = arith.constant 0 : index
    %4 = vector.load %arg5[%c0_5, %c1_6, %c0_7] : memref<18x18x128xf32, #tpu.memory_space<vmem>>, vector<1x16x128xf32>
    tpu.vector_store %arg5[%c0_5, %c1_6, %c0_7], %3 {strides = array<i32>} : memref<18x18x128xf32, #tpu.memory_space<vmem>>, vector<1x16x128xf32>,
    %5 = vector.extract_strided_slice %1 {offsets = [14, 0, 0], sizes = [1, 16, 128], strides = [1, 1, 1]} : vector<16x16x128xf32> to vector<1x16x128xf32>
    %c17 = arith.constant 17 : index
    %c1_8 = arith.constant 1 : index
    %c0_9 = arith.constant 0 : index
    %6 = vector.load %arg5[%c17, %c1_8, %c0_9] : memref<18x18x128xf32, #tpu.memory_space<vmem>>, vector<1x16x128xf32>
    tpu.vector_store %arg5[%c17, %c1_8, %c0_9], %5 {strides = array<i32>} : memref<18x18x128xf32, #tpu.memory_space<vmem>>, vector<1x16x128xf32>,
    %c0_10 = arith.constant 0 : index
    %c2 = arith.constant 2 : index
    %c0_11 = arith.constant 0 : index
    %7 = vector.load %arg5[%c0_10, %c2, %c0_11] : memref<18x18x128xf32, #tpu.memory_space<vmem>>, vector<18x1x128xf32>
    %c0_12 = arith.constant 0 : index
    %c0_13 = arith.constant 0 : index
    %c0_14 = arith.constant 0 : index
    %8 = vector.load %arg5[%c0_12, %c0_13, %c0_14] : memref<18x18x128xf32, #tpu.memory_space<vmem>>, vector<18x1x128xf32>
    tpu.vector_store %arg5[%c0_12, %c0_13, %c0_14], %7 {strides = array<i32>} : memref<18x18x128xf32, #tpu.memory_space<vmem>>, vector<18x1x128xf32>,
    %c0_15 = arith.constant 0 : index
    %c15 = arith.constant 15 : index
    %c0_16 = arith.constant 0 : index
    %9 = vector.load %arg5[%c0_15, %c15, %c0_16] : memref<18x18x128xf32, #tpu.memory_space<vmem>>, vector<18x1x128xf32>
    %c0_17 = arith.constant 0 : index
    %c17_18 = arith.constant 17 : index
    %c0_19 = arith.constant 0 : index
    %10 = vector.load %arg5[%c0_17, %c17_18, %c0_19] : memref<18x18x128xf32, #tpu.memory_space<vmem>>, vector<18x1x128xf32>
    tpu.vector_store %arg5[%c0_17, %c17_18, %c0_19], %9 {strides = array<i32>} : memref<18x18x128xf32, #tpu.memory_space<vmem>>, vector<18x1x128xf32>,
    %c0_20 = arith.constant 0 : index
    %c0_21 = arith.constant 0 : index
    %c0_22 = arith.constant 0 : index
    %11 = vector.load %arg5[%c0_20, %c0_21, %c0_22] : memref<18x18x128xf32, #tpu.memory_space<vmem>>, vector<18x18x128xf32>
    %12 = vector.extract_strided_slice %11 {offsets = [0, 0, 0], sizes = [16, 18, 128], strides = [1, 1, 1]} : vector<18x18x128xf32> to vector<16x18x128xf32>
    %13 = vector.extract_strided_slice %11 {offsets = [1, 0, 0], sizes = [16, 18, 128], strides = [1, 1, 1]} : vector<18x18x128xf32> to vector<16x18x128xf32>
    %14 = vector.extract_strided_slice %11 {offsets = [2, 0, 0], sizes = [16, 18, 128], strides = [1, 1, 1]} : vector<18x18x128xf32> to vector<16x18x128xf32>
    %15 = tpu.concatenate %12, %13, %14 in 2 : vector<16x18x128xf32>, vector<16x18x128xf32>, vector<16x18x128xf32> -> vector<16x18x384xf32>
    %16 = vector.extract_strided_slice %15 {offsets = [0, 0, 0], sizes = [16, 16, 384], strides = [1, 1, 1]} : vector<16x18x384xf32> to vector<16x16x384xf32>
    %17 = vector.shape_cast %16 : vector<16x16x384xf32> to vector<256x384xf32>
    %c0_23 = arith.constant 0 : index
    %c0_24 = arith.constant 0 : index
    %c0_25 = arith.constant 0 : index
    %18 = vector.load %arg2[%c0_23, %c0_24, %c0_25] : memref<3x384x128xf32, #tpu.memory_space<vmem>>, vector<1x384x128xf32>
    %19 = vector.shape_cast %18 : vector<1x384x128xf32> to vector<384x128xf32>
    %cst = arith.constant dense<0.000000e+00> : vector<256x128xf32>
    %20 = tpu.matmul %17, %19, %cst {dimension_numbers = #tpu.dot_dimension_numbers<[1], [0], [0], [1], [0, 0, 1, 1], [], []>} : vector<256x384xf32>, vector<384x128xf32>, vector<256x128xf32> -> vector<256x128xf32>
    %21 = vector.extract_strided_slice %15 {offsets = [0, 1, 0], sizes = [16, 16, 384], strides = [1, 1, 1]} : vector<16x18x384xf32> to vector<16x16x384xf32>
    %22 = vector.shape_cast %21 : vector<16x16x384xf32> to vector<256x384xf32>
    %c1_26 = arith.constant 1 : index
    %c0_27 = arith.constant 0 : index
    %c0_28 = arith.constant 0 : index
    %23 = vector.load %arg2[%c1_26, %c0_27, %c0_28] : memref<3x384x128xf32, #tpu.memory_space<vmem>>, vector<1x384x128xf32>
    %24 = vector.shape_cast %23 : vector<1x384x128xf32> to vector<384x128xf32>
    %cst_29 = arith.constant dense<0.000000e+00> : vector<256x128xf32>
    %25 = tpu.matmul %22, %24, %cst_29 {dimension_numbers = #tpu.dot_dimension_numbers<[1], [0], [0], [1], [0, 0, 1, 1], [], []>} : vector<256x384xf32>, vector<384x128xf32>, vector<256x128xf32> -> vector<256x128xf32>
    %26 = arith.addf %20, %25 : vector<256x128xf32>
    %27 = vector.extract_strided_slice %15 {offsets = [0, 2, 0], sizes = [16, 16, 384], strides = [1, 1, 1]} : vector<16x18x384xf32> to vector<16x16x384xf32>
    %28 = vector.shape_cast %27 : vector<16x16x384xf32> to vector<256x384xf32>
    %c2_30 = arith.constant 2 : index
    %c0_31 = arith.constant 0 : index
    %c0_32 = arith.constant 0 : index
    %29 = vector.load %arg2[%c2_30, %c0_31, %c0_32] : memref<3x384x128xf32, #tpu.memory_space<vmem>>, vector<1x384x128xf32>
    %30 = vector.shape_cast %29 : vector<1x384x128xf32> to vector<384x128xf32>
    %cst_33 = arith.constant dense<0.000000e+00> : vector<256x128xf32>
    %31 = tpu.matmul %28, %30, %cst_33 {dimension_numbers = #tpu.dot_dimension_numbers<[1], [0], [0], [1], [0, 0, 1, 1], [], []>} : vector<256x384xf32>, vector<384x128xf32>, vector<256x128xf32> -> vector<256x128xf32>
    %32 = arith.addf %26, %31 : vector<256x128xf32>
    %33 = vector.shape_cast %32 : vector<256x128xf32> to vector<16x16x128xf32>
    %c0_34 = arith.constant 0 : index
    %c0_35 = arith.constant 0 : index
    %c0_36 = arith.constant 0 : index
    %34 = vector.load %arg6[%c0_34, %c0_35, %c0_36] : memref<16x16x128xf32, #tpu.memory_space<vmem>>, vector<16x16x128xf32>
    tpu.vector_store %arg6[%c0_34, %c0_35, %c0_36], %33 {strides = array<i32>} : memref<16x16x128xf32, #tpu.memory_space<vmem>>, vector<16x16x128xf32>,
    %c0_37 = arith.constant 0 : index
    %c0_38 = arith.constant 0 : index
    %c0_39 = arith.constant 0 : index
    %35 = vector.load %arg6[%c0_37, %c0_38, %c0_39] : memref<16x16x128xf32, #tpu.memory_space<vmem>>, vector<16x16x128xf32>
    %cst_40 = arith.constant dense<0.000000e+00> : vector<128xf32>
    %36 = vector.multi_reduction <add>, %35, %cst_40 [0, 1] : vector<16x16x128xf32> to vector<128xf32>
    %37 = vector.shape_cast %36 : vector<128xf32> to vector<1x1x128xf32>
    %cst_41 = arith.constant 3.906250e-03 : f32
    %38 = vector.broadcast %cst_41 : f32 to vector<1x1x128xf32>
    %39 = arith.mulf %37, %38 : vector<1x1x128xf32>
    %40 = vector.broadcast %39 : vector<1x1x128xf32> to vector<16x16x128xf32>
    %41 = arith.subf %35, %40 : vector<16x16x128xf32>
    %42 = vector.broadcast %39 : vector<1x1x128xf32> to vector<16x16x128xf32>
    %43 = arith.subf %35, %42 : vector<16x16x128xf32>
    %44 = arith.mulf %41, %43 : vector<16x16x128xf32>
    %cst_42 = arith.constant dense<0.000000e+00> : vector<128xf32>
    %45 = vector.multi_reduction <add>, %44, %cst_42 [0, 1] : vector<16x16x128xf32> to vector<128xf32>
    %46 = vector.shape_cast %45 : vector<128xf32> to vector<1x1x128xf32>
    %cst_43 = arith.constant 3.906250e-03 : f32
    %47 = vector.broadcast %cst_43 : f32 to vector<1x1x128xf32>
    %48 = arith.mulf %46, %47 : vector<1x1x128xf32>
    %cst_44 = arith.constant 9.99999974E-6 : f32
    %49 = vector.broadcast %cst_44 : f32 to vector<1x1x128xf32>
    %50 = arith.addf %48, %49 : vector<1x1x128xf32>
    %51 = math.rsqrt %50 : vector<1x1x128xf32>
    %cst_45 = arith.constant 0.000000e+00 : f32
    %52 = vector.broadcast %cst_45 : f32 to vector<1x1x128xf32>
    %53 = arith.subf %52, %39 : vector<1x1x128xf32>
    %54 = arith.mulf %53, %51 : vector<1x1x128xf32>
    %c0_46 = arith.constant 0 : index
    %c0_47 = arith.constant 0 : index
    %c0_48 = arith.constant 0 : index
    %55 = vector.load %arg6[%c0_46, %c0_47, %c0_48] : memref<16x16x128xf32, #tpu.memory_space<vmem>>, vector<16x16x128xf32>
    %56 = vector.broadcast %51 : vector<1x1x128xf32> to vector<16x16x128xf32>
    %57 = arith.mulf %55, %56 : vector<16x16x128xf32>
    %58 = vector.broadcast %54 : vector<1x1x128xf32> to vector<16x16x128xf32>
    %59 = arith.addf %57, %58 : vector<16x16x128xf32>
    %cst_49 = arith.constant 0.000000e+00 : f32
    %60 = vector.broadcast %cst_49 : f32 to vector<16x16x128xf32>
    %61 = arith.maximumf %59, %60 : vector<16x16x128xf32>
    %c1_50 = arith.constant 1 : index
    %c1_51 = arith.constant 1 : index
    %c0_52 = arith.constant 0 : index
    %62 = vector.load %arg5[%c1_50, %c1_51, %c0_52] : memref<18x18x128xf32, #tpu.memory_space<vmem>>, vector<16x16x128xf32>
    tpu.vector_store %arg5[%c1_50, %c1_51, %c0_52], %61 {strides = array<i32>} : memref<18x18x128xf32, #tpu.memory_space<vmem>>, vector<16x16x128xf32>,
    %63 = vector.extract_strided_slice %61 {offsets = [1, 0, 0], sizes = [1, 16, 128], strides = [1, 1, 1]} : vector<16x16x128xf32> to vector<1x16x128xf32>
    %c0_53 = arith.constant 0 : index
    %c1_54 = arith.constant 1 : index
    %c0_55 = arith.constant 0 : index
    %64 = vector.load %arg5[%c0_53, %c1_54, %c0_55] : memref<18x18x128xf32, #tpu.memory_space<vmem>>, vector<1x16x128xf32>
    tpu.vector_store %arg5[%c0_53, %c1_54, %c0_55], %63 {strides = array<i32>} : memref<18x18x128xf32, #tpu.memory_space<vmem>>, vector<1x16x128xf32>,
    %65 = vector.extract_strided_slice %61 {offsets = [14, 0, 0], sizes = [1, 16, 128], strides = [1, 1, 1]} : vector<16x16x128xf32> to vector<1x16x128xf32>
    %c17_56 = arith.constant 17 : index
    %c1_57 = arith.constant 1 : index
    %c0_58 = arith.constant 0 : index
    %66 = vector.load %arg5[%c17_56, %c1_57, %c0_58] : memref<18x18x128xf32, #tpu.memory_space<vmem>>, vector<1x16x128xf32>
    tpu.vector_store %arg5[%c17_56, %c1_57, %c0_58], %65 {strides = array<i32>} : memref<18x18x128xf32, #tpu.memory_space<vmem>>, vector<1x16x128xf32>,
    %c0_59 = arith.constant 0 : index
    %c2_60 = arith.constant 2 : index
    %c0_61 = arith.constant 0 : index
    %67 = vector.load %arg5[%c0_59, %c2_60, %c0_61] : memref<18x18x128xf32, #tpu.memory_space<vmem>>, vector<18x1x128xf32>
    %c0_62 = arith.constant 0 : index
    %c0_63 = arith.constant 0 : index
    %c0_64 = arith.constant 0 : index
    %68 = vector.load %arg5[%c0_62, %c0_63, %c0_64] : memref<18x18x128xf32, #tpu.memory_space<vmem>>, vector<18x1x128xf32>
    tpu.vector_store %arg5[%c0_62, %c0_63, %c0_64], %67 {strides = array<i32>} : memref<18x18x128xf32, #tpu.memory_space<vmem>>, vector<18x1x128xf32>,
    %c0_65 = arith.constant 0 : index
    %c15_66 = arith.constant 15 : index
    %c0_67 = arith.constant 0 : index
    %69 = vector.load %arg5[%c0_65, %c15_66, %c0_67] : memref<18x18x128xf32, #tpu.memory_space<vmem>>, vector<18x1x128xf32>
    %c0_68 = arith.constant 0 : index
    %c17_69 = arith.constant 17 : index
    %c0_70 = arith.constant 0 : index
    %70 = vector.load %arg5[%c0_68, %c17_69, %c0_70] : memref<18x18x128xf32, #tpu.memory_space<vmem>>, vector<18x1x128xf32>
    tpu.vector_store %arg5[%c0_68, %c17_69, %c0_70], %69 {strides = array<i32>} : memref<18x18x128xf32, #tpu.memory_space<vmem>>, vector<18x1x128xf32>,
    %c0_71 = arith.constant 0 : index
    %c0_72 = arith.constant 0 : index
    %c0_73 = arith.constant 0 : index
    %71 = vector.load %arg5[%c0_71, %c0_72, %c0_73] : memref<18x18x128xf32, #tpu.memory_space<vmem>>, vector<18x18x128xf32>
    %72 = vector.extract_strided_slice %71 {offsets = [0, 0, 0], sizes = [16, 18, 128], strides = [1, 1, 1]} : vector<18x18x128xf32> to vector<16x18x128xf32>
    %73 = vector.extract_strided_slice %71 {offsets = [1, 0, 0], sizes = [16, 18, 128], strides = [1, 1, 1]} : vector<18x18x128xf32> to vector<16x18x128xf32>
    %74 = vector.extract_strided_slice %71 {offsets = [2, 0, 0], sizes = [16, 18, 128], strides = [1, 1, 1]} : vector<18x18x128xf32> to vector<16x18x128xf32>
    %75 = tpu.concatenate %72, %73, %74 in 2 : vector<16x18x128xf32>, vector<16x18x128xf32>, vector<16x18x128xf32> -> vector<16x18x384xf32>
    %76 = vector.extract_strided_slice %75 {offsets = [0, 0, 0], sizes = [16, 16, 384], strides = [1, 1, 1]} : vector<16x18x384xf32> to vector<16x16x384xf32>
    %77 = vector.shape_cast %76 : vector<16x16x384xf32> to vector<256x384xf32>
    %c0_74 = arith.constant 0 : index
    %c0_75 = arith.constant 0 : index
    %c0_76 = arith.constant 0 : index
    %78 = vector.load %arg3[%c0_74, %c0_75, %c0_76] : memref<3x384x128xf32, #tpu.memory_space<vmem>>, vector<1x384x128xf32>
    %79 = vector.shape_cast %78 : vector<1x384x128xf32> to vector<384x128xf32>
    %cst_77 = arith.constant dense<0.000000e+00> : vector<256x128xf32>
    %80 = tpu.matmul %77, %79, %cst_77 {dimension_numbers = #tpu.dot_dimension_numbers<[1], [0], [0], [1], [0, 0, 1, 1], [], []>} : vector<256x384xf32>, vector<384x128xf32>, vector<256x128xf32> -> vector<256x128xf32>
    %81 = vector.extract_strided_slice %75 {offsets = [0, 1, 0], sizes = [16, 16, 384], strides = [1, 1, 1]} : vector<16x18x384xf32> to vector<16x16x384xf32>
    %82 = vector.shape_cast %81 : vector<16x16x384xf32> to vector<256x384xf32>
    %c1_78 = arith.constant 1 : index
    %c0_79 = arith.constant 0 : index
    %c0_80 = arith.constant 0 : index
    %83 = vector.load %arg3[%c1_78, %c0_79, %c0_80] : memref<3x384x128xf32, #tpu.memory_space<vmem>>, vector<1x384x128xf32>
    %84 = vector.shape_cast %83 : vector<1x384x128xf32> to vector<384x128xf32>
    %cst_81 = arith.constant dense<0.000000e+00> : vector<256x128xf32>
    %85 = tpu.matmul %82, %84, %cst_81 {dimension_numbers = #tpu.dot_dimension_numbers<[1], [0], [0], [1], [0, 0, 1, 1], [], []>} : vector<256x384xf32>, vector<384x128xf32>, vector<256x128xf32> -> vector<256x128xf32>
    %86 = arith.addf %80, %85 : vector<256x128xf32>
    %87 = vector.extract_strided_slice %75 {offsets = [0, 2, 0], sizes = [16, 16, 384], strides = [1, 1, 1]} : vector<16x18x384xf32> to vector<16x16x384xf32>
    %88 = vector.shape_cast %87 : vector<16x16x384xf32> to vector<256x384xf32>
    %c2_82 = arith.constant 2 : index
    %c0_83 = arith.constant 0 : index
    %c0_84 = arith.constant 0 : index
    %89 = vector.load %arg3[%c2_82, %c0_83, %c0_84] : memref<3x384x128xf32, #tpu.memory_space<vmem>>, vector<1x384x128xf32>
    %90 = vector.shape_cast %89 : vector<1x384x128xf32> to vector<384x128xf32>
    %cst_85 = arith.constant dense<0.000000e+00> : vector<256x128xf32>
    %91 = tpu.matmul %88, %90, %cst_85 {dimension_numbers = #tpu.dot_dimension_numbers<[1], [0], [0], [1], [0, 0, 1, 1], [], []>} : vector<256x384xf32>, vector<384x128xf32>, vector<256x128xf32> -> vector<256x128xf32>
    %92 = arith.addf %86, %91 : vector<256x128xf32>
    %93 = vector.shape_cast %92 : vector<256x128xf32> to vector<16x16x128xf32>
    %c0_86 = arith.constant 0 : index
    %c0_87 = arith.constant 0 : index
    %c0_88 = arith.constant 0 : index
    %94 = vector.load %arg6[%c0_86, %c0_87, %c0_88] : memref<16x16x128xf32, #tpu.memory_space<vmem>>, vector<16x16x128xf32>
    tpu.vector_store %arg6[%c0_86, %c0_87, %c0_88], %93 {strides = array<i32>} : memref<16x16x128xf32, #tpu.memory_space<vmem>>, vector<16x16x128xf32>,
    %c0_89 = arith.constant 0 : index
    %c0_90 = arith.constant 0 : index
    %c0_91 = arith.constant 0 : index
    %95 = vector.load %arg6[%c0_89, %c0_90, %c0_91] : memref<16x16x128xf32, #tpu.memory_space<vmem>>, vector<16x16x128xf32>
    %cst_92 = arith.constant dense<0.000000e+00> : vector<128xf32>
    %96 = vector.multi_reduction <add>, %95, %cst_92 [0, 1] : vector<16x16x128xf32> to vector<128xf32>
    %97 = vector.shape_cast %96 : vector<128xf32> to vector<1x1x128xf32>
    %cst_93 = arith.constant 3.906250e-03 : f32
    %98 = vector.broadcast %cst_93 : f32 to vector<1x1x128xf32>
    %99 = arith.mulf %97, %98 : vector<1x1x128xf32>
    %100 = vector.broadcast %99 : vector<1x1x128xf32> to vector<16x16x128xf32>
    %101 = arith.subf %95, %100 : vector<16x16x128xf32>
    %102 = vector.broadcast %99 : vector<1x1x128xf32> to vector<16x16x128xf32>
    %103 = arith.subf %95, %102 : vector<16x16x128xf32>
    %104 = arith.mulf %101, %103 : vector<16x16x128xf32>
    %cst_94 = arith.constant dense<0.000000e+00> : vector<128xf32>
    %105 = vector.multi_reduction <add>, %104, %cst_94 [0, 1] : vector<16x16x128xf32> to vector<128xf32>
    %106 = vector.shape_cast %105 : vector<128xf32> to vector<1x1x128xf32>
    %cst_95 = arith.constant 3.906250e-03 : f32
    %107 = vector.broadcast %cst_95 : f32 to vector<1x1x128xf32>
    %108 = arith.mulf %106, %107 : vector<1x1x128xf32>
    %cst_96 = arith.constant 9.99999974E-6 : f32
    %109 = vector.broadcast %cst_96 : f32 to vector<1x1x128xf32>
    %110 = arith.addf %108, %109 : vector<1x1x128xf32>
    %111 = math.rsqrt %110 : vector<1x1x128xf32>
    %cst_97 = arith.constant 0.000000e+00 : f32
    %112 = vector.broadcast %cst_97 : f32 to vector<1x1x128xf32>
    %113 = arith.subf %112, %99 : vector<1x1x128xf32>
    %114 = arith.mulf %113, %111 : vector<1x1x128xf32>
    %c0_98 = arith.constant 0 : index
    %c0_99 = arith.constant 0 : index
    %c0_100 = arith.constant 0 : index
    %c0_101 = arith.constant 0 : index
    %115 = vector.load %arg1[%c0_98, %c0_99, %c0_100, %c0_101] : memref<1x16x16x128xf32, #tpu.memory_space<vmem>>, vector<1x16x16x128xf32>
    %116 = vector.shape_cast %115 : vector<1x16x16x128xf32> to vector<16x16x128xf32>
    %c0_102 = arith.constant 0 : index
    %c0_103 = arith.constant 0 : index
    %c0_104 = arith.constant 0 : index
    %117 = vector.load %arg6[%c0_102, %c0_103, %c0_104] : memref<16x16x128xf32, #tpu.memory_space<vmem>>, vector<16x16x128xf32>
    %118 = vector.broadcast %111 : vector<1x1x128xf32> to vector<16x16x128xf32>
    %119 = arith.mulf %117, %118 : vector<16x16x128xf32>
    %120 = arith.addf %116, %119 : vector<16x16x128xf32>
    %121 = vector.broadcast %114 : vector<1x1x128xf32> to vector<16x16x128xf32>
    %122 = arith.addf %120, %121 : vector<16x16x128xf32>
    %c0_105 = arith.constant 0 : index
    %c0_106 = arith.constant 0 : index
    %c0_107 = arith.constant 0 : index
    %c0_108 = arith.constant 0 : index
    %123 = vector.load %arg4[%c0_105, %c0_106, %c0_107, %c0_108] : memref<1x16x16x128xf32, #tpu.memory_space<vmem>>, vector<1x16x16x128xf32>
    %124 = vector.shape_cast %123 : vector<1x16x16x128xf32> to vector<16x16x128xf32>
    %125 = vector.shape_cast %122 : vector<16x16x128xf32> to vector<1x16x16x128xf32>
    tpu.vector_store %arg4[%c0_105, %c0_106, %c0_107, %c0_108], %125 {strides = array<i32>} : memref<1x16x16x128xf32, #tpu.memory_space<vmem>>, vector<1x16x16x128xf32>,
    return
  }
  func.func @transform_0(%arg0: i32) -> (i32, i32, i32, i32) {
    %c0_i32 = arith.constant 0 : i32
    %c0_i32_0 = arith.constant 0 : i32
    %c0_i32_1 = arith.constant 0 : i32
    %c0_i32_2 = arith.constant 0 : i32
    return %arg0, %c0_i32, %c0_i32_0, %c0_i32_1 : i32, i32, i32, i32
  }
  func.func @transform_1(%arg0: i32) -> (i32, i32, i32) {
    %c0_i32 = arith.constant 0 : i32
    %c0_i32_0 = arith.constant 0 : i32
    %c0_i32_1 = arith.constant 0 : i32
    %c0_i32_2 = arith.constant 0 : i32
    return %c0_i32, %c0_i32_0, %c0_i32_1 : i32, i32, i32
  }
  func.func @transform_2(%arg0: i32) -> (i32, i32, i32) {
    %c0_i32 = arith.constant 0 : i32
    %c0_i32_0 = arith.constant 0 : i32
    %c0_i32_1 = arith.constant 0 : i32
    %c0_i32_2 = arith.constant 0 : i32
    return %c0_i32, %c0_i32_0, %c0_i32_1 : i32, i32, i32
  }
  func.func @transform_3(%arg0: i32) -> (i32, i32, i32, i32) {
    %c0_i32 = arith.constant 0 : i32
    %c0_i32_0 = arith.constant 0 : i32
    %c0_i32_1 = arith.constant 0 : i32
    %c0_i32_2 = arith.constant 0 : i32
    return %arg0, %c0_i32, %c0_i32_0, %c0_i32_1 : i32, i32, i32, i32
  }
}

</mosaic_0001>

<llo_original>
// kernel: tpu_custom_call.1
$region0: #{tpu_custom_call.1}
  #allocation0 [shape = 'u32[]', space=smem, size = 0x4, offset = 0x4, fixed_abs, tag = 'smem constant byte address 0x4 - core index']
  #allocation1 [shape = 'u32[144,128]{1,0:T(1,128)}', space=vmem, size = 0x12000, scoped, tag = 'internal scratch']
  #allocation2 [shape = 'f32[18,18,128]{2,1,0:T(8,128)}', space=vmem, size = 0x36000, scoped, tag = 'scratch operand']
  #allocation3 [shape = 'f32[16,16,128]{2,1,0:T(8,128)}', space=vmem, size = 0x20000, scoped, tag = 'scratch operand']
  %s0 = inlined_call_operand.hbm [shape: f32[2,16,16,128], index: 0, kind: input, shape index: {}]
  %s1 = inlined_call_operand.hbm [shape: f32[3,384,128], index: 1, kind: input, shape index: {}]
  %s2 = inlined_call_operand.hbm [shape: f32[3,384,128], index: 2, kind: input, shape index: {}]
  %s3 = inlined_call_operand.hbm [shape: f32[2,16,16,128], index: 3, kind: output, shape index: {}]
  %s4 = sld [smem:[#allocation0]]
  $region57: #{tpu_custom_call.1} parent=0
    _
  %s6 = ssub.s32 1, %s4
  %s7 = scalar_select 0, %s6, %s4
  $region1: #{tpu_custom_call.1} parent=0
    #allocation4 [shape = 'u8[262144]{0}', space=vmem, size = 0x40000, scoped, tag = 'input window, operand 0']
    #allocation5 [shape = 's32[2]{0}', space=sflag, size = 0x8, scoped, tag = 'scoped memory for tpu_custom_call.1']
    #allocation6 [shape = 's32[2]{0}', space=sflag, size = 0x8, scoped, tag = 'scoped memory for tpu_custom_call.1']
    #allocation7 [shape = 'u8[589824]{0}', space=vmem, size = 0x90000, scoped, tag = 'input window, operand 1, single buffered']
    #allocation8 [shape = 's32[1]{0}', space=sflag, size = 0x4, scoped, tag = 'scoped memory for tpu_custom_call.1']
    #allocation9 [shape = 'u8[589824]{0}', space=vmem, size = 0x90000, scoped, tag = 'input window, operand 2, single buffered']
    #allocation10 [shape = 'u8[262144]{0}', space=vmem, size = 0x40000, scoped, tag = 'output window, operand 0']
    %8 = vsyncpa [#allocation5], 0
    %s9 = scalar_lea.sflag [#allocation5], 1
    %10 = vsyncpa %s9, 0
    %11 = vsyncpa [#allocation8], 0
    %12 = vsyncpa [#allocation6], 0
    %s13 = scalar_lea.sflag [#allocation6], 1
    %14 = vsyncpa %s13, 0
    loop: start=0, step=1, limit=4
    $region2: #{tpu_custom_call.1} parent=1 // loop_pre_header
      _
    $region3: #{tpu_custom_call.1} parent=1 // loop_header
      %s16 = sphi 0, %s20
      %p17 = scmp.ge.s32.totalorder %s16, 4
      %s26 = sphi 0, %s28
      %s29 = sphi 0, %s26
      %s30 = sphi 0, %s29
      %s46 = sphi 0, %s30
      %s50 = sphi 0, %s50
      %s52 = sphi 0, %s50
      %s53 = sphi 0, %s52
      %s67 = sphi 0, %s53
      %s71 = sphi 0, %s71
      %s73 = sphi 0, %s71
      %s74 = sphi 0, %s73
      %s88 = sphi 0, %s74
      %s94 = sphi 0, %s96
      %s97 = sphi 0, %s94
      %s98 = sphi 0, %s97
      %s114 = sphi 0, %s98
    $region4: #{tpu_custom_call.1} parent=1 // loop_header_branch
      %19 = sbr.rel (%p17) target = $region8
    $region5: #{tpu_custom_call.1} parent=1 // loop_body
      %s21 = ssub.s32 %s16, 1
      %s22 = ssub.s32 %s16, 2
      %s23 = sadd.s32 %s16, 1
      %s24 = ssub.s32 %s16, %s23
      %p25 = scmp.eq.s32.totalorder %s24, 0
      %s27 = sadd.s32 %s26, 1
      %s28 = scalar_select %p25, %s26, %s27
      %p31 = pneg %p25
      %p32 = scmp.eq.s32.totalorder %s16, 1
      %p33 = por %p31, %p32
      %p34 = scmp.ne.s32.totalorder %s26, %s29
      %p35 = scmp.eq.s32.totalorder %s16, 0
      %p36 = por %p34, %p35
      %p37 = scmp.ne.s32.totalorder %s26, %s29
      %p38 = scmp.eq.s32.totalorder %s21, 1
      %p39 = por %p37, %p38
      %p40 = scmp.ne.s32.totalorder %s29, %s30
      %p41 = scmp.eq.s32.totalorder %s21, 0
      %p42 = por %p40, %p41
      %p43 = scmp.ne.s32.totalorder %s29, %s30
      %p44 = scmp.eq.s32.totalorder %s22, 1
      %p45 = por %p43, %p44
      %p47 = scmp.ne.s32.totalorder %s30, %s46
      %p48 = scmp.eq.s32.totalorder %s22, 0
      %p49 = por %p47, %p48
      %s51 = sadd.s32 %s50, 1
      %p54 = scmp.eq.s32.totalorder %s16, 1
      %p55 = scmp.ne.s32.totalorder %s50, %s52
      %p56 = scmp.eq.s32.totalorder %s16, 0
      %p57 = por %p55, %p56
      %p58 = scmp.ne.s32.totalorder %s50, %s52
      %p59 = scmp.eq.s32.totalorder %s21, 1
      %p60 = por %p58, %p59
      %p61 = scmp.ne.s32.totalorder %s52, %s53
      %p62 = scmp.eq.s32.totalorder %s21, 0
      %p63 = por %p61, %p62
      %p64 = scmp.ne.s32.totalorder %s52, %s53
      %p65 = scmp.eq.s32.totalorder %s22, 1
      %p66 = por %p64, %p65
      %p68 = scmp.ne.s32.totalorder %s53, %s67
      %p69 = scmp.eq.s32.totalorder %s22, 0
      %p70 = por %p68, %p69
      %s72 = sadd.s32 %s71, 1
      %p75 = scmp.eq.s32.totalorder %s16, 1
      %p76 = scmp.ne.s32.totalorder %s71, %s73
      %p77 = scmp.eq.s32.totalorder %s16, 0
      %p78 = por %p76, %p77
      %p79 = scmp.ne.s32.totalorder %s71, %s73
      %p80 = scmp.eq.s32.totalorder %s21, 1
      %p81 = por %p79, %p80
      %p82 = scmp.ne.s32.totalorder %s73, %s74
      %p83 = scmp.eq.s32.totalorder %s21, 0
      %p84 = por %p82, %p83
      %p85 = scmp.ne.s32.totalorder %s73, %s74
      %p86 = scmp.eq.s32.totalorder %s22, 1
      %p87 = por %p85, %p86
      %p89 = scmp.ne.s32.totalorder %s74, %s88
      %p90 = scmp.eq.s32.totalorder %s22, 0
      %p91 = por %p89, %p90
      %s92 = ssub.s32 %s16, %s23
      %p93 = scmp.eq.s32.totalorder %s92, 0
      %s95 = sadd.s32 %s94, 1
      %s96 = scalar_select %p93, %s94, %s95
      %p99 = pneg %p93
      %p100 = scmp.eq.s32.totalorder %s16, 1
      %p101 = por %p99, %p100
      %p102 = scmp.ne.s32.totalorder %s94, %s97
      %p103 = scmp.eq.s32.totalorder %s16, 0
      %p104 = por %p102, %p103
      %p105 = scmp.ne.s32.totalorder %s94, %s97
      %p106 = scmp.eq.s32.totalorder %s21, 1
      %p107 = por %p105, %p106
      %p108 = scmp.ne.s32.totalorder %s97, %s98
      %p109 = scmp.eq.s32.totalorder %s21, 0
      %p110 = por %p108, %p109
      %p111 = scmp.ne.s32.totalorder %s97, %s98
      %p112 = scmp.eq.s32.totalorder %s22, 1
      %p113 = por %p111, %p112
      %p115 = scmp.ne.s32.totalorder %s98, %s114
      %p116 = scmp.eq.s32.totalorder %s22, 0
      %p117 = por %p115, %p116
      %p118 = scmp.le.s32.totalorder 1, %s16
      %p119 = scmp.lt.s32.totalorder %s16, 3
      %p120 = pnand %p118, %p119
      %p121 = pneg %p120
      // Predicated region
      $region9: #{tpu_custom_call.1} parent=5 // pred_check
        _
      $region10: #{tpu_custom_call.1} parent=5 // pred_check_branch
        %123 = sbr.rel (%p120) target = $region12
      $region11: #{tpu_custom_call.1} parent=5 // pred_region
        %s124 = ssub.s32 %s16, 1
        // Predicated region
        $region13: #{tpu_custom_call.1} parent=11 // pred_check
          %p125 = pneg %p63
        $region14: #{tpu_custom_call.1} parent=11 // pred_check_branch
          %127 = sbr.rel (%p125) target = $region16
        $region15: #{tpu_custom_call.1} parent=11 // pred_region
          %s129 = ssub.s32 18432, 18432
          %130 = vsyncadd [#allocation8], %s129
          %s131 = sshll.u32 [#allocation7], 4
          %s132 = int_to_ptr.vmem [resolvable:$true] %s131
          %137 = dma.hbm_to_vmem [thread:$0]  %s1, 18432, %s132, [#allocation8], 128, 128, 8
        $region16: #{tpu_custom_call.1} parent=11 // pred_fallthru
          _
        // Predicated region
        $region17: #{tpu_custom_call.1} parent=11 // pred_check
          %p138 = pneg %p84
        $region18: #{tpu_custom_call.1} parent=11 // pred_check_branch
          %140 = sbr.rel (%p138) target = $region20
        $region19: #{tpu_custom_call.1} parent=11 // pred_region
          %s142 = ssub.s32 18432, 18432
          %143 = vsyncadd [#allocation8], %s142
          %s144 = sshll.u32 [#allocation9], 4
          %s145 = int_to_ptr.vmem [resolvable:$true] %s144
          %150 = dma.hbm_to_vmem [thread:$0]  %s2, 18432, %s145, [#allocation8], 128, 128, 8
        $region20: #{tpu_custom_call.1} parent=11 // pred_fallthru
          _
      $region12: #{tpu_custom_call.1} parent=5 // pred_fallthru
        _
      %p151 = scmp.lt.s32.totalorder %s16, 2
      // Predicated region
      $region21: #{tpu_custom_call.1} parent=5 // pred_check
        %p152 = pneg %p151
      $region22: #{tpu_custom_call.1} parent=5 // pred_check_branch
        %154 = sbr.rel (%p152) target = $region24
      $region23: #{tpu_custom_call.1} parent=5 // pred_region
        // Predicated region
        $region25: #{tpu_custom_call.1} parent=23 // pred_check
          %p155 = pneg %p36
        $region26: #{tpu_custom_call.1} parent=23 // pred_check_branch
          %157 = sbr.rel (%p155) target = $region28
        $region27: #{tpu_custom_call.1} parent=23 // pred_region
          %s158 = sand.u32 %s26, 1
          %s159 = scalar_lea.sflag [#allocation5], %s158
          %s160 = sand.u32 %s26, 1
          %s161 = smul.addr %s160, 256
          %s162 = scalar_lea.vmem [#allocation4], %s161
          %s164 = ssub.s32 4096, 4096
          %165 = vsyncadd %s159, %s164
          %s166 = smul.addr %s16, 32
          %s167 = smul.addr %s166, 128
          %s168 = scalar_lea.hbm %s0, %s167
          %s169 = sshll.u32 %s162, 4
          %s170 = int_to_ptr.vmem [resolvable:$true] %s169
          %175 = dma.hbm_to_vmem [thread:$0]  %s168, 4096, %s170, %s159, 128, 128, 8
        $region28: #{tpu_custom_call.1} parent=23 // pred_fallthru
          _
      $region24: #{tpu_custom_call.1} parent=5 // pred_fallthru
        _
      %p176 = scmp.le.s32.totalorder 1, %s16
      %p177 = scmp.lt.s32.totalorder %s16, 3
      %p178 = pnand %p176, %p177
      %p179 = pneg %p178
      // Predicated region
      $region29: #{tpu_custom_call.1} parent=5 // pred_check
        _
      $region30: #{tpu_custom_call.1} parent=5 // pred_check_branch
        %181 = sbr.rel (%p178) target = $region32
      $region31: #{tpu_custom_call.1} parent=5 // pred_region
        %s182 = ssub.s32 %s16, 1
        %s183 = sand.u32 %s29, 1
        %s184 = scalar_lea.sflag [#allocation5], %s183
        %s185 = sand.u32 %s29, 1
        %s186 = smul.addr %s185, 256
        %s187 = scalar_lea.vmem [#allocation4], %s186
        // Predicated region
        $region33: #{tpu_custom_call.1} parent=31 // pred_check
          %p188 = pneg %p42
        $region34: #{tpu_custom_call.1} parent=31 // pred_check_branch
          %190 = sbr.rel (%p188) target = $region36
        $region35: #{tpu_custom_call.1} parent=31 // pred_region
          %191 = dma.done %s184, 4096
        $region36: #{tpu_custom_call.1} parent=31 // pred_fallthru
          _
        // Predicated region
        $region37: #{tpu_custom_call.1} parent=31 // pred_check
          %p192 = pneg %p63
        $region38: #{tpu_custom_call.1} parent=31 // pred_check_branch
          %194 = sbr.rel (%p192) target = $region40
        $region39: #{tpu_custom_call.1} parent=31 // pred_region
          %195 = dma.done [#allocation8], 18432
        $region40: #{tpu_custom_call.1} parent=31 // pred_fallthru
          _
        // Predicated region
        $region41: #{tpu_custom_call.1} parent=31 // pred_check
          %p196 = pneg %p84
        $region42: #{tpu_custom_call.1} parent=31 // pred_check_branch
          %198 = sbr.rel (%p196) target = $region44
        $region43: #{tpu_custom_call.1} parent=31 // pred_region
          %199 = dma.done [#allocation8], 18432
        $region44: #{tpu_custom_call.1} parent=31 // pred_fallthru
          _
        %s200 = sand.u32 %s29, 1
        %s201 = scalar_lea.sflag [#allocation5], %s200
        %s202 = sand.u32 %s29, 1
        %s203 = smul.addr %s202, 256
        %s204 = scalar_lea.vmem [#allocation4], %s203
        %p205 = pneg %p42
        %p206 = pneg %p39
        %p207 = pneg %p63
        %p208 = pneg %p60
        %p209 = pneg %p84
        %p210 = pneg %p81
        %p211 = pneg %p110
        %p212 = pneg %p107
        %s213 = sand.u32 %s97, 1
        %s214 = scalar_lea.sflag [#allocation6], %s213
        %s215 = sand.u32 %s97, 1
        %s216 = smul.addr %s215, 256
        %s217 = scalar_lea.vmem [#allocation10], %s216
        %v218 = vld [vmem:[%s187] sm:$0xff]
        %v219 = vld [vmem:[%s187 + $0x8] sm:$0xff]
        %v220 = vld [vmem:[%s187 + $0x10] sm:$0xff]
        %v221 = vld [vmem:[%s187 + $0x18] sm:$0xff]
        %v222 = vld [vmem:[%s187 + $0x20] sm:$0xff]
        %v223 = vld [vmem:[%s187 + $0x28] sm:$0xff]
        %v224 = vld [vmem:[%s187 + $0x30] sm:$0xff]
        %v225 = vld [vmem:[%s187 + $0x38] sm:$0xff]
        %v226 = vld [vmem:[%s187 + $0x40] sm:$0xff]
        %v227 = vld [vmem:[%s187 + $0x48] sm:$0xff]
        %v228 = vld [vmem:[%s187 + $0x50] sm:$0xff]
        %v229 = vld [vmem:[%s187 + $0x58] sm:$0xff]
        %v230 = vld [vmem:[%s187 + $0x60] sm:$0xff]
        %v231 = vld [vmem:[%s187 + $0x68] sm:$0xff]
        %v232 = vld [vmem:[%s187 + $0x70] sm:$0xff]
        %v233 = vld [vmem:[%s187 + $0x78] sm:$0xff]
        %v234 = vld [vmem:[%s187 + $0x80] sm:$0xff]
        %v235 = vld [vmem:[%s187 + $0x88] sm:$0xff]
        %v236 = vld [vmem:[%s187 + $0x90] sm:$0xff]
        %v237 = vld [vmem:[%s187 + $0x98] sm:$0xff]
        %v238 = vld [vmem:[%s187 + $0xa0] sm:$0xff]
        %v239 = vld [vmem:[%s187 + $0xa8] sm:$0xff]
        %v240 = vld [vmem:[%s187 + $0xb0] sm:$0xff]
        %v241 = vld [vmem:[%s187 + $0xb8] sm:$0xff]
        %v242 = vld [vmem:[%s187 + $0xc0] sm:$0xff]
        %v243 = vld [vmem:[%s187 + $0xc8] sm:$0xff]
        %v244 = vld [vmem:[%s187 + $0xd0] sm:$0xff]
        %v245 = vld [vmem:[%s187 + $0xd8] sm:$0xff]
        %v246 = vld [vmem:[%s187 + $0xe0] sm:$0xff]
        %v247 = vld [vmem:[%s187 + $0xe8] sm:$0xff]
        %v248 = vld [vmem:[%s187 + $0xf0] sm:$0xff]
        %v249 = vld [vmem:[%s187 + $0xf8] sm:$0xff]
        %s250 = scalar_lea.vmem [#allocation2], 24
        %251 = vst [vmem:[%s250 + $0x1] sm:$0xff] %v218
        %252 = vst [vmem:[%s250 + $0x9] sm:$0xff] %v219
        %253 = vst [vmem:[%s250 + $0x19] sm:$0xff] %v220
        %254 = vst [vmem:[%s250 + $0x21] sm:$0xff] %v221
        %255 = vst [vmem:[%s250 + $0x31] sm:$0xff] %v222
        %256 = vst [vmem:[%s250 + $0x39] sm:$0xff] %v223
        %257 = vst [vmem:[%s250 + $0x49] sm:$0xff] %v224
        %258 = vst [vmem:[%s250 + $0x51] sm:$0xff] %v225
        %259 = vst [vmem:[%s250 + $0x61] sm:$0xff] %v226
        %260 = vst [vmem:[%s250 + $0x69] sm:$0xff] %v227
        %261 = vst [vmem:[%s250 + $0x79] sm:$0xff] %v228
        %262 = vst [vmem:[%s250 + $0x81] sm:$0xff] %v229
        %263 = vst [vmem:[%s250 + $0x91] sm:$0xff] %v230
        %264 = vst [vmem:[%s250 + $0x99] sm:$0xff] %v231
        %265 = vst [vmem:[%s250 + $0xa9] sm:$0xff] %v232
        %266 = vst [vmem:[%s250 + $0xb1] sm:$0xff] %v233
        %267 = vst [vmem:[%s250 + $0xc1] sm:$0xff] %v234
        %268 = vst [vmem:[%s250 + $0xc9] sm:$0xff] %v235
        %269 = vst [vmem:[%s250 + $0xd9] sm:$0xff] %v236
        %270 = vst [vmem:[%s250 + $0xe1] sm:$0xff] %v237
        %271 = vst [vmem:[%s250 + $0xf1] sm:$0xff] %v238
        %272 = vst [vmem:[%s250 + $0xf9] sm:$0xff] %v239
        %273 = vst [vmem:[%s250 + $0x109] sm:$0xff] %v240
        %274 = vst [vmem:[%s250 + $0x111] sm:$0xff] %v241
        %275 = vst [vmem:[%s250 + $0x121] sm:$0xff] %v242
        %276 = vst [vmem:[%s250 + $0x129] sm:$0xff] %v243
        %277 = vst [vmem:[%s250 + $0x139] sm:$0xff] %v244
        %278 = vst [vmem:[%s250 + $0x141] sm:$0xff] %v245
        %279 = vst [vmem:[%s250 + $0x151] sm:$0xff] %v246
        %280 = vst [vmem:[%s250 + $0x159] sm:$0xff] %v247
        %281 = vst [vmem:[%s250 + $0x169] sm:$0xff] %v248
        %282 = vst [vmem:[%s250 + $0x171] sm:$0xff] %v249
        %283 = vst [vmem:[#allocation2 + $0x1] sm:$0xff] %v220
        %284 = vst [vmem:[#allocation2 + $0x9] sm:$0xff] %v221
        %s285 = scalar_lea.vmem [#allocation2], 408
        %286 = vst [vmem:[%s285 + $0x1] sm:$0xff] %v246
        %287 = vst [vmem:[%s285 + $0x9] sm:$0xff] %v247
        %v288 = vld [vmem:[#allocation2 + $0x2] sm:$0x1]
        %v289 = vld [vmem:[#allocation2 + $0x1a] sm:$0x1]
        %v290 = vld [vmem:[#allocation2 + $0x32] sm:$0x1]
        %v291 = vld [vmem:[#allocation2 + $0x4a] sm:$0x1]
        %v292 = vld [vmem:[#allocation2 + $0x62] sm:$0x1]
        %v293 = vld [vmem:[#allocation2 + $0x7a] sm:$0x1]
        %v294 = vld [vmem:[#allocation2 + $0x92] sm:$0x1]
        %v295 = vld [vmem:[#allocation2 + $0xaa] sm:$0x1]
        %v296 = vld [vmem:[#allocation2 + $0xc2] sm:$0x1]
        %v297 = vld [vmem:[#allocation2 + $0xda] sm:$0x1]
        %v298 = vld [vmem:[#allocation2 + $0xf2] sm:$0x1]
        %v299 = vld [vmem:[#allocation2 + $0x10a] sm:$0x1]
        %v300 = vld [vmem:[#allocation2 + $0x122] sm:$0x1]
        %v301 = vld [vmem:[#allocation2 + $0x13a] sm:$0x1]
        %v302 = vld [vmem:[#allocation2 + $0x152] sm:$0x1]
        %v303 = vld [vmem:[#allocation2 + $0x16a] sm:$0x1]
        %v304 = vld [vmem:[#allocation2 + $0x182] sm:$0x1]
        %v305 = vld [vmem:[#allocation2 + $0x19a] sm:$0x1]
        %306 = vst [vmem:[#allocation2] sm:$0x1] %v288
        %307 = vst [vmem:[#allocation2 + $0x18] sm:$0x1] %v289
        %308 = vst [vmem:[#allocation2 + $0x30] sm:$0x1] %v290
        %309 = vst [vmem:[#allocation2 + $0x48] sm:$0x1] %v291
        %310 = vst [vmem:[#allocation2 + $0x60] sm:$0x1] %v292
        %311 = vst [vmem:[#allocation2 + $0x78] sm:$0x1] %v293
        %312 = vst [vmem:[#allocation2 + $0x90] sm:$0x1] %v294
        %313 = vst [vmem:[#allocation2 + $0xa8] sm:$0x1] %v295
        %314 = vst [vmem:[#allocation2 + $0xc0] sm:$0x1] %v296
        %315 = vst [vmem:[#allocation2 + $0xd8] sm:$0x1] %v297
        %316 = vst [vmem:[#allocation2 + $0xf0] sm:$0x1] %v298
        %317 = vst [vmem:[#allocation2 + $0x108] sm:$0x1] %v299
        %318 = vst [vmem:[#allocation2 + $0x120] sm:$0x1] %v300
        %319 = vst [vmem:[#allocation2 + $0x138] sm:$0x1] %v301
        %320 = vst [vmem:[#allocation2 + $0x150] sm:$0x1] %v302
        %321 = vst [vmem:[#allocation2 + $0x168] sm:$0x1] %v303
        %322 = vst [vmem:[#allocation2 + $0x180] sm:$0x1] %v304
        %323 = vst [vmem:[#allocation2 + $0x198] sm:$0x1] %v305
        %v324 = vld [vmem:[#allocation2 + $0xf] sm:$0x1]
        %v325 = vld [vmem:[#allocation2 + $0x27] sm:$0x1]
        %v326 = vld [vmem:[#allocation2 + $0x3f] sm:$0x1]
        %v327 = vld [vmem:[#allocation2 + $0x57] sm:$0x1]
        %v328 = vld [vmem:[#allocation2 + $0x6f] sm:$0x1]
        %v329 = vld [vmem:[#allocation2 + $0x87] sm:$0x1]
        %v330 = vld [vmem:[#allocation2 + $0x9f] sm:$0x1]
        %v331 = vld [vmem:[#allocation2 + $0xb7] sm:$0x1]
        %v332 = vld [vmem:[#allocation2 + $0xcf] sm:$0x1]
        %v333 = vld [vmem:[#allocation2 + $0xe7] sm:$0x1]
        %v334 = vld [vmem:[#allocation2 + $0xff] sm:$0x1]
        %v335 = vld [vmem:[#allocation2 + $0x117] sm:$0x1]
        %v336 = vld [vmem:[#allocation2 + $0x12f] sm:$0x1]
        %v337 = vld [vmem:[#allocation2 + $0x147] sm:$0x1]
        %v338 = vld [vmem:[#allocation2 + $0x15f] sm:$0x1]
        %v339 = vld [vmem:[#allocation2 + $0x177] sm:$0x1]
        %v340 = vld [vmem:[#allocation2 + $0x18f] sm:$0x1]
        %v341 = vld [vmem:[#allocation2 + $0x1a7] sm:$0x1]
        %342 = vst [vmem:[#allocation2 + $0x11] sm:$0x1] %v324
        %343 = vst [vmem:[#allocation2 + $0x29] sm:$0x1] %v325
        %344 = vst [vmem:[#allocation2 + $0x41] sm:$0x1] %v326
        %345 = vst [vmem:[#allocation2 + $0x59] sm:$0x1] %v327
        %346 = vst [vmem:[#allocation2 + $0x71] sm:$0x1] %v328
        %347 = vst [vmem:[#allocation2 + $0x89] sm:$0x1] %v329
        %348 = vst [vmem:[#allocation2 + $0xa1] sm:$0x1] %v330
        %349 = vst [vmem:[#allocation2 + $0xb9] sm:$0x1] %v331
        %350 = vst [vmem:[#allocation2 + $0xd1] sm:$0x1] %v332
        %351 = vst [vmem:[#allocation2 + $0xe9] sm:$0x1] %v333
        %352 = vst [vmem:[#allocation2 + $0x101] sm:$0x1] %v334
        %353 = vst [vmem:[#allocation2 + $0x119] sm:$0x1] %v335
        %354 = vst [vmem:[#allocation2 + $0x131] sm:$0x1] %v336
        %355 = vst [vmem:[#allocation2 + $0x149] sm:$0x1] %v337
        %356 = vst [vmem:[#allocation2 + $0x161] sm:$0x1] %v338
        %357 = vst [vmem:[#allocation2 + $0x179] sm:$0x1] %v339
        %358 = vst [vmem:[#allocation2 + $0x191] sm:$0x1] %v340
        %359 = vst [vmem:[#allocation2 + $0x1a9] sm:$0x1] %v341
        %v360 = vld [vmem:[#allocation2] sm:$0xff]
        %v361 = vld [vmem:[#allocation2 + $0x8] sm:$0xff]
        %v362 = vld [vmem:[#allocation2 + $0x10] sm:$0x3]
        %v363 = vld [vmem:[#allocation2 + $0x18] sm:$0xff]
        %v364 = vld [vmem:[#allocation2 + $0x20] sm:$0xff]
        %v365 = vld [vmem:[#allocation2 + $0x28] sm:$0x3]
        %v366 = vld [vmem:[#allocation2 + $0x30] sm:$0xff]
        %v367 = vld [vmem:[#allocation2 + $0x38] sm:$0xff]
        %v368 = vld [vmem:[#allocation2 + $0x40] sm:$0x3]
        %v369 = vld [vmem:[#allocation2 + $0x48] sm:$0xff]
        %v370 = vld [vmem:[#allocation2 + $0x50] sm:$0xff]
        %v371 = vld [vmem:[#allocation2 + $0x58] sm:$0x3]
        %v372 = vld [vmem:[#allocation2 + $0x60] sm:$0xff]
        %v373 = vld [vmem:[#allocation2 + $0x68] sm:$0xff]
        %v374 = vld [vmem:[#allocation2 + $0x70] sm:$0x3]
        %v375 = vld [vmem:[#allocation2 + $0x78] sm:$0xff]
        %v376 = vld [vmem:[#allocation2 + $0x80] sm:$0xff]
        %v377 = vld [vmem:[#allocation2 + $0x88] sm:$0x3]
        %v378 = vld [vmem:[#allocation2 + $0x90] sm:$0xff]
        %v379 = vld [vmem:[#allocation2 + $0x98] sm:$0xff]
        %v380 = vld [vmem:[#allocation2 + $0xa0] sm:$0x3]
        %v381 = vld [vmem:[#allocation2 + $0xa8] sm:$0xff]
        %v382 = vld [vmem:[#allocation2 + $0xb0] sm:$0xff]
        %v383 = vld [vmem:[#allocation2 + $0xb8] sm:$0x3]
        %v384 = vld [vmem:[#allocation2 + $0xc0] sm:$0xff]
        %v385 = vld [vmem:[#allocation2 + $0xc8] sm:$0xff]
        %v386 = vld [vmem:[#allocation2 + $0xd0] sm:$0x3]
        %v387 = vld [vmem:[#allocation2 + $0xd8] sm:$0xff]
        %v388 = vld [vmem:[#allocation2 + $0xe0] sm:$0xff]
        %v389 = vld [vmem:[#allocation2 + $0xe8] sm:$0x3]
        %v390 = vld [vmem:[#allocation2 + $0xf0] sm:$0xff]
        %v391 = vld [vmem:[#allocation2 + $0xf8] sm:$0xff]
        %v392 = vld [vmem:[#allocation2 + $0x100] sm:$0x3]
        %v393 = vld [vmem:[#allocation2 + $0x108] sm:$0xff]
        %v394 = vld [vmem:[#allocation2 + $0x110] sm:$0xff]
        %v395 = vld [vmem:[#allocation2 + $0x118] sm:$0x3]
        %v396 = vld [vmem:[#allocation2 + $0x120] sm:$0xff]
        %v397 = vld [vmem:[#allocation2 + $0x128] sm:$0xff]
        %v398 = vld [vmem:[#allocation2 + $0x130] sm:$0x3]
        %v399 = vld [vmem:[#allocation2 + $0x138] sm:$0xff]
        %v400 = vld [vmem:[#allocation2 + $0x140] sm:$0xff]
        %v401 = vld [vmem:[#allocation2 + $0x148] sm:$0x3]
        %v402 = vld [vmem:[#allocation2 + $0x150] sm:$0xff]
        %v403 = vld [vmem:[#allocation2 + $0x158] sm:$0xff]
        %v404 = vld [vmem:[#allocation2 + $0x160] sm:$0x3]
        %v405 = vld [vmem:[#allocation2 + $0x168] sm:$0xff]
        %v406 = vld [vmem:[#allocation2 + $0x170] sm:$0xff]
        %v407 = vld [vmem:[#allocation2 + $0x178] sm:$0x3]
        %v408 = vld [vmem:[#allocation2 + $0x180] sm:$0xff]
        %v409 = vld [vmem:[#allocation2 + $0x188] sm:$0xff]
        %v410 = vld [vmem:[#allocation2 + $0x190] sm:$0x3]
        %v411 = vld [vmem:[#allocation2 + $0x198] sm:$0xff]
        %v412 = vld [vmem:[#allocation2 + $0x1a0] sm:$0xff]
        %v413 = vld [vmem:[#allocation2 + $0x1a8] sm:$0x3]
        %v414 = vld [vmem:[#allocation7] sm:$0xff]
        %v415 = vld [vmem:[#allocation7 + $0x8] sm:$0xff]
        %v416 = vld [vmem:[#allocation7 + $0x10] sm:$0xff]
        %v417 = vld [vmem:[#allocation7 + $0x18] sm:$0xff]
        %v418 = vld [vmem:[#allocation7 + $0x20] sm:$0xff]
        %v419 = vld [vmem:[#allocation7 + $0x28] sm:$0xff]
        %v420 = vld [vmem:[#allocation7 + $0x30] sm:$0xff]
        %v421 = vld [vmem:[#allocation7 + $0x38] sm:$0xff]
        %v422 = vld [vmem:[#allocation7 + $0x40] sm:$0xff]
        %v423 = vld [vmem:[#allocation7 + $0x48] sm:$0xff]
        %v424 = vld [vmem:[#allocation7 + $0x50] sm:$0xff]
        %v425 = vld [vmem:[#allocation7 + $0x58] sm:$0xff]
        %v426 = vld [vmem:[#allocation7 + $0x60] sm:$0xff]
        %v427 = vld [vmem:[#allocation7 + $0x68] sm:$0xff]
        %v428 = vld [vmem:[#allocation7 + $0x70] sm:$0xff]
        %v429 = vld [vmem:[#allocation7 + $0x78] sm:$0xff]
        %v430 = vld [vmem:[#allocation7 + $0x80] sm:$0xff]
        %v431 = vld [vmem:[#allocation7 + $0x88] sm:$0xff]
        %v432 = vld [vmem:[#allocation7 + $0x90] sm:$0xff]
        %v433 = vld [vmem:[#allocation7 + $0x98] sm:$0xff]
        %v434 = vld [vmem:[#allocation7 + $0xa0] sm:$0xff]
        %v435 = vld [vmem:[#allocation7 + $0xa8] sm:$0xff]
        %v436 = vld [vmem:[#allocation7 + $0xb0] sm:$0xff]
        %v437 = vld [vmem:[#allocation7 + $0xb8] sm:$0xff]
        %v438 = vld [vmem:[#allocation7 + $0xc0] sm:$0xff]
        %v439 = vld [vmem:[#allocation7 + $0xc8] sm:$0xff]
        %v440 = vld [vmem:[#allocation7 + $0xd0] sm:$0xff]
        %v441 = vld [vmem:[#allocation7 + $0xd8] sm:$0xff]
        %v442 = vld [vmem:[#allocation7 + $0xe0] sm:$0xff]
        %v443 = vld [vmem:[#allocation7 + $0xe8] sm:$0xff]
        %v444 = vld [vmem:[#allocation7 + $0xf0] sm:$0xff]
        %v445 = vld [vmem:[#allocation7 + $0xf8] sm:$0xff]
        %v446 = vld [vmem:[#allocation7 + $0x100] sm:$0xff]
        %v447 = vld [vmem:[#allocation7 + $0x108] sm:$0xff]
        %v448 = vld [vmem:[#allocation7 + $0x110] sm:$0xff]
        %v449 = vld [vmem:[#allocation7 + $0x118] sm:$0xff]
        %v450 = vld [vmem:[#allocation7 + $0x120] sm:$0xff]
        %v451 = vld [vmem:[#allocation7 + $0x128] sm:$0xff]
        %v452 = vld [vmem:[#allocation7 + $0x130] sm:$0xff]
        %v453 = vld [vmem:[#allocation7 + $0x138] sm:$0xff]
        %v454 = vld [vmem:[#allocation7 + $0x140] sm:$0xff]
        %v455 = vld [vmem:[#allocation7 + $0x148] sm:$0xff]
        %v456 = vld [vmem:[#allocation7 + $0x150] sm:$0xff]
        %v457 = vld [vmem:[#allocation7 + $0x158] sm:$0xff]
        %v458 = vld [vmem:[#allocation7 + $0x160] sm:$0xff]
        %v459 = vld [vmem:[#allocation7 + $0x168] sm:$0xff]
        %v460 = vld [vmem:[#allocation7 + $0x170] sm:$0xff]
        %v461 = vld [vmem:[#allocation7 + $0x178] sm:$0xff]
        %vm516 = vcmask 1046528
        %v517 = vrot.slane %v360, 1
        %v518 = vrot.slane %v361, 1
        %v519 = vsel %vm516, %v517, %v518
        %v520 = vrot.slane %v363, 1
        %v521 = vrot.slane %v364, 1
        %v522 = vsel %vm516, %v520, %v521
        %v523 = vrot.slane %v366, 1
        %v524 = vrot.slane %v367, 1
        %v525 = vsel %vm516, %v523, %v524
        %v526 = vrot.slane %v362, 1
        %v527 = vsel %vm516, %v518, %v526
        %v528 = vrot.slane %v365, 1
        %v529 = vsel %vm516, %v521, %v528
        %v530 = vrot.slane %v368, 1
        %v531 = vsel %vm516, %v524, %v530
        %v532 = vrot.slane %v369, 1
        %v533 = vrot.slane %v370, 1
        %v534 = vsel %vm516, %v532, %v533
        %v535 = vrot.slane %v371, 1
        %v536 = vsel %vm516, %v533, %v535
        %v537 = vrot.slane %v372, 1
        %v538 = vrot.slane %v373, 1
        %v539 = vsel %vm516, %v537, %v538
        %v540 = vrot.slane %v374, 1
        %v541 = vsel %vm516, %v538, %v540
        %v542 = vrot.slane %v375, 1
        %v543 = vrot.slane %v376, 1
        %v544 = vsel %vm516, %v542, %v543
        %v545 = vrot.slane %v377, 1
        %v546 = vsel %vm516, %v543, %v545
        %v547 = vrot.slane %v378, 1
        %v548 = vrot.slane %v379, 1
        %v549 = vsel %vm516, %v547, %v548
        %v550 = vrot.slane %v380, 1
        %v551 = vsel %vm516, %v548, %v550
        %v552 = vrot.slane %v381, 1
        %v553 = vrot.slane %v382, 1
        %v554 = vsel %vm516, %v552, %v553
        %v555 = vrot.slane %v383, 1
        %v556 = vsel %vm516, %v553, %v555
        %v557 = vrot.slane %v384, 1
        %v558 = vrot.slane %v385, 1
        %v559 = vsel %vm516, %v557, %v558
        %v560 = vrot.slane %v386, 1
        %v561 = vsel %vm516, %v558, %v560
        %v562 = vrot.slane %v387, 1
        %v563 = vrot.slane %v388, 1
        %v564 = vsel %vm516, %v562, %v563
        %v565 = vrot.slane %v389, 1
        %v566 = vsel %vm516, %v563, %v565
        %v567 = vrot.slane %v390, 1
        %v568 = vrot.slane %v391, 1
        %v569 = vsel %vm516, %v567, %v568
        %v570 = vrot.slane %v392, 1
        %v571 = vsel %vm516, %v568, %v570
        %v572 = vrot.slane %v393, 1
        %v573 = vrot.slane %v394, 1
        %v574 = vsel %vm516, %v572, %v573
        %v575 = vrot.slane %v395, 1
        %v576 = vsel %vm516, %v573, %v575
        %v577 = vrot.slane %v396, 1
        %v578 = vrot.slane %v397, 1
        %v579 = vsel %vm516, %v577, %v578
        %v580 = vrot.slane %v398, 1
        %v581 = vsel %vm516, %v578, %v580
        %v582 = vrot.slane %v399, 1
        %v583 = vrot.slane %v400, 1
        %v584 = vsel %vm516, %v582, %v583
        %v585 = vrot.slane %v401, 1
        %v586 = vsel %vm516, %v583, %v585
        %v587 = vrot.slane %v402, 1
        %v588 = vrot.slane %v403, 1
        %v589 = vsel %vm516, %v587, %v588
        %v590 = vrot.slane %v404, 1
        %v591 = vsel %vm516, %v588, %v590
        %v592 = vrot.slane %v405, 1
        %v593 = vrot.slane %v406, 1
        %v594 = vsel %vm516, %v592, %v593
        %v595 = vrot.slane %v407, 1
        %v596 = vsel %vm516, %v593, %v595
        %v597 = vrot.slane %v408, 1
        %v598 = vrot.slane %v409, 1
        %v599 = vsel %vm516, %v597, %v598
        %v600 = vrot.slane %v410, 1
        %v601 = vsel %vm516, %v598, %v600
        %v602 = vrot.slane %v411, 1
        %v603 = vrot.slane %v412, 1
        %v604 = vsel %vm516, %v602, %v603
        %v605 = vrot.slane %v413, 1
        %v606 = vsel %vm516, %v603, %v605
        %s643 = scalar_lea.vmem [#allocation7], 384
        %v644 = vld [vmem:[%s643] sm:$0xff]
        %v645 = vld [vmem:[%s643 + $0x8] sm:$0xff]
        %v646 = vld [vmem:[%s643 + $0x10] sm:$0xff]
        %v647 = vld [vmem:[%s643 + $0x18] sm:$0xff]
        %v648 = vld [vmem:[%s643 + $0x20] sm:$0xff]
        %v649 = vld [vmem:[%s643 + $0x28] sm:$0xff]
        %v650 = vld [vmem:[%s643 + $0x30] sm:$0xff]
        %v651 = vld [vmem:[%s643 + $0x38] sm:$0xff]
        %v652 = vld [vmem:[%s643 + $0x40] sm:$0xff]
        %v653 = vld [vmem:[%s643 + $0x48] sm:$0xff]
        %v654 = vld [vmem:[%s643 + $0x50] sm:$0xff]
        %v655 = vld [vmem:[%s643 + $0x58] sm:$0xff]
        %v656 = vld [vmem:[%s643 + $0x60] sm:$0xff]
        %v657 = vld [vmem:[%s643 + $0x68] sm:$0xff]
        %v658 = vld [vmem:[%s643 + $0x70] sm:$0xff]
        %v659 = vld [vmem:[%s643 + $0x78] sm:$0xff]
        %v660 = vld [vmem:[%s643 + $0x80] sm:$0xff]
        %v661 = vld [vmem:[%s643 + $0x88] sm:$0xff]
        %v662 = vld [vmem:[%s643 + $0x90] sm:$0xff]
        %v663 = vld [vmem:[%s643 + $0x98] sm:$0xff]
        %v664 = vld [vmem:[%s643 + $0xa0] sm:$0xff]
        %v665 = vld [vmem:[%s643 + $0xa8] sm:$0xff]
        %v666 = vld [vmem:[%s643 + $0xb0] sm:$0xff]
        %v667 = vld [vmem:[%s643 + $0xb8] sm:$0xff]
        %v668 = vld [vmem:[%s643 + $0xc0] sm:$0xff]
        %v669 = vld [vmem:[%s643 + $0xc8] sm:$0xff]
        %v670 = vld [vmem:[%s643 + $0xd0] sm:$0xff]
        %v671 = vld [vmem:[%s643 + $0xd8] sm:$0xff]
        %v672 = vld [vmem:[%s643 + $0xe0] sm:$0xff]
        %v673 = vld [vmem:[%s643 + $0xe8] sm:$0xff]
        %v674 = vld [vmem:[%s643 + $0xf0] sm:$0xff]
        %v675 = vld [vmem:[%s643 + $0xf8] sm:$0xff]
        %v676 = vld [vmem:[%s643 + $0x100] sm:$0xff]
        %v677 = vld [vmem:[%s643 + $0x108] sm:$0xff]
        %v678 = vld [vmem:[%s643 + $0x110] sm:$0xff]
        %v679 = vld [vmem:[%s643 + $0x118] sm:$0xff]
        %v680 = vld [vmem:[%s643 + $0x120] sm:$0xff]
        %v681 = vld [vmem:[%s643 + $0x128] sm:$0xff]
        %v682 = vld [vmem:[%s643 + $0x130] sm:$0xff]
        %v683 = vld [vmem:[%s643 + $0x138] sm:$0xff]
        %v684 = vld [vmem:[%s643 + $0x140] sm:$0xff]
        %v685 = vld [vmem:[%s643 + $0x148] sm:$0xff]
        %v686 = vld [vmem:[%s643 + $0x150] sm:$0xff]
        %v687 = vld [vmem:[%s643 + $0x158] sm:$0xff]
        %v688 = vld [vmem:[%s643 + $0x160] sm:$0xff]
        %v689 = vld [vmem:[%s643 + $0x168] sm:$0xff]
        %v690 = vld [vmem:[%s643 + $0x170] sm:$0xff]
        %v691 = vld [vmem:[%s643 + $0x178] sm:$0xff]
        %692 = vmatprep.subr.mxu0 0.0
        %693 = vmatpush1.msra.mxu0 %v644
        %694 = vmatprep.subr.mxu0 0.0
        %695 = vmatpush1.msra.mxu0 %v645
        %696 = vmatprep.subr.mxu0 0.0
        %697 = vmatpush1.msra.mxu0 %v646
        %698 = vmatprep.subr.mxu0 0.0
        %699 = vmatpush1.msra.mxu0 %v647
        %700 = vmatprep.subr.mxu0 0.0
        %701 = vmatpush1.msra.mxu0 %v648
        %702 = vmatprep.subr.mxu0 0.0
        %703 = vmatpush1.msra.mxu0 %v649
        %704 = vmatprep.subr.mxu0 0.0
        %705 = vmatpush1.msra.mxu0 %v650
        %706 = vmatprep.subr.mxu0 0.0
        %707 = vmatpush1.msra.mxu0 %v651
        %708 = vmatprep.subr.mxu0 0.0
        %709 = vmatpush1.msra.mxu0 %v652
        %710 = vmatprep.subr.mxu0 0.0
        %711 = vmatpush1.msra.mxu0 %v653
        %712 = vmatprep.subr.mxu0 0.0
        %713 = vmatpush1.msra.mxu0 %v654
        %714 = vmatprep.subr.mxu0 0.0
        %715 = vmatpush1.msra.mxu0 %v655
        %716 = vmatprep.subr.mxu0 0.0
        %717 = vmatpush1.msra.mxu0 %v656
        %718 = vmatprep.subr.mxu0 0.0
        %719 = vmatpush1.msra.mxu0 %v657
        %720 = vmatprep.subr.mxu0 0.0
        %721 = vmatpush1.msra.mxu0 %v658
        %722 = vmatprep.subr.mxu0 0.0
        %723 = vmatpush1.msra.mxu0 %v659
        %724 = vmatprep.subr.mxu0 0.0
        %725 = vmatpush1.msra.mxu0 %v660
        %726 = vmatprep.subr.mxu0 0.0
        %727 = vmatpush1.msra.mxu0 %v661
        %728 = vmatprep.subr.mxu0 0.0
        %729 = vmatpush1.msra.mxu0 %v662
        %730 = vmatprep.subr.mxu0 0.0
        %731 = vmatpush1.msra.mxu0 %v663
        %732 = vmatprep.subr.mxu0 0.0
        %733 = vmatpush1.msra.mxu0 %v664
        %734 = vmatprep.subr.mxu0 0.0
        %735 = vmatpush1.msra.mxu0 %v665
        %736 = vmatprep.subr.mxu0 0.0
        %737 = vmatpush1.msra.mxu0 %v666
        %738 = vmatprep.subr.mxu0 0.0
        %739 = vmatpush1.msra.mxu0 %v667
        %740 = vmatprep.subr.mxu0 0.0
        %741 = vmatpush1.msra.mxu0 %v668
        %742 = vmatprep.subr.mxu0 0.0
        %743 = vmatpush1.msra.mxu0 %v669
        %744 = vmatprep.subr.mxu0 0.0
        %745 = vmatpush1.msra.mxu0 %v670
        %746 = vmatprep.subr.mxu0 0.0
        %747 = vmatpush1.msra.mxu0 %v671
        %748 = vmatprep.subr.mxu0 0.0
        %749 = vmatpush1.msra.mxu0 %v672
        %750 = vmatprep.subr.mxu0 0.0
        %751 = vmatpush1.msra.mxu0 %v673
        %752 = vmatprep.subr.mxu0 0.0
        %753 = vmatpush1.msra.mxu0 %v674
        %754 = vmatprep.subr.mxu0 0.0
        %755 = vmatpush1.msra.mxu0 %v675
        %756 = vmatprep.mubr.f32.mxu0 %v522
        %757 = vmatmul.mubr.f32.gmra.mrb[0].mxu0 %v519
        %v758 = vpop.f32.mrb[0].mxu0
        %v759 = vadd.f32 0.0, %v758
        %v760 = vpop.f32.mrb[0].mxu0
        %761 = vmatprep.mubr.f32.mxu0 %v529
        %762 = vmatmul.mubr.f32.gmra.mrb[0].mxu0 %v527
        %v763 = vpop.f32.mrb[0].mxu0
        %v764 = vadd.f32 0.0, %v763
        %v765 = vpop.f32.mrb[0].mxu0
        %766 = vmatprep.mubr.f32.mxu0 %v525
        %767 = vmatmul.mubr.f32.gmra.mrb[0].mxu0 %v522
        %v768 = vpop.f32.mrb[0].mxu0
        %v769 = vadd.f32 0.0, %v768
        %v770 = vpop.f32.mrb[0].mxu0
        %771 = vmatprep.mubr.f32.mxu0 %v531
        %772 = vmatmul.mubr.f32.gmra.mrb[0].mxu0 %v529
        %v773 = vpop.f32.mrb[0].mxu0
        %v774 = vadd.f32 0.0, %v773
        %v775 = vpop.f32.mrb[0].mxu0
        %776 = vmatprep.mubr.f32.mxu0 %v534
        %777 = vmatmul.mubr.f32.gmra.mrb[0].mxu0 %v525
        %v778 = vpop.f32.mrb[0].mxu0
        %v779 = vadd.f32 0.0, %v778
        %v780 = vpop.f32.mrb[0].mxu0
        %781 = vmatprep.mubr.f32.mxu0 %v536
        %782 = vmatmul.mubr.f32.gmra.mrb[0].mxu0 %v531
        %v783 = vpop.f32.mrb[0].mxu0
        %v784 = vadd.f32 0.0, %v783
        %v785 = vpop.f32.mrb[0].mxu0
        %786 = vmatprep.mubr.f32.mxu0 %v539
        %787 = vmatmul.mubr.f32.gmra.mrb[0].mxu0 %v534
        %v788 = vpop.f32.mrb[0].mxu0
        %v789 = vadd.f32 0.0, %v788
        %v790 = vpop.f32.mrb[0].mxu0
        %791 = vmatprep.mubr.f32.mxu0 %v541
        %792 = vmatmul.mubr.f32.gmra.mrb[0].mxu0 %v536
        %v793 = vpop.f32.mrb[0].mxu0
        %v794 = vadd.f32 0.0, %v793
        %v795 = vpop.f32.mrb[0].mxu0
        %796 = vmatprep.mubr.f32.mxu0 %v544
        %797 = vmatmul.mubr.f32.gmra.mrb[0].mxu0 %v539
        %v798 = vpop.f32.mrb[0].mxu0
        %v799 = vadd.f32 0.0, %v798
        %v800 = vpop.f32.mrb[0].mxu0
        %801 = vmatprep.mubr.f32.mxu0 %v546
        %802 = vmatmul.mubr.f32.gmra.mrb[0].mxu0 %v541
        %v803 = vpop.f32.mrb[0].mxu0
        %v804 = vadd.f32 0.0, %v803
        %v805 = vpop.f32.mrb[0].mxu0
        %806 = vmatprep.mubr.f32.mxu0 %v549
        %807 = vmatmul.mubr.f32.gmra.mrb[0].mxu0 %v544
        %v808 = vpop.f32.mrb[0].mxu0
        %v809 = vadd.f32 0.0, %v808
        %v810 = vpop.f32.mrb[0].mxu0
        %811 = vmatprep.mubr.f32.mxu0 %v551
        %812 = vmatmul.mubr.f32.gmra.mrb[0].mxu0 %v546
        %v813 = vpop.f32.mrb[0].mxu0
        %v814 = vadd.f32 0.0, %v813
        %v815 = vpop.f32.mrb[0].mxu0
        %816 = vmatprep.mubr.f32.mxu0 %v554
        %817 = vmatmul.mubr.f32.gmra.mrb[0].mxu0 %v549
        %v818 = vpop.f32.mrb[0].mxu0
        %v819 = vadd.f32 0.0, %v818
        %v820 = vpop.f32.mrb[0].mxu0
        %821 = vmatprep.mubr.f32.mxu0 %v556
        %822 = vmatmul.mubr.f32.gmra.mrb[0].mxu0 %v551
        %v823 = vpop.f32.mrb[0].mxu0
        %v824 = vadd.f32 0.0, %v823
        %v825 = vpop.f32.mrb[0].mxu0
        %826 = vmatprep.mubr.f32.mxu0 %v559
        %827 = vmatmul.mubr.f32.gmra.mrb[0].mxu0 %v554
        %v828 = vpop.f32.mrb[0].mxu0
        %v829 = vadd.f32 0.0, %v828
        %v830 = vpop.f32.mrb[0].mxu0
        %831 = vmatprep.mubr.f32.mxu0 %v561
        %832 = vmatmul.mubr.f32.gmra.mrb[0].mxu0 %v556
        %v833 = vpop.f32.mrb[0].mxu0
        %v834 = vadd.f32 0.0, %v833
        %v835 = vpop.f32.mrb[0].mxu0
        %836 = vmatprep.mubr.f32.mxu0 %v564
        %837 = vmatmul.mubr.f32.gmra.mrb[0].mxu0 %v559
        %v838 = vpop.f32.mrb[0].mxu0
        %v839 = vadd.f32 0.0, %v838
        %v840 = vpop.f32.mrb[0].mxu0
        %841 = vmatprep.mubr.f32.mxu0 %v566
        %842 = vmatmul.mubr.f32.gmra.mrb[0].mxu0 %v561
        %v843 = vpop.f32.mrb[0].mxu0
        %v844 = vadd.f32 0.0, %v843
        %v845 = vpop.f32.mrb[0].mxu0
        %846 = vmatprep.mubr.f32.mxu0 %v569
        %847 = vmatmul.mubr.f32.gmra.mrb[0].mxu0 %v564
        %v848 = vpop.f32.mrb[0].mxu0
        %v849 = vadd.f32 0.0, %v848
        %v850 = vpop.f32.mrb[0].mxu0
        %851 = vmatprep.mubr.f32.mxu0 %v571
        %852 = vmatmul.mubr.f32.gmra.mrb[0].mxu0 %v566
        %v853 = vpop.f32.mrb[0].mxu0
        %v854 = vadd.f32 0.0, %v853
        %v855 = vpop.f32.mrb[0].mxu0
        %856 = vmatprep.mubr.f32.mxu0 %v574
        %857 = vmatmul.mubr.f32.gmra.mrb[0].mxu0 %v569
        %v858 = vpop.f32.mrb[0].mxu0
        %v859 = vadd.f32 0.0, %v858
        %v860 = vpop.f32.mrb[0].mxu0
        %861 = vmatprep.mubr.f32.mxu0 %v576
        %862 = vmatmul.mubr.f32.gmra.mrb[0].mxu0 %v571
        %v863 = vpop.f32.mrb[0].mxu0
        %v864 = vadd.f32 0.0, %v863
        %v865 = vpop.f32.mrb[0].mxu0
        %866 = vmatprep.mubr.f32.mxu0 %v579
        %867 = vmatmul.mubr.f32.gmra.mrb[0].mxu0 %v574
        %v868 = vpop.f32.mrb[0].mxu0
        %v869 = vadd.f32 0.0, %v868
        %v870 = vpop.f32.mrb[0].mxu0
        %871 = vmatprep.mubr.f32.mxu0 %v581
        %872 = vmatmul.mubr.f32.gmra.mrb[0].mxu0 %v576
        %v873 = vpop.f32.mrb[0].mxu0
        %v874 = vadd.f32 0.0, %v873
        %v875 = vpop.f32.mrb[0].mxu0
        %876 = vmatprep.mubr.f32.mxu0 %v584
        %877 = vmatmul.mubr.f32.gmra.mrb[0].mxu0 %v579
        %v878 = vpop.f32.mrb[0].mxu0
        %v879 = vadd.f32 0.0, %v878
        %v880 = vpop.f32.mrb[0].mxu0
        %881 = vmatprep.mubr.f32.mxu0 %v586
        %882 = vmatmul.mubr.f32.gmra.mrb[0].mxu0 %v581
        %v883 = vpop.f32.mrb[0].mxu0
        %v884 = vadd.f32 0.0, %v883
        %v885 = vpop.f32.mrb[0].mxu0
        %886 = vmatprep.mubr.f32.mxu0 %v589
        %887 = vmatmul.mubr.f32.gmra.mrb[0].mxu0 %v584
        %v888 = vpop.f32.mrb[0].mxu0
        %v889 = vadd.f32 0.0, %v888
        %v890 = vpop.f32.mrb[0].mxu0
        %891 = vmatprep.mubr.f32.mxu0 %v591
        %892 = vmatmul.mubr.f32.gmra.mrb[0].mxu0 %v586
        %v893 = vpop.f32.mrb[0].mxu0
        %v894 = vadd.f32 0.0, %v893
        %v895 = vpop.f32.mrb[0].mxu0
        %896 = vmatprep.mubr.f32.mxu0 %v594
        %897 = vmatmul.mubr.f32.gmra.mrb[0].mxu0 %v589
        %v898 = vpop.f32.mrb[0].mxu0
        %v899 = vadd.f32 0.0, %v898
        %v900 = vpop.f32.mrb[0].mxu0
        %901 = vmatprep.mubr.f32.mxu0 %v596
        %902 = vmatmul.mubr.f32.gmra.mrb[0].mxu0 %v591
        %v903 = vpop.f32.mrb[0].mxu0
        %v904 = vadd.f32 0.0, %v903
        %v905 = vpop.f32.mrb[0].mxu0
        %906 = vmatprep.mubr.f32.mxu0 %v599
        %907 = vmatmul.mubr.f32.gmra.mrb[0].mxu0 %v594
        %v908 = vpop.f32.mrb[0].mxu0
        %v909 = vadd.f32 0.0, %v908
        %v910 = vpop.f32.mrb[0].mxu0
        %911 = vmatprep.mubr.f32.mxu0 %v601
        %912 = vmatmul.mubr.f32.gmra.mrb[0].mxu0 %v596
        %v913 = vpop.f32.mrb[0].mxu0
        %v914 = vadd.f32 0.0, %v913
        %v915 = vpop.f32.mrb[0].mxu0
        %916 = vdwg.mxu0
        %917 = vmatprep.subr.mxu0 0.0
        %918 = vmatpush1.msra.mxu0 %v676
        %919 = vmatprep.subr.mxu0 0.0
        %920 = vmatpush1.msra.mxu0 %v677
        %921 = vmatprep.subr.mxu0 0.0
        %922 = vmatpush1.msra.mxu0 %v678
        %923 = vmatprep.subr.mxu0 0.0
        %924 = vmatpush1.msra.mxu0 %v679
        %925 = vmatprep.subr.mxu0 0.0
        %926 = vmatpush1.msra.mxu0 %v680
        %927 = vmatprep.subr.mxu0 0.0
        %928 = vmatpush1.msra.mxu0 %v681
        %929 = vmatprep.subr.mxu0 0.0
        %930 = vmatpush1.msra.mxu0 %v682
        %931 = vmatprep.subr.mxu0 0.0
        %932 = vmatpush1.msra.mxu0 %v683
        %933 = vmatprep.subr.mxu0 0.0
        %934 = vmatpush1.msra.mxu0 %v684
        %935 = vmatprep.subr.mxu0 0.0
        %936 = vmatpush1.msra.mxu0 %v685
        %937 = vmatprep.subr.mxu0 0.0
        %938 = vmatpush1.msra.mxu0 %v686
        %939 = vmatprep.subr.mxu0 0.0
        %940 = vmatpush1.msra.mxu0 %v687
        %941 = vmatprep.subr.mxu0 0.0
        %942 = vmatpush1.msra.mxu0 %v688
        %943 = vmatprep.subr.mxu0 0.0
        %944 = vmatpush1.msra.mxu0 %v689
        %945 = vmatprep.subr.mxu0 0.0
        %946 = vmatpush1.msra.mxu0 %v690
        %947 = vmatprep.subr.mxu0 0.0
        %948 = vmatpush1.msra.mxu0 %v691
        %949 = vmatprep.subr.mxu0 0.0
        %950 = vmatpush1.msra.mxu0 0.0
        %951 = vmatprep.subr.mxu0 0.0
        %952 = vmatpush1.msra.mxu0 0.0
        %953 = vmatprep.subr.mxu0 0.0
        %954 = vmatpush1.msra.mxu0 0.0
        %955 = vmatprep.subr.mxu0 0.0
        %956 = vmatpush1.msra.mxu0 0.0
        %957 = vmatprep.subr.mxu0 0.0
        %958 = vmatpush1.msra.mxu0 0.0
        %959 = vmatprep.subr.mxu0 0.0
        %960 = vmatpush1.msra.mxu0 0.0
        %961 = vmatprep.subr.mxu0 0.0
        %962 = vmatpush1.msra.mxu0 0.0
        %963 = vmatprep.subr.mxu0 0.0
        %964 = vmatpush1.msra.mxu0 0.0
        %965 = vmatprep.subr.mxu0 0.0
        %966 = vmatpush1.msra.mxu0 0.0
        %967 = vmatprep.subr.mxu0 0.0
        %968 = vmatpush1.msra.mxu0 0.0
        %969 = vmatprep.subr.mxu0 0.0
        %970 = vmatpush1.msra.mxu0 0.0
        %971 = vmatprep.subr.mxu0 0.0
        %972 = vmatpush1.msra.mxu0 0.0
        %973 = vmatprep.subr.mxu0 0.0
        %974 = vmatpush1.msra.mxu0 0.0
        %975 = vmatprep.subr.mxu0 0.0
        %976 = vmatpush1.msra.mxu0 0.0
        %977 = vmatprep.subr.mxu0 0.0
        %978 = vmatpush1.msra.mxu0 0.0
        %979 = vmatprep.subr.mxu0 0.0
        %980 = vmatpush1.msra.mxu0 0.0
        %981 = vmatprep.mubr.f32.mxu0 0.0
        %982 = vmatmul.mubr.f32.gmra.mrb[0].mxu0 %v525
        %v983 = vpop.f32.mrb[0].mxu0
        %v984 = vadd.f32 %v759, %v983
        %v985 = vpop.f32.mrb[0].mxu0
        %986 = vmatprep.mubr.f32.mxu0 0.0
        %987 = vmatmul.mubr.f32.gmra.mrb[0].mxu0 %v531
        %v988 = vpop.f32.mrb[0].mxu0
        %v989 = vadd.f32 %v764, %v988
        %v990 = vpop.f32.mrb[0].mxu0
        %991 = vmatprep.mubr.f32.mxu0 0.0
        %992 = vmatmul.mubr.f32.gmra.mrb[0].mxu0 %v534
        %v993 = vpop.f32.mrb[0].mxu0
        %v994 = vadd.f32 %v769, %v993
        %v995 = vpop.f32.mrb[0].mxu0
        %996 = vmatprep.mubr.f32.mxu0 0.0
        %997 = vmatmul.mubr.f32.gmra.mrb[0].mxu0 %v536
        %v998 = vpop.f32.mrb[0].mxu0
        %v999 = vadd.f32 %v774, %v998
        %v1000 = vpop.f32.mrb[0].mxu0
        %1001 = vmatprep.mubr.f32.mxu0 0.0
        %1002 = vmatmul.mubr.f32.gmra.mrb[0].mxu0 %v539
        %v1003 = vpop.f32.mrb[0].mxu0
        %v1004 = vadd.f32 %v779, %v1003
        %v1005 = vpop.f32.mrb[0].mxu0
        %1006 = vmatprep.mubr.f32.mxu0 0.0
        %1007 = vmatmul.mubr.f32.gmra.mrb[0].mxu0 %v541
        %v1008 = vpop.f32.mrb[0].mxu0
        %v1009 = vadd.f32 %v784, %v1008
        %v1010 = vpop.f32.mrb[0].mxu0
        %1011 = vmatprep.mubr.f32.mxu0 0.0
        %1012 = vmatmul.mubr.f32.gmra.mrb[0].mxu0 %v544
        %v1013 = vpop.f32.mrb[0].mxu0
        %v1014 = vadd.f32 %v789, %v1013
        %v1015 = vpop.f32.mrb[0].mxu0
        %1016 = vmatprep.mubr.f32.mxu0 0.0
        %1017 = vmatmul.mubr.f32.gmra.mrb[0].mxu0 %v546
        %v1018 = vpop.f32.mrb[0].mxu0
        %v1019 = vadd.f32 %v794, %v1018
        %v1020 = vpop.f32.mrb[0].mxu0
        %1021 = vmatprep.mubr.f32.mxu0 0.0
        %1022 = vmatmul.mubr.f32.gmra.mrb[0].mxu0 %v549
        %v1023 = vpop.f32.mrb[0].mxu0
        %v1024 = vadd.f32 %v799, %v1023
        %v1025 = vpop.f32.mrb[0].mxu0
        %1026 = vmatprep.mubr.f32.mxu0 0.0
        %1027 = vmatmul.mubr.f32.gmra.mrb[0].mxu0 %v551
        %v1028 = vpop.f32.mrb[0].mxu0
        %v1029 = vadd.f32 %v804, %v1028
        %v1030 = vpop.f32.mrb[0].mxu0
        %1031 = vmatprep.mubr.f32.mxu0 0.0
        %1032 = vmatmul.mubr.f32.gmra.mrb[0].mxu0 %v554
        %v1033 = vpop.f32.mrb[0].mxu0
        %v1034 = vadd.f32 %v809, %v1033
        %v1035 = vpop.f32.mrb[0].mxu0
        %1036 = vmatprep.mubr.f32.mxu0 0.0
        %1037 = vmatmul.mubr.f32.gmra.mrb[0].mxu0 %v556
        %v1038 = vpop.f32.mrb[0].mxu0
        %v1039 = vadd.f32 %v814, %v1038
        %v1040 = vpop.f32.mrb[0].mxu0
        %1041 = vmatprep.mubr.f32.mxu0 0.0
        %1042 = vmatmul.mubr.f32.gmra.mrb[0].mxu0 %v559
        %v1043 = vpop.f32.mrb[0].mxu0
        %v1044 = vadd.f32 %v819, %v1043
        %v1045 = vpop.f32.mrb[0].mxu0
        %1046 = vmatprep.mubr.f32.mxu0 0.0
        %1047 = vmatmul.mubr.f32.gmra.mrb[0].mxu0 %v561
        %v1048 = vpop.f32.mrb[0].mxu0
        %v1049 = vadd.f32 %v824, %v1048
        %v1050 = vpop.f32.mrb[0].mxu0
        %1051 = vmatprep.mubr.f32.mxu0 0.0
        %1052 = vmatmul.mubr.f32.gmra.mrb[0].mxu0 %v564
        %v1053 = vpop.f32.mrb[0].mxu0
        %v1054 = vadd.f32 %v829, %v1053
        %v1055 = vpop.f32.mrb[0].mxu0
        %1056 = vmatprep.mubr.f32.mxu0 0.0
        %1057 = vmatmul.mubr.f32.gmra.mrb[0].mxu0 %v566
        %v1058 = vpop.f32.mrb[0].mxu0
        %v1059 = vadd.f32 %v834, %v1058
        %v1060 = vpop.f32.mrb[0].mxu0
        %1061 = vmatprep.mubr.f32.mxu0 0.0
        %1062 = vmatmul.mubr.f32.gmra.mrb[0].mxu0 %v569
        %v1063 = vpop.f32.mrb[0].mxu0
        %v1064 = vadd.f32 %v839, %v1063
        %v1065 = vpop.f32.mrb[0].mxu0
        %1066 = vmatprep.mubr.f32.mxu0 0.0
        %1067 = vmatmul.mubr.f32.gmra.mrb[0].mxu0 %v571
        %v1068 = vpop.f32.mrb[0].mxu0
        %v1069 = vadd.f32 %v844, %v1068
        %v1070 = vpop.f32.mrb[0].mxu0
        %1071 = vmatprep.mubr.f32.mxu0 0.0
        %1072 = vmatmul.mubr.f32.gmra.mrb[0].mxu0 %v574
        %v1073 = vpop.f32.mrb[0].mxu0
        %v1074 = vadd.f32 %v849, %v1073
        %v1075 = vpop.f32.mrb[0].mxu0
        %1076 = vmatprep.mubr.f32.mxu0 0.0
        %1077 = vmatmul.mubr.f32.gmra.mrb[0].mxu0 %v576
        %v1078 = vpop.f32.mrb[0].mxu0
        %v1079 = vadd.f32 %v854, %v1078
        %v1080 = vpop.f32.mrb[0].mxu0
        %1081 = vmatprep.mubr.f32.mxu0 0.0
        %1082 = vmatmul.mubr.f32.gmra.mrb[0].mxu0 %v579
        %v1083 = vpop.f32.mrb[0].mxu0
        %v1084 = vadd.f32 %v859, %v1083
        %v1085 = vpop.f32.mrb[0].mxu0
        %1086 = vmatprep.mubr.f32.mxu0 0.0
        %1087 = vmatmul.mubr.f32.gmra.mrb[0].mxu0 %v581
        %v1088 = vpop.f32.mrb[0].mxu0
        %v1089 = vadd.f32 %v864, %v1088
        %v1090 = vpop.f32.mrb[0].mxu0
        %1091 = vmatprep.mubr.f32.mxu0 0.0
        %1092 = vmatmul.mubr.f32.gmra.mrb[0].mxu0 %v584
        %v1093 = vpop.f32.mrb[0].mxu0
        %v1094 = vadd.f32 %v869, %v1093
        %v1095 = vpop.f32.mrb[0].mxu0
        %1096 = vmatprep.mubr.f32.mxu0 0.0
        %1097 = vmatmul.mubr.f32.gmra.mrb[0].mxu0 %v586
        %v1098 = vpop.f32.mrb[0].mxu0
        %v1099 = vadd.f32 %v874, %v1098
        %v1100 = vpop.f32.mrb[0].mxu0
        %1101 = vmatprep.mubr.f32.mxu0 0.0
        %1102 = vmatmul.mubr.f32.gmra.mrb[0].mxu0 %v589
        %v1103 = vpop.f32.mrb[0].mxu0
        %v1104 = vadd.f32 %v879, %v1103
        %v1105 = vpop.f32.mrb[0].mxu0
        %1106 = vmatprep.mubr.f32.mxu0 0.0
        %1107 = vmatmul.mubr.f32.gmra.mrb[0].mxu0 %v591
        %v1108 = vpop.f32.mrb[0].mxu0
        %v1109 = vadd.f32 %v884, %v1108
        %v1110 = vpop.f32.mrb[0].mxu0
        %1111 = vmatprep.mubr.f32.mxu0 0.0
        %1112 = vmatmul.mubr.f32.gmra.mrb[0].mxu0 %v594
        %v1113 = vpop.f32.mrb[0].mxu0
        %v1114 = vadd.f32 %v889, %v1113
        %v1115 = vpop.f32.mrb[0].mxu0
        %1116 = vmatprep.mubr.f32.mxu0 0.0
        %1117 = vmatmul.mubr.f32.gmra.mrb[0].mxu0 %v596
        %v1118 = vpop.f32.mrb[0].mxu0
        %v1119 = vadd.f32 %v894, %v1118
        %v1120 = vpop.f32.mrb[0].mxu0
        %1121 = vmatprep.mubr.f32.mxu0 0.0
        %1122 = vmatmul.mubr.f32.gmra.mrb[0].mxu0 %v599
        %v1123 = vpop.f32.mrb[0].mxu0
        %v1124 = vadd.f32 %v899, %v1123
        %v1125 = vpop.f32.mrb[0].mxu0
        %1126 = vmatprep.mubr.f32.mxu0 0.0
        %1127 = vmatmul.mubr.f32.gmra.mrb[0].mxu0 %v601
        %v1128 = vpop.f32.mrb[0].mxu0
        %v1129 = vadd.f32 %v904, %v1128
        %v1130 = vpop.f32.mrb[0].mxu0
        %1131 = vmatprep.mubr.f32.mxu0 0.0
        %1132 = vmatmul.mubr.f32.gmra.mrb[0].mxu0 %v604
        %v1133 = vpop.f32.mrb[0].mxu0
        %v1134 = vadd.f32 %v909, %v1133
        %v1135 = vpop.f32.mrb[0].mxu0
        %1136 = vmatprep.mubr.f32.mxu0 0.0
        %1137 = vmatmul.mubr.f32.gmra.mrb[0].mxu0 %v606
        %v1138 = vpop.f32.mrb[0].mxu0
        %v1139 = vadd.f32 %v914, %v1138
        %v1140 = vpop.f32.mrb[0].mxu0
        %1141 = vdwg.mxu0
        %1142 = vmatprep.subr.mxu0 0.0
        %1143 = vmatpush1.msra.mxu0 %v414
        %1144 = vmatprep.subr.mxu0 0.0
        %1145 = vmatpush1.msra.mxu0 %v415
        %1146 = vmatprep.subr.mxu0 0.0
        %1147 = vmatpush1.msra.mxu0 %v416
        %1148 = vmatprep.subr.mxu0 0.0
        %1149 = vmatpush1.msra.mxu0 %v417
        %1150 = vmatprep.subr.mxu0 0.0
        %1151 = vmatpush1.msra.mxu0 %v418
        %1152 = vmatprep.subr.mxu0 0.0
        %1153 = vmatpush1.msra.mxu0 %v419
        %1154 = vmatprep.subr.mxu0 0.0
        %1155 = vmatpush1.msra.mxu0 %v420
        %1156 = vmatprep.subr.mxu0 0.0
        %1157 = vmatpush1.msra.mxu0 %v421
        %1158 = vmatprep.subr.mxu0 0.0
        %1159 = vmatpush1.msra.mxu0 %v422
        %1160 = vmatprep.subr.mxu0 0.0
        %1161 = vmatpush1.msra.mxu0 %v423
        %1162 = vmatprep.subr.mxu0 0.0
        %1163 = vmatpush1.msra.mxu0 %v424
        %1164 = vmatprep.subr.mxu0 0.0
        %1165 = vmatpush1.msra.mxu0 %v425
        %1166 = vmatprep.subr.mxu0 0.0
        %1167 = vmatpush1.msra.mxu0 %v426
        %1168 = vmatprep.subr.mxu0 0.0
        %1169 = vmatpush1.msra.mxu0 %v427
        %1170 = vmatprep.subr.mxu0 0.0
        %1171 = vmatpush1.msra.mxu0 %v428
        %1172 = vmatprep.subr.mxu0 0.0
        %1173 = vmatpush1.msra.mxu0 %v429
        %1174 = vmatprep.subr.mxu0 0.0
        %1175 = vmatpush1.msra.mxu0 %v430
        %1176 = vmatprep.subr.mxu0 0.0
        %1177 = vmatpush1.msra.mxu0 %v431
        %1178 = vmatprep.subr.mxu0 0.0
        %1179 = vmatpush1.msra.mxu0 %v432
        %1180 = vmatprep.subr.mxu0 0.0
        %1181 = vmatpush1.msra.mxu0 %v433
        %1182 = vmatprep.subr.mxu0 0.0
        %1183 = vmatpush1.msra.mxu0 %v434
        %1184 = vmatprep.subr.mxu0 0.0
        %1185 = vmatpush1.msra.mxu0 %v435
        %1186 = vmatprep.subr.mxu0 0.0
        %1187 = vmatpush1.msra.mxu0 %v436
        %1188 = vmatprep.subr.mxu0 0.0
        %1189 = vmatpush1.msra.mxu0 %v437
        %1190 = vmatprep.subr.mxu0 0.0
        %1191 = vmatpush1.msra.mxu0 %v438
        %1192 = vmatprep.subr.mxu0 0.0
        %1193 = vmatpush1.msra.mxu0 %v439
        %1194 = vmatprep.subr.mxu0 0.0
        %1195 = vmatpush1.msra.mxu0 %v440
        %1196 = vmatprep.subr.mxu0 0.0
        %1197 = vmatpush1.msra.mxu0 %v441
        %1198 = vmatprep.subr.mxu0 0.0
        %1199 = vmatpush1.msra.mxu0 %v442
        %1200 = vmatprep.subr.mxu0 0.0
        %1201 = vmatpush1.msra.mxu0 %v443
        %1202 = vmatprep.subr.mxu0 0.0
        %1203 = vmatpush1.msra.mxu0 %v444
        %1204 = vmatprep.subr.mxu0 0.0
        %1205 = vmatpush1.msra.mxu0 %v445
        %1206 = vmatprep.mubr.f32.mxu0 %v363
        %1207 = vmatmul.mubr.f32.gmra.mrb[0].mxu0 %v360
        %v1208 = vpop.f32.mrb[0].mxu0
        %v1209 = vadd.f32 %v984, %v1208
        %v1210 = vpop.f32.mrb[0].mxu0
        %1211 = vmatprep.mubr.f32.mxu0 %v364
        %1212 = vmatmul.mubr.f32.gmra.mrb[0].mxu0 %v361
        %v1213 = vpop.f32.mrb[0].mxu0
        %v1214 = vadd.f32 %v989, %v1213
        %v1215 = vpop.f32.mrb[0].mxu0
        %1216 = vmatprep.mubr.f32.mxu0 %v366
        %1217 = vmatmul.mubr.f32.gmra.mrb[0].mxu0 %v363
        %v1218 = vpop.f32.mrb[0].mxu0
        %v1219 = vadd.f32 %v994, %v1218
        %v1220 = vpop.f32.mrb[0].mxu0
        %1221 = vmatprep.mubr.f32.mxu0 %v367
        %1222 = vmatmul.mubr.f32.gmra.mrb[0].mxu0 %v364
        %v1223 = vpop.f32.mrb[0].mxu0
        %v1224 = vadd.f32 %v999, %v1223
        %v1225 = vpop.f32.mrb[0].mxu0
        %1226 = vmatprep.mubr.f32.mxu0 %v369
        %1227 = vmatmul.mubr.f32.gmra.mrb[0].mxu0 %v366
        %v1228 = vpop.f32.mrb[0].mxu0
        %v1229 = vadd.f32 %v1004, %v1228
        %v1230 = vpop.f32.mrb[0].mxu0
        %1231 = vmatprep.mubr.f32.mxu0 %v370
        %1232 = vmatmul.mubr.f32.gmra.mrb[0].mxu0 %v367
        %v1233 = vpop.f32.mrb[0].mxu0
        %v1234 = vadd.f32 %v1009, %v1233
        %v1235 = vpop.f32.mrb[0].mxu0
        %1236 = vmatprep.mubr.f32.mxu0 %v372
        %1237 = vmatmul.mubr.f32.gmra.mrb[0].mxu0 %v369
        %v1238 = vpop.f32.mrb[0].mxu0
        %v1239 = vadd.f32 %v1014, %v1238
        %v1240 = vpop.f32.mrb[0].mxu0
        %1241 = vmatprep.mubr.f32.mxu0 %v373
        %1242 = vmatmul.mubr.f32.gmra.mrb[0].mxu0 %v370
        %v1243 = vpop.f32.mrb[0].mxu0
        %v1244 = vadd.f32 %v1019, %v1243
        %v1245 = vpop.f32.mrb[0].mxu0
        %1246 = vmatprep.mubr.f32.mxu0 %v375
        %1247 = vmatmul.mubr.f32.gmra.mrb[0].mxu0 %v372
        %v1248 = vpop.f32.mrb[0].mxu0
        %v1249 = vadd.f32 %v1024, %v1248
        %v1250 = vpop.f32.mrb[0].mxu0
        %1251 = vmatprep.mubr.f32.mxu0 %v376
        %1252 = vmatmul.mubr.f32.gmra.mrb[0].mxu0 %v373
        %v1253 = vpop.f32.mrb[0].mxu0
        %v1254 = vadd.f32 %v1029, %v1253
        %v1255 = vpop.f32.mrb[0].mxu0
        %1256 = vmatprep.mubr.f32.mxu0 %v378
        %1257 = vmatmul.mubr.f32.gmra.mrb[0].mxu0 %v375
        %v1258 = vpop.f32.mrb[0].mxu0
        %v1259 = vadd.f32 %v1034, %v1258
        %v1260 = vpop.f32.mrb[0].mxu0
        %1261 = vmatprep.mubr.f32.mxu0 %v379
        %1262 = vmatmul.mubr.f32.gmra.mrb[0].mxu0 %v376
        %v1263 = vpop.f32.mrb[0].mxu0
        %v1264 = vadd.f32 %v1039, %v1263
        %v1265 = vpop.f32.mrb[0].mxu0
        %1266 = vmatprep.mubr.f32.mxu0 %v381
        %1267 = vmatmul.mubr.f32.gmra.mrb[0].mxu0 %v378
        %v1268 = vpop.f32.mrb[0].mxu0
        %v1269 = vadd.f32 %v1044, %v1268
        %v1270 = vpop.f32.mrb[0].mxu0
        %1271 = vmatprep.mubr.f32.mxu0 %v382
        %1272 = vmatmul.mubr.f32.gmra.mrb[0].mxu0 %v379
        %v1273 = vpop.f32.mrb[0].mxu0
        %v1274 = vadd.f32 %v1049, %v1273
        %v1275 = vpop.f32.mrb[0].mxu0
        %1276 = vmatprep.mubr.f32.mxu0 %v384
        %1277 = vmatmul.mubr.f32.gmra.mrb[0].mxu0 %v381
        %v1278 = vpop.f32.mrb[0].mxu0
        %v1279 = vadd.f32 %v1054, %v1278
        %v1280 = vpop.f32.mrb[0].mxu0
        %1281 = vmatprep.mubr.f32.mxu0 %v385
        %1282 = vmatmul.mubr.f32.gmra.mrb[0].mxu0 %v382
        %v1283 = vpop.f32.mrb[0].mxu0
        %v1284 = vadd.f32 %v1059, %v1283
        %v1285 = vpop.f32.mrb[0].mxu0
        %1286 = vmatprep.mubr.f32.mxu0 %v387
        %1287 = vmatmul.mubr.f32.gmra.mrb[0].mxu0 %v384
        %v1288 = vpop.f32.mrb[0].mxu0
        %v1289 = vadd.f32 %v1064, %v1288
        %v1290 = vpop.f32.mrb[0].mxu0
        %1291 = vmatprep.mubr.f32.mxu0 %v388
        %1292 = vmatmul.mubr.f32.gmra.mrb[0].mxu0 %v385
        %v1293 = vpop.f32.mrb[0].mxu0
        %v1294 = vadd.f32 %v1069, %v1293
        %v1295 = vpop.f32.mrb[0].mxu0
        %1296 = vmatprep.mubr.f32.mxu0 %v390
        %1297 = vmatmul.mubr.f32.gmra.mrb[0].mxu0 %v387
        %v1298 = vpop.f32.mrb[0].mxu0
        %v1299 = vadd.f32 %v1074, %v1298
        %v1300 = vpop.f32.mrb[0].mxu0
        %1301 = vmatprep.mubr.f32.mxu0 %v391
        %1302 = vmatmul.mubr.f32.gmra.mrb[0].mxu0 %v388
        %v1303 = vpop.f32.mrb[0].mxu0
        %v1304 = vadd.f32 %v1079, %v1303
        %v1305 = vpop.f32.mrb[0].mxu0
        %1306 = vmatprep.mubr.f32.mxu0 %v393
        %1307 = vmatmul.mubr.f32.gmra.mrb[0].mxu0 %v390
        %v1308 = vpop.f32.mrb[0].mxu0
        %v1309 = vadd.f32 %v1084, %v1308
        %v1310 = vpop.f32.mrb[0].mxu0
        %1311 = vmatprep.mubr.f32.mxu0 %v394
        %1312 = vmatmul.mubr.f32.gmra.mrb[0].mxu0 %v391
        %v1313 = vpop.f32.mrb[0].mxu0
        %v1314 = vadd.f32 %v1089, %v1313
        %v1315 = vpop.f32.mrb[0].mxu0
        %1316 = vmatprep.mubr.f32.mxu0 %v396
        %1317 = vmatmul.mubr.f32.gmra.mrb[0].mxu0 %v393
        %v1318 = vpop.f32.mrb[0].mxu0
        %v1319 = vadd.f32 %v1094, %v1318
        %v1320 = vpop.f32.mrb[0].mxu0
        %1321 = vmatprep.mubr.f32.mxu0 %v397
        %1322 = vmatmul.mubr.f32.gmra.mrb[0].mxu0 %v394
        %v1323 = vpop.f32.mrb[0].mxu0
        %v1324 = vadd.f32 %v1099, %v1323
        %v1325 = vpop.f32.mrb[0].mxu0
        %1326 = vmatprep.mubr.f32.mxu0 %v399
        %1327 = vmatmul.mubr.f32.gmra.mrb[0].mxu0 %v396
        %v1328 = vpop.f32.mrb[0].mxu0
        %v1329 = vadd.f32 %v1104, %v1328
        %v1330 = vpop.f32.mrb[0].mxu0
        %1331 = vmatprep.mubr.f32.mxu0 %v400
        %1332 = vmatmul.mubr.f32.gmra.mrb[0].mxu0 %v397
        %v1333 = vpop.f32.mrb[0].mxu0
        %v1334 = vadd.f32 %v1109, %v1333
        %v1335 = vpop.f32.mrb[0].mxu0
        %1336 = vmatprep.mubr.f32.mxu0 %v402
        %1337 = vmatmul.mubr.f32.gmra.mrb[0].mxu0 %v399
        %v1338 = vpop.f32.mrb[0].mxu0
        %v1339 = vadd.f32 %v1114, %v1338
        %v1340 = vpop.f32.mrb[0].mxu0
        %1341 = vmatprep.mubr.f32.mxu0 %v403
        %1342 = vmatmul.mubr.f32.gmra.mrb[0].mxu0 %v400
        %v1343 = vpop.f32.mrb[0].mxu0
        %v1344 = vadd.f32 %v1119, %v1343
        %v1345 = vpop.f32.mrb[0].mxu0
        %1346 = vmatprep.mubr.f32.mxu0 %v405
        %1347 = vmatmul.mubr.f32.gmra.mrb[0].mxu0 %v402
        %v1348 = vpop.f32.mrb[0].mxu0
        %v1349 = vadd.f32 %v1124, %v1348
        %v1350 = vpop.f32.mrb[0].mxu0
        %1351 = vmatprep.mubr.f32.mxu0 %v406
        %1352 = vmatmul.mubr.f32.gmra.mrb[0].mxu0 %v403
        %v1353 = vpop.f32.mrb[0].mxu0
        %v1354 = vadd.f32 %v1129, %v1353
        %v1355 = vpop.f32.mrb[0].mxu0
        %1356 = vmatprep.mubr.f32.mxu0 %v408
        %1357 = vmatmul.mubr.f32.gmra.mrb[0].mxu0 %v405
        %v1358 = vpop.f32.mrb[0].mxu0
        %v1359 = vadd.f32 %v1134, %v1358
        %v1360 = vpop.f32.mrb[0].mxu0
        %1361 = vmatprep.mubr.f32.mxu0 %v409
        %1362 = vmatmul.mubr.f32.gmra.mrb[0].mxu0 %v406
        %v1363 = vpop.f32.mrb[0].mxu0
        %v1364 = vadd.f32 %v1139, %v1363
        %v1365 = vpop.f32.mrb[0].mxu0
        %1366 = vdwg.mxu0
        %1367 = vmatprep.subr.mxu0 0.0
        %1368 = vmatpush1.msra.mxu0 %v446
        %1369 = vmatprep.subr.mxu0 0.0
        %1370 = vmatpush1.msra.mxu0 %v447
        %1371 = vmatprep.subr.mxu0 0.0
        %1372 = vmatpush1.msra.mxu0 %v448
        %1373 = vmatprep.subr.mxu0 0.0
        %1374 = vmatpush1.msra.mxu0 %v449
        %1375 = vmatprep.subr.mxu0 0.0
        %1376 = vmatpush1.msra.mxu0 %v450
        %1377 = vmatprep.subr.mxu0 0.0
        %1378 = vmatpush1.msra.mxu0 %v451
        %1379 = vmatprep.subr.mxu0 0.0
        %1380 = vmatpush1.msra.mxu0 %v452
        %1381 = vmatprep.subr.mxu0 0.0
        %1382 = vmatpush1.msra.mxu0 %v453
        %1383 = vmatprep.subr.mxu0 0.0
        %1384 = vmatpush1.msra.mxu0 %v454
        %1385 = vmatprep.subr.mxu0 0.0
        %1386 = vmatpush1.msra.mxu0 %v455
        %1387 = vmatprep.subr.mxu0 0.0
        %1388 = vmatpush1.msra.mxu0 %v456
        %1389 = vmatprep.subr.mxu0 0.0
        %1390 = vmatpush1.msra.mxu0 %v457
        %1391 = vmatprep.subr.mxu0 0.0
        %1392 = vmatpush1.msra.mxu0 %v458
        %1393 = vmatprep.subr.mxu0 0.0
        %1394 = vmatpush1.msra.mxu0 %v459
        %1395 = vmatprep.subr.mxu0 0.0
        %1396 = vmatpush1.msra.mxu0 %v460
        %1397 = vmatprep.subr.mxu0 0.0
        %1398 = vmatpush1.msra.mxu0 %v461
        %1399 = vmatprep.subr.mxu0 0.0
        %1400 = vmatpush1.msra.mxu0 0.0
        %1401 = vmatprep.subr.mxu0 0.0
        %1402 = vmatpush1.msra.mxu0 0.0
        %1403 = vmatprep.subr.mxu0 0.0
        %1404 = vmatpush1.msra.mxu0 0.0
        %1405 = vmatprep.subr.mxu0 0.0
        %1406 = vmatpush1.msra.mxu0 0.0
        %1407 = vmatprep.subr.mxu0 0.0
        %1408 = vmatpush1.msra.mxu0 0.0
        %1409 = vmatprep.subr.mxu0 0.0
        %1410 = vmatpush1.msra.mxu0 0.0
        %1411 = vmatprep.subr.mxu0 0.0
        %1412 = vmatpush1.msra.mxu0 0.0
        %1413 = vmatprep.subr.mxu0 0.0
        %1414 = vmatpush1.msra.mxu0 0.0
        %1415 = vmatprep.subr.mxu0 0.0
        %1416 = vmatpush1.msra.mxu0 0.0
        %1417 = vmatprep.subr.mxu0 0.0
        %1418 = vmatpush1.msra.mxu0 0.0
        %1419 = vmatprep.subr.mxu0 0.0
        %1420 = vmatpush1.msra.mxu0 0.0
        %1421 = vmatprep.subr.mxu0 0.0
        %1422 = vmatpush1.msra.mxu0 0.0
        %1423 = vmatprep.subr.mxu0 0.0
        %1424 = vmatpush1.msra.mxu0 0.0
        %1425 = vmatprep.subr.mxu0 0.0
        %1426 = vmatpush1.msra.mxu0 0.0
        %1427 = vmatprep.subr.mxu0 0.0
        %1428 = vmatpush1.msra.mxu0 0.0
        %1429 = vmatprep.subr.mxu0 0.0
        %1430 = vmatpush1.msra.mxu0 0.0
        %1431 = vmatprep.mubr.f32.mxu0 0.0
        %1432 = vmatmul.mubr.f32.gmra.mrb[0].mxu0 %v366
        %v1433 = vpop.f32.mrb[0].mxu0
        %v1434 = vadd.f32 %v1209, %v1433
        %v1435 = vpop.f32.mrb[0].mxu0
        %1436 = vmatprep.mubr.f32.mxu0 0.0
        %1437 = vmatmul.mubr.f32.gmra.mrb[0].mxu0 %v367
        %v1438 = vpop.f32.mrb[0].mxu0
        %v1439 = vadd.f32 %v1214, %v1438
        %v1440 = vpop.f32.mrb[0].mxu0
        %1441 = vmatprep.mubr.f32.mxu0 0.0
        %1442 = vmatmul.mubr.f32.gmra.mrb[0].mxu0 %v369
        %v1443 = vpop.f32.mrb[0].mxu0
        %v1444 = vadd.f32 %v1219, %v1443
        %v1445 = vpop.f32.mrb[0].mxu0
        %1446 = vmatprep.mubr.f32.mxu0 0.0
        %1447 = vmatmul.mubr.f32.gmra.mrb[0].mxu0 %v370
        %v1448 = vpop.f32.mrb[0].mxu0
        %v1449 = vadd.f32 %v1224, %v1448
        %v1450 = vpop.f32.mrb[0].mxu0
        %1451 = vmatprep.mubr.f32.mxu0 0.0
        %1452 = vmatmul.mubr.f32.gmra.mrb[0].mxu0 %v372
        %v1453 = vpop.f32.mrb[0].mxu0
        %v1454 = vadd.f32 %v1229, %v1453
        %v1455 = vpop.f32.mrb[0].mxu0
        %1456 = vmatprep.mubr.f32.mxu0 0.0
        %1457 = vmatmul.mubr.f32.gmra.mrb[0].mxu0 %v373
        %v1458 = vpop.f32.mrb[0].mxu0
        %v1459 = vadd.f32 %v1234, %v1458
        %v1460 = vpop.f32.mrb[0].mxu0
        %1461 = vmatprep.mubr.f32.mxu0 0.0
        %1462 = vmatmul.mubr.f32.gmra.mrb[0].mxu0 %v375
        %v1463 = vpop.f32.mrb[0].mxu0
        %v1464 = vadd.f32 %v1239, %v1463
        %v1465 = vpop.f32.mrb[0].mxu0
        %1466 = vmatprep.mubr.f32.mxu0 0.0
        %1467 = vmatmul.mubr.f32.gmra.mrb[0].mxu0 %v376
        %v1468 = vpop.f32.mrb[0].mxu0
        %v1469 = vadd.f32 %v1244, %v1468
        %v1470 = vpop.f32.mrb[0].mxu0
        %1471 = vmatprep.mubr.f32.mxu0 0.0
        %1472 = vmatmul.mubr.f32.gmra.mrb[0].mxu0 %v378
        %v1473 = vpop.f32.mrb[0].mxu0
        %v1474 = vadd.f32 %v1249, %v1473
        %v1475 = vpop.f32.mrb[0].mxu0
        %1476 = vmatprep.mubr.f32.mxu0 0.0
        %1477 = vmatmul.mubr.f32.gmra.mrb[0].mxu0 %v379
        %v1478 = vpop.f32.mrb[0].mxu0
        %v1479 = vadd.f32 %v1254, %v1478
        %v1480 = vpop.f32.mrb[0].mxu0
        %1481 = vmatprep.mubr.f32.mxu0 0.0
        %1482 = vmatmul.mubr.f32.gmra.mrb[0].mxu0 %v381
        %v1483 = vpop.f32.mrb[0].mxu0
        %v1484 = vadd.f32 %v1259, %v1483
        %v1485 = vpop.f32.mrb[0].mxu0
        %1486 = vmatprep.mubr.f32.mxu0 0.0
        %1487 = vmatmul.mubr.f32.gmra.mrb[0].mxu0 %v382
        %v1488 = vpop.f32.mrb[0].mxu0
        %v1489 = vadd.f32 %v1264, %v1488
        %v1490 = vpop.f32.mrb[0].mxu0
        %1491 = vmatprep.mubr.f32.mxu0 0.0
        %1492 = vmatmul.mubr.f32.gmra.mrb[0].mxu0 %v384
        %v1493 = vpop.f32.mrb[0].mxu0
        %v1494 = vadd.f32 %v1269, %v1493
        %v1495 = vpop.f32.mrb[0].mxu0
        %1496 = vmatprep.mubr.f32.mxu0 0.0
        %1497 = vmatmul.mubr.f32.gmra.mrb[0].mxu0 %v385
        %v1498 = vpop.f32.mrb[0].mxu0
        %v1499 = vadd.f32 %v1274, %v1498
        %v1500 = vpop.f32.mrb[0].mxu0
        %1501 = vmatprep.mubr.f32.mxu0 0.0
        %1502 = vmatmul.mubr.f32.gmra.mrb[0].mxu0 %v387
        %v1503 = vpop.f32.mrb[0].mxu0
        %v1504 = vadd.f32 %v1279, %v1503
        %v1505 = vpop.f32.mrb[0].mxu0
        %1506 = vmatprep.mubr.f32.mxu0 0.0
        %1507 = vmatmul.mubr.f32.gmra.mrb[0].mxu0 %v388
        %v1508 = vpop.f32.mrb[0].mxu0
        %v1509 = vadd.f32 %v1284, %v1508
        %v1510 = vpop.f32.mrb[0].mxu0
        %1511 = vmatprep.mubr.f32.mxu0 0.0
        %1512 = vmatmul.mubr.f32.gmra.mrb[0].mxu0 %v390
        %v1513 = vpop.f32.mrb[0].mxu0
        %v1514 = vadd.f32 %v1289, %v1513
        %v1515 = vpop.f32.mrb[0].mxu0
        %1516 = vmatprep.mubr.f32.mxu0 0.0
        %1517 = vmatmul.mubr.f32.gmra.mrb[0].mxu0 %v391
        %v1518 = vpop.f32.mrb[0].mxu0
        %v1519 = vadd.f32 %v1294, %v1518
        %v1520 = vpop.f32.mrb[0].mxu0
        %1521 = vmatprep.mubr.f32.mxu0 0.0
        %1522 = vmatmul.mubr.f32.gmra.mrb[0].mxu0 %v393
        %v1523 = vpop.f32.mrb[0].mxu0
        %v1524 = vadd.f32 %v1299, %v1523
        %v1525 = vpop.f32.mrb[0].mxu0
        %1526 = vmatprep.mubr.f32.mxu0 0.0
        %1527 = vmatmul.mubr.f32.gmra.mrb[0].mxu0 %v394
        %v1528 = vpop.f32.mrb[0].mxu0
        %v1529 = vadd.f32 %v1304, %v1528
        %v1530 = vpop.f32.mrb[0].mxu0
        %1531 = vmatprep.mubr.f32.mxu0 0.0
        %1532 = vmatmul.mubr.f32.gmra.mrb[0].mxu0 %v396
        %v1533 = vpop.f32.mrb[0].mxu0
        %v1534 = vadd.f32 %v1309, %v1533
        %v1535 = vpop.f32.mrb[0].mxu0
        %1536 = vmatprep.mubr.f32.mxu0 0.0
        %1537 = vmatmul.mubr.f32.gmra.mrb[0].mxu0 %v397
        %v1538 = vpop.f32.mrb[0].mxu0
        %v1539 = vadd.f32 %v1314, %v1538
        %v1540 = vpop.f32.mrb[0].mxu0
        %1541 = vmatprep.mubr.f32.mxu0 0.0
        %1542 = vmatmul.mubr.f32.gmra.mrb[0].mxu0 %v399
        %v1543 = vpop.f32.mrb[0].mxu0
        %v1544 = vadd.f32 %v1319, %v1543
        %v1545 = vpop.f32.mrb[0].mxu0
        %1546 = vmatprep.mubr.f32.mxu0 0.0
        %1547 = vmatmul.mubr.f32.gmra.mrb[0].mxu0 %v400
        %v1548 = vpop.f32.mrb[0].mxu0
        %v1549 = vadd.f32 %v1324, %v1548
        %v1550 = vpop.f32.mrb[0].mxu0
        %1551 = vmatprep.mubr.f32.mxu0 0.0
        %1552 = vmatmul.mubr.f32.gmra.mrb[0].mxu0 %v402
        %v1553 = vpop.f32.mrb[0].mxu0
        %v1554 = vadd.f32 %v1329, %v1553
        %v1555 = vpop.f32.mrb[0].mxu0
        %1556 = vmatprep.mubr.f32.mxu0 0.0
        %1557 = vmatmul.mubr.f32.gmra.mrb[0].mxu0 %v403
        %v1558 = vpop.f32.mrb[0].mxu0
        %v1559 = vadd.f32 %v1334, %v1558
        %v1560 = vpop.f32.mrb[0].mxu0
        %1561 = vmatprep.mubr.f32.mxu0 0.0
        %1562 = vmatmul.mubr.f32.gmra.mrb[0].mxu0 %v405
        %v1563 = vpop.f32.mrb[0].mxu0
        %v1564 = vadd.f32 %v1339, %v1563
        %v1565 = vpop.f32.mrb[0].mxu0
        %1566 = vmatprep.mubr.f32.mxu0 0.0
        %1567 = vmatmul.mubr.f32.gmra.mrb[0].mxu0 %v406
        %v1568 = vpop.f32.mrb[0].mxu0
        %v1569 = vadd.f32 %v1344, %v1568
        %v1570 = vpop.f32.mrb[0].mxu0
        %1571 = vmatprep.mubr.f32.mxu0 0.0
        %1572 = vmatmul.mubr.f32.gmra.mrb[0].mxu0 %v408
        %v1573 = vpop.f32.mrb[0].mxu0
        %v1574 = vadd.f32 %v1349, %v1573
        %v1575 = vpop.f32.mrb[0].mxu0
        %1576 = vmatprep.mubr.f32.mxu0 0.0
        %1577 = vmatmul.mubr.f32.gmra.mrb[0].mxu0 %v409
        %v1578 = vpop.f32.mrb[0].mxu0
        %v1579 = vadd.f32 %v1354, %v1578
        %v1580 = vpop.f32.mrb[0].mxu0
        %1581 = vmatprep.mubr.f32.mxu0 0.0
        %1582 = vmatmul.mubr.f32.gmra.mrb[0].mxu0 %v411
        %v1583 = vpop.f32.mrb[0].mxu0
        %v1584 = vadd.f32 %v1359, %v1583
        %v1585 = vpop.f32.mrb[0].mxu0
        %1586 = vmatprep.mubr.f32.mxu0 0.0
        %1587 = vmatmul.mubr.f32.gmra.mrb[0].mxu0 %v412
        %v1588 = vpop.f32.mrb[0].mxu0
        %v1589 = vadd.f32 %v1364, %v1588
        %v1590 = vpop.f32.mrb[0].mxu0
        %1591 = vdwg.mxu0
        %vm1592 = vcmask 1045504
        %v1593 = vrot.slane %v360, 2
        %v1594 = vrot.slane %v361, 2
        %v1595 = vsel %vm1592, %v1593, %v1594
        %v1596 = vrot.slane %v363, 2
        %v1597 = vrot.slane %v364, 2
        %v1598 = vsel %vm1592, %v1596, %v1597
        %v1599 = vrot.slane %v366, 2
        %v1600 = vrot.slane %v367, 2
        %v1601 = vsel %vm1592, %v1599, %v1600
        %v1602 = vrot.slane %v362, 2
        %v1603 = vsel %vm1592, %v1594, %v1602
        %v1604 = vrot.slane %v365, 2
        %v1605 = vsel %vm1592, %v1597, %v1604
        %v1606 = vrot.slane %v368, 2
        %v1607 = vsel %vm1592, %v1600, %v1606
        %v1608 = vrot.slane %v369, 2
        %v1609 = vrot.slane %v370, 2
        %v1610 = vsel %vm1592, %v1608, %v1609
        %v1611 = vrot.slane %v371, 2
        %v1612 = vsel %vm1592, %v1609, %v1611
        %v1613 = vrot.slane %v372, 2
        %v1614 = vrot.slane %v373, 2
        %v1615 = vsel %vm1592, %v1613, %v1614
        %v1616 = vrot.slane %v374, 2
        %v1617 = vsel %vm1592, %v1614, %v1616
        %v1618 = vrot.slane %v375, 2
        %v1619 = vrot.slane %v376, 2
        %v1620 = vsel %vm1592, %v1618, %v1619
        %v1621 = vrot.slane %v377, 2
        %v1622 = vsel %vm1592, %v1619, %v1621
        %v1623 = vrot.slane %v378, 2
        %v1624 = vrot.slane %v379, 2
        %v1625 = vsel %vm1592, %v1623, %v1624
        %v1626 = vrot.slane %v380, 2
        %v1627 = vsel %vm1592, %v1624, %v1626
        %v1628 = vrot.slane %v381, 2
        %v1629 = vrot.slane %v382, 2
        %v1630 = vsel %vm1592, %v1628, %v1629
        %v1631 = vrot.slane %v383, 2
        %v1632 = vsel %vm1592, %v1629, %v1631
        %v1633 = vrot.slane %v384, 2
        %v1634 = vrot.slane %v385, 2
        %v1635 = vsel %vm1592, %v1633, %v1634
        %v1636 = vrot.slane %v386, 2
        %v1637 = vsel %vm1592, %v1634, %v1636
        %v1638 = vrot.slane %v387, 2
        %v1639 = vrot.slane %v388, 2
        %v1640 = vsel %vm1592, %v1638, %v1639
        %v1641 = vrot.slane %v389, 2
        %v1642 = vsel %vm1592, %v1639, %v1641
        %v1643 = vrot.slane %v390, 2
        %v1644 = vrot.slane %v391, 2
        %v1645 = vsel %vm1592, %v1643, %v1644
        %v1646 = vrot.slane %v392, 2
        %v1647 = vsel %vm1592, %v1644, %v1646
        %v1648 = vrot.slane %v393, 2
        %v1649 = vrot.slane %v394, 2
        %v1650 = vsel %vm1592, %v1648, %v1649
        %v1651 = vrot.slane %v395, 2
        %v1652 = vsel %vm1592, %v1649, %v1651
        %v1653 = vrot.slane %v396, 2
        %v1654 = vrot.slane %v397, 2
        %v1655 = vsel %vm1592, %v1653, %v1654
        %v1656 = vrot.slane %v398, 2
        %v1657 = vsel %vm1592, %v1654, %v1656
        %v1658 = vrot.slane %v399, 2
        %v1659 = vrot.slane %v400, 2
        %v1660 = vsel %vm1592, %v1658, %v1659
        %v1661 = vrot.slane %v401, 2
        %v1662 = vsel %vm1592, %v1659, %v1661
        %v1663 = vrot.slane %v402, 2
        %v1664 = vrot.slane %v403, 2
        %v1665 = vsel %vm1592, %v1663, %v1664
        %v1666 = vrot.slane %v404, 2
        %v1667 = vsel %vm1592, %v1664, %v1666
        %v1668 = vrot.slane %v405, 2
        %v1669 = vrot.slane %v406, 2
        %v1670 = vsel %vm1592, %v1668, %v1669
        %v1671 = vrot.slane %v407, 2
        %v1672 = vsel %vm1592, %v1669, %v1671
        %v1673 = vrot.slane %v408, 2
        %v1674 = vrot.slane %v409, 2
        %v1675 = vsel %vm1592, %v1673, %v1674
        %v1676 = vrot.slane %v410, 2
        %v1677 = vsel %vm1592, %v1674, %v1676
        %v1678 = vrot.slane %v411, 2
        %v1679 = vrot.slane %v412, 2
        %v1680 = vsel %vm1592, %v1678, %v1679
        %v1681 = vrot.slane %v413, 2
        %v1682 = vsel %vm1592, %v1679, %v1681
        %s1719 = scalar_lea.vmem [#allocation7], 768
        %v1720 = vld [vmem:[%s1719] sm:$0xff]
        %v1721 = vld [vmem:[%s1719 + $0x8] sm:$0xff]
        %v1722 = vld [vmem:[%s1719 + $0x10] sm:$0xff]
        %v1723 = vld [vmem:[%s1719 + $0x18] sm:$0xff]
        %v1724 = vld [vmem:[%s1719 + $0x20] sm:$0xff]
        %v1725 = vld [vmem:[%s1719 + $0x28] sm:$0xff]
        %v1726 = vld [vmem:[%s1719 + $0x30] sm:$0xff]
        %v1727 = vld [vmem:[%s1719 + $0x38] sm:$0xff]
        %v1728 = vld [vmem:[%s1719 + $0x40] sm:$0xff]
        %v1729 = vld [vmem:[%s1719 + $0x48] sm:$0xff]
        %v1730 = vld [vmem:[%s1719 + $0x50] sm:$0xff]
        %v1731 = vld [vmem:[%s1719 + $0x58] sm:$0xff]
        %v1732 = vld [vmem:[%s1719 + $0x60] sm:$0xff]
        %v1733 = vld [vmem:[%s1719 + $0x68] sm:$0xff]
        %v1734 = vld [vmem:[%s1719 + $0x70] sm:$0xff]
        %v1735 = vld [vmem:[%s1719 + $0x78] sm:$0xff]
        %v1736 = vld [vmem:[%s1719 + $0x80] sm:$0xff]
        %v1737 = vld [vmem:[%s1719 + $0x88] sm:$0xff]
        %v1738 = vld [vmem:[%s1719 + $0x90] sm:$0xff]
        %v1739 = vld [vmem:[%s1719 + $0x98] sm:$0xff]
        %v1740 = vld [vmem:[%s1719 + $0xa0] sm:$0xff]
        %v1741 = vld [vmem:[%s1719 + $0xa8] sm:$0xff]
        %v1742 = vld [vmem:[%s1719 + $0xb0] sm:$0xff]
        %v1743 = vld [vmem:[%s1719 + $0xb8] sm:$0xff]
        %v1744 = vld [vmem:[%s1719 + $0xc0] sm:$0xff]
        %v1745 = vld [vmem:[%s1719 + $0xc8] sm:$0xff]
        %v1746 = vld [vmem:[%s1719 + $0xd0] sm:$0xff]
        %v1747 = vld [vmem:[%s1719 + $0xd8] sm:$0xff]
        %v1748 = vld [vmem:[%s1719 + $0xe0] sm:$0xff]
        %v1749 = vld [vmem:[%s1719 + $0xe8] sm:$0xff]
        %v1750 = vld [vmem:[%s1719 + $0xf0] sm:$0xff]
        %v1751 = vld [vmem:[%s1719 + $0xf8] sm:$0xff]
        %v1752 = vld [vmem:[%s1719 + $0x100] sm:$0xff]
        %v1753 = vld [vmem:[%s1719 + $0x108] sm:$0xff]
        %v1754 = vld [vmem:[%s1719 + $0x110] sm:$0xff]
        %v1755 = vld [vmem:[%s1719 + $0x118] sm:$0xff]
        %v1756 = vld [vmem:[%s1719 + $0x120] sm:$0xff]
        %v1757 = vld [vmem:[%s1719 + $0x128] sm:$0xff]
        %v1758 = vld [vmem:[%s1719 + $0x130] sm:$0xff]
        %v1759 = vld [vmem:[%s1719 + $0x138] sm:$0xff]
        %v1760 = vld [vmem:[%s1719 + $0x140] sm:$0xff]
        %v1761 = vld [vmem:[%s1719 + $0x148] sm:$0xff]
        %v1762 = vld [vmem:[%s1719 + $0x150] sm:$0xff]
        %v1763 = vld [vmem:[%s1719 + $0x158] sm:$0xff]
        %v1764 = vld [vmem:[%s1719 + $0x160] sm:$0xff]
        %v1765 = vld [vmem:[%s1719 + $0x168] sm:$0xff]
        %v1766 = vld [vmem:[%s1719 + $0x170] sm:$0xff]
        %v1767 = vld [vmem:[%s1719 + $0x178] sm:$0xff]
        %1768 = vmatprep.subr.mxu0 0.0
        %1769 = vmatpush1.msra.mxu0 %v1720
        %1770 = vmatprep.subr.mxu0 0.0
        %1771 = vmatpush1.msra.mxu0 %v1721
        %1772 = vmatprep.subr.mxu0 0.0
        %1773 = vmatpush1.msra.mxu0 %v1722
        %1774 = vmatprep.subr.mxu0 0.0
        %1775 = vmatpush1.msra.mxu0 %v1723
        %1776 = vmatprep.subr.mxu0 0.0
        %1777 = vmatpush1.msra.mxu0 %v1724
        %1778 = vmatprep.subr.mxu0 0.0
        %1779 = vmatpush1.msra.mxu0 %v1725
        %1780 = vmatprep.subr.mxu0 0.0
        %1781 = vmatpush1.msra.mxu0 %v1726
        %1782 = vmatprep.subr.mxu0 0.0
        %1783 = vmatpush1.msra.mxu0 %v1727
        %1784 = vmatprep.subr.mxu0 0.0
        %1785 = vmatpush1.msra.mxu0 %v1728
        %1786 = vmatprep.subr.mxu0 0.0
        %1787 = vmatpush1.msra.mxu0 %v1729
        %1788 = vmatprep.subr.mxu0 0.0
        %1789 = vmatpush1.msra.mxu0 %v1730
        %1790 = vmatprep.subr.mxu0 0.0
        %1791 = vmatpush1.msra.mxu0 %v1731
        %1792 = vmatprep.subr.mxu0 0.0
        %1793 = vmatpush1.msra.mxu0 %v1732
        %1794 = vmatprep.subr.mxu0 0.0
        %1795 = vmatpush1.msra.mxu0 %v1733
        %1796 = vmatprep.subr.mxu0 0.0
        %1797 = vmatpush1.msra.mxu0 %v1734
        %1798 = vmatprep.subr.mxu0 0.0
        %1799 = vmatpush1.msra.mxu0 %v1735
        %1800 = vmatprep.subr.mxu0 0.0
        %1801 = vmatpush1.msra.mxu0 %v1736
        %1802 = vmatprep.subr.mxu0 0.0
        %1803 = vmatpush1.msra.mxu0 %v1737
        %1804 = vmatprep.subr.mxu0 0.0
        %1805 = vmatpush1.msra.mxu0 %v1738
        %1806 = vmatprep.subr.mxu0 0.0
        %1807 = vmatpush1.msra.mxu0 %v1739
        %1808 = vmatprep.subr.mxu0 0.0
        %1809 = vmatpush1.msra.mxu0 %v1740
        %1810 = vmatprep.subr.mxu0 0.0
        %1811 = vmatpush1.msra.mxu0 %v1741
        %1812 = vmatprep.subr.mxu0 0.0
        %1813 = vmatpush1.msra.mxu0 %v1742
        %1814 = vmatprep.subr.mxu0 0.0
        %1815 = vmatpush1.msra.mxu0 %v1743
        %1816 = vmatprep.subr.mxu0 0.0
        %1817 = vmatpush1.msra.mxu0 %v1744
        %1818 = vmatprep.subr.mxu0 0.0
        %1819 = vmatpush1.msra.mxu0 %v1745
        %1820 = vmatprep.subr.mxu0 0.0
        %1821 = vmatpush1.msra.mxu0 %v1746
        %1822 = vmatprep.subr.mxu0 0.0
        %1823 = vmatpush1.msra.mxu0 %v1747
        %1824 = vmatprep.subr.mxu0 0.0
        %1825 = vmatpush1.msra.mxu0 %v1748
        %1826 = vmatprep.subr.mxu0 0.0
        %1827 = vmatpush1.msra.mxu0 %v1749
        %1828 = vmatprep.subr.mxu0 0.0
        %1829 = vmatpush1.msra.mxu0 %v1750
        %1830 = vmatprep.subr.mxu0 0.0
        %1831 = vmatpush1.msra.mxu0 %v1751
        %1832 = vmatprep.mubr.f32.mxu0 %v1598
        %1833 = vmatmul.mubr.f32.gmra.mrb[0].mxu0 %v1595
        %v1834 = vpop.f32.mrb[0].mxu0
        %v1835 = vadd.f32 0.0, %v1834
        %v1836 = vpop.f32.mrb[0].mxu0
        %1837 = vmatprep.mubr.f32.mxu0 %v1605
        %1838 = vmatmul.mubr.f32.gmra.mrb[0].mxu0 %v1603
        %v1839 = vpop.f32.mrb[0].mxu0
        %v1840 = vadd.f32 0.0, %v1839
        %v1841 = vpop.f32.mrb[0].mxu0
        %1842 = vmatprep.mubr.f32.mxu0 %v1601
        %1843 = vmatmul.mubr.f32.gmra.mrb[0].mxu0 %v1598
        %v1844 = vpop.f32.mrb[0].mxu0
        %v1845 = vadd.f32 0.0, %v1844
        %v1846 = vpop.f32.mrb[0].mxu0
        %1847 = vmatprep.mubr.f32.mxu0 %v1607
        %1848 = vmatmul.mubr.f32.gmra.mrb[0].mxu0 %v1605
        %v1849 = vpop.f32.mrb[0].mxu0
        %v1850 = vadd.f32 0.0, %v1849
        %v1851 = vpop.f32.mrb[0].mxu0
        %1852 = vmatprep.mubr.f32.mxu0 %v1610
        %1853 = vmatmul.mubr.f32.gmra.mrb[0].mxu0 %v1601
        %v1854 = vpop.f32.mrb[0].mxu0
        %v1855 = vadd.f32 0.0, %v1854
        %v1856 = vpop.f32.mrb[0].mxu0
        %1857 = vmatprep.mubr.f32.mxu0 %v1612
        %1858 = vmatmul.mubr.f32.gmra.mrb[0].mxu0 %v1607
        %v1859 = vpop.f32.mrb[0].mxu0
        %v1860 = vadd.f32 0.0, %v1859
        %v1861 = vpop.f32.mrb[0].mxu0
        %1862 = vmatprep.mubr.f32.mxu0 %v1615
        %1863 = vmatmul.mubr.f32.gmra.mrb[0].mxu0 %v1610
        %v1864 = vpop.f32.mrb[0].mxu0
        %v1865 = vadd.f32 0.0, %v1864
        %v1866 = vpop.f32.mrb[0].mxu0
        %1867 = vmatprep.mubr.f32.mxu0 %v1617
        %1868 = vmatmul.mubr.f32.gmra.mrb[0].mxu0 %v1612
        %v1869 = vpop.f32.mrb[0].mxu0
        %v1870 = vadd.f32 0.0, %v1869
        %v1871 = vpop.f32.mrb[0].mxu0
        %1872 = vmatprep.mubr.f32.mxu0 %v1620
        %1873 = vmatmul.mubr.f32.gmra.mrb[0].mxu0 %v1615
        %v1874 = vpop.f32.mrb[0].mxu0
        %v1875 = vadd.f32 0.0, %v1874
        %v1876 = vpop.f32.mrb[0].mxu0
        %1877 = vmatprep.mubr.f32.mxu0 %v1622
        %1878 = vmatmul.mubr.f32.gmra.mrb[0].mxu0 %v1617
        %v1879 = vpop.f32.mrb[0].mxu0
        %v1880 = vadd.f32 0.0, %v1879
        %v1881 = vpop.f32.mrb[0].mxu0
        %1882 = vmatprep.mubr.f32.mxu0 %v1625
        %1883 = vmatmul.mubr.f32.gmra.mrb[0].mxu0 %v1620
        %v1884 = vpop.f32.mrb[0].mxu0
        %v1885 = vadd.f32 0.0, %v1884
        %v1886 = vpop.f32.mrb[0].mxu0
        %1887 = vmatprep.mubr.f32.mxu0 %v1627
        %1888 = vmatmul.mubr.f32.gmra.mrb[0].mxu0 %v1622
        %v1889 = vpop.f32.mrb[0].mxu0
        %v1890 = vadd.f32 0.0, %v1889
        %v1891 = vpop.f32.mrb[0].mxu0
        %1892 = vmatprep.mubr.f32.mxu0 %v1630
        %1893 = vmatmul.mubr.f32.gmra.mrb[0].mxu0 %v1625
        %v1894 = vpop.f32.mrb[0].mxu0
        %v1895 = vadd.f32 0.0, %v1894
        %v1896 = vpop.f32.mrb[0].mxu0
        %1897 = vmatprep.mubr.f32.mxu0 %v1632
        %1898 = vmatmul.mubr.f32.gmra.mrb[0].mxu0 %v1627
        %v1899 = vpop.f32.mrb[0].mxu0
        %v1900 = vadd.f32 0.0, %v1899
        %v1901 = vpop.f32.mrb[0].mxu0
        %1902 = vmatprep.mubr.f32.mxu0 %v1635
        %1903 = vmatmul.mubr.f32.gmra.mrb[0].mxu0 %v1630
        %v1904 = vpop.f32.mrb[0].mxu0
        %v1905 = vadd.f32 0.0, %v1904
        %v1906 = vpop.f32.mrb[0].mxu0
        %1907 = vmatprep.mubr.f32.mxu0 %v1637
        %1908 = vmatmul.mubr.f32.gmra.mrb[0].mxu0 %v1632
        %v1909 = vpop.f32.mrb[0].mxu0
        %v1910 = vadd.f32 0.0, %v1909
        %v1911 = vpop.f32.mrb[0].mxu0
        %1912 = vmatprep.mubr.f32.mxu0 %v1640
        %1913 = vmatmul.mubr.f32.gmra.mrb[0].mxu0 %v1635
        %v1914 = vpop.f32.mrb[0].mxu0
        %v1915 = vadd.f32 0.0, %v1914
        %v1916 = vpop.f32.mrb[0].mxu0
        %1917 = vmatprep.mubr.f32.mxu0 %v1642
        %1918 = vmatmul.mubr.f32.gmra.mrb[0].mxu0 %v1637
        %v1919 = vpop.f32.mrb[0].mxu0
        %v1920 = vadd.f32 0.0, %v1919
        %v1921 = vpop.f32.mrb[0].mxu0
        %1922 = vmatprep.mubr.f32.mxu0 %v1645
        %1923 = vmatmul.mubr.f32.gmra.mrb[0].mxu0 %v1640
        %v1924 = vpop.f32.mrb[0].mxu0
        %v1925 = vadd.f32 0.0, %v1924
        %v1926 = vpop.f32.mrb[0].mxu0
        %1927 = vmatprep.mubr.f32.mxu0 %v1647
        %1928 = vmatmul.mubr.f32.gmra.mrb[0].mxu0 %v1642
        %v1929 = vpop.f32.mrb[0].mxu0
        %v1930 = vadd.f32 0.0, %v1929
        %v1931 = vpop.f32.mrb[0].mxu0
        %1932 = vmatprep.mubr.f32.mxu0 %v1650
        %1933 = vmatmul.mubr.f32.gmra.mrb[0].mxu0 %v1645
        %v1934 = vpop.f32.mrb[0].mxu0
        %v1935 = vadd.f32 0.0, %v1934
        %v1936 = vpop.f32.mrb[0].mxu0
        %1937 = vmatprep.mubr.f32.mxu0 %v1652
        %1938 = vmatmul.mubr.f32.gmra.mrb[0].mxu0 %v1647
        %v1939 = vpop.f32.mrb[0].mxu0
        %v1940 = vadd.f32 0.0, %v1939
        %v1941 = vpop.f32.mrb[0].mxu0
        %1942 = vmatprep.mubr.f32.mxu0 %v1655
        %1943 = vmatmul.mubr.f32.gmra.mrb[0].mxu0 %v1650
        %v1944 = vpop.f32.mrb[0].mxu0
        %v1945 = vadd.f32 0.0, %v1944
        %v1946 = vpop.f32.mrb[0].mxu0
        %1947 = vmatprep.mubr.f32.mxu0 %v1657
        %1948 = vmatmul.mubr.f32.gmra.mrb[0].mxu0 %v1652
        %v1949 = vpop.f32.mrb[0].mxu0
        %v1950 = vadd.f32 0.0, %v1949
        %v1951 = vpop.f32.mrb[0].mxu0
        %1952 = vmatprep.mubr.f32.mxu0 %v1660
        %1953 = vmatmul.mubr.f32.gmra.mrb[0].mxu0 %v1655
        %v1954 = vpop.f32.mrb[0].mxu0
        %v1955 = vadd.f32 0.0, %v1954
        %v1956 = vpop.f32.mrb[0].mxu0
        %1957 = vmatprep.mubr.f32.mxu0 %v1662
        %1958 = vmatmul.mubr.f32.gmra.mrb[0].mxu0 %v1657
        %v1959 = vpop.f32.mrb[0].mxu0
        %v1960 = vadd.f32 0.0, %v1959
        %v1961 = vpop.f32.mrb[0].mxu0
        %1962 = vmatprep.mubr.f32.mxu0 %v1665
        %1963 = vmatmul.mubr.f32.gmra.mrb[0].mxu0 %v1660
        %v1964 = vpop.f32.mrb[0].mxu0
        %v1965 = vadd.f32 0.0, %v1964
        %v1966 = vpop.f32.mrb[0].mxu0
        %1967 = vmatprep.mubr.f32.mxu0 %v1667
        %1968 = vmatmul.mubr.f32.gmra.mrb[0].mxu0 %v1662
        %v1969 = vpop.f32.mrb[0].mxu0
        %v1970 = vadd.f32 0.0, %v1969
        %v1971 = vpop.f32.mrb[0].mxu0
        %1972 = vmatprep.mubr.f32.mxu0 %v1670
        %1973 = vmatmul.mubr.f32.gmra.mrb[0].mxu0 %v1665
        %v1974 = vpop.f32.mrb[0].mxu0
        %v1975 = vadd.f32 0.0, %v1974
        %v1976 = vpop.f32.mrb[0].mxu0
        %1977 = vmatprep.mubr.f32.mxu0 %v1672
        %1978 = vmatmul.mubr.f32.gmra.mrb[0].mxu0 %v1667
        %v1979 = vpop.f32.mrb[0].mxu0
        %v1980 = vadd.f32 0.0, %v1979
        %v1981 = vpop.f32.mrb[0].mxu0
        %1982 = vmatprep.mubr.f32.mxu0 %v1675
        %1983 = vmatmul.mubr.f32.gmra.mrb[0].mxu0 %v1670
        %v1984 = vpop.f32.mrb[0].mxu0
        %v1985 = vadd.f32 0.0, %v1984
        %v1986 = vpop.f32.mrb[0].mxu0
        %1987 = vmatprep.mubr.f32.mxu0 %v1677
        %1988 = vmatmul.mubr.f32.gmra.mrb[0].mxu0 %v1672
        %v1989 = vpop.f32.mrb[0].mxu0
        %v1990 = vadd.f32 0.0, %v1989
        %v1991 = vpop.f32.mrb[0].mxu0
        %1992 = vdwg.mxu0
        %1993 = vmatprep.subr.mxu0 0.0
        %1994 = vmatpush1.msra.mxu0 %v1752
        %1995 = vmatprep.subr.mxu0 0.0
        %1996 = vmatpush1.msra.mxu0 %v1753
        %1997 = vmatprep.subr.mxu0 0.0
        %1998 = vmatpush1.msra.mxu0 %v1754
        %1999 = vmatprep.subr.mxu0 0.0
        %2000 = vmatpush1.msra.mxu0 %v1755
        %2001 = vmatprep.subr.mxu0 0.0
        %2002 = vmatpush1.msra.mxu0 %v1756
        %2003 = vmatprep.subr.mxu0 0.0
        %2004 = vmatpush1.msra.mxu0 %v1757
        %2005 = vmatprep.subr.mxu0 0.0
        %2006 = vmatpush1.msra.mxu0 %v1758
        %2007 = vmatprep.subr.mxu0 0.0
        %2008 = vmatpush1.msra.mxu0 %v1759
        %2009 = vmatprep.subr.mxu0 0.0
        %2010 = vmatpush1.msra.mxu0 %v1760
        %2011 = vmatprep.subr.mxu0 0.0
        %2012 = vmatpush1.msra.mxu0 %v1761
        %2013 = vmatprep.subr.mxu0 0.0
        %2014 = vmatpush1.msra.mxu0 %v1762
        %2015 = vmatprep.subr.mxu0 0.0
        %2016 = vmatpush1.msra.mxu0 %v1763
        %2017 = vmatprep.subr.mxu0 0.0
        %2018 = vmatpush1.msra.mxu0 %v1764
        %2019 = vmatprep.subr.mxu0 0.0
        %2020 = vmatpush1.msra.mxu0 %v1765
        %2021 = vmatprep.subr.mxu0 0.0
        %2022 = vmatpush1.msra.mxu0 %v1766
        %2023 = vmatprep.subr.mxu0 0.0
        %2024 = vmatpush1.msra.mxu0 %v1767
        %2025 = vmatprep.subr.mxu0 0.0
        %2026 = vmatpush1.msra.mxu0 0.0
        %2027 = vmatprep.subr.mxu0 0.0
        %2028 = vmatpush1.msra.mxu0 0.0
        %2029 = vmatprep.subr.mxu0 0.0
        %2030 = vmatpush1.msra.mxu0 0.0
        %2031 = vmatprep.subr.mxu0 0.0
        %2032 = vmatpush1.msra.mxu0 0.0
        %2033 = vmatprep.subr.mxu0 0.0
        %2034 = vmatpush1.msra.mxu0 0.0
        %2035 = vmatprep.subr.mxu0 0.0
        %2036 = vmatpush1.msra.mxu0 0.0
        %2037 = vmatprep.subr.mxu0 0.0
        %2038 = vmatpush1.msra.mxu0 0.0
        %2039 = vmatprep.subr.mxu0 0.0
        %2040 = vmatpush1.msra.mxu0 0.0
        %2041 = vmatprep.subr.mxu0 0.0
        %2042 = vmatpush1.msra.mxu0 0.0
        %2043 = vmatprep.subr.mxu0 0.0
        %2044 = vmatpush1.msra.mxu0 0.0
        %2045 = vmatprep.subr.mxu0 0.0
        %2046 = vmatpush1.msra.mxu0 0.0
        %2047 = vmatprep.subr.mxu0 0.0
        %2048 = vmatpush1.msra.mxu0 0.0
        %2049 = vmatprep.subr.mxu0 0.0
        %2050 = vmatpush1.msra.mxu0 0.0
        %2051 = vmatprep.subr.mxu0 0.0
        %2052 = vmatpush1.msra.mxu0 0.0
        %2053 = vmatprep.subr.mxu0 0.0
        %2054 = vmatpush1.msra.mxu0 0.0
        %2055 = vmatprep.subr.mxu0 0.0
        %2056 = vmatpush1.msra.mxu0 0.0
        %2057 = vmatprep.mubr.f32.mxu0 0.0
        %2058 = vmatmul.mubr.f32.gmra.mrb[0].mxu0 %v1601
        %v2059 = vpop.f32.mrb[0].mxu0
        %v2060 = vadd.f32 %v1835, %v2059
        %v2061 = vpop.f32.mrb[0].mxu0
        %2062 = vmatprep.mubr.f32.mxu0 0.0
        %2063 = vmatmul.mubr.f32.gmra.mrb[0].mxu0 %v1607
        %v2064 = vpop.f32.mrb[0].mxu0
        %v2065 = vadd.f32 %v1840, %v2064
        %v2066 = vpop.f32.mrb[0].mxu0
        %2067 = vmatprep.mubr.f32.mxu0 0.0
        %2068 = vmatmul.mubr.f32.gmra.mrb[0].mxu0 %v1610
        %v2069 = vpop.f32.mrb[0].mxu0
        %v2070 = vadd.f32 %v1845, %v2069
        %v2071 = vpop.f32.mrb[0].mxu0
        %2072 = vmatprep.mubr.f32.mxu0 0.0
        %2073 = vmatmul.mubr.f32.gmra.mrb[0].mxu0 %v1612
        %v2074 = vpop.f32.mrb[0].mxu0
        %v2075 = vadd.f32 %v1850, %v2074
        %v2076 = vpop.f32.mrb[0].mxu0
        %2077 = vmatprep.mubr.f32.mxu0 0.0
        %2078 = vmatmul.mubr.f32.gmra.mrb[0].mxu0 %v1615
        %v2079 = vpop.f32.mrb[0].mxu0
        %v2080 = vadd.f32 %v1855, %v2079
        %v2081 = vpop.f32.mrb[0].mxu0
        %2082 = vmatprep.mubr.f32.mxu0 0.0
        %2083 = vmatmul.mubr.f32.gmra.mrb[0].mxu0 %v1617
        %v2084 = vpop.f32.mrb[0].mxu0
        %v2085 = vadd.f32 %v1860, %v2084
        %v2086 = vpop.f32.mrb[0].mxu0
        %2087 = vmatprep.mubr.f32.mxu0 0.0
        %2088 = vmatmul.mubr.f32.gmra.mrb[0].mxu0 %v1620
        %v2089 = vpop.f32.mrb[0].mxu0
        %v2090 = vadd.f32 %v1865, %v2089
        %v2091 = vpop.f32.mrb[0].mxu0
        %2092 = vmatprep.mubr.f32.mxu0 0.0
        %2093 = vmatmul.mubr.f32.gmra.mrb[0].mxu0 %v1622
        %v2094 = vpop.f32.mrb[0].mxu0
        %v2095 = vadd.f32 %v1870, %v2094
        %v2096 = vpop.f32.mrb[0].mxu0
        %2097 = vmatprep.mubr.f32.mxu0 0.0
        %2098 = vmatmul.mubr.f32.gmra.mrb[0].mxu0 %v1625
        %v2099 = vpop.f32.mrb[0].mxu0
        %v2100 = vadd.f32 %v1875, %v2099
        %v2101 = vpop.f32.mrb[0].mxu0
        %2102 = vmatprep.mubr.f32.mxu0 0.0
        %2103 = vmatmul.mubr.f32.gmra.mrb[0].mxu0 %v1627
        %v2104 = vpop.f32.mrb[0].mxu0
        %v2105 = vadd.f32 %v1880, %v2104
        %v2106 = vpop.f32.mrb[0].mxu0
        %2107 = vmatprep.mubr.f32.mxu0 0.0
        %2108 = vmatmul.mubr.f32.gmra.mrb[0].mxu0 %v1630
        %v2109 = vpop.f32.mrb[0].mxu0
        %v2110 = vadd.f32 %v1885, %v2109
        %v2111 = vpop.f32.mrb[0].mxu0
        %2112 = vmatprep.mubr.f32.mxu0 0.0
        %2113 = vmatmul.mubr.f32.gmra.mrb[0].mxu0 %v1632
        %v2114 = vpop.f32.mrb[0].mxu0
        %v2115 = vadd.f32 %v1890, %v2114
        %v2116 = vpop.f32.mrb[0].mxu0
        %2117 = vmatprep.mubr.f32.mxu0 0.0
        %2118 = vmatmul.mubr.f32.gmra.mrb[0].mxu0 %v1635
        %v2119 = vpop.f32.mrb[0].mxu0
        %v2120 = vadd.f32 %v1895, %v2119
        %v2121 = vpop.f32.mrb[0].mxu0
        %2122 = vmatprep.mubr.f32.mxu0 0.0
        %2123 = vmatmul.mubr.f32.gmra.mrb[0].mxu0 %v1637
        %v2124 = vpop.f32.mrb[0].mxu0
        %v2125 = vadd.f32 %v1900, %v2124
        %v2126 = vpop.f32.mrb[0].mxu0
        %2127 = vmatprep.mubr.f32.mxu0 0.0
        %2128 = vmatmul.mubr.f32.gmra.mrb[0].mxu0 %v1640
        %v2129 = vpop.f32.mrb[0].mxu0
        %v2130 = vadd.f32 %v1905, %v2129
        %v2131 = vpop.f32.mrb[0].mxu0
        %2132 = vmatprep.mubr.f32.mxu0 0.0
        %2133 = vmatmul.mubr.f32.gmra.mrb[0].mxu0 %v1642
        %v2134 = vpop.f32.mrb[0].mxu0
        %v2135 = vadd.f32 %v1910, %v2134
        %v2136 = vpop.f32.mrb[0].mxu0
        %2137 = vmatprep.mubr.f32.mxu0 0.0
        %2138 = vmatmul.mubr.f32.gmra.mrb[0].mxu0 %v1645
        %v2139 = vpop.f32.mrb[0].mxu0
        %v2140 = vadd.f32 %v1915, %v2139
        %v2141 = vpop.f32.mrb[0].mxu0
        %2142 = vmatprep.mubr.f32.mxu0 0.0
        %2143 = vmatmul.mubr.f32.gmra.mrb[0].mxu0 %v1647
        %v2144 = vpop.f32.mrb[0].mxu0
        %v2145 = vadd.f32 %v1920, %v2144
        %v2146 = vpop.f32.mrb[0].mxu0
        %2147 = vmatprep.mubr.f32.mxu0 0.0
        %2148 = vmatmul.mubr.f32.gmra.mrb[0].mxu0 %v1650
        %v2149 = vpop.f32.mrb[0].mxu0
        %v2150 = vadd.f32 %v1925, %v2149
        %v2151 = vpop.f32.mrb[0].mxu0
        %2152 = vmatprep.mubr.f32.mxu0 0.0
        %2153 = vmatmul.mubr.f32.gmra.mrb[0].mxu0 %v1652
        %v2154 = vpop.f32.mrb[0].mxu0
        %v2155 = vadd.f32 %v1930, %v2154
        %v2156 = vpop.f32.mrb[0].mxu0
        %2157 = vmatprep.mubr.f32.mxu0 0.0
        %2158 = vmatmul.mubr.f32.gmra.mrb[0].mxu0 %v1655
        %v2159 = vpop.f32.mrb[0].mxu0
        %v2160 = vadd.f32 %v1935, %v2159
        %v2161 = vpop.f32.mrb[0].mxu0
        %2162 = vmatprep.mubr.f32.mxu0 0.0
        %2163 = vmatmul.mubr.f32.gmra.mrb[0].mxu0 %v1657
        %v2164 = vpop.f32.mrb[0].mxu0
        %v2165 = vadd.f32 %v1940, %v2164
        %v2166 = vpop.f32.mrb[0].mxu0
        %2167 = vmatprep.mubr.f32.mxu0 0.0
        %2168 = vmatmul.mubr.f32.gmra.mrb[0].mxu0 %v1660
        %v2169 = vpop.f32.mrb[0].mxu0
        %v2170 = vadd.f32 %v1945, %v2169
        %v2171 = vpop.f32.mrb[0].mxu0
        %2172 = vmatprep.mubr.f32.mxu0 0.0
        %2173 = vmatmul.mubr.f32.gmra.mrb[0].mxu0 %v1662
        %v2174 = vpop.f32.mrb[0].mxu0
        %v2175 = vadd.f32 %v1950, %v2174
        %v2176 = vpop.f32.mrb[0].mxu0
        %2177 = vmatprep.mubr.f32.mxu0 0.0
        %2178 = vmatmul.mubr.f32.gmra.mrb[0].mxu0 %v1665
        %v2179 = vpop.f32.mrb[0].mxu0
        %v2180 = vadd.f32 %v1955, %v2179
        %v2181 = vpop.f32.mrb[0].mxu0
        %2182 = vmatprep.mubr.f32.mxu0 0.0
        %2183 = vmatmul.mubr.f32.gmra.mrb[0].mxu0 %v1667
        %v2184 = vpop.f32.mrb[0].mxu0
        %v2185 = vadd.f32 %v1960, %v2184
        %v2186 = vpop.f32.mrb[0].mxu0
        %2187 = vmatprep.mubr.f32.mxu0 0.0
        %2188 = vmatmul.mubr.f32.gmra.mrb[0].mxu0 %v1670
        %v2189 = vpop.f32.mrb[0].mxu0
        %v2190 = vadd.f32 %v1965, %v2189
        %v2191 = vpop.f32.mrb[0].mxu0
        %2192 = vmatprep.mubr.f32.mxu0 0.0
        %2193 = vmatmul.mubr.f32.gmra.mrb[0].mxu0 %v1672
        %v2194 = vpop.f32.mrb[0].mxu0
        %v2195 = vadd.f32 %v1970, %v2194
        %v2196 = vpop.f32.mrb[0].mxu0
        %2197 = vmatprep.mubr.f32.mxu0 0.0
        %2198 = vmatmul.mubr.f32.gmra.mrb[0].mxu0 %v1675
        %v2199 = vpop.f32.mrb[0].mxu0
        %v2200 = vadd.f32 %v1975, %v2199
        %v2201 = vpop.f32.mrb[0].mxu0
        %2202 = vmatprep.mubr.f32.mxu0 0.0
        %2203 = vmatmul.mubr.f32.gmra.mrb[0].mxu0 %v1677
        %v2204 = vpop.f32.mrb[0].mxu0
        %v2205 = vadd.f32 %v1980, %v2204
        %v2206 = vpop.f32.mrb[0].mxu0
        %2207 = vmatprep.mubr.f32.mxu0 0.0
        %2208 = vmatmul.mubr.f32.gmra.mrb[0].mxu0 %v1680
        %v2209 = vpop.f32.mrb[0].mxu0
        %v2210 = vadd.f32 %v1985, %v2209
        %v2211 = vpop.f32.mrb[0].mxu0
        %2212 = vmatprep.mubr.f32.mxu0 0.0
        %2213 = vmatmul.mubr.f32.gmra.mrb[0].mxu0 %v1682
        %v2214 = vpop.f32.mrb[0].mxu0
        %v2215 = vadd.f32 %v1990, %v2214
        %v2216 = vpop.f32.mrb[0].mxu0
        %2217 = vdwg.mxu0
        %v2218 = vadd.f32 %v1434, %v2060
        %v2219 = vadd.f32 %v1439, %v2065
        %v2220 = vadd.f32 %v1444, %v2070
        %v2221 = vadd.f32 %v1449, %v2075
        %v2222 = vadd.f32 %v1454, %v2080
        %v2223 = vadd.f32 %v1459, %v2085
        %v2224 = vadd.f32 %v1464, %v2090
        %v2225 = vadd.f32 %v1469, %v2095
        %v2226 = vadd.f32 %v1474, %v2100
        %v2227 = vadd.f32 %v1479, %v2105
        %v2228 = vadd.f32 %v1484, %v2110
        %v2229 = vadd.f32 %v1489, %v2115
        %v2230 = vadd.f32 %v1494, %v2120
        %v2231 = vadd.f32 %v1499, %v2125
        %v2232 = vadd.f32 %v1504, %v2130
        %v2233 = vadd.f32 %v1509, %v2135
        %v2234 = vadd.f32 %v1514, %v2140
        %v2235 = vadd.f32 %v1519, %v2145
        %v2236 = vadd.f32 %v1524, %v2150
        %v2237 = vadd.f32 %v1529, %v2155
        %v2238 = vadd.f32 %v1534, %v2160
        %v2239 = vadd.f32 %v1539, %v2165
        %v2240 = vadd.f32 %v1544, %v2170
        %v2241 = vadd.f32 %v1549, %v2175
        %v2242 = vadd.f32 %v1554, %v2180
        %v2243 = vadd.f32 %v1559, %v2185
        %v2244 = vadd.f32 %v1564, %v2190
        %v2245 = vadd.f32 %v1569, %v2195
        %v2246 = vadd.f32 %v1574, %v2200
        %v2247 = vadd.f32 %v1579, %v2205
        %v2248 = vadd.f32 %v1584, %v2210
        %v2249 = vadd.f32 %v1589, %v2215
        %2250 = vst [vmem:[#allocation3] sm:$0xff] %v2218
        %2251 = vst [vmem:[#allocation3 + $0x8] sm:$0xff] %v2219
        %2252 = vst [vmem:[#allocation3 + $0x10] sm:$0xff] %v2220
        %2253 = vst [vmem:[#allocation3 + $0x18] sm:$0xff] %v2221
        %2254 = vst [vmem:[#allocation3 + $0x20] sm:$0xff] %v2222
        %2255 = vst [vmem:[#allocation3 + $0x28] sm:$0xff] %v2223
        %2256 = vst [vmem:[#allocation3 + $0x30] sm:$0xff] %v2224
        %2257 = vst [vmem:[#allocation3 + $0x38] sm:$0xff] %v2225
        %2258 = vst [vmem:[#allocation3 + $0x40] sm:$0xff] %v2226
        %2259 = vst [vmem:[#allocation3 + $0x48] sm:$0xff] %v2227
        %2260 = vst [vmem:[#allocation3 + $0x50] sm:$0xff] %v2228
        %2261 = vst [vmem:[#allocation3 + $0x58] sm:$0xff] %v2229
        %2262 = vst [vmem:[#allocation3 + $0x60] sm:$0xff] %v2230
        %2263 = vst [vmem:[#allocation3 + $0x68] sm:$0xff] %v2231
        %2264 = vst [vmem:[#allocation3 + $0x70] sm:$0xff] %v2232
        %2265 = vst [vmem:[#allocation3 + $0x78] sm:$0xff] %v2233
        %2266 = vst [vmem:[#allocation3 + $0x80] sm:$0xff] %v2234
        %2267 = vst [vmem:[#allocation3 + $0x88] sm:$0xff] %v2235
        %2268 = vst [vmem:[#allocation3 + $0x90] sm:$0xff] %v2236
        %2269 = vst [vmem:[#allocation3 + $0x98] sm:$0xff] %v2237
        %2270 = vst [vmem:[#allocation3 + $0xa0] sm:$0xff] %v2238
        %2271 = vst [vmem:[#allocation3 + $0xa8] sm:$0xff] %v2239
        %2272 = vst [vmem:[#allocation3 + $0xb0] sm:$0xff] %v2240
        %2273 = vst [vmem:[#allocation3 + $0xb8] sm:$0xff] %v2241
        %2274 = vst [vmem:[#allocation3 + $0xc0] sm:$0xff] %v2242
        %2275 = vst [vmem:[#allocation3 + $0xc8] sm:$0xff] %v2243
        %2276 = vst [vmem:[#allocation3 + $0xd0] sm:$0xff] %v2244
        %2277 = vst [vmem:[#allocation3 + $0xd8] sm:$0xff] %v2245
        %2278 = vst [vmem:[#allocation3 + $0xe0] sm:$0xff] %v2246
        %2279 = vst [vmem:[#allocation3 + $0xe8] sm:$0xff] %v2247
        %2280 = vst [vmem:[#allocation3 + $0xf0] sm:$0xff] %v2248
        %2281 = vst [vmem:[#allocation3 + $0xf8] sm:$0xff] %v2249
        %v2282 = vld [vmem:[#allocation3] sm:$0xff]
        %v2283 = vld [vmem:[#allocation3 + $0x8] sm:$0xff]
        %v2284 = vld [vmem:[#allocation3 + $0x10] sm:$0xff]
        %v2285 = vld [vmem:[#allocation3 + $0x18] sm:$0xff]
        %v2286 = vld [vmem:[#allocation3 + $0x20] sm:$0xff]
        %v2287 = vld [vmem:[#allocation3 + $0x28] sm:$0xff]
        %v2288 = vld [vmem:[#allocation3 + $0x30] sm:$0xff]
        %v2289 = vld [vmem:[#allocation3 + $0x38] sm:$0xff]
        %v2290 = vld [vmem:[#allocation3 + $0x40] sm:$0xff]
        %v2291 = vld [vmem:[#allocation3 + $0x48] sm:$0xff]
        %v2292 = vld [vmem:[#allocation3 + $0x50] sm:$0xff]
        %v2293 = vld [vmem:[#allocation3 + $0x58] sm:$0xff]
        %v2294 = vld [vmem:[#allocation3 + $0x60] sm:$0xff]
        %v2295 = vld [vmem:[#allocation3 + $0x68] sm:$0xff]
        %v2296 = vld [vmem:[#allocation3 + $0x70] sm:$0xff]
        %v2297 = vld [vmem:[#allocation3 + $0x78] sm:$0xff]
        %v2298 = vld [vmem:[#allocation3 + $0x80] sm:$0xff]
        %v2299 = vld [vmem:[#allocation3 + $0x88] sm:$0xff]
        %v2300 = vld [vmem:[#allocation3 + $0x90] sm:$0xff]
        %v2301 = vld [vmem:[#allocation3 + $0x98] sm:$0xff]
        %v2302 = vld [vmem:[#allocation3 + $0xa0] sm:$0xff]
        %v2303 = vld [vmem:[#allocation3 + $0xa8] sm:$0xff]
        %v2304 = vld [vmem:[#allocation3 + $0xb0] sm:$0xff]
        %v2305 = vld [vmem:[#allocation3 + $0xb8] sm:$0xff]
        %v2306 = vld [vmem:[#allocation3 + $0xc0] sm:$0xff]
        %v2307 = vld [vmem:[#allocation3 + $0xc8] sm:$0xff]
        %v2308 = vld [vmem:[#allocation3 + $0xd0] sm:$0xff]
        %v2309 = vld [vmem:[#allocation3 + $0xd8] sm:$0xff]
        %v2310 = vld [vmem:[#allocation3 + $0xe0] sm:$0xff]
        %v2311 = vld [vmem:[#allocation3 + $0xe8] sm:$0xff]
        %v2312 = vld [vmem:[#allocation3 + $0xf0] sm:$0xff]
        %v2313 = vld [vmem:[#allocation3 + $0xf8] sm:$0xff]
        %v2314 = vadd.f32 %v2282, %v2283
        %v2315 = vadd.f32 %v2314, %v2284
        %v2316 = vadd.f32 %v2315, %v2285
        %v2317 = vadd.f32 %v2316, %v2286
        %v2318 = vadd.f32 %v2317, %v2287
        %v2319 = vadd.f32 %v2318, %v2288
        %v2320 = vadd.f32 %v2319, %v2289
        %v2321 = vadd.f32 %v2320, %v2290
        %v2322 = vadd.f32 %v2321, %v2291
        %v2323 = vadd.f32 %v2322, %v2292
        %v2324 = vadd.f32 %v2323, %v2293
        %v2325 = vadd.f32 %v2324, %v2294
        %v2326 = vadd.f32 %v2325, %v2295
        %v2327 = vadd.f32 %v2326, %v2296
        %v2328 = vadd.f32 %v2327, %v2297
        %v2329 = vadd.f32 %v2328, %v2298
        %v2330 = vadd.f32 %v2329, %v2299
        %v2331 = vadd.f32 %v2330, %v2300
        %v2332 = vadd.f32 %v2331, %v2301
        %v2333 = vadd.f32 %v2332, %v2302
        %v2334 = vadd.f32 %v2333, %v2303
        %v2335 = vadd.f32 %v2334, %v2304
        %v2336 = vadd.f32 %v2335, %v2305
        %v2337 = vadd.f32 %v2336, %v2306
        %v2338 = vadd.f32 %v2337, %v2307
        %v2339 = vadd.f32 %v2338, %v2308
        %v2340 = vadd.f32 %v2339, %v2309
        %v2341 = vadd.f32 %v2340, %v2310
        %v2342 = vadd.f32 %v2341, %v2311
        %v2343 = vadd.f32 %v2342, %v2312
        %v2344 = vadd.f32 %v2343, %v2313
        %v2345 = vrot.slane %v2344, 4
        %v2346 = vadd.f32 %v2344, %v2345
        %v2347 = vrot.slane %v2346, 2
        %v2348 = vadd.f32 %v2346, %v2347
        %v2349 = vrot.slane %v2348, 1
        %v2350 = vadd.f32 %v2348, %v2349
        %v2351 = vmul.f32 %v2350, 0.00390625
        %v2352 = vsub.f32 %v2282, %v2351
        %v2353 = vsub.f32 %v2283, %v2351
        %v2354 = vsub.f32 %v2284, %v2351
        %v2355 = vsub.f32 %v2285, %v2351
        %v2356 = vsub.f32 %v2286, %v2351
        %v2357 = vsub.f32 %v2287, %v2351
        %v2358 = vsub.f32 %v2288, %v2351
        %v2359 = vsub.f32 %v2289, %v2351
        %v2360 = vsub.f32 %v2290, %v2351
        %v2361 = vsub.f32 %v2291, %v2351
        %v2362 = vsub.f32 %v2292, %v2351
        %v2363 = vsub.f32 %v2293, %v2351
        %v2364 = vsub.f32 %v2294, %v2351
        %v2365 = vsub.f32 %v2295, %v2351
        %v2366 = vsub.f32 %v2296, %v2351
        %v2367 = vsub.f32 %v2297, %v2351
        %v2368 = vsub.f32 %v2298, %v2351
        %v2369 = vsub.f32 %v2299, %v2351
        %v2370 = vsub.f32 %v2300, %v2351
        %v2371 = vsub.f32 %v2301, %v2351
        %v2372 = vsub.f32 %v2302, %v2351
        %v2373 = vsub.f32 %v2303, %v2351
        %v2374 = vsub.f32 %v2304, %v2351
        %v2375 = vsub.f32 %v2305, %v2351
        %v2376 = vsub.f32 %v2306, %v2351
        %v2377 = vsub.f32 %v2307, %v2351
        %v2378 = vsub.f32 %v2308, %v2351
        %v2379 = vsub.f32 %v2309, %v2351
        %v2380 = vsub.f32 %v2310, %v2351
        %v2381 = vsub.f32 %v2311, %v2351
        %v2382 = vsub.f32 %v2312, %v2351
        %v2383 = vsub.f32 %v2313, %v2351
        %v2384 = vmul.f32 %v2352, %v2352
        %v2385 = vmul.f32 %v2353, %v2353
        %v2386 = vmul.f32 %v2354, %v2354
        %v2387 = vmul.f32 %v2355, %v2355
        %v2388 = vmul.f32 %v2356, %v2356
        %v2389 = vmul.f32 %v2357, %v2357
        %v2390 = vmul.f32 %v2358, %v2358
        %v2391 = vmul.f32 %v2359, %v2359
        %v2392 = vmul.f32 %v2360, %v2360
        %v2393 = vmul.f32 %v2361, %v2361
        %v2394 = vmul.f32 %v2362, %v2362
        %v2395 = vmul.f32 %v2363, %v2363
        %v2396 = vmul.f32 %v2364, %v2364
        %v2397 = vmul.f32 %v2365, %v2365
        %v2398 = vmul.f32 %v2366, %v2366
        %v2399 = vmul.f32 %v2367, %v2367
        %v2400 = vmul.f32 %v2368, %v2368
        %v2401 = vmul.f32 %v2369, %v2369
        %v2402 = vmul.f32 %v2370, %v2370
        %v2403 = vmul.f32 %v2371, %v2371
        %v2404 = vmul.f32 %v2372, %v2372
        %v2405 = vmul.f32 %v2373, %v2373
        %v2406 = vmul.f32 %v2374, %v2374
        %v2407 = vmul.f32 %v2375, %v2375
        %v2408 = vmul.f32 %v2376, %v2376
        %v2409 = vmul.f32 %v2377, %v2377
        %v2410 = vmul.f32 %v2378, %v2378
        %v2411 = vmul.f32 %v2379, %v2379
        %v2412 = vmul.f32 %v2380, %v2380
        %v2413 = vmul.f32 %v2381, %v2381
        %v2414 = vmul.f32 %v2382, %v2382
        %v2415 = vmul.f32 %v2383, %v2383
        %v2416 = vadd.f32 %v2384, %v2385
        %v2417 = vadd.f32 %v2416, %v2386
        %v2418 = vadd.f32 %v2417, %v2387
        %v2419 = vadd.f32 %v2418, %v2388
        %v2420 = vadd.f32 %v2419, %v2389
        %v2421 = vadd.f32 %v2420, %v2390
        %v2422 = vadd.f32 %v2421, %v2391
        %v2423 = vadd.f32 %v2422, %v2392
        %v2424 = vadd.f32 %v2423, %v2393
        %v2425 = vadd.f32 %v2424, %v2394
        %v2426 = vadd.f32 %v2425, %v2395
        %v2427 = vadd.f32 %v2426, %v2396
        %v2428 = vadd.f32 %v2427, %v2397
        %v2429 = vadd.f32 %v2428, %v2398
        %v2430 = vadd.f32 %v2429, %v2399
        %v2431 = vadd.f32 %v2430, %v2400
        %v2432 = vadd.f32 %v2431, %v2401
        %v2433 = vadd.f32 %v2432, %v2402
        %v2434 = vadd.f32 %v2433, %v2403
        %v2435 = vadd.f32 %v2434, %v2404
        %v2436 = vadd.f32 %v2435, %v2405
        %v2437 = vadd.f32 %v2436, %v2406
        %v2438 = vadd.f32 %v2437, %v2407
        %v2439 = vadd.f32 %v2438, %v2408
        %v2440 = vadd.f32 %v2439, %v2409
        %v2441 = vadd.f32 %v2440, %v2410
        %v2442 = vadd.f32 %v2441, %v2411
        %v2443 = vadd.f32 %v2442, %v2412
        %v2444 = vadd.f32 %v2443, %v2413
        %v2445 = vadd.f32 %v2444, %v2414
        %v2446 = vadd.f32 %v2445, %v2415
        %v2447 = vrot.slane %v2446, 4
        %v2448 = vadd.f32 %v2446, %v2447
        %v2449 = vrot.slane %v2448, 2
        %v2450 = vadd.f32 %v2448, %v2449
        %v2451 = vrot.slane %v2450, 1
        %v2452 = vadd.f32 %v2450, %v2451
        %v2453 = vmul.f32 %v2452, 0.00390625
        %v2454 = vadd.f32 %v2453, 1e-05
        %v2455 = vrsqrt.pop %v2454
        %v2456 = vsub.f32 0.0, %v2351
        %v2457 = vmul.f32 %v2456, %v2455
        %v2458 = vmul.f32 %v2282, %v2455
        %v2459 = vmul.f32 %v2283, %v2455
        %v2460 = vmul.f32 %v2284, %v2455
        %v2461 = vmul.f32 %v2285, %v2455
        %v2462 = vmul.f32 %v2286, %v2455
        %v2463 = vmul.f32 %v2287, %v2455
        %v2464 = vmul.f32 %v2288, %v2455
        %v2465 = vmul.f32 %v2289, %v2455
        %v2466 = vmul.f32 %v2290, %v2455
        %v2467 = vmul.f32 %v2291, %v2455
        %v2468 = vmul.f32 %v2292, %v2455
        %v2469 = vmul.f32 %v2293, %v2455
        %v2470 = vmul.f32 %v2294, %v2455
        %v2471 = vmul.f32 %v2295, %v2455
        %v2472 = vmul.f32 %v2296, %v2455
        %v2473 = vmul.f32 %v2297, %v2455
        %v2474 = vmul.f32 %v2298, %v2455
        %v2475 = vmul.f32 %v2299, %v2455
        %v2476 = vmul.f32 %v2300, %v2455
        %v2477 = vmul.f32 %v2301, %v2455
        %v2478 = vmul.f32 %v2302, %v2455
        %v2479 = vmul.f32 %v2303, %v2455
        %v2480 = vmul.f32 %v2304, %v2455
        %v2481 = vmul.f32 %v2305, %v2455
        %v2482 = vmul.f32 %v2306, %v2455
        %v2483 = vmul.f32 %v2307, %v2455
        %v2484 = vmul.f32 %v2308, %v2455
        %v2485 = vmul.f32 %v2309, %v2455
        %v2486 = vmul.f32 %v2310, %v2455
        %v2487 = vmul.f32 %v2311, %v2455
        %v2488 = vmul.f32 %v2312, %v2455
        %v2489 = vmul.f32 %v2313, %v2455
        %v2490 = vadd.f32 %v2458, %v2457
        %v2491 = vadd.f32 %v2459, %v2457
        %v2492 = vadd.f32 %v2460, %v2457
        %v2493 = vadd.f32 %v2461, %v2457
        %v2494 = vadd.f32 %v2462, %v2457
        %v2495 = vadd.f32 %v2463, %v2457
        %v2496 = vadd.f32 %v2464, %v2457
        %v2497 = vadd.f32 %v2465, %v2457
        %v2498 = vadd.f32 %v2466, %v2457
        %v2499 = vadd.f32 %v2467, %v2457
        %v2500 = vadd.f32 %v2468, %v2457
        %v2501 = vadd.f32 %v2469, %v2457
        %v2502 = vadd.f32 %v2470, %v2457
        %v2503 = vadd.f32 %v2471, %v2457
        %v2504 = vadd.f32 %v2472, %v2457
        %v2505 = vadd.f32 %v2473, %v2457
        %v2506 = vadd.f32 %v2474, %v2457
        %v2507 = vadd.f32 %v2475, %v2457
        %v2508 = vadd.f32 %v2476, %v2457
        %v2509 = vadd.f32 %v2477, %v2457
        %v2510 = vadd.f32 %v2478, %v2457
        %v2511 = vadd.f32 %v2479, %v2457
        %v2512 = vadd.f32 %v2480, %v2457
        %v2513 = vadd.f32 %v2481, %v2457
        %v2514 = vadd.f32 %v2482, %v2457
        %v2515 = vadd.f32 %v2483, %v2457
        %v2516 = vadd.f32 %v2484, %v2457
        %v2517 = vadd.f32 %v2485, %v2457
        %v2518 = vadd.f32 %v2486, %v2457
        %v2519 = vadd.f32 %v2487, %v2457
        %v2520 = vadd.f32 %v2488, %v2457
        %v2521 = vadd.f32 %v2489, %v2457
        %v2522 = vmax.f32 %v2490, 0.0
        %v2523 = vmax.f32 %v2491, 0.0
        %v2524 = vmax.f32 %v2492, 0.0
        %v2525 = vmax.f32 %v2493, 0.0
        %v2526 = vmax.f32 %v2494, 0.0
        %v2527 = vmax.f32 %v2495, 0.0
        %v2528 = vmax.f32 %v2496, 0.0
        %v2529 = vmax.f32 %v2497, 0.0
        %v2530 = vmax.f32 %v2498, 0.0
        %v2531 = vmax.f32 %v2499, 0.0
        %v2532 = vmax.f32 %v2500, 0.0
        %v2533 = vmax.f32 %v2501, 0.0
        %v2534 = vmax.f32 %v2502, 0.0
        %v2535 = vmax.f32 %v2503, 0.0
        %v2536 = vmax.f32 %v2504, 0.0
        %v2537 = vmax.f32 %v2505, 0.0
        %v2538 = vmax.f32 %v2506, 0.0
        %v2539 = vmax.f32 %v2507, 0.0
        %v2540 = vmax.f32 %v2508, 0.0
        %v2541 = vmax.f32 %v2509, 0.0
        %v2542 = vmax.f32 %v2510, 0.0
        %v2543 = vmax.f32 %v2511, 0.0
        %v2544 = vmax.f32 %v2512, 0.0
        %v2545 = vmax.f32 %v2513, 0.0
        %v2546 = vmax.f32 %v2514, 0.0
        %v2547 = vmax.f32 %v2515, 0.0
        %v2548 = vmax.f32 %v2516, 0.0
        %v2549 = vmax.f32 %v2517, 0.0
        %v2550 = vmax.f32 %v2518, 0.0
        %v2551 = vmax.f32 %v2519, 0.0
        %v2552 = vmax.f32 %v2520, 0.0
        %v2553 = vmax.f32 %v2521, 0.0
        %2554 = vst [vmem:[%s250 + $0x1] sm:$0xff] %v2522
        %2555 = vst [vmem:[%s250 + $0x9] sm:$0xff] %v2523
        %2556 = vst [vmem:[%s250 + $0x19] sm:$0xff] %v2524
        %2557 = vst [vmem:[%s250 + $0x21] sm:$0xff] %v2525
        %2558 = vst [vmem:[%s250 + $0x31] sm:$0xff] %v2526
        %2559 = vst [vmem:[%s250 + $0x39] sm:$0xff] %v2527
        %2560 = vst [vmem:[%s250 + $0x49] sm:$0xff] %v2528
        %2561 = vst [vmem:[%s250 + $0x51] sm:$0xff] %v2529
        %2562 = vst [vmem:[%s250 + $0x61] sm:$0xff] %v2530
        %2563 = vst [vmem:[%s250 + $0x69] sm:$0xff] %v2531
        %2564 = vst [vmem:[%s250 + $0x79] sm:$0xff] %v2532
        %2565 = vst [vmem:[%s250 + $0x81] sm:$0xff] %v2533
        %2566 = vst [vmem:[%s250 + $0x91] sm:$0xff] %v2534
        %2567 = vst [vmem:[%s250 + $0x99] sm:$0xff] %v2535
        %2568 = vst [vmem:[%s250 + $0xa9] sm:$0xff] %v2536
        %2569 = vst [vmem:[%s250 + $0xb1] sm:$0xff] %v2537
        %2570 = vst [vmem:[%s250 + $0xc1] sm:$0xff] %v2538
        %2571 = vst [vmem:[%s250 + $0xc9] sm:$0xff] %v2539
        %2572 = vst [vmem:[%s250 + $0xd9] sm:$0xff] %v2540
        %2573 = vst [vmem:[%s250 + $0xe1] sm:$0xff] %v2541
        %2574 = vst [vmem:[%s250 + $0xf1] sm:$0xff] %v2542
        %2575 = vst [vmem:[%s250 + $0xf9] sm:$0xff] %v2543
        %2576 = vst [vmem:[%s250 + $0x109] sm:$0xff] %v2544
        %2577 = vst [vmem:[%s250 + $0x111] sm:$0xff] %v2545
        %2578 = vst [vmem:[%s250 + $0x121] sm:$0xff] %v2546
        %2579 = vst [vmem:[%s250 + $0x129] sm:$0xff] %v2547
        %2580 = vst [vmem:[%s250 + $0x139] sm:$0xff] %v2548
        %2581 = vst [vmem:[%s250 + $0x141] sm:$0xff] %v2549
        %2582 = vst [vmem:[%s250 + $0x151] sm:$0xff] %v2550
        %2583 = vst [vmem:[%s250 + $0x159] sm:$0xff] %v2551
        %2584 = vst [vmem:[%s250 + $0x169] sm:$0xff] %v2552
        %2585 = vst [vmem:[%s250 + $0x171] sm:$0xff] %v2553
        %2586 = vst [vmem:[#allocation2 + $0x1] sm:$0xff] %v2524
        %2587 = vst [vmem:[#allocation2 + $0x9] sm:$0xff] %v2525
        %2588 = vst [vmem:[%s285 + $0x1] sm:$0xff] %v2550
        %2589 = vst [vmem:[%s285 + $0x9] sm:$0xff] %v2551
        %v2590 = vld [vmem:[#allocation2 + $0x2] sm:$0x1]
        %v2591 = vld [vmem:[#allocation2 + $0x1a] sm:$0x1]
        %v2592 = vld [vmem:[#allocation2 + $0x32] sm:$0x1]
        %v2593 = vld [vmem:[#allocation2 + $0x4a] sm:$0x1]
        %v2594 = vld [vmem:[#allocation2 + $0x62] sm:$0x1]
        %v2595 = vld [vmem:[#allocation2 + $0x7a] sm:$0x1]
        %v2596 = vld [vmem:[#allocation2 + $0x92] sm:$0x1]
        %v2597 = vld [vmem:[#allocation2 + $0xaa] sm:$0x1]
        %v2598 = vld [vmem:[#allocation2 + $0xc2] sm:$0x1]
        %v2599 = vld [vmem:[#allocation2 + $0xda] sm:$0x1]
        %v2600 = vld [vmem:[#allocation2 + $0xf2] sm:$0x1]
        %v2601 = vld [vmem:[#allocation2 + $0x10a] sm:$0x1]
        %v2602 = vld [vmem:[#allocation2 + $0x122] sm:$0x1]
        %v2603 = vld [vmem:[#allocation2 + $0x13a] sm:$0x1]
        %v2604 = vld [vmem:[#allocation2 + $0x152] sm:$0x1]
        %v2605 = vld [vmem:[#allocation2 + $0x16a] sm:$0x1]
        %v2606 = vld [vmem:[#allocation2 + $0x182] sm:$0x1]
        %v2607 = vld [vmem:[#allocation2 + $0x19a] sm:$0x1]
        %2608 = vst [vmem:[#allocation2] sm:$0x1] %v2590
        %2609 = vst [vmem:[#allocation2 + $0x18] sm:$0x1] %v2591
        %2610 = vst [vmem:[#allocation2 + $0x30] sm:$0x1] %v2592
        %2611 = vst [vmem:[#allocation2 + $0x48] sm:$0x1] %v2593
        %2612 = vst [vmem:[#allocation2 + $0x60] sm:$0x1] %v2594
        %2613 = vst [vmem:[#allocation2 + $0x78] sm:$0x1] %v2595
        %2614 = vst [vmem:[#allocation2 + $0x90] sm:$0x1] %v2596
        %2615 = vst [vmem:[#allocation2 + $0xa8] sm:$0x1] %v2597
        %2616 = vst [vmem:[#allocation2 + $0xc0] sm:$0x1] %v2598
        %2617 = vst [vmem:[#allocation2 + $0xd8] sm:$0x1] %v2599
        %2618 = vst [vmem:[#allocation2 + $0xf0] sm:$0x1] %v2600
        %2619 = vst [vmem:[#allocation2 + $0x108] sm:$0x1] %v2601
        %2620 = vst [vmem:[#allocation2 + $0x120] sm:$0x1] %v2602
        %2621 = vst [vmem:[#allocation2 + $0x138] sm:$0x1] %v2603
        %2622 = vst [vmem:[#allocation2 + $0x150] sm:$0x1] %v2604
        %2623 = vst [vmem:[#allocation2 + $0x168] sm:$0x1] %v2605
        %2624 = vst [vmem:[#allocation2 + $0x180] sm:$0x1] %v2606
        %2625 = vst [vmem:[#allocation2 + $0x198] sm:$0x1] %v2607
        %v2626 = vld [vmem:[#allocation2 + $0xf] sm:$0x1]
        %v2627 = vld [vmem:[#allocation2 + $0x27] sm:$0x1]
        %v2628 = vld [vmem:[#allocation2 + $0x3f] sm:$0x1]
        %v2629 = vld [vmem:[#allocation2 + $0x57] sm:$0x1]
        %v2630 = vld [vmem:[#allocation2 + $0x6f] sm:$0x1]
        %v2631 = vld [vmem:[#allocation2 + $0x87] sm:$0x1]
        %v2632 = vld [vmem:[#allocation2 + $0x9f] sm:$0x1]
        %v2633 = vld [vmem:[#allocation2 + $0xb7] sm:$0x1]
        %v2634 = vld [vmem:[#allocation2 + $0xcf] sm:$0x1]
        %v2635 = vld [vmem:[#allocation2 + $0xe7] sm:$0x1]
        %v2636 = vld [vmem:[#allocation2 + $0xff] sm:$0x1]
        %v2637 = vld [vmem:[#allocation2 + $0x117] sm:$0x1]
        %v2638 = vld [vmem:[#allocation2 + $0x12f] sm:$0x1]
        %v2639 = vld [vmem:[#allocation2 + $0x147] sm:$0x1]
        %v2640 = vld [vmem:[#allocation2 + $0x15f] sm:$0x1]
        %v2641 = vld [vmem:[#allocation2 + $0x177] sm:$0x1]
        %v2642 = vld [vmem:[#allocation2 + $0x18f] sm:$0x1]
        %v2643 = vld [vmem:[#allocation2 + $0x1a7] sm:$0x1]
        %2644 = vst [vmem:[#allocation2 + $0x11] sm:$0x1] %v2626
        %2645 = vst [vmem:[#allocation2 + $0x29] sm:$0x1] %v2627
        %2646 = vst [vmem:[#allocation2 + $0x41] sm:$0x1] %v2628
        %2647 = vst [vmem:[#allocation2 + $0x59] sm:$0x1] %v2629
        %2648 = vst [vmem:[#allocation2 + $0x71] sm:$0x1] %v2630
        %2649 = vst [vmem:[#allocation2 + $0x89] sm:$0x1] %v2631
        %2650 = vst [vmem:[#allocation2 + $0xa1] sm:$0x1] %v2632
        %2651 = vst [vmem:[#allocation2 + $0xb9] sm:$0x1] %v2633
        %2652 = vst [vmem:[#allocation2 + $0xd1] sm:$0x1] %v2634
        %2653 = vst [vmem:[#allocation2 + $0xe9] sm:$0x1] %v2635
        %2654 = vst [vmem:[#allocation2 + $0x101] sm:$0x1] %v2636
        %2655 = vst [vmem:[#allocation2 + $0x119] sm:$0x1] %v2637
        %2656 = vst [vmem:[#allocation2 + $0x131] sm:$0x1] %v2638
        %2657 = vst [vmem:[#allocation2 + $0x149] sm:$0x1] %v2639
        %2658 = vst [vmem:[#allocation2 + $0x161] sm:$0x1] %v2640
        %2659 = vst [vmem:[#allocation2 + $0x179] sm:$0x1] %v2641
        %2660 = vst [vmem:[#allocation2 + $0x191] sm:$0x1] %v2642
        %2661 = vst [vmem:[#allocation2 + $0x1a9] sm:$0x1] %v2643
        %v2662 = vld [vmem:[#allocation2] sm:$0xff]
        %v2663 = vld [vmem:[#allocation2 + $0x8] sm:$0xff]
        %v2664 = vld [vmem:[#allocation2 + $0x10] sm:$0x3]
        %v2665 = vld [vmem:[#allocation2 + $0x18] sm:$0xff]
        %v2666 = vld [vmem:[#allocation2 + $0x20] sm:$0xff]
        %v2667 = vld [vmem:[#allocation2 + $0x28] sm:$0x3]
        %v2668 = vld [vmem:[#allocation2 + $0x30] sm:$0xff]
        %v2669 = vld [vmem:[#allocation2 + $0x38] sm:$0xff]
        %v2670 = vld [vmem:[#allocation2 + $0x40] sm:$0x3]
        %v2671 = vld [vmem:[#allocation2 + $0x48] sm:$0xff]
        %v2672 = vld [vmem:[#allocation2 + $0x50] sm:$0xff]
        %v2673 = vld [vmem:[#allocation2 + $0x58] sm:$0x3]
        %v2674 = vld [vmem:[#allocation2 + $0x60] sm:$0xff]
        %v2675 = vld [vmem:[#allocation2 + $0x68] sm:$0xff]
        %v2676 = vld [vmem:[#allocation2 + $0x70] sm:$0x3]
        %v2677 = vld [vmem:[#allocation2 + $0x78] sm:$0xff]
        %v2678 = vld [vmem:[#allocation2 + $0x80] sm:$0xff]
        %v2679 = vld [vmem:[#allocation2 + $0x88] sm:$0x3]
        %v2680 = vld [vmem:[#allocation2 + $0x90] sm:$0xff]
        %v2681 = vld [vmem:[#allocation2 + $0x98] sm:$0xff]
        %v2682 = vld [vmem:[#allocation2 + $0xa0] sm:$0x3]
        %v2683 = vld [vmem:[#allocation2 + $0xa8] sm:$0xff]
        %v2684 = vld [vmem:[#allocation2 + $0xb0] sm:$0xff]
        %v2685 = vld [vmem:[#allocation2 + $0xb8] sm:$0x3]
        %v2686 = vld [vmem:[#allocation2 + $0xc0] sm:$0xff]
        %v2687 = vld [vmem:[#allocation2 + $0xc8] sm:$0xff]
        %v2688 = vld [vmem:[#allocation2 + $0xd0] sm:$0x3]
        %v2689 = vld [vmem:[#allocation2 + $0xd8] sm:$0xff]
        %v2690 = vld [vmem:[#allocation2 + $0xe0] sm:$0xff]
        %v2691 = vld [vmem:[#allocation2 + $0xe8] sm:$0x3]
        %v2692 = vld [vmem:[#allocation2 + $0xf0] sm:$0xff]
        %v2693 = vld [vmem:[#allocation2 + $0xf8] sm:$0xff]
        %v2694 = vld [vmem:[#allocation2 + $0x100] sm:$0x3]
        %v2695 = vld [vmem:[#allocation2 + $0x108] sm:$0xff]
        %v2696 = vld [vmem:[#allocation2 + $0x110] sm:$0xff]
        %v2697 = vld [vmem:[#allocation2 + $0x118] sm:$0x3]
        %v2698 = vld [vmem:[#allocation2 + $0x120] sm:$0xff]
        %v2699 = vld [vmem:[#allocation2 + $0x128] sm:$0xff]
        %v2700 = vld [vmem:[#allocation2 + $0x130] sm:$0x3]
        %v2701 = vld [vmem:[#allocation2 + $0x138] sm:$0xff]
        %v2702 = vld [vmem:[#allocation2 + $0x140] sm:$0xff]
        %v2703 = vld [vmem:[#allocation2 + $0x148] sm:$0x3]
        %v2704 = vld [vmem:[#allocation2 + $0x150] sm:$0xff]
        %v2705 = vld [vmem:[#allocation2 + $0x158] sm:$0xff]
        %v2706 = vld [vmem:[#allocation2 + $0x160] sm:$0x3]
        %v2707 = vld [vmem:[#allocation2 + $0x168] sm:$0xff]
        %v2708 = vld [vmem:[#allocation2 + $0x170] sm:$0xff]
        %v2709 = vld [vmem:[#allocation2 + $0x178] sm:$0x3]
        %v2710 = vld [vmem:[#allocation2 + $0x180] sm:$0xff]
        %v2711 = vld [vmem:[#allocation2 + $0x188] sm:$0xff]
        %v2712 = vld [vmem:[#allocation2 + $0x190] sm:$0x3]
        %v2713 = vld [vmem:[#allocation2 + $0x198] sm:$0xff]
        %v2714 = vld [vmem:[#allocation2 + $0x1a0] sm:$0xff]
        %v2715 = vld [vmem:[#allocation2 + $0x1a8] sm:$0x3]
        %v2716 = vld [vmem:[#allocation9] sm:$0xff]
        %v2717 = vld [vmem:[#allocation9 + $0x8] sm:$0xff]
        %v2718 = vld [vmem:[#allocation9 + $0x10] sm:$0xff]
        %v2719 = vld [vmem:[#allocation9 + $0x18] sm:$0xff]
        %v2720 = vld [vmem:[#allocation9 + $0x20] sm:$0xff]
        %v2721 = vld [vmem:[#allocation9 + $0x28] sm:$0xff]
        %v2722 = vld [vmem:[#allocation9 + $0x30] sm:$0xff]
        %v2723 = vld [vmem:[#allocation9 + $0x38] sm:$0xff]
        %v2724 = vld [vmem:[#allocation9 + $0x40] sm:$0xff]
        %v2725 = vld [vmem:[#allocation9 + $0x48] sm:$0xff]
        %v2726 = vld [vmem:[#allocation9 + $0x50] sm:$0xff]
        %v2727 = vld [vmem:[#allocation9 + $0x58] sm:$0xff]
        %v2728 = vld [vmem:[#allocation9 + $0x60] sm:$0xff]
        %v2729 = vld [vmem:[#allocation9 + $0x68] sm:$0xff]
        %v2730 = vld [vmem:[#allocation9 + $0x70] sm:$0xff]
        %v2731 = vld [vmem:[#allocation9 + $0x78] sm:$0xff]
        %v2732 = vld [vmem:[#allocation9 + $0x80] sm:$0xff]
        %v2733 = vld [vmem:[#allocation9 + $0x88] sm:$0xff]
        %v2734 = vld [vmem:[#allocation9 + $0x90] sm:$0xff]
        %v2735 = vld [vmem:[#allocation9 + $0x98] sm:$0xff]
        %v2736 = vld [vmem:[#allocation9 + $0xa0] sm:$0xff]
        %v2737 = vld [vmem:[#allocation9 + $0xa8] sm:$0xff]
        %v2738 = vld [vmem:[#allocation9 + $0xb0] sm:$0xff]
        %v2739 = vld [vmem:[#allocation9 + $0xb8] sm:$0xff]
        %v2740 = vld [vmem:[#allocation9 + $0xc0] sm:$0xff]
        %v2741 = vld [vmem:[#allocation9 + $0xc8] sm:$0xff]
        %v2742 = vld [vmem:[#allocation9 + $0xd0] sm:$0xff]
        %v2743 = vld [vmem:[#allocation9 + $0xd8] sm:$0xff]
        %v2744 = vld [vmem:[#allocation9 + $0xe0] sm:$0xff]
        %v2745 = vld [vmem:[#allocation9 + $0xe8] sm:$0xff]
        %v2746 = vld [vmem:[#allocation9 + $0xf0] sm:$0xff]
        %v2747 = vld [vmem:[#allocation9 + $0xf8] sm:$0xff]
        %v2748 = vld [vmem:[#allocation9 + $0x100] sm:$0xff]
        %v2749 = vld [vmem:[#allocation9 + $0x108] sm:$0xff]
        %v2750 = vld [vmem:[#allocation9 + $0x110] sm:$0xff]
        %v2751 = vld [vmem:[#allocation9 + $0x118] sm:$0xff]
        %v2752 = vld [vmem:[#allocation9 + $0x120] sm:$0xff]
        %v2753 = vld [vmem:[#allocation9 + $0x128] sm:$0xff]
        %v2754 = vld [vmem:[#allocation9 + $0x130] sm:$0xff]
        %v2755 = vld [vmem:[#allocation9 + $0x138] sm:$0xff]
        %v2756 = vld [vmem:[#allocation9 + $0x140] sm:$0xff]
        %v2757 = vld [vmem:[#allocation9 + $0x148] sm:$0xff]
        %v2758 = vld [vmem:[#allocation9 + $0x150] sm:$0xff]
        %v2759 = vld [vmem:[#allocation9 + $0x158] sm:$0xff]
        %v2760 = vld [vmem:[#allocation9 + $0x160] sm:$0xff]
        %v2761 = vld [vmem:[#allocation9 + $0x168] sm:$0xff]
        %v2762 = vld [vmem:[#allocation9 + $0x170] sm:$0xff]
        %v2763 = vld [vmem:[#allocation9 + $0x178] sm:$0xff]
        %v2818 = vrot.slane %v2662, 1
        %v2819 = vrot.slane %v2663, 1
        %v2820 = vsel %vm516, %v2818, %v2819
        %v2821 = vrot.slane %v2665, 1
        %v2822 = vrot.slane %v2666, 1
        %v2823 = vsel %vm516, %v2821, %v2822
        %v2824 = vrot.slane %v2668, 1
        %v2825 = vrot.slane %v2669, 1
        %v2826 = vsel %vm516, %v2824, %v2825
        %v2827 = vrot.slane %v2664, 1
        %v2828 = vsel %vm516, %v2819, %v2827
        %v2829 = vrot.slane %v2667, 1
        %v2830 = vsel %vm516, %v2822, %v2829
        %v2831 = vrot.slane %v2670, 1
        %v2832 = vsel %vm516, %v2825, %v2831
        %v2833 = vrot.slane %v2671, 1
        %v2834 = vrot.slane %v2672, 1
        %v2835 = vsel %vm516, %v2833, %v2834
        %v2836 = vrot.slane %v2673, 1
        %v2837 = vsel %vm516, %v2834, %v2836
        %v2838 = vrot.slane %v2674, 1
        %v2839 = vrot.slane %v2675, 1
        %v2840 = vsel %vm516, %v2838, %v2839
        %v2841 = vrot.slane %v2676, 1
        %v2842 = vsel %vm516, %v2839, %v2841
        %v2843 = vrot.slane %v2677, 1
        %v2844 = vrot.slane %v2678, 1
        %v2845 = vsel %vm516, %v2843, %v2844
        %v2846 = vrot.slane %v2679, 1
        %v2847 = vsel %vm516, %v2844, %v2846
        %v2848 = vrot.slane %v2680, 1
        %v2849 = vrot.slane %v2681, 1
        %v2850 = vsel %vm516, %v2848, %v2849
        %v2851 = vrot.slane %v2682, 1
        %v2852 = vsel %vm516, %v2849, %v2851
        %v2853 = vrot.slane %v2683, 1
        %v2854 = vrot.slane %v2684, 1
        %v2855 = vsel %vm516, %v2853, %v2854
        %v2856 = vrot.slane %v2685, 1
        %v2857 = vsel %vm516, %v2854, %v2856
        %v2858 = vrot.slane %v2686, 1
        %v2859 = vrot.slane %v2687, 1
        %v2860 = vsel %vm516, %v2858, %v2859
        %v2861 = vrot.slane %v2688, 1
        %v2862 = vsel %vm516, %v2859, %v2861
        %v2863 = vrot.slane %v2689, 1
        %v2864 = vrot.slane %v2690, 1
        %v2865 = vsel %vm516, %v2863, %v2864
        %v2866 = vrot.slane %v2691, 1
        %v2867 = vsel %vm516, %v2864, %v2866
        %v2868 = vrot.slane %v2692, 1
        %v2869 = vrot.slane %v2693, 1
        %v2870 = vsel %vm516, %v2868, %v2869
        %v2871 = vrot.slane %v2694, 1
        %v2872 = vsel %vm516, %v2869, %v2871
        %v2873 = vrot.slane %v2695, 1
        %v2874 = vrot.slane %v2696, 1
        %v2875 = vsel %vm516, %v2873, %v2874
        %v2876 = vrot.slane %v2697, 1
        %v2877 = vsel %vm516, %v2874, %v2876
        %v2878 = vrot.slane %v2698, 1
        %v2879 = vrot.slane %v2699, 1
        %v2880 = vsel %vm516, %v2878, %v2879
        %v2881 = vrot.slane %v2700, 1
        %v2882 = vsel %vm516, %v2879, %v2881
        %v2883 = vrot.slane %v2701, 1
        %v2884 = vrot.slane %v2702, 1
        %v2885 = vsel %vm516, %v2883, %v2884
        %v2886 = vrot.slane %v2703, 1
        %v2887 = vsel %vm516, %v2884, %v2886
        %v2888 = vrot.slane %v2704, 1
        %v2889 = vrot.slane %v2705, 1
        %v2890 = vsel %vm516, %v2888, %v2889
        %v2891 = vrot.slane %v2706, 1
        %v2892 = vsel %vm516, %v2889, %v2891
        %v2893 = vrot.slane %v2707, 1
        %v2894 = vrot.slane %v2708, 1
        %v2895 = vsel %vm516, %v2893, %v2894
        %v2896 = vrot.slane %v2709, 1
        %v2897 = vsel %vm516, %v2894, %v2896
        %v2898 = vrot.slane %v2710, 1
        %v2899 = vrot.slane %v2711, 1
        %v2900 = vsel %vm516, %v2898, %v2899
        %v2901 = vrot.slane %v2712, 1
        %v2902 = vsel %vm516, %v2899, %v2901
        %v2903 = vrot.slane %v2713, 1
        %v2904 = vrot.slane %v2714, 1
        %v2905 = vsel %vm516, %v2903, %v2904
        %v2906 = vrot.slane %v2715, 1
        %v2907 = vsel %vm516, %v2904, %v2906
        %s2944 = scalar_lea.vmem [#allocation9], 384
        %v2945 = vld [vmem:[%s2944] sm:$0xff]
        %v2946 = vld [vmem:[%s2944 + $0x8] sm:$0xff]
        %v2947 = vld [vmem:[%s2944 + $0x10] sm:$0xff]
        %v2948 = vld [vmem:[%s2944 + $0x18] sm:$0xff]
        %v2949 = vld [vmem:[%s2944 + $0x20] sm:$0xff]
        %v2950 = vld [vmem:[%s2944 + $0x28] sm:$0xff]
        %v2951 = vld [vmem:[%s2944 + $0x30] sm:$0xff]
        %v2952 = vld [vmem:[%s2944 + $0x38] sm:$0xff]
        %v2953 = vld [vmem:[%s2944 + $0x40] sm:$0xff]
        %v2954 = vld [vmem:[%s2944 + $0x48] sm:$0xff]
        %v2955 = vld [vmem:[%s2944 + $0x50] sm:$0xff]
        %v2956 = vld [vmem:[%s2944 + $0x58] sm:$0xff]
        %v2957 = vld [vmem:[%s2944 + $0x60] sm:$0xff]
        %v2958 = vld [vmem:[%s2944 + $0x68] sm:$0xff]
        %v2959 = vld [vmem:[%s2944 + $0x70] sm:$0xff]
        %v2960 = vld [vmem:[%s2944 + $0x78] sm:$0xff]
        %v2961 = vld [vmem:[%s2944 + $0x80] sm:$0xff]
        %v2962 = vld [vmem:[%s2944 + $0x88] sm:$0xff]
        %v2963 = vld [vmem:[%s2944 + $0x90] sm:$0xff]
        %v2964 = vld [vmem:[%s2944 + $0x98] sm:$0xff]
        %v2965 = vld [vmem:[%s2944 + $0xa0] sm:$0xff]
        %v2966 = vld [vmem:[%s2944 + $0xa8] sm:$0xff]
        %v2967 = vld [vmem:[%s2944 + $0xb0] sm:$0xff]
        %v2968 = vld [vmem:[%s2944 + $0xb8] sm:$0xff]
        %v2969 = vld [vmem:[%s2944 + $0xc0] sm:$0xff]
        %v2970 = vld [vmem:[%s2944 + $0xc8] sm:$0xff]
        %v2971 = vld [vmem:[%s2944 + $0xd0] sm:$0xff]
        %v2972 = vld [vmem:[%s2944 + $0xd8] sm:$0xff]
        %v2973 = vld [vmem:[%s2944 + $0xe0] sm:$0xff]
        %v2974 = vld [vmem:[%s2944 + $0xe8] sm:$0xff]
        %v2975 = vld [vmem:[%s2944 + $0xf0] sm:$0xff]
        %v2976 = vld [vmem:[%s2944 + $0xf8] sm:$0xff]
        %v2977 = vld [vmem:[%s2944 + $0x100] sm:$0xff]
        %v2978 = vld [vmem:[%s2944 + $0x108] sm:$0xff]
        %v2979 = vld [vmem:[%s2944 + $0x110] sm:$0xff]
        %v2980 = vld [vmem:[%s2944 + $0x118] sm:$0xff]
        %v2981 = vld [vmem:[%s2944 + $0x120] sm:$0xff]
        %v2982 = vld [vmem:[%s2944 + $0x128] sm:$0xff]
        %v2983 = vld [vmem:[%s2944 + $0x130] sm:$0xff]
        %v2984 = vld [vmem:[%s2944 + $0x138] sm:$0xff]
        %v2985 = vld [vmem:[%s2944 + $0x140] sm:$0xff]
        %v2986 = vld [vmem:[%s2944 + $0x148] sm:$0xff]
        %v2987 = vld [vmem:[%s2944 + $0x150] sm:$0xff]
        %v2988 = vld [vmem:[%s2944 + $0x158] sm:$0xff]
        %v2989 = vld [vmem:[%s2944 + $0x160] sm:$0xff]
        %v2990 = vld [vmem:[%s2944 + $0x168] sm:$0xff]
        %v2991 = vld [vmem:[%s2944 + $0x170] sm:$0xff]
        %v2992 = vld [vmem:[%s2944 + $0x178] sm:$0xff]
        %2993 = vmatprep.subr.mxu0 0.0
        %2994 = vmatpush1.msra.mxu0 %v2945
        %2995 = vmatprep.subr.mxu0 0.0
        %2996 = vmatpush1.msra.mxu0 %v2946
        %2997 = vmatprep.subr.mxu0 0.0
        %2998 = vmatpush1.msra.mxu0 %v2947
        %2999 = vmatprep.subr.mxu0 0.0
        %3000 = vmatpush1.msra.mxu0 %v2948
        %3001 = vmatprep.subr.mxu0 0.0
        %3002 = vmatpush1.msra.mxu0 %v2949
        %3003 = vmatprep.subr.mxu0 0.0
        %3004 = vmatpush1.msra.mxu0 %v2950
        %3005 = vmatprep.subr.mxu0 0.0
        %3006 = vmatpush1.msra.mxu0 %v2951
        %3007 = vmatprep.subr.mxu0 0.0
        %3008 = vmatpush1.msra.mxu0 %v2952
        %3009 = vmatprep.subr.mxu0 0.0
        %3010 = vmatpush1.msra.mxu0 %v2953
        %3011 = vmatprep.subr.mxu0 0.0
        %3012 = vmatpush1.msra.mxu0 %v2954
        %3013 = vmatprep.subr.mxu0 0.0
        %3014 = vmatpush1.msra.mxu0 %v2955
        %3015 = vmatprep.subr.mxu0 0.0
        %3016 = vmatpush1.msra.mxu0 %v2956
        %3017 = vmatprep.subr.mxu0 0.0
        %3018 = vmatpush1.msra.mxu0 %v2957
        %3019 = vmatprep.subr.mxu0 0.0
        %3020 = vmatpush1.msra.mxu0 %v2958
        %3021 = vmatprep.subr.mxu0 0.0
        %3022 = vmatpush1.msra.mxu0 %v2959
        %3023 = vmatprep.subr.mxu0 0.0
        %3024 = vmatpush1.msra.mxu0 %v2960
        %3025 = vmatprep.subr.mxu0 0.0
        %3026 = vmatpush1.msra.mxu0 %v2961
        %3027 = vmatprep.subr.mxu0 0.0
        %3028 = vmatpush1.msra.mxu0 %v2962
        %3029 = vmatprep.subr.mxu0 0.0
        %3030 = vmatpush1.msra.mxu0 %v2963
        %3031 = vmatprep.subr.mxu0 0.0
        %3032 = vmatpush1.msra.mxu0 %v2964
        %3033 = vmatprep.subr.mxu0 0.0
        %3034 = vmatpush1.msra.mxu0 %v2965
        %3035 = vmatprep.subr.mxu0 0.0
        %3036 = vmatpush1.msra.mxu0 %v2966
        %3037 = vmatprep.subr.mxu0 0.0
        %3038 = vmatpush1.msra.mxu0 %v2967
        %3039 = vmatprep.subr.mxu0 0.0
        %3040 = vmatpush1.msra.mxu0 %v2968
        %3041 = vmatprep.subr.mxu0 0.0
        %3042 = vmatpush1.msra.mxu0 %v2969
        %3043 = vmatprep.subr.mxu0 0.0
        %3044 = vmatpush1.msra.mxu0 %v2970
        %3045 = vmatprep.subr.mxu0 0.0
        %3046 = vmatpush1.msra.mxu0 %v2971
        %3047 = vmatprep.subr.mxu0 0.0
        %3048 = vmatpush1.msra.mxu0 %v2972
        %3049 = vmatprep.subr.mxu0 0.0
        %3050 = vmatpush1.msra.mxu0 %v2973
        %3051 = vmatprep.subr.mxu0 0.0
        %3052 = vmatpush1.msra.mxu0 %v2974
        %3053 = vmatprep.subr.mxu0 0.0
        %3054 = vmatpush1.msra.mxu0 %v2975
        %3055 = vmatprep.subr.mxu0 0.0
        %3056 = vmatpush1.msra.mxu0 %v2976
        %3057 = vmatprep.mubr.f32.mxu0 %v2823
        %3058 = vmatmul.mubr.f32.gmra.mrb[0].mxu0 %v2820
        %v3059 = vpop.f32.mrb[0].mxu0
        %v3060 = vadd.f32 0.0, %v3059
        %v3061 = vpop.f32.mrb[0].mxu0
        %3062 = vmatprep.mubr.f32.mxu0 %v2830
        %3063 = vmatmul.mubr.f32.gmra.mrb[0].mxu0 %v2828
        %v3064 = vpop.f32.mrb[0].mxu0
        %v3065 = vadd.f32 0.0, %v3064
        %v3066 = vpop.f32.mrb[0].mxu0
        %3067 = vmatprep.mubr.f32.mxu0 %v2826
        %3068 = vmatmul.mubr.f32.gmra.mrb[0].mxu0 %v2823
        %v3069 = vpop.f32.mrb[0].mxu0
        %v3070 = vadd.f32 0.0, %v3069
        %v3071 = vpop.f32.mrb[0].mxu0
        %3072 = vmatprep.mubr.f32.mxu0 %v2832
        %3073 = vmatmul.mubr.f32.gmra.mrb[0].mxu0 %v2830
        %v3074 = vpop.f32.mrb[0].mxu0
        %v3075 = vadd.f32 0.0, %v3074
        %v3076 = vpop.f32.mrb[0].mxu0
        %3077 = vmatprep.mubr.f32.mxu0 %v2835
        %3078 = vmatmul.mubr.f32.gmra.mrb[0].mxu0 %v2826
        %v3079 = vpop.f32.mrb[0].mxu0
        %v3080 = vadd.f32 0.0, %v3079
        %v3081 = vpop.f32.mrb[0].mxu0
        %3082 = vmatprep.mubr.f32.mxu0 %v2837
        %3083 = vmatmul.mubr.f32.gmra.mrb[0].mxu0 %v2832
        %v3084 = vpop.f32.mrb[0].mxu0
        %v3085 = vadd.f32 0.0, %v3084
        %v3086 = vpop.f32.mrb[0].mxu0
        %3087 = vmatprep.mubr.f32.mxu0 %v2840
        %3088 = vmatmul.mubr.f32.gmra.mrb[0].mxu0 %v2835
        %v3089 = vpop.f32.mrb[0].mxu0
        %v3090 = vadd.f32 0.0, %v3089
        %v3091 = vpop.f32.mrb[0].mxu0
        %3092 = vmatprep.mubr.f32.mxu0 %v2842
        %3093 = vmatmul.mubr.f32.gmra.mrb[0].mxu0 %v2837
        %v3094 = vpop.f32.mrb[0].mxu0
        %v3095 = vadd.f32 0.0, %v3094
        %v3096 = vpop.f32.mrb[0].mxu0
        %3097 = vmatprep.mubr.f32.mxu0 %v2845
        %3098 = vmatmul.mubr.f32.gmra.mrb[0].mxu0 %v2840
        %v3099 = vpop.f32.mrb[0].mxu0
        %v3100 = vadd.f32 0.0, %v3099
        %v3101 = vpop.f32.mrb[0].mxu0
        %3102 = vmatprep.mubr.f32.mxu0 %v2847
        %3103 = vmatmul.mubr.f32.gmra.mrb[0].mxu0 %v2842
        %v3104 = vpop.f32.mrb[0].mxu0
        %v3105 = vadd.f32 0.0, %v3104
        %v3106 = vpop.f32.mrb[0].mxu0
        %3107 = vmatprep.mubr.f32.mxu0 %v2850
        %3108 = vmatmul.mubr.f32.gmra.mrb[0].mxu0 %v2845
        %v3109 = vpop.f32.mrb[0].mxu0
        %v3110 = vadd.f32 0.0, %v3109
        %v3111 = vpop.f32.mrb[0].mxu0
        %3112 = vmatprep.mubr.f32.mxu0 %v2852
        %3113 = vmatmul.mubr.f32.gmra.mrb[0].mxu0 %v2847
        %v3114 = vpop.f32.mrb[0].mxu0
        %v3115 = vadd.f32 0.0, %v3114
        %v3116 = vpop.f32.mrb[0].mxu0
        %3117 = vmatprep.mubr.f32.mxu0 %v2855
        %3118 = vmatmul.mubr.f32.gmra.mrb[0].mxu0 %v2850
        %v3119 = vpop.f32.mrb[0].mxu0
        %v3120 = vadd.f32 0.0, %v3119
        %v3121 = vpop.f32.mrb[0].mxu0
        %3122 = vmatprep.mubr.f32.mxu0 %v2857
        %3123 = vmatmul.mubr.f32.gmra.mrb[0].mxu0 %v2852
        %v3124 = vpop.f32.mrb[0].mxu0
        %v3125 = vadd.f32 0.0, %v3124
        %v3126 = vpop.f32.mrb[0].mxu0
        %3127 = vmatprep.mubr.f32.mxu0 %v2860
        %3128 = vmatmul.mubr.f32.gmra.mrb[0].mxu0 %v2855
        %v3129 = vpop.f32.mrb[0].mxu0
        %v3130 = vadd.f32 0.0, %v3129
        %v3131 = vpop.f32.mrb[0].mxu0
        %3132 = vmatprep.mubr.f32.mxu0 %v2862
        %3133 = vmatmul.mubr.f32.gmra.mrb[0].mxu0 %v2857
        %v3134 = vpop.f32.mrb[0].mxu0
        %v3135 = vadd.f32 0.0, %v3134
        %v3136 = vpop.f32.mrb[0].mxu0
        %3137 = vmatprep.mubr.f32.mxu0 %v2865
        %3138 = vmatmul.mubr.f32.gmra.mrb[0].mxu0 %v2860
        %v3139 = vpop.f32.mrb[0].mxu0
        %v3140 = vadd.f32 0.0, %v3139
        %v3141 = vpop.f32.mrb[0].mxu0
        %3142 = vmatprep.mubr.f32.mxu0 %v2867
        %3143 = vmatmul.mubr.f32.gmra.mrb[0].mxu0 %v2862
        %v3144 = vpop.f32.mrb[0].mxu0
        %v3145 = vadd.f32 0.0, %v3144
        %v3146 = vpop.f32.mrb[0].mxu0
        %3147 = vmatprep.mubr.f32.mxu0 %v2870
        %3148 = vmatmul.mubr.f32.gmra.mrb[0].mxu0 %v2865
        %v3149 = vpop.f32.mrb[0].mxu0
        %v3150 = vadd.f32 0.0, %v3149
        %v3151 = vpop.f32.mrb[0].mxu0
        %3152 = vmatprep.mubr.f32.mxu0 %v2872
        %3153 = vmatmul.mubr.f32.gmra.mrb[0].mxu0 %v2867
        %v3154 = vpop.f32.mrb[0].mxu0
        %v3155 = vadd.f32 0.0, %v3154
        %v3156 = vpop.f32.mrb[0].mxu0
        %3157 = vmatprep.mubr.f32.mxu0 %v2875
        %3158 = vmatmul.mubr.f32.gmra.mrb[0].mxu0 %v2870
        %v3159 = vpop.f32.mrb[0].mxu0
        %v3160 = vadd.f32 0.0, %v3159
        %v3161 = vpop.f32.mrb[0].mxu0
        %3162 = vmatprep.mubr.f32.mxu0 %v2877
        %3163 = vmatmul.mubr.f32.gmra.mrb[0].mxu0 %v2872
        %v3164 = vpop.f32.mrb[0].mxu0
        %v3165 = vadd.f32 0.0, %v3164
        %v3166 = vpop.f32.mrb[0].mxu0
        %3167 = vmatprep.mubr.f32.mxu0 %v2880
        %3168 = vmatmul.mubr.f32.gmra.mrb[0].mxu0 %v2875
        %v3169 = vpop.f32.mrb[0].mxu0
        %v3170 = vadd.f32 0.0, %v3169
        %v3171 = vpop.f32.mrb[0].mxu0
        %3172 = vmatprep.mubr.f32.mxu0 %v2882
        %3173 = vmatmul.mubr.f32.gmra.mrb[0].mxu0 %v2877
        %v3174 = vpop.f32.mrb[0].mxu0
        %v3175 = vadd.f32 0.0, %v3174
        %v3176 = vpop.f32.mrb[0].mxu0
        %3177 = vmatprep.mubr.f32.mxu0 %v2885
        %3178 = vmatmul.mubr.f32.gmra.mrb[0].mxu0 %v2880
        %v3179 = vpop.f32.mrb[0].mxu0
        %v3180 = vadd.f32 0.0, %v3179
        %v3181 = vpop.f32.mrb[0].mxu0
        %3182 = vmatprep.mubr.f32.mxu0 %v2887
        %3183 = vmatmul.mubr.f32.gmra.mrb[0].mxu0 %v2882
        %v3184 = vpop.f32.mrb[0].mxu0
        %v3185 = vadd.f32 0.0, %v3184
        %v3186 = vpop.f32.mrb[0].mxu0
        %3187 = vmatprep.mubr.f32.mxu0 %v2890
        %3188 = vmatmul.mubr.f32.gmra.mrb[0].mxu0 %v2885
        %v3189 = vpop.f32.mrb[0].mxu0
        %v3190 = vadd.f32 0.0, %v3189
        %v3191 = vpop.f32.mrb[0].mxu0
        %3192 = vmatprep.mubr.f32.mxu0 %v2892
        %3193 = vmatmul.mubr.f32.gmra.mrb[0].mxu0 %v2887
        %v3194 = vpop.f32.mrb[0].mxu0
        %v3195 = vadd.f32 0.0, %v3194
        %v3196 = vpop.f32.mrb[0].mxu0
        %3197 = vmatprep.mubr.f32.mxu0 %v2895
        %3198 = vmatmul.mubr.f32.gmra.mrb[0].mxu0 %v2890
        %v3199 = vpop.f32.mrb[0].mxu0
        %v3200 = vadd.f32 0.0, %v3199
        %v3201 = vpop.f32.mrb[0].mxu0
        %3202 = vmatprep.mubr.f32.mxu0 %v2897
        %3203 = vmatmul.mubr.f32.gmra.mrb[0].mxu0 %v2892
        %v3204 = vpop.f32.mrb[0].mxu0
        %v3205 = vadd.f32 0.0, %v3204
        %v3206 = vpop.f32.mrb[0].mxu0
        %3207 = vmatprep.mubr.f32.mxu0 %v2900
        %3208 = vmatmul.mubr.f32.gmra.mrb[0].mxu0 %v2895
        %v3209 = vpop.f32.mrb[0].mxu0
        %v3210 = vadd.f32 0.0, %v3209
        %v3211 = vpop.f32.mrb[0].mxu0
        %3212 = vmatprep.mubr.f32.mxu0 %v2902
        %3213 = vmatmul.mubr.f32.gmra.mrb[0].mxu0 %v2897
        %v3214 = vpop.f32.mrb[0].mxu0
        %v3215 = vadd.f32 0.0, %v3214
        %v3216 = vpop.f32.mrb[0].mxu0
        %3217 = vdwg.mxu0
        %3218 = vmatprep.subr.mxu0 0.0
        %3219 = vmatpush1.msra.mxu0 %v2977
        %3220 = vmatprep.subr.mxu0 0.0
        %3221 = vmatpush1.msra.mxu0 %v2978
        %3222 = vmatprep.subr.mxu0 0.0
        %3223 = vmatpush1.msra.mxu0 %v2979
        %3224 = vmatprep.subr.mxu0 0.0
        %3225 = vmatpush1.msra.mxu0 %v2980
        %3226 = vmatprep.subr.mxu0 0.0
        %3227 = vmatpush1.msra.mxu0 %v2981
        %3228 = vmatprep.subr.mxu0 0.0
        %3229 = vmatpush1.msra.mxu0 %v2982
        %3230 = vmatprep.subr.mxu0 0.0
        %3231 = vmatpush1.msra.mxu0 %v2983
        %3232 = vmatprep.subr.mxu0 0.0
        %3233 = vmatpush1.msra.mxu0 %v2984
        %3234 = vmatprep.subr.mxu0 0.0
        %3235 = vmatpush1.msra.mxu0 %v2985
        %3236 = vmatprep.subr.mxu0 0.0
        %3237 = vmatpush1.msra.mxu0 %v2986
        %3238 = vmatprep.subr.mxu0 0.0
        %3239 = vmatpush1.msra.mxu0 %v2987
        %3240 = vmatprep.subr.mxu0 0.0
        %3241 = vmatpush1.msra.mxu0 %v2988
        %3242 = vmatprep.subr.mxu0 0.0
        %3243 = vmatpush1.msra.mxu0 %v2989
        %3244 = vmatprep.subr.mxu0 0.0
        %3245 = vmatpush1.msra.mxu0 %v2990
        %3246 = vmatprep.subr.mxu0 0.0
        %3247 = vmatpush1.msra.mxu0 %v2991
        %3248 = vmatprep.subr.mxu0 0.0
        %3249 = vmatpush1.msra.mxu0 %v2992
        %3250 = vmatprep.subr.mxu0 0.0
        %3251 = vmatpush1.msra.mxu0 0.0
        %3252 = vmatprep.subr.mxu0 0.0
        %3253 = vmatpush1.msra.mxu0 0.0
        %3254 = vmatprep.subr.mxu0 0.0
        %3255 = vmatpush1.msra.mxu0 0.0
        %3256 = vmatprep.subr.mxu0 0.0
        %3257 = vmatpush1.msra.mxu0 0.0
        %3258 = vmatprep.subr.mxu0 0.0
        %3259 = vmatpush1.msra.mxu0 0.0
        %3260 = vmatprep.subr.mxu0 0.0
        %3261 = vmatpush1.msra.mxu0 0.0
        %3262 = vmatprep.subr.mxu0 0.0
        %3263 = vmatpush1.msra.mxu0 0.0
        %3264 = vmatprep.subr.mxu0 0.0
        %3265 = vmatpush1.msra.mxu0 0.0
        %3266 = vmatprep.subr.mxu0 0.0
        %3267 = vmatpush1.msra.mxu0 0.0
        %3268 = vmatprep.subr.mxu0 0.0
        %3269 = vmatpush1.msra.mxu0 0.0
        %3270 = vmatprep.subr.mxu0 0.0
        %3271 = vmatpush1.msra.mxu0 0.0
        %3272 = vmatprep.subr.mxu0 0.0
        %3273 = vmatpush1.msra.mxu0 0.0
        %3274 = vmatprep.subr.mxu0 0.0
        %3275 = vmatpush1.msra.mxu0 0.0
        %3276 = vmatprep.subr.mxu0 0.0
        %3277 = vmatpush1.msra.mxu0 0.0
        %3278 = vmatprep.subr.mxu0 0.0
        %3279 = vmatpush1.msra.mxu0 0.0
        %3280 = vmatprep.subr.mxu0 0.0
        %3281 = vmatpush1.msra.mxu0 0.0
        %3282 = vmatprep.mubr.f32.mxu0 0.0
        %3283 = vmatmul.mubr.f32.gmra.mrb[0].mxu0 %v2826
        %v3284 = vpop.f32.mrb[0].mxu0
        %v3285 = vadd.f32 %v3060, %v3284
        %v3286 = vpop.f32.mrb[0].mxu0
        %3287 = vmatprep.mubr.f32.mxu0 0.0
        %3288 = vmatmul.mubr.f32.gmra.mrb[0].mxu0 %v2832
        %v3289 = vpop.f32.mrb[0].mxu0
        %v3290 = vadd.f32 %v3065, %v3289
        %v3291 = vpop.f32.mrb[0].mxu0
        %3292 = vmatprep.mubr.f32.mxu0 0.0
        %3293 = vmatmul.mubr.f32.gmra.mrb[0].mxu0 %v2835
        %v3294 = vpop.f32.mrb[0].mxu0
        %v3295 = vadd.f32 %v3070, %v3294
        %v3296 = vpop.f32.mrb[0].mxu0
        %3297 = vmatprep.mubr.f32.mxu0 0.0
        %3298 = vmatmul.mubr.f32.gmra.mrb[0].mxu0 %v2837
        %v3299 = vpop.f32.mrb[0].mxu0
        %v3300 = vadd.f32 %v3075, %v3299
        %v3301 = vpop.f32.mrb[0].mxu0
        %3302 = vmatprep.mubr.f32.mxu0 0.0
        %3303 = vmatmul.mubr.f32.gmra.mrb[0].mxu0 %v2840
        %v3304 = vpop.f32.mrb[0].mxu0
        %v3305 = vadd.f32 %v3080, %v3304
        %v3306 = vpop.f32.mrb[0].mxu0
        %3307 = vmatprep.mubr.f32.mxu0 0.0
        %3308 = vmatmul.mubr.f32.gmra.mrb[0].mxu0 %v2842
        %v3309 = vpop.f32.mrb[0].mxu0
        %v3310 = vadd.f32 %v3085, %v3309
        %v3311 = vpop.f32.mrb[0].mxu0
        %3312 = vmatprep.mubr.f32.mxu0 0.0
        %3313 = vmatmul.mubr.f32.gmra.mrb[0].mxu0 %v2845
        %v3314 = vpop.f32.mrb[0].mxu0
        %v3315 = vadd.f32 %v3090, %v3314
        %v3316 = vpop.f32.mrb[0].mxu0
        %3317 = vmatprep.mubr.f32.mxu0 0.0
        %3318 = vmatmul.mubr.f32.gmra.mrb[0].mxu0 %v2847
        %v3319 = vpop.f32.mrb[0].mxu0
        %v3320 = vadd.f32 %v3095, %v3319
        %v3321 = vpop.f32.mrb[0].mxu0
        %3322 = vmatprep.mubr.f32.mxu0 0.0
        %3323 = vmatmul.mubr.f32.gmra.mrb[0].mxu0 %v2850
        %v3324 = vpop.f32.mrb[0].mxu0
        %v3325 = vadd.f32 %v3100, %v3324
        %v3326 = vpop.f32.mrb[0].mxu0
        %3327 = vmatprep.mubr.f32.mxu0 0.0
        %3328 = vmatmul.mubr.f32.gmra.mrb[0].mxu0 %v2852
        %v3329 = vpop.f32.mrb[0].mxu0
        %v3330 = vadd.f32 %v3105, %v3329
        %v3331 = vpop.f32.mrb[0].mxu0
        %3332 = vmatprep.mubr.f32.mxu0 0.0
        %3333 = vmatmul.mubr.f32.gmra.mrb[0].mxu0 %v2855
        %v3334 = vpop.f32.mrb[0].mxu0
        %v3335 = vadd.f32 %v3110, %v3334
        %v3336 = vpop.f32.mrb[0].mxu0
        %3337 = vmatprep.mubr.f32.mxu0 0.0
        %3338 = vmatmul.mubr.f32.gmra.mrb[0].mxu0 %v2857
        %v3339 = vpop.f32.mrb[0].mxu0
        %v3340 = vadd.f32 %v3115, %v3339
        %v3341 = vpop.f32.mrb[0].mxu0
        %3342 = vmatprep.mubr.f32.mxu0 0.0
        %3343 = vmatmul.mubr.f32.gmra.mrb[0].mxu0 %v2860
        %v3344 = vpop.f32.mrb[0].mxu0
        %v3345 = vadd.f32 %v3120, %v3344
        %v3346 = vpop.f32.mrb[0].mxu0
        %3347 = vmatprep.mubr.f32.mxu0 0.0
        %3348 = vmatmul.mubr.f32.gmra.mrb[0].mxu0 %v2862
        %v3349 = vpop.f32.mrb[0].mxu0
        %v3350 = vadd.f32 %v3125, %v3349
        %v3351 = vpop.f32.mrb[0].mxu0
        %3352 = vmatprep.mubr.f32.mxu0 0.0
        %3353 = vmatmul.mubr.f32.gmra.mrb[0].mxu0 %v2865
        %v3354 = vpop.f32.mrb[0].mxu0
        %v3355 = vadd.f32 %v3130, %v3354
        %v3356 = vpop.f32.mrb[0].mxu0
        %3357 = vmatprep.mubr.f32.mxu0 0.0
        %3358 = vmatmul.mubr.f32.gmra.mrb[0].mxu0 %v2867
        %v3359 = vpop.f32.mrb[0].mxu0
        %v3360 = vadd.f32 %v3135, %v3359
        %v3361 = vpop.f32.mrb[0].mxu0
        %3362 = vmatprep.mubr.f32.mxu0 0.0
        %3363 = vmatmul.mubr.f32.gmra.mrb[0].mxu0 %v2870
        %v3364 = vpop.f32.mrb[0].mxu0
        %v3365 = vadd.f32 %v3140, %v3364
        %v3366 = vpop.f32.mrb[0].mxu0
        %3367 = vmatprep.mubr.f32.mxu0 0.0
        %3368 = vmatmul.mubr.f32.gmra.mrb[0].mxu0 %v2872
        %v3369 = vpop.f32.mrb[0].mxu0
        %v3370 = vadd.f32 %v3145, %v3369
        %v3371 = vpop.f32.mrb[0].mxu0
        %3372 = vmatprep.mubr.f32.mxu0 0.0
        %3373 = vmatmul.mubr.f32.gmra.mrb[0].mxu0 %v2875
        %v3374 = vpop.f32.mrb[0].mxu0
        %v3375 = vadd.f32 %v3150, %v3374
        %v3376 = vpop.f32.mrb[0].mxu0
        %3377 = vmatprep.mubr.f32.mxu0 0.0
        %3378 = vmatmul.mubr.f32.gmra.mrb[0].mxu0 %v2877
        %v3379 = vpop.f32.mrb[0].mxu0
        %v3380 = vadd.f32 %v3155, %v3379
        %v3381 = vpop.f32.mrb[0].mxu0
        %3382 = vmatprep.mubr.f32.mxu0 0.0
        %3383 = vmatmul.mubr.f32.gmra.mrb[0].mxu0 %v2880
        %v3384 = vpop.f32.mrb[0].mxu0
        %v3385 = vadd.f32 %v3160, %v3384
        %v3386 = vpop.f32.mrb[0].mxu0
        %3387 = vmatprep.mubr.f32.mxu0 0.0
        %3388 = vmatmul.mubr.f32.gmra.mrb[0].mxu0 %v2882
        %v3389 = vpop.f32.mrb[0].mxu0
        %v3390 = vadd.f32 %v3165, %v3389
        %v3391 = vpop.f32.mrb[0].mxu0
        %3392 = vmatprep.mubr.f32.mxu0 0.0
        %3393 = vmatmul.mubr.f32.gmra.mrb[0].mxu0 %v2885
        %v3394 = vpop.f32.mrb[0].mxu0
        %v3395 = vadd.f32 %v3170, %v3394
        %v3396 = vpop.f32.mrb[0].mxu0
        %3397 = vmatprep.mubr.f32.mxu0 0.0
        %3398 = vmatmul.mubr.f32.gmra.mrb[0].mxu0 %v2887
        %v3399 = vpop.f32.mrb[0].mxu0
        %v3400 = vadd.f32 %v3175, %v3399
        %v3401 = vpop.f32.mrb[0].mxu0
        %3402 = vmatprep.mubr.f32.mxu0 0.0
        %3403 = vmatmul.mubr.f32.gmra.mrb[0].mxu0 %v2890
        %v3404 = vpop.f32.mrb[0].mxu0
        %v3405 = vadd.f32 %v3180, %v3404
        %v3406 = vpop.f32.mrb[0].mxu0
        %3407 = vmatprep.mubr.f32.mxu0 0.0
        %3408 = vmatmul.mubr.f32.gmra.mrb[0].mxu0 %v2892
        %v3409 = vpop.f32.mrb[0].mxu0
        %v3410 = vadd.f32 %v3185, %v3409
        %v3411 = vpop.f32.mrb[0].mxu0
        %3412 = vmatprep.mubr.f32.mxu0 0.0
        %3413 = vmatmul.mubr.f32.gmra.mrb[0].mxu0 %v2895
        %v3414 = vpop.f32.mrb[0].mxu0
        %v3415 = vadd.f32 %v3190, %v3414
        %v3416 = vpop.f32.mrb[0].mxu0
        %3417 = vmatprep.mubr.f32.mxu0 0.0
        %3418 = vmatmul.mubr.f32.gmra.mrb[0].mxu0 %v2897
        %v3419 = vpop.f32.mrb[0].mxu0
        %v3420 = vadd.f32 %v3195, %v3419
        %v3421 = vpop.f32.mrb[0].mxu0
        %3422 = vmatprep.mubr.f32.mxu0 0.0
        %3423 = vmatmul.mubr.f32.gmra.mrb[0].mxu0 %v2900
        %v3424 = vpop.f32.mrb[0].mxu0
        %v3425 = vadd.f32 %v3200, %v3424
        %v3426 = vpop.f32.mrb[0].mxu0
        %3427 = vmatprep.mubr.f32.mxu0 0.0
        %3428 = vmatmul.mubr.f32.gmra.mrb[0].mxu0 %v2902
        %v3429 = vpop.f32.mrb[0].mxu0
        %v3430 = vadd.f32 %v3205, %v3429
        %v3431 = vpop.f32.mrb[0].mxu0
        %3432 = vmatprep.mubr.f32.mxu0 0.0
        %3433 = vmatmul.mubr.f32.gmra.mrb[0].mxu0 %v2905
        %v3434 = vpop.f32.mrb[0].mxu0
        %v3435 = vadd.f32 %v3210, %v3434
        %v3436 = vpop.f32.mrb[0].mxu0
        %3437 = vmatprep.mubr.f32.mxu0 0.0
        %3438 = vmatmul.mubr.f32.gmra.mrb[0].mxu0 %v2907
        %v3439 = vpop.f32.mrb[0].mxu0
        %v3440 = vadd.f32 %v3215, %v3439
        %v3441 = vpop.f32.mrb[0].mxu0
        %3442 = vdwg.mxu0
        %3443 = vmatprep.subr.mxu0 0.0
        %3444 = vmatpush1.msra.mxu0 %v2716
        %3445 = vmatprep.subr.mxu0 0.0
        %3446 = vmatpush1.msra.mxu0 %v2717
        %3447 = vmatprep.subr.mxu0 0.0
        %3448 = vmatpush1.msra.mxu0 %v2718
        %3449 = vmatprep.subr.mxu0 0.0
        %3450 = vmatpush1.msra.mxu0 %v2719
        %3451 = vmatprep.subr.mxu0 0.0
        %3452 = vmatpush1.msra.mxu0 %v2720
        %3453 = vmatprep.subr.mxu0 0.0
        %3454 = vmatpush1.msra.mxu0 %v2721
        %3455 = vmatprep.subr.mxu0 0.0
        %3456 = vmatpush1.msra.mxu0 %v2722
        %3457 = vmatprep.subr.mxu0 0.0
        %3458 = vmatpush1.msra.mxu0 %v2723
        %3459 = vmatprep.subr.mxu0 0.0
        %3460 = vmatpush1.msra.mxu0 %v2724
        %3461 = vmatprep.subr.mxu0 0.0
        %3462 = vmatpush1.msra.mxu0 %v2725
        %3463 = vmatprep.subr.mxu0 0.0
        %3464 = vmatpush1.msra.mxu0 %v2726
        %3465 = vmatprep.subr.mxu0 0.0
        %3466 = vmatpush1.msra.mxu0 %v2727
        %3467 = vmatprep.subr.mxu0 0.0
        %3468 = vmatpush1.msra.mxu0 %v2728
        %3469 = vmatprep.subr.mxu0 0.0
        %3470 = vmatpush1.msra.mxu0 %v2729
        %3471 = vmatprep.subr.mxu0 0.0
        %3472 = vmatpush1.msra.mxu0 %v2730
        %3473 = vmatprep.subr.mxu0 0.0
        %3474 = vmatpush1.msra.mxu0 %v2731
        %3475 = vmatprep.subr.mxu0 0.0
        %3476 = vmatpush1.msra.mxu0 %v2732
        %3477 = vmatprep.subr.mxu0 0.0
        %3478 = vmatpush1.msra.mxu0 %v2733
        %3479 = vmatprep.subr.mxu0 0.0
        %3480 = vmatpush1.msra.mxu0 %v2734
        %3481 = vmatprep.subr.mxu0 0.0
        %3482 = vmatpush1.msra.mxu0 %v2735
        %3483 = vmatprep.subr.mxu0 0.0
        %3484 = vmatpush1.msra.mxu0 %v2736
        %3485 = vmatprep.subr.mxu0 0.0
        %3486 = vmatpush1.msra.mxu0 %v2737
        %3487 = vmatprep.subr.mxu0 0.0
        %3488 = vmatpush1.msra.mxu0 %v2738
        %3489 = vmatprep.subr.mxu0 0.0
        %3490 = vmatpush1.msra.mxu0 %v2739
        %3491 = vmatprep.subr.mxu0 0.0
        %3492 = vmatpush1.msra.mxu0 %v2740
        %3493 = vmatprep.subr.mxu0 0.0
        %3494 = vmatpush1.msra.mxu0 %v2741
        %3495 = vmatprep.subr.mxu0 0.0
        %3496 = vmatpush1.msra.mxu0 %v2742
        %3497 = vmatprep.subr.mxu0 0.0
        %3498 = vmatpush1.msra.mxu0 %v2743
        %3499 = vmatprep.subr.mxu0 0.0
        %3500 = vmatpush1.msra.mxu0 %v2744
        %3501 = vmatprep.subr.mxu0 0.0
        %3502 = vmatpush1.msra.mxu0 %v2745
        %3503 = vmatprep.subr.mxu0 0.0
        %3504 = vmatpush1.msra.mxu0 %v2746
        %3505 = vmatprep.subr.mxu0 0.0
        %3506 = vmatpush1.msra.mxu0 %v2747
        %3507 = vmatprep.mubr.f32.mxu0 %v2665
        %3508 = vmatmul.mubr.f32.gmra.mrb[0].mxu0 %v2662
        %v3509 = vpop.f32.mrb[0].mxu0
        %v3510 = vadd.f32 %v3285, %v3509
        %v3511 = vpop.f32.mrb[0].mxu0
        %3512 = vmatprep.mubr.f32.mxu0 %v2666
        %3513 = vmatmul.mubr.f32.gmra.mrb[0].mxu0 %v2663
        %v3514 = vpop.f32.mrb[0].mxu0
        %v3515 = vadd.f32 %v3290, %v3514
        %v3516 = vpop.f32.mrb[0].mxu0
        %3517 = vmatprep.mubr.f32.mxu0 %v2668
        %3518 = vmatmul.mubr.f32.gmra.mrb[0].mxu0 %v2665
        %v3519 = vpop.f32.mrb[0].mxu0
        %v3520 = vadd.f32 %v3295, %v3519
        %v3521 = vpop.f32.mrb[0].mxu0
        %3522 = vmatprep.mubr.f32.mxu0 %v2669
        %3523 = vmatmul.mubr.f32.gmra.mrb[0].mxu0 %v2666
        %v3524 = vpop.f32.mrb[0].mxu0
        %v3525 = vadd.f32 %v3300, %v3524
        %v3526 = vpop.f32.mrb[0].mxu0
        %3527 = vmatprep.mubr.f32.mxu0 %v2671
        %3528 = vmatmul.mubr.f32.gmra.mrb[0].mxu0 %v2668
        %v3529 = vpop.f32.mrb[0].mxu0
        %v3530 = vadd.f32 %v3305, %v3529
        %v3531 = vpop.f32.mrb[0].mxu0
        %3532 = vmatprep.mubr.f32.mxu0 %v2672
        %3533 = vmatmul.mubr.f32.gmra.mrb[0].mxu0 %v2669
        %v3534 = vpop.f32.mrb[0].mxu0
        %v3535 = vadd.f32 %v3310, %v3534
        %v3536 = vpop.f32.mrb[0].mxu0
        %3537 = vmatprep.mubr.f32.mxu0 %v2674
        %3538 = vmatmul.mubr.f32.gmra.mrb[0].mxu0 %v2671
        %v3539 = vpop.f32.mrb[0].mxu0
        %v3540 = vadd.f32 %v3315, %v3539
        %v3541 = vpop.f32.mrb[0].mxu0
        %3542 = vmatprep.mubr.f32.mxu0 %v2675
        %3543 = vmatmul.mubr.f32.gmra.mrb[0].mxu0 %v2672
        %v3544 = vpop.f32.mrb[0].mxu0
        %v3545 = vadd.f32 %v3320, %v3544
        %v3546 = vpop.f32.mrb[0].mxu0
        %3547 = vmatprep.mubr.f32.mxu0 %v2677
        %3548 = vmatmul.mubr.f32.gmra.mrb[0].mxu0 %v2674
        %v3549 = vpop.f32.mrb[0].mxu0
        %v3550 = vadd.f32 %v3325, %v3549
        %v3551 = vpop.f32.mrb[0].mxu0
        %3552 = vmatprep.mubr.f32.mxu0 %v2678
        %3553 = vmatmul.mubr.f32.gmra.mrb[0].mxu0 %v2675
        %v3554 = vpop.f32.mrb[0].mxu0
        %v3555 = vadd.f32 %v3330, %v3554
        %v3556 = vpop.f32.mrb[0].mxu0
        %3557 = vmatprep.mubr.f32.mxu0 %v2680
        %3558 = vmatmul.mubr.f32.gmra.mrb[0].mxu0 %v2677
        %v3559 = vpop.f32.mrb[0].mxu0
        %v3560 = vadd.f32 %v3335, %v3559
        %v3561 = vpop.f32.mrb[0].mxu0
        %3562 = vmatprep.mubr.f32.mxu0 %v2681
        %3563 = vmatmul.mubr.f32.gmra.mrb[0].mxu0 %v2678
        %v3564 = vpop.f32.mrb[0].mxu0
        %v3565 = vadd.f32 %v3340, %v3564
        %v3566 = vpop.f32.mrb[0].mxu0
        %3567 = vmatprep.mubr.f32.mxu0 %v2683
        %3568 = vmatmul.mubr.f32.gmra.mrb[0].mxu0 %v2680
        %v3569 = vpop.f32.mrb[0].mxu0
        %v3570 = vadd.f32 %v3345, %v3569
        %v3571 = vpop.f32.mrb[0].mxu0
        %3572 = vmatprep.mubr.f32.mxu0 %v2684
        %3573 = vmatmul.mubr.f32.gmra.mrb[0].mxu0 %v2681
        %v3574 = vpop.f32.mrb[0].mxu0
        %v3575 = vadd.f32 %v3350, %v3574
        %v3576 = vpop.f32.mrb[0].mxu0
        %3577 = vmatprep.mubr.f32.mxu0 %v2686
        %3578 = vmatmul.mubr.f32.gmra.mrb[0].mxu0 %v2683
        %v3579 = vpop.f32.mrb[0].mxu0
        %v3580 = vadd.f32 %v3355, %v3579
        %v3581 = vpop.f32.mrb[0].mxu0
        %3582 = vmatprep.mubr.f32.mxu0 %v2687
        %3583 = vmatmul.mubr.f32.gmra.mrb[0].mxu0 %v2684
        %v3584 = vpop.f32.mrb[0].mxu0
        %v3585 = vadd.f32 %v3360, %v3584
        %v3586 = vpop.f32.mrb[0].mxu0
        %3587 = vmatprep.mubr.f32.mxu0 %v2689
        %3588 = vmatmul.mubr.f32.gmra.mrb[0].mxu0 %v2686
        %v3589 = vpop.f32.mrb[0].mxu0
        %v3590 = vadd.f32 %v3365, %v3589
        %v3591 = vpop.f32.mrb[0].mxu0
        %3592 = vmatprep.mubr.f32.mxu0 %v2690
        %3593 = vmatmul.mubr.f32.gmra.mrb[0].mxu0 %v2687
        %v3594 = vpop.f32.mrb[0].mxu0
        %v3595 = vadd.f32 %v3370, %v3594
        %v3596 = vpop.f32.mrb[0].mxu0
        %3597 = vmatprep.mubr.f32.mxu0 %v2692
        %3598 = vmatmul.mubr.f32.gmra.mrb[0].mxu0 %v2689
        %v3599 = vpop.f32.mrb[0].mxu0
        %v3600 = vadd.f32 %v3375, %v3599
        %v3601 = vpop.f32.mrb[0].mxu0
        %3602 = vmatprep.mubr.f32.mxu0 %v2693
        %3603 = vmatmul.mubr.f32.gmra.mrb[0].mxu0 %v2690
        %v3604 = vpop.f32.mrb[0].mxu0
        %v3605 = vadd.f32 %v3380, %v3604
        %v3606 = vpop.f32.mrb[0].mxu0
        %3607 = vmatprep.mubr.f32.mxu0 %v2695
        %3608 = vmatmul.mubr.f32.gmra.mrb[0].mxu0 %v2692
        %v3609 = vpop.f32.mrb[0].mxu0
        %v3610 = vadd.f32 %v3385, %v3609
        %v3611 = vpop.f32.mrb[0].mxu0
        %3612 = vmatprep.mubr.f32.mxu0 %v2696
        %3613 = vmatmul.mubr.f32.gmra.mrb[0].mxu0 %v2693
        %v3614 = vpop.f32.mrb[0].mxu0
        %v3615 = vadd.f32 %v3390, %v3614
        %v3616 = vpop.f32.mrb[0].mxu0
        %3617 = vmatprep.mubr.f32.mxu0 %v2698
        %3618 = vmatmul.mubr.f32.gmra.mrb[0].mxu0 %v2695
        %v3619 = vpop.f32.mrb[0].mxu0
        %v3620 = vadd.f32 %v3395, %v3619
        %v3621 = vpop.f32.mrb[0].mxu0
        %3622 = vmatprep.mubr.f32.mxu0 %v2699
        %3623 = vmatmul.mubr.f32.gmra.mrb[0].mxu0 %v2696
        %v3624 = vpop.f32.mrb[0].mxu0
        %v3625 = vadd.f32 %v3400, %v3624
        %v3626 = vpop.f32.mrb[0].mxu0
        %3627 = vmatprep.mubr.f32.mxu0 %v2701
        %3628 = vmatmul.mubr.f32.gmra.mrb[0].mxu0 %v2698
        %v3629 = vpop.f32.mrb[0].mxu0
        %v3630 = vadd.f32 %v3405, %v3629
        %v3631 = vpop.f32.mrb[0].mxu0
        %3632 = vmatprep.mubr.f32.mxu0 %v2702
        %3633 = vmatmul.mubr.f32.gmra.mrb[0].mxu0 %v2699
        %v3634 = vpop.f32.mrb[0].mxu0
        %v3635 = vadd.f32 %v3410, %v3634
        %v3636 = vpop.f32.mrb[0].mxu0
        %3637 = vmatprep.mubr.f32.mxu0 %v2704
        %3638 = vmatmul.mubr.f32.gmra.mrb[0].mxu0 %v2701
        %v3639 = vpop.f32.mrb[0].mxu0
        %v3640 = vadd.f32 %v3415, %v3639
        %v3641 = vpop.f32.mrb[0].mxu0
        %3642 = vmatprep.mubr.f32.mxu0 %v2705
        %3643 = vmatmul.mubr.f32.gmra.mrb[0].mxu0 %v2702
        %v3644 = vpop.f32.mrb[0].mxu0
        %v3645 = vadd.f32 %v3420, %v3644
        %v3646 = vpop.f32.mrb[0].mxu0
        %3647 = vmatprep.mubr.f32.mxu0 %v2707
        %3648 = vmatmul.mubr.f32.gmra.mrb[0].mxu0 %v2704
        %v3649 = vpop.f32.mrb[0].mxu0
        %v3650 = vadd.f32 %v3425, %v3649
        %v3651 = vpop.f32.mrb[0].mxu0
        %3652 = vmatprep.mubr.f32.mxu0 %v2708
        %3653 = vmatmul.mubr.f32.gmra.mrb[0].mxu0 %v2705
        %v3654 = vpop.f32.mrb[0].mxu0
        %v3655 = vadd.f32 %v3430, %v3654
        %v3656 = vpop.f32.mrb[0].mxu0
        %3657 = vmatprep.mubr.f32.mxu0 %v2710
        %3658 = vmatmul.mubr.f32.gmra.mrb[0].mxu0 %v2707
        %v3659 = vpop.f32.mrb[0].mxu0
        %v3660 = vadd.f32 %v3435, %v3659
        %v3661 = vpop.f32.mrb[0].mxu0
        %3662 = vmatprep.mubr.f32.mxu0 %v2711
        %3663 = vmatmul.mubr.f32.gmra.mrb[0].mxu0 %v2708
        %v3664 = vpop.f32.mrb[0].mxu0
        %v3665 = vadd.f32 %v3440, %v3664
        %v3666 = vpop.f32.mrb[0].mxu0
        %3667 = vdwg.mxu0
        %3668 = vmatprep.subr.mxu0 0.0
        %3669 = vmatpush1.msra.mxu0 %v2748
        %3670 = vmatprep.subr.mxu0 0.0
        %3671 = vmatpush1.msra.mxu0 %v2749
        %3672 = vmatprep.subr.mxu0 0.0
        %3673 = vmatpush1.msra.mxu0 %v2750
        %3674 = vmatprep.subr.mxu0 0.0
        %3675 = vmatpush1.msra.mxu0 %v2751
        %3676 = vmatprep.subr.mxu0 0.0
        %3677 = vmatpush1.msra.mxu0 %v2752
        %3678 = vmatprep.subr.mxu0 0.0
        %3679 = vmatpush1.msra.mxu0 %v2753
        %3680 = vmatprep.subr.mxu0 0.0
        %3681 = vmatpush1.msra.mxu0 %v2754
        %3682 = vmatprep.subr.mxu0 0.0
        %3683 = vmatpush1.msra.mxu0 %v2755
        %3684 = vmatprep.subr.mxu0 0.0
        %3685 = vmatpush1.msra.mxu0 %v2756
        %3686 = vmatprep.subr.mxu0 0.0
        %3687 = vmatpush1.msra.mxu0 %v2757
        %3688 = vmatprep.subr.mxu0 0.0
        %3689 = vmatpush1.msra.mxu0 %v2758
        %3690 = vmatprep.subr.mxu0 0.0
        %3691 = vmatpush1.msra.mxu0 %v2759
        %3692 = vmatprep.subr.mxu0 0.0
        %3693 = vmatpush1.msra.mxu0 %v2760
        %3694 = vmatprep.subr.mxu0 0.0
        %3695 = vmatpush1.msra.mxu0 %v2761
        %3696 = vmatprep.subr.mxu0 0.0
        %3697 = vmatpush1.msra.mxu0 %v2762
        %3698 = vmatprep.subr.mxu0 0.0
        %3699 = vmatpush1.msra.mxu0 %v2763
        %3700 = vmatprep.subr.mxu0 0.0
        %3701 = vmatpush1.msra.mxu0 0.0
        %3702 = vmatprep.subr.mxu0 0.0
        %3703 = vmatpush1.msra.mxu0 0.0
        %3704 = vmatprep.subr.mxu0 0.0
        %3705 = vmatpush1.msra.mxu0 0.0
        %3706 = vmatprep.subr.mxu0 0.0
        %3707 = vmatpush1.msra.mxu0 0.0
        %3708 = vmatprep.subr.mxu0 0.0
        %3709 = vmatpush1.msra.mxu0 0.0
        %3710 = vmatprep.subr.mxu0 0.0
        %3711 = vmatpush1.msra.mxu0 0.0
        %3712 = vmatprep.subr.mxu0 0.0
        %3713 = vmatpush1.msra.mxu0 0.0
        %3714 = vmatprep.subr.mxu0 0.0
        %3715 = vmatpush1.msra.mxu0 0.0
        %3716 = vmatprep.subr.mxu0 0.0
        %3717 = vmatpush1.msra.mxu0 0.0
        %3718 = vmatprep.subr.mxu0 0.0
        %3719 = vmatpush1.msra.mxu0 0.0
        %3720 = vmatprep.subr.mxu0 0.0
        %3721 = vmatpush1.msra.mxu0 0.0
        %3722 = vmatprep.subr.mxu0 0.0
        %3723 = vmatpush1.msra.mxu0 0.0
        %3724 = vmatprep.subr.mxu0 0.0
        %3725 = vmatpush1.msra.mxu0 0.0
        %3726 = vmatprep.subr.mxu0 0.0
        %3727 = vmatpush1.msra.mxu0 0.0
        %3728 = vmatprep.subr.mxu0 0.0
        %3729 = vmatpush1.msra.mxu0 0.0
        %3730 = vmatprep.subr.mxu0 0.0
        %3731 = vmatpush1.msra.mxu0 0.0
        %3732 = vmatprep.mubr.f32.mxu0 0.0
        %3733 = vmatmul.mubr.f32.gmra.mrb[0].mxu0 %v2668
        %v3734 = vpop.f32.mrb[0].mxu0
        %v3735 = vadd.f32 %v3510, %v3734
        %v3736 = vpop.f32.mrb[0].mxu0
        %3737 = vmatprep.mubr.f32.mxu0 0.0
        %3738 = vmatmul.mubr.f32.gmra.mrb[0].mxu0 %v2669
        %v3739 = vpop.f32.mrb[0].mxu0
        %v3740 = vadd.f32 %v3515, %v3739
        %v3741 = vpop.f32.mrb[0].mxu0
        %3742 = vmatprep.mubr.f32.mxu0 0.0
        %3743 = vmatmul.mubr.f32.gmra.mrb[0].mxu0 %v2671
        %v3744 = vpop.f32.mrb[0].mxu0
        %v3745 = vadd.f32 %v3520, %v3744
        %v3746 = vpop.f32.mrb[0].mxu0
        %3747 = vmatprep.mubr.f32.mxu0 0.0
        %3748 = vmatmul.mubr.f32.gmra.mrb[0].mxu0 %v2672
        %v3749 = vpop.f32.mrb[0].mxu0
        %v3750 = vadd.f32 %v3525, %v3749
        %v3751 = vpop.f32.mrb[0].mxu0
        %3752 = vmatprep.mubr.f32.mxu0 0.0
        %3753 = vmatmul.mubr.f32.gmra.mrb[0].mxu0 %v2674
        %v3754 = vpop.f32.mrb[0].mxu0
        %v3755 = vadd.f32 %v3530, %v3754
        %v3756 = vpop.f32.mrb[0].mxu0
        %3757 = vmatprep.mubr.f32.mxu0 0.0
        %3758 = vmatmul.mubr.f32.gmra.mrb[0].mxu0 %v2675
        %v3759 = vpop.f32.mrb[0].mxu0
        %v3760 = vadd.f32 %v3535, %v3759
        %v3761 = vpop.f32.mrb[0].mxu0
        %3762 = vmatprep.mubr.f32.mxu0 0.0
        %3763 = vmatmul.mubr.f32.gmra.mrb[0].mxu0 %v2677
        %v3764 = vpop.f32.mrb[0].mxu0
        %v3765 = vadd.f32 %v3540, %v3764
        %v3766 = vpop.f32.mrb[0].mxu0
        %3767 = vmatprep.mubr.f32.mxu0 0.0
        %3768 = vmatmul.mubr.f32.gmra.mrb[0].mxu0 %v2678
        %v3769 = vpop.f32.mrb[0].mxu0
        %v3770 = vadd.f32 %v3545, %v3769
        %v3771 = vpop.f32.mrb[0].mxu0
        %3772 = vmatprep.mubr.f32.mxu0 0.0
        %3773 = vmatmul.mubr.f32.gmra.mrb[0].mxu0 %v2680
        %v3774 = vpop.f32.mrb[0].mxu0
        %v3775 = vadd.f32 %v3550, %v3774
        %v3776 = vpop.f32.mrb[0].mxu0
        %3777 = vmatprep.mubr.f32.mxu0 0.0
        %3778 = vmatmul.mubr.f32.gmra.mrb[0].mxu0 %v2681
        %v3779 = vpop.f32.mrb[0].mxu0
        %v3780 = vadd.f32 %v3555, %v3779
        %v3781 = vpop.f32.mrb[0].mxu0
        %3782 = vmatprep.mubr.f32.mxu0 0.0
        %3783 = vmatmul.mubr.f32.gmra.mrb[0].mxu0 %v2683
        %v3784 = vpop.f32.mrb[0].mxu0
        %v3785 = vadd.f32 %v3560, %v3784
        %v3786 = vpop.f32.mrb[0].mxu0
        %3787 = vmatprep.mubr.f32.mxu0 0.0
        %3788 = vmatmul.mubr.f32.gmra.mrb[0].mxu0 %v2684
        %v3789 = vpop.f32.mrb[0].mxu0
        %v3790 = vadd.f32 %v3565, %v3789
        %v3791 = vpop.f32.mrb[0].mxu0
        %3792 = vmatprep.mubr.f32.mxu0 0.0
        %3793 = vmatmul.mubr.f32.gmra.mrb[0].mxu0 %v2686
        %v3794 = vpop.f32.mrb[0].mxu0
        %v3795 = vadd.f32 %v3570, %v3794
        %v3796 = vpop.f32.mrb[0].mxu0
        %3797 = vmatprep.mubr.f32.mxu0 0.0
        %3798 = vmatmul.mubr.f32.gmra.mrb[0].mxu0 %v2687
        %v3799 = vpop.f32.mrb[0].mxu0
        %v3800 = vadd.f32 %v3575, %v3799
        %v3801 = vpop.f32.mrb[0].mxu0
        %3802 = vmatprep.mubr.f32.mxu0 0.0
        %3803 = vmatmul.mubr.f32.gmra.mrb[0].mxu0 %v2689
        %v3804 = vpop.f32.mrb[0].mxu0
        %v3805 = vadd.f32 %v3580, %v3804
        %v3806 = vpop.f32.mrb[0].mxu0
        %3807 = vmatprep.mubr.f32.mxu0 0.0
        %3808 = vmatmul.mubr.f32.gmra.mrb[0].mxu0 %v2690
        %v3809 = vpop.f32.mrb[0].mxu0
        %v3810 = vadd.f32 %v3585, %v3809
        %v3811 = vpop.f32.mrb[0].mxu0
        %3812 = vmatprep.mubr.f32.mxu0 0.0
        %3813 = vmatmul.mubr.f32.gmra.mrb[0].mxu0 %v2692
        %v3814 = vpop.f32.mrb[0].mxu0
        %v3815 = vadd.f32 %v3590, %v3814
        %v3816 = vpop.f32.mrb[0].mxu0
        %3817 = vmatprep.mubr.f32.mxu0 0.0
        %3818 = vmatmul.mubr.f32.gmra.mrb[0].mxu0 %v2693
        %v3819 = vpop.f32.mrb[0].mxu0
        %v3820 = vadd.f32 %v3595, %v3819
        %v3821 = vpop.f32.mrb[0].mxu0
        %3822 = vmatprep.mubr.f32.mxu0 0.0
        %3823 = vmatmul.mubr.f32.gmra.mrb[0].mxu0 %v2695
        %v3824 = vpop.f32.mrb[0].mxu0
        %v3825 = vadd.f32 %v3600, %v3824
        %v3826 = vpop.f32.mrb[0].mxu0
        %3827 = vmatprep.mubr.f32.mxu0 0.0
        %3828 = vmatmul.mubr.f32.gmra.mrb[0].mxu0 %v2696
        %v3829 = vpop.f32.mrb[0].mxu0
        %v3830 = vadd.f32 %v3605, %v3829
        %v3831 = vpop.f32.mrb[0].mxu0
        %3832 = vmatprep.mubr.f32.mxu0 0.0
        %3833 = vmatmul.mubr.f32.gmra.mrb[0].mxu0 %v2698
        %v3834 = vpop.f32.mrb[0].mxu0
        %v3835 = vadd.f32 %v3610, %v3834
        %v3836 = vpop.f32.mrb[0].mxu0
        %3837 = vmatprep.mubr.f32.mxu0 0.0
        %3838 = vmatmul.mubr.f32.gmra.mrb[0].mxu0 %v2699
        %v3839 = vpop.f32.mrb[0].mxu0
        %v3840 = vadd.f32 %v3615, %v3839
        %v3841 = vpop.f32.mrb[0].mxu0
        %3842 = vmatprep.mubr.f32.mxu0 0.0
        %3843 = vmatmul.mubr.f32.gmra.mrb[0].mxu0 %v2701
        %v3844 = vpop.f32.mrb[0].mxu0
        %v3845 = vadd.f32 %v3620, %v3844
        %v3846 = vpop.f32.mrb[0].mxu0
        %3847 = vmatprep.mubr.f32.mxu0 0.0
        %3848 = vmatmul.mubr.f32.gmra.mrb[0].mxu0 %v2702
        %v3849 = vpop.f32.mrb[0].mxu0
        %v3850 = vadd.f32 %v3625, %v3849
        %v3851 = vpop.f32.mrb[0].mxu0
        %3852 = vmatprep.mubr.f32.mxu0 0.0
        %3853 = vmatmul.mubr.f32.gmra.mrb[0].mxu0 %v2704
        %v3854 = vpop.f32.mrb[0].mxu0
        %v3855 = vadd.f32 %v3630, %v3854
        %v3856 = vpop.f32.mrb[0].mxu0
        %3857 = vmatprep.mubr.f32.mxu0 0.0
        %3858 = vmatmul.mubr.f32.gmra.mrb[0].mxu0 %v2705
        %v3859 = vpop.f32.mrb[0].mxu0
        %v3860 = vadd.f32 %v3635, %v3859
        %v3861 = vpop.f32.mrb[0].mxu0
        %3862 = vmatprep.mubr.f32.mxu0 0.0
        %3863 = vmatmul.mubr.f32.gmra.mrb[0].mxu0 %v2707
        %v3864 = vpop.f32.mrb[0].mxu0
        %v3865 = vadd.f32 %v3640, %v3864
        %v3866 = vpop.f32.mrb[0].mxu0
        %3867 = vmatprep.mubr.f32.mxu0 0.0
        %3868 = vmatmul.mubr.f32.gmra.mrb[0].mxu0 %v2708
        %v3869 = vpop.f32.mrb[0].mxu0
        %v3870 = vadd.f32 %v3645, %v3869
        %v3871 = vpop.f32.mrb[0].mxu0
        %3872 = vmatprep.mubr.f32.mxu0 0.0
        %3873 = vmatmul.mubr.f32.gmra.mrb[0].mxu0 %v2710
        %v3874 = vpop.f32.mrb[0].mxu0
        %v3875 = vadd.f32 %v3650, %v3874
        %v3876 = vpop.f32.mrb[0].mxu0
        %3877 = vmatprep.mubr.f32.mxu0 0.0
        %3878 = vmatmul.mubr.f32.gmra.mrb[0].mxu0 %v2711
        %v3879 = vpop.f32.mrb[0].mxu0
        %v3880 = vadd.f32 %v3655, %v3879
        %v3881 = vpop.f32.mrb[0].mxu0
        %3882 = vmatprep.mubr.f32.mxu0 0.0
        %3883 = vmatmul.mubr.f32.gmra.mrb[0].mxu0 %v2713
        %v3884 = vpop.f32.mrb[0].mxu0
        %v3885 = vadd.f32 %v3660, %v3884
        %v3886 = vpop.f32.mrb[0].mxu0
        %3887 = vmatprep.mubr.f32.mxu0 0.0
        %3888 = vmatmul.mubr.f32.gmra.mrb[0].mxu0 %v2714
        %v3889 = vpop.f32.mrb[0].mxu0
        %v3890 = vadd.f32 %v3665, %v3889
        %v3891 = vpop.f32.mrb[0].mxu0
        %3892 = vdwg.mxu0
        %v3893 = vrot.slane %v2662, 2
        %v3894 = vrot.slane %v2663, 2
        %v3895 = vsel %vm1592, %v3893, %v3894
        %v3896 = vrot.slane %v2665, 2
        %v3897 = vrot.slane %v2666, 2
        %v3898 = vsel %vm1592, %v3896, %v3897
        %v3899 = vrot.slane %v2668, 2
        %v3900 = vrot.slane %v2669, 2
        %v3901 = vsel %vm1592, %v3899, %v3900
        %v3902 = vrot.slane %v2664, 2
        %v3903 = vsel %vm1592, %v3894, %v3902
        %v3904 = vrot.slane %v2667, 2
        %v3905 = vsel %vm1592, %v3897, %v3904
        %v3906 = vrot.slane %v2670, 2
        %v3907 = vsel %vm1592, %v3900, %v3906
        %v3908 = vrot.slane %v2671, 2
        %v3909 = vrot.slane %v2672, 2
        %v3910 = vsel %vm1592, %v3908, %v3909
        %v3911 = vrot.slane %v2673, 2
        %v3912 = vsel %vm1592, %v3909, %v3911
        %v3913 = vrot.slane %v2674, 2
        %v3914 = vrot.slane %v2675, 2
        %v3915 = vsel %vm1592, %v3913, %v3914
        %v3916 = vrot.slane %v2676, 2
        %v3917 = vsel %vm1592, %v3914, %v3916
        %v3918 = vrot.slane %v2677, 2
        %v3919 = vrot.slane %v2678, 2
        %v3920 = vsel %vm1592, %v3918, %v3919
        %v3921 = vrot.slane %v2679, 2
        %v3922 = vsel %vm1592, %v3919, %v3921
        %v3923 = vrot.slane %v2680, 2
        %v3924 = vrot.slane %v2681, 2
        %v3925 = vsel %vm1592, %v3923, %v3924
        %v3926 = vrot.slane %v2682, 2
        %v3927 = vsel %vm1592, %v3924, %v3926
        %v3928 = vrot.slane %v2683, 2
        %v3929 = vrot.slane %v2684, 2
        %v3930 = vsel %vm1592, %v3928, %v3929
        %v3931 = vrot.slane %v2685, 2
        %v3932 = vsel %vm1592, %v3929, %v3931
        %v3933 = vrot.slane %v2686, 2
        %v3934 = vrot.slane %v2687, 2
        %v3935 = vsel %vm1592, %v3933, %v3934
        %v3936 = vrot.slane %v2688, 2
        %v3937 = vsel %vm1592, %v3934, %v3936
        %v3938 = vrot.slane %v2689, 2
        %v3939 = vrot.slane %v2690, 2
        %v3940 = vsel %vm1592, %v3938, %v3939
        %v3941 = vrot.slane %v2691, 2
        %v3942 = vsel %vm1592, %v3939, %v3941
        %v3943 = vrot.slane %v2692, 2
        %v3944 = vrot.slane %v2693, 2
        %v3945 = vsel %vm1592, %v3943, %v3944
        %v3946 = vrot.slane %v2694, 2
        %v3947 = vsel %vm1592, %v3944, %v3946
        %v3948 = vrot.slane %v2695, 2
        %v3949 = vrot.slane %v2696, 2
        %v3950 = vsel %vm1592, %v3948, %v3949
        %v3951 = vrot.slane %v2697, 2
        %v3952 = vsel %vm1592, %v3949, %v3951
        %v3953 = vrot.slane %v2698, 2
        %v3954 = vrot.slane %v2699, 2
        %v3955 = vsel %vm1592, %v3953, %v3954
        %v3956 = vrot.slane %v2700, 2
        %v3957 = vsel %vm1592, %v3954, %v3956
        %v3958 = vrot.slane %v2701, 2
        %v3959 = vrot.slane %v2702, 2
        %v3960 = vsel %vm1592, %v3958, %v3959
        %v3961 = vrot.slane %v2703, 2
        %v3962 = vsel %vm1592, %v3959, %v3961
        %v3963 = vrot.slane %v2704, 2
        %v3964 = vrot.slane %v2705, 2
        %v3965 = vsel %vm1592, %v3963, %v3964
        %v3966 = vrot.slane %v2706, 2
        %v3967 = vsel %vm1592, %v3964, %v3966
        %v3968 = vrot.slane %v2707, 2
        %v3969 = vrot.slane %v2708, 2
        %v3970 = vsel %vm1592, %v3968, %v3969
        %v3971 = vrot.slane %v2709, 2
        %v3972 = vsel %vm1592, %v3969, %v3971
        %v3973 = vrot.slane %v2710, 2
        %v3974 = vrot.slane %v2711, 2
        %v3975 = vsel %vm1592, %v3973, %v3974
        %v3976 = vrot.slane %v2712, 2
        %v3977 = vsel %vm1592, %v3974, %v3976
        %v3978 = vrot.slane %v2713, 2
        %v3979 = vrot.slane %v2714, 2
        %v3980 = vsel %vm1592, %v3978, %v3979
        %v3981 = vrot.slane %v2715, 2
        %v3982 = vsel %vm1592, %v3979, %v3981
        %s4019 = scalar_lea.vmem [#allocation9], 768
        %v4020 = vld [vmem:[%s4019] sm:$0xff]
        %v4021 = vld [vmem:[%s4019 + $0x8] sm:$0xff]
        %v4022 = vld [vmem:[%s4019 + $0x10] sm:$0xff]
        %v4023 = vld [vmem:[%s4019 + $0x18] sm:$0xff]
        %v4024 = vld [vmem:[%s4019 + $0x20] sm:$0xff]
        %v4025 = vld [vmem:[%s4019 + $0x28] sm:$0xff]
        %v4026 = vld [vmem:[%s4019 + $0x30] sm:$0xff]
        %v4027 = vld [vmem:[%s4019 + $0x38] sm:$0xff]
        %v4028 = vld [vmem:[%s4019 + $0x40] sm:$0xff]
        %v4029 = vld [vmem:[%s4019 + $0x48] sm:$0xff]
        %v4030 = vld [vmem:[%s4019 + $0x50] sm:$0xff]
        %v4031 = vld [vmem:[%s4019 + $0x58] sm:$0xff]
        %v4032 = vld [vmem:[%s4019 + $0x60] sm:$0xff]
        %v4033 = vld [vmem:[%s4019 + $0x68] sm:$0xff]
        %v4034 = vld [vmem:[%s4019 + $0x70] sm:$0xff]
        %v4035 = vld [vmem:[%s4019 + $0x78] sm:$0xff]
        %v4036 = vld [vmem:[%s4019 + $0x80] sm:$0xff]
        %v4037 = vld [vmem:[%s4019 + $0x88] sm:$0xff]
        %v4038 = vld [vmem:[%s4019 + $0x90] sm:$0xff]
        %v4039 = vld [vmem:[%s4019 + $0x98] sm:$0xff]
        %v4040 = vld [vmem:[%s4019 + $0xa0] sm:$0xff]
        %v4041 = vld [vmem:[%s4019 + $0xa8] sm:$0xff]
        %v4042 = vld [vmem:[%s4019 + $0xb0] sm:$0xff]
        %v4043 = vld [vmem:[%s4019 + $0xb8] sm:$0xff]
        %v4044 = vld [vmem:[%s4019 + $0xc0] sm:$0xff]
        %v4045 = vld [vmem:[%s4019 + $0xc8] sm:$0xff]
        %v4046 = vld [vmem:[%s4019 + $0xd0] sm:$0xff]
        %v4047 = vld [vmem:[%s4019 + $0xd8] sm:$0xff]
        %v4048 = vld [vmem:[%s4019 + $0xe0] sm:$0xff]
        %v4049 = vld [vmem:[%s4019 + $0xe8] sm:$0xff]
        %v4050 = vld [vmem:[%s4019 + $0xf0] sm:$0xff]
        %v4051 = vld [vmem:[%s4019 + $0xf8] sm:$0xff]
        %v4052 = vld [vmem:[%s4019 + $0x100] sm:$0xff]
        %v4053 = vld [vmem:[%s4019 + $0x108] sm:$0xff]
        %v4054 = vld [vmem:[%s4019 + $0x110] sm:$0xff]
        %v4055 = vld [vmem:[%s4019 + $0x118] sm:$0xff]
        %v4056 = vld [vmem:[%s4019 + $0x120] sm:$0xff]
        %v4057 = vld [vmem:[%s4019 + $0x128] sm:$0xff]
        %v4058 = vld [vmem:[%s4019 + $0x130] sm:$0xff]
        %v4059 = vld [vmem:[%s4019 + $0x138] sm:$0xff]
        %v4060 = vld [vmem:[%s4019 + $0x140] sm:$0xff]
        %v4061 = vld [vmem:[%s4019 + $0x148] sm:$0xff]
        %v4062 = vld [vmem:[%s4019 + $0x150] sm:$0xff]
        %v4063 = vld [vmem:[%s4019 + $0x158] sm:$0xff]
        %v4064 = vld [vmem:[%s4019 + $0x160] sm:$0xff]
        %v4065 = vld [vmem:[%s4019 + $0x168] sm:$0xff]
        %v4066 = vld [vmem:[%s4019 + $0x170] sm:$0xff]
        %v4067 = vld [vmem:[%s4019 + $0x178] sm:$0xff]
        %4068 = vmatprep.subr.mxu0 0.0
        %4069 = vmatpush1.msra.mxu0 %v4020
        %4070 = vmatprep.subr.mxu0 0.0
        %4071 = vmatpush1.msra.mxu0 %v4021
        %4072 = vmatprep.subr.mxu0 0.0
        %4073 = vmatpush1.msra.mxu0 %v4022
        %4074 = vmatprep.subr.mxu0 0.0
        %4075 = vmatpush1.msra.mxu0 %v4023
        %4076 = vmatprep.subr.mxu0 0.0
        %4077 = vmatpush1.msra.mxu0 %v4024
        %4078 = vmatprep.subr.mxu0 0.0
        %4079 = vmatpush1.msra.mxu0 %v4025
        %4080 = vmatprep.subr.mxu0 0.0
        %4081 = vmatpush1.msra.mxu0 %v4026
        %4082 = vmatprep.subr.mxu0 0.0
        %4083 = vmatpush1.msra.mxu0 %v4027
        %4084 = vmatprep.subr.mxu0 0.0
        %4085 = vmatpush1.msra.mxu0 %v4028
        %4086 = vmatprep.subr.mxu0 0.0
        %4087 = vmatpush1.msra.mxu0 %v4029
        %4088 = vmatprep.subr.mxu0 0.0
        %4089 = vmatpush1.msra.mxu0 %v4030
        %4090 = vmatprep.subr.mxu0 0.0
        %4091 = vmatpush1.msra.mxu0 %v4031
        %4092 = vmatprep.subr.mxu0 0.0
        %4093 = vmatpush1.msra.mxu0 %v4032
        %4094 = vmatprep.subr.mxu0 0.0
        %4095 = vmatpush1.msra.mxu0 %v4033
        %4096 = vmatprep.subr.mxu0 0.0
        %4097 = vmatpush1.msra.mxu0 %v4034
        %4098 = vmatprep.subr.mxu0 0.0
        %4099 = vmatpush1.msra.mxu0 %v4035
        %4100 = vmatprep.subr.mxu0 0.0
        %4101 = vmatpush1.msra.mxu0 %v4036
        %4102 = vmatprep.subr.mxu0 0.0
        %4103 = vmatpush1.msra.mxu0 %v4037
        %4104 = vmatprep.subr.mxu0 0.0
        %4105 = vmatpush1.msra.mxu0 %v4038
        %4106 = vmatprep.subr.mxu0 0.0
        %4107 = vmatpush1.msra.mxu0 %v4039
        %4108 = vmatprep.subr.mxu0 0.0
        %4109 = vmatpush1.msra.mxu0 %v4040
        %4110 = vmatprep.subr.mxu0 0.0
        %4111 = vmatpush1.msra.mxu0 %v4041
        %4112 = vmatprep.subr.mxu0 0.0
        %4113 = vmatpush1.msra.mxu0 %v4042
        %4114 = vmatprep.subr.mxu0 0.0
        %4115 = vmatpush1.msra.mxu0 %v4043
        %4116 = vmatprep.subr.mxu0 0.0
        %4117 = vmatpush1.msra.mxu0 %v4044
        %4118 = vmatprep.subr.mxu0 0.0
        %4119 = vmatpush1.msra.mxu0 %v4045
        %4120 = vmatprep.subr.mxu0 0.0
        %4121 = vmatpush1.msra.mxu0 %v4046
        %4122 = vmatprep.subr.mxu0 0.0
        %4123 = vmatpush1.msra.mxu0 %v4047
        %4124 = vmatprep.subr.mxu0 0.0
        %4125 = vmatpush1.msra.mxu0 %v4048
        %4126 = vmatprep.subr.mxu0 0.0
        %4127 = vmatpush1.msra.mxu0 %v4049
        %4128 = vmatprep.subr.mxu0 0.0
        %4129 = vmatpush1.msra.mxu0 %v4050
        %4130 = vmatprep.subr.mxu0 0.0
        %4131 = vmatpush1.msra.mxu0 %v4051
        %4132 = vmatprep.mubr.f32.mxu0 %v3898
        %4133 = vmatmul.mubr.f32.gmra.mrb[0].mxu0 %v3895
        %v4134 = vpop.f32.mrb[0].mxu0
        %v4135 = vadd.f32 0.0, %v4134
        %v4136 = vpop.f32.mrb[0].mxu0
        %4137 = vmatprep.mubr.f32.mxu0 %v3905
        %4138 = vmatmul.mubr.f32.gmra.mrb[0].mxu0 %v3903
        %v4139 = vpop.f32.mrb[0].mxu0
        %v4140 = vadd.f32 0.0, %v4139
        %v4141 = vpop.f32.mrb[0].mxu0
        %4142 = vmatprep.mubr.f32.mxu0 %v3901
        %4143 = vmatmul.mubr.f32.gmra.mrb[0].mxu0 %v3898
        %v4144 = vpop.f32.mrb[0].mxu0
        %v4145 = vadd.f32 0.0, %v4144
        %v4146 = vpop.f32.mrb[0].mxu0
        %4147 = vmatprep.mubr.f32.mxu0 %v3907
        %4148 = vmatmul.mubr.f32.gmra.mrb[0].mxu0 %v3905
        %v4149 = vpop.f32.mrb[0].mxu0
        %v4150 = vadd.f32 0.0, %v4149
        %v4151 = vpop.f32.mrb[0].mxu0
        %4152 = vmatprep.mubr.f32.mxu0 %v3910
        %4153 = vmatmul.mubr.f32.gmra.mrb[0].mxu0 %v3901
        %v4154 = vpop.f32.mrb[0].mxu0
        %v4155 = vadd.f32 0.0, %v4154
        %v4156 = vpop.f32.mrb[0].mxu0
        %4157 = vmatprep.mubr.f32.mxu0 %v3912
        %4158 = vmatmul.mubr.f32.gmra.mrb[0].mxu0 %v3907
        %v4159 = vpop.f32.mrb[0].mxu0
        %v4160 = vadd.f32 0.0, %v4159
        %v4161 = vpop.f32.mrb[0].mxu0
        %4162 = vmatprep.mubr.f32.mxu0 %v3915
        %4163 = vmatmul.mubr.f32.gmra.mrb[0].mxu0 %v3910
        %v4164 = vpop.f32.mrb[0].mxu0
        %v4165 = vadd.f32 0.0, %v4164
        %v4166 = vpop.f32.mrb[0].mxu0
        %4167 = vmatprep.mubr.f32.mxu0 %v3917
        %4168 = vmatmul.mubr.f32.gmra.mrb[0].mxu0 %v3912
        %v4169 = vpop.f32.mrb[0].mxu0
        %v4170 = vadd.f32 0.0, %v4169
        %v4171 = vpop.f32.mrb[0].mxu0
        %4172 = vmatprep.mubr.f32.mxu0 %v3920
        %4173 = vmatmul.mubr.f32.gmra.mrb[0].mxu0 %v3915
        %v4174 = vpop.f32.mrb[0].mxu0
        %v4175 = vadd.f32 0.0, %v4174
        %v4176 = vpop.f32.mrb[0].mxu0
        %4177 = vmatprep.mubr.f32.mxu0 %v3922
        %4178 = vmatmul.mubr.f32.gmra.mrb[0].mxu0 %v3917
        %v4179 = vpop.f32.mrb[0].mxu0
        %v4180 = vadd.f32 0.0, %v4179
        %v4181 = vpop.f32.mrb[0].mxu0
        %4182 = vmatprep.mubr.f32.mxu0 %v3925
        %4183 = vmatmul.mubr.f32.gmra.mrb[0].mxu0 %v3920
        %v4184 = vpop.f32.mrb[0].mxu0
        %v4185 = vadd.f32 0.0, %v4184
        %v4186 = vpop.f32.mrb[0].mxu0
        %4187 = vmatprep.mubr.f32.mxu0 %v3927
        %4188 = vmatmul.mubr.f32.gmra.mrb[0].mxu0 %v3922
        %v4189 = vpop.f32.mrb[0].mxu0
        %v4190 = vadd.f32 0.0, %v4189
        %v4191 = vpop.f32.mrb[0].mxu0
        %4192 = vmatprep.mubr.f32.mxu0 %v3930
        %4193 = vmatmul.mubr.f32.gmra.mrb[0].mxu0 %v3925
        %v4194 = vpop.f32.mrb[0].mxu0
        %v4195 = vadd.f32 0.0, %v4194
        %v4196 = vpop.f32.mrb[0].mxu0
        %4197 = vmatprep.mubr.f32.mxu0 %v3932
        %4198 = vmatmul.mubr.f32.gmra.mrb[0].mxu0 %v3927
        %v4199 = vpop.f32.mrb[0].mxu0
        %v4200 = vadd.f32 0.0, %v4199
        %v4201 = vpop.f32.mrb[0].mxu0
        %4202 = vmatprep.mubr.f32.mxu0 %v3935
        %4203 = vmatmul.mubr.f32.gmra.mrb[0].mxu0 %v3930
        %v4204 = vpop.f32.mrb[0].mxu0
        %v4205 = vadd.f32 0.0, %v4204
        %v4206 = vpop.f32.mrb[0].mxu0
        %4207 = vmatprep.mubr.f32.mxu0 %v3937
        %4208 = vmatmul.mubr.f32.gmra.mrb[0].mxu0 %v3932
        %v4209 = vpop.f32.mrb[0].mxu0
        %v4210 = vadd.f32 0.0, %v4209
        %v4211 = vpop.f32.mrb[0].mxu0
        %4212 = vmatprep.mubr.f32.mxu0 %v3940
        %4213 = vmatmul.mubr.f32.gmra.mrb[0].mxu0 %v3935
        %v4214 = vpop.f32.mrb[0].mxu0
        %v4215 = vadd.f32 0.0, %v4214
        %v4216 = vpop.f32.mrb[0].mxu0
        %4217 = vmatprep.mubr.f32.mxu0 %v3942
        %4218 = vmatmul.mubr.f32.gmra.mrb[0].mxu0 %v3937
        %v4219 = vpop.f32.mrb[0].mxu0
        %v4220 = vadd.f32 0.0, %v4219
        %v4221 = vpop.f32.mrb[0].mxu0
        %4222 = vmatprep.mubr.f32.mxu0 %v3945
        %4223 = vmatmul.mubr.f32.gmra.mrb[0].mxu0 %v3940
        %v4224 = vpop.f32.mrb[0].mxu0
        %v4225 = vadd.f32 0.0, %v4224
        %v4226 = vpop.f32.mrb[0].mxu0
        %4227 = vmatprep.mubr.f32.mxu0 %v3947
        %4228 = vmatmul.mubr.f32.gmra.mrb[0].mxu0 %v3942
        %v4229 = vpop.f32.mrb[0].mxu0
        %v4230 = vadd.f32 0.0, %v4229
        %v4231 = vpop.f32.mrb[0].mxu0
        %4232 = vmatprep.mubr.f32.mxu0 %v3950
        %4233 = vmatmul.mubr.f32.gmra.mrb[0].mxu0 %v3945
        %v4234 = vpop.f32.mrb[0].mxu0
        %v4235 = vadd.f32 0.0, %v4234
        %v4236 = vpop.f32.mrb[0].mxu0
        %4237 = vmatprep.mubr.f32.mxu0 %v3952
        %4238 = vmatmul.mubr.f32.gmra.mrb[0].mxu0 %v3947
        %v4239 = vpop.f32.mrb[0].mxu0
        %v4240 = vadd.f32 0.0, %v4239
        %v4241 = vpop.f32.mrb[0].mxu0
        %4242 = vmatprep.mubr.f32.mxu0 %v3955
        %4243 = vmatmul.mubr.f32.gmra.mrb[0].mxu0 %v3950
        %v4244 = vpop.f32.mrb[0].mxu0
        %v4245 = vadd.f32 0.0, %v4244
        %v4246 = vpop.f32.mrb[0].mxu0
        %4247 = vmatprep.mubr.f32.mxu0 %v3957
        %4248 = vmatmul.mubr.f32.gmra.mrb[0].mxu0 %v3952
        %v4249 = vpop.f32.mrb[0].mxu0
        %v4250 = vadd.f32 0.0, %v4249
        %v4251 = vpop.f32.mrb[0].mxu0
        %4252 = vmatprep.mubr.f32.mxu0 %v3960
        %4253 = vmatmul.mubr.f32.gmra.mrb[0].mxu0 %v3955
        %v4254 = vpop.f32.mrb[0].mxu0
        %v4255 = vadd.f32 0.0, %v4254
        %v4256 = vpop.f32.mrb[0].mxu0
        %4257 = vmatprep.mubr.f32.mxu0 %v3962
        %4258 = vmatmul.mubr.f32.gmra.mrb[0].mxu0 %v3957
        %v4259 = vpop.f32.mrb[0].mxu0
        %v4260 = vadd.f32 0.0, %v4259
        %v4261 = vpop.f32.mrb[0].mxu0
        %4262 = vmatprep.mubr.f32.mxu0 %v3965
        %4263 = vmatmul.mubr.f32.gmra.mrb[0].mxu0 %v3960
        %v4264 = vpop.f32.mrb[0].mxu0
        %v4265 = vadd.f32 0.0, %v4264
        %v4266 = vpop.f32.mrb[0].mxu0
        %4267 = vmatprep.mubr.f32.mxu0 %v3967
        %4268 = vmatmul.mubr.f32.gmra.mrb[0].mxu0 %v3962
        %v4269 = vpop.f32.mrb[0].mxu0
        %v4270 = vadd.f32 0.0, %v4269
        %v4271 = vpop.f32.mrb[0].mxu0
        %4272 = vmatprep.mubr.f32.mxu0 %v3970
        %4273 = vmatmul.mubr.f32.gmra.mrb[0].mxu0 %v3965
        %v4274 = vpop.f32.mrb[0].mxu0
        %v4275 = vadd.f32 0.0, %v4274
        %v4276 = vpop.f32.mrb[0].mxu0
        %4277 = vmatprep.mubr.f32.mxu0 %v3972
        %4278 = vmatmul.mubr.f32.gmra.mrb[0].mxu0 %v3967
        %v4279 = vpop.f32.mrb[0].mxu0
        %v4280 = vadd.f32 0.0, %v4279
        %v4281 = vpop.f32.mrb[0].mxu0
        %4282 = vmatprep.mubr.f32.mxu0 %v3975
        %4283 = vmatmul.mubr.f32.gmra.mrb[0].mxu0 %v3970
        %v4284 = vpop.f32.mrb[0].mxu0
        %v4285 = vadd.f32 0.0, %v4284
        %v4286 = vpop.f32.mrb[0].mxu0
        %4287 = vmatprep.mubr.f32.mxu0 %v3977
        %4288 = vmatmul.mubr.f32.gmra.mrb[0].mxu0 %v3972
        %v4289 = vpop.f32.mrb[0].mxu0
        %v4290 = vadd.f32 0.0, %v4289
        %v4291 = vpop.f32.mrb[0].mxu0
        %4292 = vdwg.mxu0
        %4293 = vmatprep.subr.mxu0 0.0
        %4294 = vmatpush1.msra.mxu0 %v4052
        %4295 = vmatprep.subr.mxu0 0.0
        %4296 = vmatpush1.msra.mxu0 %v4053
        %4297 = vmatprep.subr.mxu0 0.0
        %4298 = vmatpush1.msra.mxu0 %v4054
        %4299 = vmatprep.subr.mxu0 0.0
        %4300 = vmatpush1.msra.mxu0 %v4055
        %4301 = vmatprep.subr.mxu0 0.0
        %4302 = vmatpush1.msra.mxu0 %v4056
        %4303 = vmatprep.subr.mxu0 0.0
        %4304 = vmatpush1.msra.mxu0 %v4057
        %4305 = vmatprep.subr.mxu0 0.0
        %4306 = vmatpush1.msra.mxu0 %v4058
        %4307 = vmatprep.subr.mxu0 0.0
        %4308 = vmatpush1.msra.mxu0 %v4059
        %4309 = vmatprep.subr.mxu0 0.0
        %4310 = vmatpush1.msra.mxu0 %v4060
        %4311 = vmatprep.subr.mxu0 0.0
        %4312 = vmatpush1.msra.mxu0 %v4061
        %4313 = vmatprep.subr.mxu0 0.0
        %4314 = vmatpush1.msra.mxu0 %v4062
        %4315 = vmatprep.subr.mxu0 0.0
        %4316 = vmatpush1.msra.mxu0 %v4063
        %4317 = vmatprep.subr.mxu0 0.0
        %4318 = vmatpush1.msra.mxu0 %v4064
        %4319 = vmatprep.subr.mxu0 0.0
        %4320 = vmatpush1.msra.mxu0 %v4065
        %4321 = vmatprep.subr.mxu0 0.0
        %4322 = vmatpush1.msra.mxu0 %v4066
        %4323 = vmatprep.subr.mxu0 0.0
        %4324 = vmatpush1.msra.mxu0 %v4067
        %4325 = vmatprep.subr.mxu0 0.0
        %4326 = vmatpush1.msra.mxu0 0.0
        %4327 = vmatprep.subr.mxu0 0.0
        %4328 = vmatpush1.msra.mxu0 0.0
        %4329 = vmatprep.subr.mxu0 0.0
        %4330 = vmatpush1.msra.mxu0 0.0
        %4331 = vmatprep.subr.mxu0 0.0
        %4332 = vmatpush1.msra.mxu0 0.0
        %4333 = vmatprep.subr.mxu0 0.0
        %4334 = vmatpush1.msra.mxu0 0.0
        %4335 = vmatprep.subr.mxu0 0.0
        %4336 = vmatpush1.msra.mxu0 0.0
        %4337 = vmatprep.subr.mxu0 0.0
        %4338 = vmatpush1.msra.mxu0 0.0
        %4339 = vmatprep.subr.mxu0 0.0
        %4340 = vmatpush1.msra.mxu0 0.0
        %4341 = vmatprep.subr.mxu0 0.0
        %4342 = vmatpush1.msra.mxu0 0.0
        %4343 = vmatprep.subr.mxu0 0.0
        %4344 = vmatpush1.msra.mxu0 0.0
        %4345 = vmatprep.subr.mxu0 0.0
        %4346 = vmatpush1.msra.mxu0 0.0
        %4347 = vmatprep.subr.mxu0 0.0
        %4348 = vmatpush1.msra.mxu0 0.0
        %4349 = vmatprep.subr.mxu0 0.0
        %4350 = vmatpush1.msra.mxu0 0.0
        %4351 = vmatprep.subr.mxu0 0.0
        %4352 = vmatpush1.msra.mxu0 0.0
        %4353 = vmatprep.subr.mxu0 0.0
        %4354 = vmatpush1.msra.mxu0 0.0
        %4355 = vmatprep.subr.mxu0 0.0
        %4356 = vmatpush1.msra.mxu0 0.0
        %4357 = vmatprep.mubr.f32.mxu0 0.0
        %4358 = vmatmul.mubr.f32.gmra.mrb[0].mxu0 %v3901
        %v4359 = vpop.f32.mrb[0].mxu0
        %v4360 = vadd.f32 %v4135, %v4359
        %v4361 = vpop.f32.mrb[0].mxu0
        %4362 = vmatprep.mubr.f32.mxu0 0.0
        %4363 = vmatmul.mubr.f32.gmra.mrb[0].mxu0 %v3907
        %v4364 = vpop.f32.mrb[0].mxu0
        %v4365 = vadd.f32 %v4140, %v4364
        %v4366 = vpop.f32.mrb[0].mxu0
        %4367 = vmatprep.mubr.f32.mxu0 0.0
        %4368 = vmatmul.mubr.f32.gmra.mrb[0].mxu0 %v3910
        %v4369 = vpop.f32.mrb[0].mxu0
        %v4370 = vadd.f32 %v4145, %v4369
        %v4371 = vpop.f32.mrb[0].mxu0
        %4372 = vmatprep.mubr.f32.mxu0 0.0
        %4373 = vmatmul.mubr.f32.gmra.mrb[0].mxu0 %v3912
        %v4374 = vpop.f32.mrb[0].mxu0
        %v4375 = vadd.f32 %v4150, %v4374
        %v4376 = vpop.f32.mrb[0].mxu0
        %4377 = vmatprep.mubr.f32.mxu0 0.0
        %4378 = vmatmul.mubr.f32.gmra.mrb[0].mxu0 %v3915
        %v4379 = vpop.f32.mrb[0].mxu0
        %v4380 = vadd.f32 %v4155, %v4379
        %v4381 = vpop.f32.mrb[0].mxu0
        %4382 = vmatprep.mubr.f32.mxu0 0.0
        %4383 = vmatmul.mubr.f32.gmra.mrb[0].mxu0 %v3917
        %v4384 = vpop.f32.mrb[0].mxu0
        %v4385 = vadd.f32 %v4160, %v4384
        %v4386 = vpop.f32.mrb[0].mxu0
        %4387 = vmatprep.mubr.f32.mxu0 0.0
        %4388 = vmatmul.mubr.f32.gmra.mrb[0].mxu0 %v3920
        %v4389 = vpop.f32.mrb[0].mxu0
        %v4390 = vadd.f32 %v4165, %v4389
        %v4391 = vpop.f32.mrb[0].mxu0
        %4392 = vmatprep.mubr.f32.mxu0 0.0
        %4393 = vmatmul.mubr.f32.gmra.mrb[0].mxu0 %v3922
        %v4394 = vpop.f32.mrb[0].mxu0
        %v4395 = vadd.f32 %v4170, %v4394
        %v4396 = vpop.f32.mrb[0].mxu0
        %4397 = vmatprep.mubr.f32.mxu0 0.0
        %4398 = vmatmul.mubr.f32.gmra.mrb[0].mxu0 %v3925
        %v4399 = vpop.f32.mrb[0].mxu0
        %v4400 = vadd.f32 %v4175, %v4399
        %v4401 = vpop.f32.mrb[0].mxu0
        %4402 = vmatprep.mubr.f32.mxu0 0.0
        %4403 = vmatmul.mubr.f32.gmra.mrb[0].mxu0 %v3927
        %v4404 = vpop.f32.mrb[0].mxu0
        %v4405 = vadd.f32 %v4180, %v4404
        %v4406 = vpop.f32.mrb[0].mxu0
        %4407 = vmatprep.mubr.f32.mxu0 0.0
        %4408 = vmatmul.mubr.f32.gmra.mrb[0].mxu0 %v3930
        %v4409 = vpop.f32.mrb[0].mxu0
        %v4410 = vadd.f32 %v4185, %v4409
        %v4411 = vpop.f32.mrb[0].mxu0
        %4412 = vmatprep.mubr.f32.mxu0 0.0
        %4413 = vmatmul.mubr.f32.gmra.mrb[0].mxu0 %v3932
        %v4414 = vpop.f32.mrb[0].mxu0
        %v4415 = vadd.f32 %v4190, %v4414
        %v4416 = vpop.f32.mrb[0].mxu0
        %4417 = vmatprep.mubr.f32.mxu0 0.0
        %4418 = vmatmul.mubr.f32.gmra.mrb[0].mxu0 %v3935
        %v4419 = vpop.f32.mrb[0].mxu0
        %v4420 = vadd.f32 %v4195, %v4419
        %v4421 = vpop.f32.mrb[0].mxu0
        %4422 = vmatprep.mubr.f32.mxu0 0.0
        %4423 = vmatmul.mubr.f32.gmra.mrb[0].mxu0 %v3937
        %v4424 = vpop.f32.mrb[0].mxu0
        %v4425 = vadd.f32 %v4200, %v4424
        %v4426 = vpop.f32.mrb[0].mxu0
        %4427 = vmatprep.mubr.f32.mxu0 0.0
        %4428 = vmatmul.mubr.f32.gmra.mrb[0].mxu0 %v3940
        %v4429 = vpop.f32.mrb[0].mxu0
        %v4430 = vadd.f32 %v4205, %v4429
        %v4431 = vpop.f32.mrb[0].mxu0
        %4432 = vmatprep.mubr.f32.mxu0 0.0
        %4433 = vmatmul.mubr.f32.gmra.mrb[0].mxu0 %v3942
        %v4434 = vpop.f32.mrb[0].mxu0
        %v4435 = vadd.f32 %v4210, %v4434
        %v4436 = vpop.f32.mrb[0].mxu0
        %4437 = vmatprep.mubr.f32.mxu0 0.0
        %4438 = vmatmul.mubr.f32.gmra.mrb[0].mxu0 %v3945
        %v4439 = vpop.f32.mrb[0].mxu0
        %v4440 = vadd.f32 %v4215, %v4439
        %v4441 = vpop.f32.mrb[0].mxu0
        %4442 = vmatprep.mubr.f32.mxu0 0.0
        %4443 = vmatmul.mubr.f32.gmra.mrb[0].mxu0 %v3947
        %v4444 = vpop.f32.mrb[0].mxu0
        %v4445 = vadd.f32 %v4220, %v4444
        %v4446 = vpop.f32.mrb[0].mxu0
        %4447 = vmatprep.mubr.f32.mxu0 0.0
        %4448 = vmatmul.mubr.f32.gmra.mrb[0].mxu0 %v3950
        %v4449 = vpop.f32.mrb[0].mxu0
        %v4450 = vadd.f32 %v4225, %v4449
        %v4451 = vpop.f32.mrb[0].mxu0
        %4452 = vmatprep.mubr.f32.mxu0 0.0
        %4453 = vmatmul.mubr.f32.gmra.mrb[0].mxu0 %v3952
        %v4454 = vpop.f32.mrb[0].mxu0
        %v4455 = vadd.f32 %v4230, %v4454
        %v4456 = vpop.f32.mrb[0].mxu0
        %4457 = vmatprep.mubr.f32.mxu0 0.0
        %4458 = vmatmul.mubr.f32.gmra.mrb[0].mxu0 %v3955
        %v4459 = vpop.f32.mrb[0].mxu0
        %v4460 = vadd.f32 %v4235, %v4459
        %v4461 = vpop.f32.mrb[0].mxu0
        %4462 = vmatprep.mubr.f32.mxu0 0.0
        %4463 = vmatmul.mubr.f32.gmra.mrb[0].mxu0 %v3957
        %v4464 = vpop.f32.mrb[0].mxu0
        %v4465 = vadd.f32 %v4240, %v4464
        %v4466 = vpop.f32.mrb[0].mxu0
        %4467 = vmatprep.mubr.f32.mxu0 0.0
        %4468 = vmatmul.mubr.f32.gmra.mrb[0].mxu0 %v3960
        %v4469 = vpop.f32.mrb[0].mxu0
        %v4470 = vadd.f32 %v4245, %v4469
        %v4471 = vpop.f32.mrb[0].mxu0
        %4472 = vmatprep.mubr.f32.mxu0 0.0
        %4473 = vmatmul.mubr.f32.gmra.mrb[0].mxu0 %v3962
        %v4474 = vpop.f32.mrb[0].mxu0
        %v4475 = vadd.f32 %v4250, %v4474
        %v4476 = vpop.f32.mrb[0].mxu0
        %4477 = vmatprep.mubr.f32.mxu0 0.0
        %4478 = vmatmul.mubr.f32.gmra.mrb[0].mxu0 %v3965
        %v4479 = vpop.f32.mrb[0].mxu0
        %v4480 = vadd.f32 %v4255, %v4479
        %v4481 = vpop.f32.mrb[0].mxu0
        %4482 = vmatprep.mubr.f32.mxu0 0.0
        %4483 = vmatmul.mubr.f32.gmra.mrb[0].mxu0 %v3967
        %v4484 = vpop.f32.mrb[0].mxu0
        %v4485 = vadd.f32 %v4260, %v4484
        %v4486 = vpop.f32.mrb[0].mxu0
        %4487 = vmatprep.mubr.f32.mxu0 0.0
        %4488 = vmatmul.mubr.f32.gmra.mrb[0].mxu0 %v3970
        %v4489 = vpop.f32.mrb[0].mxu0
        %v4490 = vadd.f32 %v4265, %v4489
        %v4491 = vpop.f32.mrb[0].mxu0
        %4492 = vmatprep.mubr.f32.mxu0 0.0
        %4493 = vmatmul.mubr.f32.gmra.mrb[0].mxu0 %v3972
        %v4494 = vpop.f32.mrb[0].mxu0
        %v4495 = vadd.f32 %v4270, %v4494
        %v4496 = vpop.f32.mrb[0].mxu0
        %4497 = vmatprep.mubr.f32.mxu0 0.0
        %4498 = vmatmul.mubr.f32.gmra.mrb[0].mxu0 %v3975
        %v4499 = vpop.f32.mrb[0].mxu0
        %v4500 = vadd.f32 %v4275, %v4499
        %v4501 = vpop.f32.mrb[0].mxu0
        %4502 = vmatprep.mubr.f32.mxu0 0.0
        %4503 = vmatmul.mubr.f32.gmra.mrb[0].mxu0 %v3977
        %v4504 = vpop.f32.mrb[0].mxu0
        %v4505 = vadd.f32 %v4280, %v4504
        %v4506 = vpop.f32.mrb[0].mxu0
        %4507 = vmatprep.mubr.f32.mxu0 0.0
        %4508 = vmatmul.mubr.f32.gmra.mrb[0].mxu0 %v3980
        %v4509 = vpop.f32.mrb[0].mxu0
        %v4510 = vadd.f32 %v4285, %v4509
        %v4511 = vpop.f32.mrb[0].mxu0
        %4512 = vmatprep.mubr.f32.mxu0 0.0
        %4513 = vmatmul.mubr.f32.gmra.mrb[0].mxu0 %v3982
        %v4514 = vpop.f32.mrb[0].mxu0
        %v4515 = vadd.f32 %v4290, %v4514
        %v4516 = vpop.f32.mrb[0].mxu0
        %4517 = vdwg.mxu0
        %v4518 = vadd.f32 %v3735, %v4360
        %v4519 = vadd.f32 %v3740, %v4365
        %v4520 = vadd.f32 %v3745, %v4370
        %v4521 = vadd.f32 %v3750, %v4375
        %v4522 = vadd.f32 %v3755, %v4380
        %v4523 = vadd.f32 %v3760, %v4385
        %v4524 = vadd.f32 %v3765, %v4390
        %v4525 = vadd.f32 %v3770, %v4395
        %v4526 = vadd.f32 %v3775, %v4400
        %v4527 = vadd.f32 %v3780, %v4405
        %v4528 = vadd.f32 %v3785, %v4410
        %v4529 = vadd.f32 %v3790, %v4415
        %v4530 = vadd.f32 %v3795, %v4420
        %v4531 = vadd.f32 %v3800, %v4425
        %v4532 = vadd.f32 %v3805, %v4430
        %v4533 = vadd.f32 %v3810, %v4435
        %v4534 = vadd.f32 %v3815, %v4440
        %v4535 = vadd.f32 %v3820, %v4445
        %v4536 = vadd.f32 %v3825, %v4450
        %v4537 = vadd.f32 %v3830, %v4455
        %v4538 = vadd.f32 %v3835, %v4460
        %v4539 = vadd.f32 %v3840, %v4465
        %v4540 = vadd.f32 %v3845, %v4470
        %v4541 = vadd.f32 %v3850, %v4475
        %v4542 = vadd.f32 %v3855, %v4480
        %v4543 = vadd.f32 %v3860, %v4485
        %v4544 = vadd.f32 %v3865, %v4490
        %v4545 = vadd.f32 %v3870, %v4495
        %v4546 = vadd.f32 %v3875, %v4500
        %v4547 = vadd.f32 %v3880, %v4505
        %v4548 = vadd.f32 %v3885, %v4510
        %v4549 = vadd.f32 %v3890, %v4515
        %4550 = vst [vmem:[#allocation3] sm:$0xff] %v4518
        %4551 = vst [vmem:[#allocation3 + $0x8] sm:$0xff] %v4519
        %4552 = vst [vmem:[#allocation3 + $0x10] sm:$0xff] %v4520
        %4553 = vst [vmem:[#allocation3 + $0x18] sm:$0xff] %v4521
        %4554 = vst [vmem:[#allocation3 + $0x20] sm:$0xff] %v4522
        %4555 = vst [vmem:[#allocation3 + $0x28] sm:$0xff] %v4523
        %4556 = vst [vmem:[#allocation3 + $0x30] sm:$0xff] %v4524
        %4557 = vst [vmem:[#allocation3 + $0x38] sm:$0xff] %v4525
        %4558 = vst [vmem:[#allocation3 + $0x40] sm:$0xff] %v4526
        %4559 = vst [vmem:[#allocation3 + $0x48] sm:$0xff] %v4527
        %4560 = vst [vmem:[#allocation3 + $0x50] sm:$0xff] %v4528
        %4561 = vst [vmem:[#allocation3 + $0x58] sm:$0xff] %v4529
        %4562 = vst [vmem:[#allocation3 + $0x60] sm:$0xff] %v4530
        %4563 = vst [vmem:[#allocation3 + $0x68] sm:$0xff] %v4531
        %4564 = vst [vmem:[#allocation3 + $0x70] sm:$0xff] %v4532
        %4565 = vst [vmem:[#allocation3 + $0x78] sm:$0xff] %v4533
        %4566 = vst [vmem:[#allocation3 + $0x80] sm:$0xff] %v4534
        %4567 = vst [vmem:[#allocation3 + $0x88] sm:$0xff] %v4535
        %4568 = vst [vmem:[#allocation3 + $0x90] sm:$0xff] %v4536
        %4569 = vst [vmem:[#allocation3 + $0x98] sm:$0xff] %v4537
        %4570 = vst [vmem:[#allocation3 + $0xa0] sm:$0xff] %v4538
        %4571 = vst [vmem:[#allocation3 + $0xa8] sm:$0xff] %v4539
        %4572 = vst [vmem:[#allocation3 + $0xb0] sm:$0xff] %v4540
        %4573 = vst [vmem:[#allocation3 + $0xb8] sm:$0xff] %v4541
        %4574 = vst [vmem:[#allocation3 + $0xc0] sm:$0xff] %v4542
        %4575 = vst [vmem:[#allocation3 + $0xc8] sm:$0xff] %v4543
        %4576 = vst [vmem:[#allocation3 + $0xd0] sm:$0xff] %v4544
        %4577 = vst [vmem:[#allocation3 + $0xd8] sm:$0xff] %v4545
        %4578 = vst [vmem:[#allocation3 + $0xe0] sm:$0xff] %v4546
        %4579 = vst [vmem:[#allocation3 + $0xe8] sm:$0xff] %v4547
        %4580 = vst [vmem:[#allocation3 + $0xf0] sm:$0xff] %v4548
        %4581 = vst [vmem:[#allocation3 + $0xf8] sm:$0xff] %v4549
        %v4582 = vld [vmem:[#allocation3] sm:$0xff]
        %v4583 = vld [vmem:[#allocation3 + $0x8] sm:$0xff]
        %v4584 = vld [vmem:[#allocation3 + $0x10] sm:$0xff]
        %v4585 = vld [vmem:[#allocation3 + $0x18] sm:$0xff]
        %v4586 = vld [vmem:[#allocation3 + $0x20] sm:$0xff]
        %v4587 = vld [vmem:[#allocation3 + $0x28] sm:$0xff]
        %v4588 = vld [vmem:[#allocation3 + $0x30] sm:$0xff]
        %v4589 = vld [vmem:[#allocation3 + $0x38] sm:$0xff]
        %v4590 = vld [vmem:[#allocation3 + $0x40] sm:$0xff]
        %v4591 = vld [vmem:[#allocation3 + $0x48] sm:$0xff]
        %v4592 = vld [vmem:[#allocation3 + $0x50] sm:$0xff]
        %v4593 = vld [vmem:[#allocation3 + $0x58] sm:$0xff]
        %v4594 = vld [vmem:[#allocation3 + $0x60] sm:$0xff]
        %v4595 = vld [vmem:[#allocation3 + $0x68] sm:$0xff]
        %v4596 = vld [vmem:[#allocation3 + $0x70] sm:$0xff]
        %v4597 = vld [vmem:[#allocation3 + $0x78] sm:$0xff]
        %v4598 = vld [vmem:[#allocation3 + $0x80] sm:$0xff]
        %v4599 = vld [vmem:[#allocation3 + $0x88] sm:$0xff]
        %v4600 = vld [vmem:[#allocation3 + $0x90] sm:$0xff]
        %v4601 = vld [vmem:[#allocation3 + $0x98] sm:$0xff]
        %v4602 = vld [vmem:[#allocation3 + $0xa0] sm:$0xff]
        %v4603 = vld [vmem:[#allocation3 + $0xa8] sm:$0xff]
        %v4604 = vld [vmem:[#allocation3 + $0xb0] sm:$0xff]
        %v4605 = vld [vmem:[#allocation3 + $0xb8] sm:$0xff]
        %v4606 = vld [vmem:[#allocation3 + $0xc0] sm:$0xff]
        %v4607 = vld [vmem:[#allocation3 + $0xc8] sm:$0xff]
        %v4608 = vld [vmem:[#allocation3 + $0xd0] sm:$0xff]
        %v4609 = vld [vmem:[#allocation3 + $0xd8] sm:$0xff]
        %v4610 = vld [vmem:[#allocation3 + $0xe0] sm:$0xff]
        %v4611 = vld [vmem:[#allocation3 + $0xe8] sm:$0xff]
        %v4612 = vld [vmem:[#allocation3 + $0xf0] sm:$0xff]
        %v4613 = vld [vmem:[#allocation3 + $0xf8] sm:$0xff]
        %v4614 = vadd.f32 %v4582, %v4583
        %v4615 = vadd.f32 %v4614, %v4584
        %v4616 = vadd.f32 %v4615, %v4585
        %v4617 = vadd.f32 %v4616, %v4586
        %v4618 = vadd.f32 %v4617, %v4587
        %v4619 = vadd.f32 %v4618, %v4588
        %v4620 = vadd.f32 %v4619, %v4589
        %v4621 = vadd.f32 %v4620, %v4590
        %v4622 = vadd.f32 %v4621, %v4591
        %v4623 = vadd.f32 %v4622, %v4592
        %v4624 = vadd.f32 %v4623, %v4593
        %v4625 = vadd.f32 %v4624, %v4594
        %v4626 = vadd.f32 %v4625, %v4595
        %v4627 = vadd.f32 %v4626, %v4596
        %v4628 = vadd.f32 %v4627, %v4597
        %v4629 = vadd.f32 %v4628, %v4598
        %v4630 = vadd.f32 %v4629, %v4599
        %v4631 = vadd.f32 %v4630, %v4600
        %v4632 = vadd.f32 %v4631, %v4601
        %v4633 = vadd.f32 %v4632, %v4602
        %v4634 = vadd.f32 %v4633, %v4603
        %v4635 = vadd.f32 %v4634, %v4604
        %v4636 = vadd.f32 %v4635, %v4605
        %v4637 = vadd.f32 %v4636, %v4606
        %v4638 = vadd.f32 %v4637, %v4607
        %v4639 = vadd.f32 %v4638, %v4608
        %v4640 = vadd.f32 %v4639, %v4609
        %v4641 = vadd.f32 %v4640, %v4610
        %v4642 = vadd.f32 %v4641, %v4611
        %v4643 = vadd.f32 %v4642, %v4612
        %v4644 = vadd.f32 %v4643, %v4613
        %v4645 = vrot.slane %v4644, 4
        %v4646 = vadd.f32 %v4644, %v4645
        %v4647 = vrot.slane %v4646, 2
        %v4648 = vadd.f32 %v4646, %v4647
        %v4649 = vrot.slane %v4648, 1
        %v4650 = vadd.f32 %v4648, %v4649
        %v4651 = vmul.f32 %v4650, 0.00390625
        %v4652 = vsub.f32 %v4582, %v4651
        %v4653 = vsub.f32 %v4583, %v4651
        %v4654 = vsub.f32 %v4584, %v4651
        %v4655 = vsub.f32 %v4585, %v4651
        %v4656 = vsub.f32 %v4586, %v4651
        %v4657 = vsub.f32 %v4587, %v4651
        %v4658 = vsub.f32 %v4588, %v4651
        %v4659 = vsub.f32 %v4589, %v4651
        %v4660 = vsub.f32 %v4590, %v4651
        %v4661 = vsub.f32 %v4591, %v4651
        %v4662 = vsub.f32 %v4592, %v4651
        %v4663 = vsub.f32 %v4593, %v4651
        %v4664 = vsub.f32 %v4594, %v4651
        %v4665 = vsub.f32 %v4595, %v4651
        %v4666 = vsub.f32 %v4596, %v4651
        %v4667 = vsub.f32 %v4597, %v4651
        %v4668 = vsub.f32 %v4598, %v4651
        %v4669 = vsub.f32 %v4599, %v4651
        %v4670 = vsub.f32 %v4600, %v4651
        %v4671 = vsub.f32 %v4601, %v4651
        %v4672 = vsub.f32 %v4602, %v4651
        %v4673 = vsub.f32 %v4603, %v4651
        %v4674 = vsub.f32 %v4604, %v4651
        %v4675 = vsub.f32 %v4605, %v4651
        %v4676 = vsub.f32 %v4606, %v4651
        %v4677 = vsub.f32 %v4607, %v4651
        %v4678 = vsub.f32 %v4608, %v4651
        %v4679 = vsub.f32 %v4609, %v4651
        %v4680 = vsub.f32 %v4610, %v4651
        %v4681 = vsub.f32 %v4611, %v4651
        %v4682 = vsub.f32 %v4612, %v4651
        %v4683 = vsub.f32 %v4613, %v4651
        %v4684 = vmul.f32 %v4652, %v4652
        %v4685 = vmul.f32 %v4653, %v4653
        %v4686 = vmul.f32 %v4654, %v4654
        %v4687 = vmul.f32 %v4655, %v4655
        %v4688 = vmul.f32 %v4656, %v4656
        %v4689 = vmul.f32 %v4657, %v4657
        %v4690 = vmul.f32 %v4658, %v4658
        %v4691 = vmul.f32 %v4659, %v4659
        %v4692 = vmul.f32 %v4660, %v4660
        %v4693 = vmul.f32 %v4661, %v4661
        %v4694 = vmul.f32 %v4662, %v4662
        %v4695 = vmul.f32 %v4663, %v4663
        %v4696 = vmul.f32 %v4664, %v4664
        %v4697 = vmul.f32 %v4665, %v4665
        %v4698 = vmul.f32 %v4666, %v4666
        %v4699 = vmul.f32 %v4667, %v4667
        %v4700 = vmul.f32 %v4668, %v4668
        %v4701 = vmul.f32 %v4669, %v4669
        %v4702 = vmul.f32 %v4670, %v4670
        %v4703 = vmul.f32 %v4671, %v4671
        %v4704 = vmul.f32 %v4672, %v4672
        %v4705 = vmul.f32 %v4673, %v4673
        %v4706 = vmul.f32 %v4674, %v4674
        %v4707 = vmul.f32 %v4675, %v4675
        %v4708 = vmul.f32 %v4676, %v4676
        %v4709 = vmul.f32 %v4677, %v4677
        %v4710 = vmul.f32 %v4678, %v4678
        %v4711 = vmul.f32 %v4679, %v4679
        %v4712 = vmul.f32 %v4680, %v4680
        %v4713 = vmul.f32 %v4681, %v4681
        %v4714 = vmul.f32 %v4682, %v4682
        %v4715 = vmul.f32 %v4683, %v4683
        %v4716 = vadd.f32 %v4684, %v4685
        %v4717 = vadd.f32 %v4716, %v4686
        %v4718 = vadd.f32 %v4717, %v4687
        %v4719 = vadd.f32 %v4718, %v4688
        %v4720 = vadd.f32 %v4719, %v4689
        %v4721 = vadd.f32 %v4720, %v4690
        %v4722 = vadd.f32 %v4721, %v4691
        %v4723 = vadd.f32 %v4722, %v4692
        %v4724 = vadd.f32 %v4723, %v4693
        %v4725 = vadd.f32 %v4724, %v4694
        %v4726 = vadd.f32 %v4725, %v4695
        %v4727 = vadd.f32 %v4726, %v4696
        %v4728 = vadd.f32 %v4727, %v4697
        %v4729 = vadd.f32 %v4728, %v4698
        %v4730 = vadd.f32 %v4729, %v4699
        %v4731 = vadd.f32 %v4730, %v4700
        %v4732 = vadd.f32 %v4731, %v4701
        %v4733 = vadd.f32 %v4732, %v4702
        %v4734 = vadd.f32 %v4733, %v4703
        %v4735 = vadd.f32 %v4734, %v4704
        %v4736 = vadd.f32 %v4735, %v4705
        %v4737 = vadd.f32 %v4736, %v4706
        %v4738 = vadd.f32 %v4737, %v4707
        %v4739 = vadd.f32 %v4738, %v4708
        %v4740 = vadd.f32 %v4739, %v4709
        %v4741 = vadd.f32 %v4740, %v4710
        %v4742 = vadd.f32 %v4741, %v4711
        %v4743 = vadd.f32 %v4742, %v4712
        %v4744 = vadd.f32 %v4743, %v4713
        %v4745 = vadd.f32 %v4744, %v4714
        %v4746 = vadd.f32 %v4745, %v4715
        %v4747 = vrot.slane %v4746, 4
        %v4748 = vadd.f32 %v4746, %v4747
        %v4749 = vrot.slane %v4748, 2
        %v4750 = vadd.f32 %v4748, %v4749
        %v4751 = vrot.slane %v4750, 1
        %v4752 = vadd.f32 %v4750, %v4751
        %v4753 = vmul.f32 %v4752, 0.00390625
        %v4754 = vadd.f32 %v4753, 1e-05
        %v4755 = vrsqrt.pop %v4754
        %v4756 = vsub.f32 0.0, %v4651
        %v4757 = vmul.f32 %v4756, %v4755
        %v4758 = vld [vmem:[%s187] sm:$0xff]
        %v4759 = vld [vmem:[%s187 + $0x8] sm:$0xff]
        %v4760 = vld [vmem:[%s187 + $0x10] sm:$0xff]
        %v4761 = vld [vmem:[%s187 + $0x18] sm:$0xff]
        %v4762 = vld [vmem:[%s187 + $0x20] sm:$0xff]
        %v4763 = vld [vmem:[%s187 + $0x28] sm:$0xff]
        %v4764 = vld [vmem:[%s187 + $0x30] sm:$0xff]
        %v4765 = vld [vmem:[%s187 + $0x38] sm:$0xff]
        %v4766 = vld [vmem:[%s187 + $0x40] sm:$0xff]
        %v4767 = vld [vmem:[%s187 + $0x48] sm:$0xff]
        %v4768 = vld [vmem:[%s187 + $0x50] sm:$0xff]
        %v4769 = vld [vmem:[%s187 + $0x58] sm:$0xff]
        %v4770 = vld [vmem:[%s187 + $0x60] sm:$0xff]
        %v4771 = vld [vmem:[%s187 + $0x68] sm:$0xff]
        %v4772 = vld [vmem:[%s187 + $0x70] sm:$0xff]
        %v4773 = vld [vmem:[%s187 + $0x78] sm:$0xff]
        %v4774 = vld [vmem:[%s187 + $0x80] sm:$0xff]
        %v4775 = vld [vmem:[%s187 + $0x88] sm:$0xff]
        %v4776 = vld [vmem:[%s187 + $0x90] sm:$0xff]
        %v4777 = vld [vmem:[%s187 + $0x98] sm:$0xff]
        %v4778 = vld [vmem:[%s187 + $0xa0] sm:$0xff]
        %v4779 = vld [vmem:[%s187 + $0xa8] sm:$0xff]
        %v4780 = vld [vmem:[%s187 + $0xb0] sm:$0xff]
        %v4781 = vld [vmem:[%s187 + $0xb8] sm:$0xff]
        %v4782 = vld [vmem:[%s187 + $0xc0] sm:$0xff]
        %v4783 = vld [vmem:[%s187 + $0xc8] sm:$0xff]
        %v4784 = vld [vmem:[%s187 + $0xd0] sm:$0xff]
        %v4785 = vld [vmem:[%s187 + $0xd8] sm:$0xff]
        %v4786 = vld [vmem:[%s187 + $0xe0] sm:$0xff]
        %v4787 = vld [vmem:[%s187 + $0xe8] sm:$0xff]
        %v4788 = vld [vmem:[%s187 + $0xf0] sm:$0xff]
        %v4789 = vld [vmem:[%s187 + $0xf8] sm:$0xff]
        %v4790 = vmul.f32 %v4582, %v4755
        %v4791 = vmul.f32 %v4583, %v4755
        %v4792 = vmul.f32 %v4584, %v4755
        %v4793 = vmul.f32 %v4585, %v4755
        %v4794 = vmul.f32 %v4586, %v4755
        %v4795 = vmul.f32 %v4587, %v4755
        %v4796 = vmul.f32 %v4588, %v4755
        %v4797 = vmul.f32 %v4589, %v4755
        %v4798 = vmul.f32 %v4590, %v4755
        %v4799 = vmul.f32 %v4591, %v4755
        %v4800 = vmul.f32 %v4592, %v4755
        %v4801 = vmul.f32 %v4593, %v4755
        %v4802 = vmul.f32 %v4594, %v4755
        %v4803 = vmul.f32 %v4595, %v4755
        %v4804 = vmul.f32 %v4596, %v4755
        %v4805 = vmul.f32 %v4597, %v4755
        %v4806 = vmul.f32 %v4598, %v4755
        %v4807 = vmul.f32 %v4599, %v4755
        %v4808 = vmul.f32 %v4600, %v4755
        %v4809 = vmul.f32 %v4601, %v4755
        %v4810 = vmul.f32 %v4602, %v4755
        %v4811 = vmul.f32 %v4603, %v4755
        %v4812 = vmul.f32 %v4604, %v4755
        %v4813 = vmul.f32 %v4605, %v4755
        %v4814 = vmul.f32 %v4606, %v4755
        %v4815 = vmul.f32 %v4607, %v4755
        %v4816 = vmul.f32 %v4608, %v4755
        %v4817 = vmul.f32 %v4609, %v4755
        %v4818 = vmul.f32 %v4610, %v4755
        %v4819 = vmul.f32 %v4611, %v4755
        %v4820 = vmul.f32 %v4612, %v4755
        %v4821 = vmul.f32 %v4613, %v4755
        %v4822 = vadd.f32 %v4758, %v4790
        %v4823 = vadd.f32 %v4759, %v4791
        %v4824 = vadd.f32 %v4760, %v4792
        %v4825 = vadd.f32 %v4761, %v4793
        %v4826 = vadd.f32 %v4762, %v4794
        %v4827 = vadd.f32 %v4763, %v4795
        %v4828 = vadd.f32 %v4764, %v4796
        %v4829 = vadd.f32 %v4765, %v4797
        %v4830 = vadd.f32 %v4766, %v4798
        %v4831 = vadd.f32 %v4767, %v4799
        %v4832 = vadd.f32 %v4768, %v4800
        %v4833 = vadd.f32 %v4769, %v4801
        %v4834 = vadd.f32 %v4770, %v4802
        %v4835 = vadd.f32 %v4771, %v4803
        %v4836 = vadd.f32 %v4772, %v4804
        %v4837 = vadd.f32 %v4773, %v4805
        %v4838 = vadd.f32 %v4774, %v4806
        %v4839 = vadd.f32 %v4775, %v4807
        %v4840 = vadd.f32 %v4776, %v4808
        %v4841 = vadd.f32 %v4777, %v4809
        %v4842 = vadd.f32 %v4778, %v4810
        %v4843 = vadd.f32 %v4779, %v4811
        %v4844 = vadd.f32 %v4780, %v4812
        %v4845 = vadd.f32 %v4781, %v4813
        %v4846 = vadd.f32 %v4782, %v4814
        %v4847 = vadd.f32 %v4783, %v4815
        %v4848 = vadd.f32 %v4784, %v4816
        %v4849 = vadd.f32 %v4785, %v4817
        %v4850 = vadd.f32 %v4786, %v4818
        %v4851 = vadd.f32 %v4787, %v4819
        %v4852 = vadd.f32 %v4788, %v4820
        %v4853 = vadd.f32 %v4789, %v4821
        %v4854 = vadd.f32 %v4822, %v4757
        %v4855 = vadd.f32 %v4823, %v4757
        %v4856 = vadd.f32 %v4824, %v4757
        %v4857 = vadd.f32 %v4825, %v4757
        %v4858 = vadd.f32 %v4826, %v4757
        %v4859 = vadd.f32 %v4827, %v4757
        %v4860 = vadd.f32 %v4828, %v4757
        %v4861 = vadd.f32 %v4829, %v4757
        %v4862 = vadd.f32 %v4830, %v4757
        %v4863 = vadd.f32 %v4831, %v4757
        %v4864 = vadd.f32 %v4832, %v4757
        %v4865 = vadd.f32 %v4833, %v4757
        %v4866 = vadd.f32 %v4834, %v4757
        %v4867 = vadd.f32 %v4835, %v4757
        %v4868 = vadd.f32 %v4836, %v4757
        %v4869 = vadd.f32 %v4837, %v4757
        %v4870 = vadd.f32 %v4838, %v4757
        %v4871 = vadd.f32 %v4839, %v4757
        %v4872 = vadd.f32 %v4840, %v4757
        %v4873 = vadd.f32 %v4841, %v4757
        %v4874 = vadd.f32 %v4842, %v4757
        %v4875 = vadd.f32 %v4843, %v4757
        %v4876 = vadd.f32 %v4844, %v4757
        %v4877 = vadd.f32 %v4845, %v4757
        %v4878 = vadd.f32 %v4846, %v4757
        %v4879 = vadd.f32 %v4847, %v4757
        %v4880 = vadd.f32 %v4848, %v4757
        %v4881 = vadd.f32 %v4849, %v4757
        %v4882 = vadd.f32 %v4850, %v4757
        %v4883 = vadd.f32 %v4851, %v4757
        %v4884 = vadd.f32 %v4852, %v4757
        %v4885 = vadd.f32 %v4853, %v4757
        %4886 = vst [vmem:[%s217] sm:$0xff] %v4854
        %4887 = vst [vmem:[%s217 + $0x8] sm:$0xff] %v4855
        %4888 = vst [vmem:[%s217 + $0x10] sm:$0xff] %v4856
        %4889 = vst [vmem:[%s217 + $0x18] sm:$0xff] %v4857
        %4890 = vst [vmem:[%s217 + $0x20] sm:$0xff] %v4858
        %4891 = vst [vmem:[%s217 + $0x28] sm:$0xff] %v4859
        %4892 = vst [vmem:[%s217 + $0x30] sm:$0xff] %v4860
        %4893 = vst [vmem:[%s217 + $0x38] sm:$0xff] %v4861
        %4894 = vst [vmem:[%s217 + $0x40] sm:$0xff] %v4862
        %4895 = vst [vmem:[%s217 + $0x48] sm:$0xff] %v4863
        %4896 = vst [vmem:[%s217 + $0x50] sm:$0xff] %v4864
        %4897 = vst [vmem:[%s217 + $0x58] sm:$0xff] %v4865
        %4898 = vst [vmem:[%s217 + $0x60] sm:$0xff] %v4866
        %4899 = vst [vmem:[%s217 + $0x68] sm:$0xff] %v4867
        %4900 = vst [vmem:[%s217 + $0x70] sm:$0xff] %v4868
        %4901 = vst [vmem:[%s217 + $0x78] sm:$0xff] %v4869
        %4902 = vst [vmem:[%s217 + $0x80] sm:$0xff] %v4870
        %4903 = vst [vmem:[%s217 + $0x88] sm:$0xff] %v4871
        %4904 = vst [vmem:[%s217 + $0x90] sm:$0xff] %v4872
        %4905 = vst [vmem:[%s217 + $0x98] sm:$0xff] %v4873
        %4906 = vst [vmem:[%s217 + $0xa0] sm:$0xff] %v4874
        %4907 = vst [vmem:[%s217 + $0xa8] sm:$0xff] %v4875
        %4908 = vst [vmem:[%s217 + $0xb0] sm:$0xff] %v4876
        %4909 = vst [vmem:[%s217 + $0xb8] sm:$0xff] %v4877
        %4910 = vst [vmem:[%s217 + $0xc0] sm:$0xff] %v4878
        %4911 = vst [vmem:[%s217 + $0xc8] sm:$0xff] %v4879
        %4912 = vst [vmem:[%s217 + $0xd0] sm:$0xff] %v4880
        %4913 = vst [vmem:[%s217 + $0xd8] sm:$0xff] %v4881
        %4914 = vst [vmem:[%s217 + $0xe0] sm:$0xff] %v4882
        %4915 = vst [vmem:[%s217 + $0xe8] sm:$0xff] %v4883
        %4916 = vst [vmem:[%s217 + $0xf0] sm:$0xff] %v4884
        %4917 = vst [vmem:[%s217 + $0xf8] sm:$0xff] %v4885
        %s4918 = sand.u32 %s97, 1
        %s4919 = scalar_lea.sflag [#allocation6], %s4918
        %s4920 = sand.u32 %s97, 1
        %s4921 = smul.addr %s4920, 256
        %s4922 = scalar_lea.vmem [#allocation10], %s4921
        // Predicated region
        $region45: #{tpu_custom_call.1} parent=31 // pred_check
          %p4923 = pneg %p107
        $region46: #{tpu_custom_call.1} parent=31 // pred_check_branch
          %4925 = sbr.rel (%p4923) target = $region48
        $region47: #{tpu_custom_call.1} parent=31 // pred_region
          %s4927 = ssub.s32 4096, 4096
          %4928 = vsyncadd %s4919, %s4927
          %s4929 = smul.addr %s21, 32
          %s4930 = smul.addr %s4929, 128
          %s4931 = scalar_lea.hbm %s3, %s4930
          %s4932 = sshll.u32 %s4922, 4
          %s4933 = int_to_ptr.vmem [resolvable:$true] %s4932
          %4938 = dma.vmem_to_hbm [thread:$0]  %s4933, 4096, %s4931, %s4919, 128, 128, 8
        $region48: #{tpu_custom_call.1} parent=31 // pred_fallthru
          _
      $region32: #{tpu_custom_call.1} parent=5 // pred_fallthru
        _
      %p4939 = scmp.le.s32.totalorder 2, %s16
      // Predicated region
      $region49: #{tpu_custom_call.1} parent=5 // pred_check
        %p4940 = pneg %p4939
      $region50: #{tpu_custom_call.1} parent=5 // pred_check_branch
        %4942 = sbr.rel (%p4940) target = $region52
      $region51: #{tpu_custom_call.1} parent=5 // pred_region
        %s4943 = ssub.s32 %s16, 2
        // Predicated region
        $region53: #{tpu_custom_call.1} parent=51 // pred_check
          %p4944 = pneg %p113
        $region54: #{tpu_custom_call.1} parent=51 // pred_check_branch
          %4946 = sbr.rel (%p4944) target = $region56
        $region55: #{tpu_custom_call.1} parent=51 // pred_region
          %s4947 = sand.u32 %s98, 1
          %s4948 = scalar_lea.sflag [#allocation6], %s4947
          %s4949 = sand.u32 %s98, 1
          %s4950 = smul.addr %s4949, 256
          %s4951 = scalar_lea.vmem [#allocation10], %s4950
          %4952 = dma.done %s4948, 4096
        $region56: #{tpu_custom_call.1} parent=51 // pred_fallthru
          _
      $region52: #{tpu_custom_call.1} parent=5 // pred_fallthru
        _
    $region6: #{tpu_custom_call.1} parent=1 // loop_footer
      %s20 = sadd.s32 1, %s16
    $region7: #{tpu_custom_call.1} parent=1 // loop_footer_branch
      %15 = sbr.rel target = $region3
    $region8: #{tpu_custom_call.1} parent=1 // loop_exit
      _
    %4953 = vsyncpa [#allocation5], 1
    %s4954 = scalar_lea.sflag [#allocation5], 1
    %4955 = vsyncpa %s4954, 1
    %4956 = vsyncpa [#allocation8], 1
    %4957 = vsyncpa [#allocation6], 1
    %s4958 = scalar_lea.sflag [#allocation6], 1
    %4959 = vsyncpa %s4958, 1

// kernel: tpu_custom_call.1
$region0: #{tpu_custom_call.1}
  #allocation0 [shape = 'u32[]', space=smem, size = 0x4, offset = 0x4, fixed_abs, tag = 'smem constant byte address 0x4 - core index']
  #allocation1 [shape = 'u32[144,128]{1,0:T(1,128)}', space=vmem, size = 0x12000, scoped, tag = 'internal scratch']
  #allocation2 [shape = 'f32[18,18,128]{2,1,0:T(8,128)}', space=vmem, size = 0x36000, scoped, tag = 'scratch operand']
  #allocation3 [shape = 'f32[16,16,128]{2,1,0:T(8,128)}', space=vmem, size = 0x20000, scoped, tag = 'scratch operand']
  %s0 = inlined_call_operand.hbm [shape: f32[2,16,16,128], index: 0, kind: input, shape index: {}]
  %s1 = inlined_call_operand.hbm [shape: f32[3,384,128], index: 1, kind: input, shape index: {}]
  %s2 = inlined_call_operand.hbm [shape: f32[3,384,128], index: 2, kind: input, shape index: {}]
  %s3 = inlined_call_operand.hbm [shape: f32[2,16,16,128], index: 3, kind: output, shape index: {}]
  %s4 = sld [smem:[#allocation0]]
  $region57: #{tpu_custom_call.1} parent=0
    _
  %s6 = ssub.s32 1, %s4
  %s7 = scalar_select 0, %s6, %s4
  $region1: #{tpu_custom_call.1} parent=0
    #allocation4 [shape = 'u8[262144]{0}', space=vmem, size = 0x40000, scoped, tag = 'input window, operand 0']
    #allocation5 [shape = 's32[2]{0}', space=sflag, size = 0x8, scoped, tag = 'scoped memory for tpu_custom_call.1']
    #allocation6 [shape = 's32[2]{0}', space=sflag, size = 0x8, scoped, tag = 'scoped memory for tpu_custom_call.1']
    #allocation7 [shape = 'u8[589824]{0}', space=vmem, size = 0x90000, scoped, tag = 'input window, operand 1, single buffered']
    #allocation8 [shape = 's32[1]{0}', space=sflag, size = 0x4, scoped, tag = 'scoped memory for tpu_custom_call.1']
    #allocation9 [shape = 'u8[589824]{0}', space=vmem, size = 0x90000, scoped, tag = 'input window, operand 2, single buffered']
    #allocation10 [shape = 'u8[262144]{0}', space=vmem, size = 0x40000, scoped, tag = 'output window, operand 0']
    %8 = vsyncpa [#allocation5], 0
    %s9 = scalar_lea.sflag [#allocation5], 1
    %10 = vsyncpa %s9, 0
    %11 = vsyncpa [#allocation8], 0
    %12 = vsyncpa [#allocation6], 0
    %s13 = scalar_lea.sflag [#allocation6], 1
    %14 = vsyncpa %s13, 0
    loop: start=0, step=1, limit=4
    $region2: #{tpu_custom_call.1} parent=1 // loop_pre_header
      _
    $region3: #{tpu_custom_call.1} parent=1 // loop_header
      %s16 = sphi 0, %s20
      %p17 = scmp.ge.s32.totalorder %s16, 4
      %s26 = sphi 0, %s28
      %s29 = sphi 0, %s26
      %s30 = sphi 0, %s29
      %s46 = sphi 0, %s30
      %s50 = sphi 0, %s50
      %s52 = sphi 0, %s50
      %s53 = sphi 0, %s52
      %s67 = sphi 0, %s53
      %s71 = sphi 0, %s71
      %s73 = sphi 0, %s71
      %s74 = sphi 0, %s73
      %s88 = sphi 0, %s74
      %s94 = sphi 0, %s96
      %s97 = sphi 0, %s94
      %s98 = sphi 0, %s97
      %s114 = sphi 0, %s98
    $region4: #{tpu_custom_call.1} parent=1 // loop_header_branch
      %19 = sbr.rel (%p17) target = $region8
    $region5: #{tpu_custom_call.1} parent=1 // loop_body
      %s21 = ssub.s32 %s16, 1
      %s22 = ssub.s32 %s16, 2
      %s23 = sadd.s32 %s16, 1
      %s24 = ssub.s32 %s16, %s23
      %p25 = scmp.eq.s32.totalorder %s24, 0
      %s27 = sadd.s32 %s26, 1
      %s28 = scalar_select %p25, %s26, %s27
      %p31 = pneg %p25
      %p32 = scmp.eq.s32.totalorder %s16, 1
      %p33 = por %p31, %p32
      %p34 = scmp.ne.s32.totalorder %s26, %s29
      %p35 = scmp.eq.s32.totalorder %s16, 0
      %p36 = por %p34, %p35
      %p37 = scmp.ne.s32.totalorder %s26, %s29
      %p38 = scmp.eq.s32.totalorder %s21, 1
      %p39 = por %p37, %p38
      %p40 = scmp.ne.s32.totalorder %s29, %s30
      %p41 = scmp.eq.s32.totalorder %s21, 0
      %p42 = por %p40, %p41
      %p43 = scmp.ne.s32.totalorder %s29, %s30
      %p44 = scmp.eq.s32.totalorder %s22, 1
      %p45 = por %p43, %p44
      %p47 = scmp.ne.s32.totalorder %s30, %s46
      %p48 = scmp.eq.s32.totalorder %s22, 0
      %p49 = por %p47, %p48
      %s51 = sadd.s32 %s50, 1
      %p54 = scmp.eq.s32.totalorder %s16, 1
      %p55 = scmp.ne.s32.totalorder %s50, %s52
      %p56 = scmp.eq.s32.totalorder %s16, 0
      %p57 = por %p55, %p56
      %p58 = scmp.ne.s32.totalorder %s50, %s52
      %p59 = scmp.eq.s32.totalorder %s21, 1
      %p60 = por %p58, %p59
      %p61 = scmp.ne.s32.totalorder %s52, %s53
      %p62 = scmp.eq.s32.totalorder %s21, 0
      %p63 = por %p61, %p62
      %p64 = scmp.ne.s32.totalorder %s52, %s53
      %p65 = scmp.eq.s32.totalorder %s22, 1
      %p66 = por %p64, %p65
      %p68 = scmp.ne.s32.totalorder %s53, %s67
      %p69 = scmp.eq.s32.totalorder %s22, 0
      %p70 = por %p68, %p69
      %s72 = sadd.s32 %s71, 1
      %p75 = scmp.eq.s32.totalorder %s16, 1
      %p76 = scmp.ne.s32.totalorder %s71, %s73
      %p77 = scmp.eq.s32.totalorder %s16, 0
      %p78 = por %p76, %p77
      %p79 = scmp.ne.s32.totalorder %s71, %s73
      %p80 = scmp.eq.s32.totalorder %s21, 1
      %p81 = por %p79, %p80
      %p82 = scmp.ne.s32.totalorder %s73, %s74
      %p83 = scmp.eq.s32.totalorder %s21, 0
      %p84 = por %p82, %p83
      %p85 = scmp.ne.s32.totalorder %s73, %s74
      %p86 = scmp.eq.s32.totalorder %s22, 1
      %p87 = por %p85, %p86
      %p89 = scmp.ne.s32.totalorder %s74, %s88
      %p90 = scmp.eq.s32.totalorder %s22, 0
      %p91 = por %p89, %p90
      %s92 = ssub.s32 %s16, %s23
      %p93 = scmp.eq.s32.totalorder %s92, 0
      %s95 = sadd.s32 %s94, 1
      %s96 = scalar_select %p93, %s94, %s95
      %p99 = pneg %p93
      %p100 = scmp.eq.s32.totalorder %s16, 1
      %p101 = por %p99, %p100
      %p102 = scmp.ne.s32.totalorder %s94, %s97
      %p103 = scmp.eq.s32.totalorder %s16, 0
      %p104 = por %p102, %p103
      %p105 = scmp.ne.s32.totalorder %s94, %s97
      %p106 = scmp.eq.s32.totalorder %s21, 1
      %p107 = por %p105, %p106
      %p108 = scmp.ne.s32.totalorder %s97, %s98
      %p109 = scmp.eq.s32.totalorder %s21, 0
      %p110 = por %p108, %p109
      %p111 = scmp.ne.s32.totalorder %s97, %s98
      %p112 = scmp.eq.s32.totalorder %s22, 1
      %p113 = por %p111, %p112
      %p115 = scmp.ne.s32.totalorder %s98, %s114
      %p116 = scmp.eq.s32.totalorder %s22, 0
      %p117 = por %p115, %p116
      %p118 = scmp.le.s32.totalorder 1, %s16
      %p119 = scmp.lt.s32.totalorder %s16, 3
      %p120 = pnand %p118, %p119
      %p121 = pneg %p120
      // Predicated region
      $region9: #{tpu_custom_call.1} parent=5 // pred_check
        _
      $region10: #{tpu_custom_call.1} parent=5 // pred_check_branch
        %123 = sbr.rel (%p120) target = $region12
      $region11: #{tpu_custom_call.1} parent=5 // pred_region
        %s124 = ssub.s32 %s16, 1
        // Predicated region
        $region13: #{tpu_custom_call.1} parent=11 // pred_check
          %p125 = pneg %p63
        $region14: #{tpu_custom_call.1} parent=11 // pred_check_branch
          %127 = sbr.rel (%p125) target = $region16
        $region15: #{tpu_custom_call.1} parent=11 // pred_region
          %s129 = ssub.s32 18432, 18432
          %130 = vsyncadd [#allocation8], %s129
          %s131 = sshll.u32 [#allocation7], 4
          %s132 = int_to_ptr.vmem [resolvable:$true] %s131
          %137 = dma.hbm_to_vmem [thread:$0]  %s1, 18432, %s132, [#allocation8], 128, 128, 8
        $region16: #{tpu_custom_call.1} parent=11 // pred_fallthru
          _
        // Predicated region
        $region17: #{tpu_custom_call.1} parent=11 // pred_check
          %p138 = pneg %p84
        $region18: #{tpu_custom_call.1} parent=11 // pred_check_branch
          %140 = sbr.rel (%p138) target = $region20
        $region19: #{tpu_custom_call.1} parent=11 // pred_region
          %s142 = ssub.s32 18432, 18432
          %143 = vsyncadd [#allocation8], %s142
          %s144 = sshll.u32 [#allocation9], 4
          %s145 = int_to_ptr.vmem [resolvable:$true] %s144
          %150 = dma.hbm_to_vmem [thread:$0]  %s2, 18432, %s145, [#allocation8], 128, 128, 8
        $region20: #{tpu_custom_call.1} parent=11 // pred_fallthru
          _
      $region12: #{tpu_custom_call.1} parent=5 // pred_fallthru
        _
      %p151 = scmp.lt.s32.totalorder %s16, 2
      // Predicated region
      $region21: #{tpu_custom_call.1} parent=5 // pred_check
        %p152 = pneg %p151
      $region22: #{tpu_custom_call.1} parent=5 // pred_check_branch
        %154 = sbr.rel (%p152) target = $region24
      $region23: #{tpu_custom_call.1} parent=5 // pred_region
        // Predicated region
        $region25: #{tpu_custom_call.1} parent=23 // pred_check
          %p155 = pneg %p36
        $region26: #{tpu_custom_call.1} parent=23 // pred_check_branch
          %157 = sbr.rel (%p155) target = $region28
        $region27: #{tpu_custom_call.1} parent=23 // pred_region
          %s158 = sand.u32 %s26, 1
          %s159 = scalar_lea.sflag [#allocation5], %s158
          %s160 = sand.u32 %s26, 1
          %s161 = smul.addr %s160, 256
          %s162 = scalar_lea.vmem [#allocation4], %s161
          %s164 = ssub.s32 4096, 4096
          %165 = vsyncadd %s159, %s164
          %s166 = smul.addr %s16, 32
          %s167 = smul.addr %s166, 128
          %s168 = scalar_lea.hbm %s0, %s167
          %s169 = sshll.u32 %s162, 4
          %s170 = int_to_ptr.vmem [resolvable:$true] %s169
          %175 = dma.hbm_to_vmem [thread:$0]  %s168, 4096, %s170, %s159, 128, 128, 8
        $region28: #{tpu_custom_call.1} parent=23 // pred_fallthru
          _
      $region24: #{tpu_custom_call.1} parent=5 // pred_fallthru
        _
      %p176 = scmp.le.s32.totalorder 1, %s16
      %p177 = scmp.lt.s32.totalorder %s16, 3
      %p178 = pnand %p176, %p177
      %p179 = pneg %p178
      // Predicated region
      $region29: #{tpu_custom_call.1} parent=5 // pred_check
        _
      $region30: #{tpu_custom_call.1} parent=5 // pred_check_branch
        %181 = sbr.rel (%p178) target = $region32
      $region31: #{tpu_custom_call.1} parent=5 // pred_region
        %s182 = ssub.s32 %s16, 1
        %s183 = sand.u32 %s29, 1
        %s184 = scalar_lea.sflag [#allocation5], %s183
        %s185 = sand.u32 %s29, 1
        %s186 = smul.addr %s185, 256
        %s187 = scalar_lea.vmem [#allocation4], %s186
        // Predicated region
        $region33: #{tpu_custom_call.1} parent=31 // pred_check
          %p188 = pneg %p42
        $region34: #{tpu_custom_call.1} parent=31 // pred_check_branch
          %190 = sbr.rel (%p188) target = $region36
        $region35: #{tpu_custom_call.1} parent=31 // pred_region
          %191 = dma.done %s184, 4096
        $region36: #{tpu_custom_call.1} parent=31 // pred_fallthru
          _
        // Predicated region
        $region37: #{tpu_custom_call.1} parent=31 // pred_check
          %p192 = pneg %p63
        $region38: #{tpu_custom_call.1} parent=31 // pred_check_branch
          %194 = sbr.rel (%p192) target = $region40
        $region39: #{tpu_custom_call.1} parent=31 // pred_region
          %195 = dma.done [#allocation8], 18432
        $region40: #{tpu_custom_call.1} parent=31 // pred_fallthru
          _
        // Predicated region
        $region41: #{tpu_custom_call.1} parent=31 // pred_check
          %p196 = pneg %p84
        $region42: #{tpu_custom_call.1} parent=31 // pred_check_branch
          %198 = sbr.rel (%p196) target = $region44
        $region43: #{tpu_custom_call.1} parent=31 // pred_region
          %199 = dma.done [#allocation8], 18432
        $region44: #{tpu_custom_call.1} parent=31 // pred_fallthru
          _
        %s200 = sand.u32 %s29, 1
        %s201 = scalar_lea.sflag [#allocation5], %s200
        %s202 = sand.u32 %s29, 1
        %s203 = smul.addr %s202, 256
        %s204 = scalar_lea.vmem [#allocation4], %s203
        %p205 = pneg %p42
        %p206 = pneg %p39
        %p207 = pneg %p63
        %p208 = pneg %p60
        %p209 = pneg %p84
        %p210 = pneg %p81
        %p211 = pneg %p110
        %p212 = pneg %p107
        %s213 = sand.u32 %s97, 1
        %s214 = scalar_lea.sflag [#allocation6], %s213
        %s215 = sand.u32 %s97, 1
        %s216 = smul.addr %s215, 256
        %s217 = scalar_lea.vmem [#allocation10], %s216
        %v218 = vld [vmem:[%s187] sm:$0xff]
        %v219 = vld [vmem:[%s187 + $0x8] sm:$0xff]
        %v220 = vld [vmem:[%s187 + $0x10] sm:$0xff]
        %v221 = vld [vmem:[%s187 + $0x18] sm:$0xff]
        %v222 = vld [vmem:[%s187 + $0x20] sm:$0xff]
        %v223 = vld [vmem:[%s187 + $0x28] sm:$0xff]
        %v224 = vld [vmem:[%s187 + $0x30] sm:$0xff]
        %v225 = vld [vmem:[%s187 + $0x38] sm:$0xff]
        %v226 = vld [vmem:[%s187 + $0x40] sm:$0xff]
        %v227 = vld [vmem:[%s187 + $0x48] sm:$0xff]
        %v228 = vld [vmem:[%s187 + $0x50] sm:$0xff]
        %v229 = vld [vmem:[%s187 + $0x58] sm:$0xff]
        %v230 = vld [vmem:[%s187 + $0x60] sm:$0xff]
        %v231 = vld [vmem:[%s187 + $0x68] sm:$0xff]
        %v232 = vld [vmem:[%s187 + $0x70] sm:$0xff]
        %v233 = vld [vmem:[%s187 + $0x78] sm:$0xff]
        %v234 = vld [vmem:[%s187 + $0x80] sm:$0xff]
        %v235 = vld [vmem:[%s187 + $0x88] sm:$0xff]
        %v236 = vld [vmem:[%s187 + $0x90] sm:$0xff]
        %v237 = vld [vmem:[%s187 + $0x98] sm:$0xff]
        %v238 = vld [vmem:[%s187 + $0xa0] sm:$0xff]
        %v239 = vld [vmem:[%s187 + $0xa8] sm:$0xff]
        %v240 = vld [vmem:[%s187 + $0xb0] sm:$0xff]
        %v241 = vld [vmem:[%s187 + $0xb8] sm:$0xff]
        %v242 = vld [vmem:[%s187 + $0xc0] sm:$0xff]
        %v243 = vld [vmem:[%s187 + $0xc8] sm:$0xff]
        %v244 = vld [vmem:[%s187 + $0xd0] sm:$0xff]
        %v245 = vld [vmem:[%s187 + $0xd8] sm:$0xff]
        %v246 = vld [vmem:[%s187 + $0xe0] sm:$0xff]
        %v247 = vld [vmem:[%s187 + $0xe8] sm:$0xff]
        %v248 = vld [vmem:[%s187 + $0xf0] sm:$0xff]
        %v249 = vld [vmem:[%s187 + $0xf8] sm:$0xff]
        %s250 = scalar_lea.vmem [#allocation2], 24
        %251 = vst [vmem:[%s250 + $0x1] sm:$0xff] %v218
        %252 = vst [vmem:[%s250 + $0x9] sm:$0xff] %v219
        %253 = vst [vmem:[%s250 + $0x19] sm:$0xff] %v220
        %254 = vst [vmem:[%s250 + $0x21] sm:$0xff] %v221
        %255 = vst [vmem:[%s250 + $0x31] sm:$0xff] %v222
        %256 = vst [vmem:[%s250 + $0x39] sm:$0xff] %v223
        %257 = vst [vmem:[%s250 + $0x49] sm:$0xff] %v224
        %258 = vst [vmem:[%s250 + $0x51] sm:$0xff] %v225
        %259 = vst [vmem:[%s250 + $0x61] sm:$0xff] %v226
        %260 = vst [vmem:[%s250 + $0x69] sm:$0xff] %v227
        %261 = vst [vmem:[%s250 + $0x79] sm:$0xff] %v228
        %262 = vst [vmem:[%s250 + $0x81] sm:$0xff] %v229
        %263 = vst [vmem:[%s250 + $0x91] sm:$0xff] %v230
        %264 = vst [vmem:[%s250 + $0x99] sm:$0xff] %v231
        %265 = vst [vmem:[%s250 + $0xa9] sm:$0xff] %v232
        %266 = vst [vmem:[%s250 + $0xb1] sm:$0xff] %v233
        %267 = vst [vmem:[%s250 + $0xc1] sm:$0xff] %v234
        %268 = vst [vmem:[%s250 + $0xc9] sm:$0xff] %v235
        %269 = vst [vmem:[%s250 + $0xd9] sm:$0xff] %v236
        %270 = vst [vmem:[%s250 + $0xe1] sm:$0xff] %v237
        %271 = vst [vmem:[%s250 + $0xf1] sm:$0xff] %v238
        %272 = vst [vmem:[%s250 + $0xf9] sm:$0xff] %v239
        %273 = vst [vmem:[%s250 + $0x109] sm:$0xff] %v240
        %274 = vst [vmem:[%s250 + $0x111] sm:$0xff] %v241
        %275 = vst [vmem:[%s250 + $0x121] sm:$0xff] %v242
        %276 = vst [vmem:[%s250 + $0x129] sm:$0xff] %v243
        %277 = vst [vmem:[%s250 + $0x139] sm:$0xff] %v244
        %278 = vst [vmem:[%s250 + $0x141] sm:$0xff] %v245
        %279 = vst [vmem:[%s250 + $0x151] sm:$0xff] %v246
        %280 = vst [vmem:[%s250 + $0x159] sm:$0xff] %v247
        %281 = vst [vmem:[%s250 + $0x169] sm:$0xff] %v248
        %282 = vst [vmem:[%s250 + $0x171] sm:$0xff] %v249
        %283 = vst [vmem:[#allocation2 + $0x1] sm:$0xff] %v220
        %284 = vst [vmem:[#allocation2 + $0x9] sm:$0xff] %v221
        %s285 = scalar_lea.vmem [#allocation2], 408
        %286 = vst [vmem:[%s285 + $0x1] sm:$0xff] %v246
        %287 = vst [vmem:[%s285 + $0x9] sm:$0xff] %v247
        %v288 = vld [vmem:[#allocation2 + $0x2] sm:$0x1]
        %v289 = vld [vmem:[#allocation2 + $0x1a] sm:$0x1]
        %v290 = vld [vmem:[#allocation2 + $0x32] sm:$0x1]
        %v291 = vld [vmem:[#allocation2 + $0x4a] sm:$0x1]
        %v292 = vld [vmem:[#allocation2 + $0x62] sm:$0x1]
        %v293 = vld [vmem:[#allocation2 + $0x7a] sm:$0x1]
        %v294 = vld [vmem:[#allocation2 + $0x92] sm:$0x1]
        %v295 = vld [vmem:[#allocation2 + $0xaa] sm:$0x1]
        %v296 = vld [vmem:[#allocation2 + $0xc2] sm:$0x1]
        %v297 = vld [vmem:[#allocation2 + $0xda] sm:$0x1]
        %v298 = vld [vmem:[#allocation2 + $0xf2] sm:$0x1]
        %v299 = vld [vmem:[#allocation2 + $0x10a] sm:$0x1]
        %v300 = vld [vmem:[#allocation2 + $0x122] sm:$0x1]
        %v301 = vld [vmem:[#allocation2 + $0x13a] sm:$0x1]
        %v302 = vld [vmem:[#allocation2 + $0x152] sm:$0x1]
        %v303 = vld [vmem:[#allocation2 + $0x16a] sm:$0x1]
        %v304 = vld [vmem:[#allocation2 + $0x182] sm:$0x1]
        %v305 = vld [vmem:[#allocation2 + $0x19a] sm:$0x1]
        %306 = vst [vmem:[#allocation2] sm:$0x1] %v288
        %307 = vst [vmem:[#allocation2 + $0x18] sm:$0x1] %v289
        %308 = vst [vmem:[#allocation2 + $0x30] sm:$0x1] %v290
        %309 = vst [vmem:[#allocation2 + $0x48] sm:$0x1] %v291
        %310 = vst [vmem:[#allocation2 + $0x60] sm:$0x1] %v292
        %311 = vst [vmem:[#allocation2 + $0x78] sm:$0x1] %v293
        %312 = vst [vmem:[#allocation2 + $0x90] sm:$0x1] %v294
        %313 = vst [vmem:[#allocation2 + $0xa8] sm:$0x1] %v295
        %314 = vst [vmem:[#allocation2 + $0xc0] sm:$0x1] %v296
        %315 = vst [vmem:[#allocation2 + $0xd8] sm:$0x1] %v297
        %316 = vst [vmem:[#allocation2 + $0xf0] sm:$0x1] %v298
        %317 = vst [vmem:[#allocation2 + $0x108] sm:$0x1] %v299
        %318 = vst [vmem:[#allocation2 + $0x120] sm:$0x1] %v300
        %319 = vst [vmem:[#allocation2 + $0x138] sm:$0x1] %v301
        %320 = vst [vmem:[#allocation2 + $0x150] sm:$0x1] %v302
        %321 = vst [vmem:[#allocation2 + $0x168] sm:$0x1] %v303
        %322 = vst [vmem:[#allocation2 + $0x180] sm:$0x1] %v304
        %323 = vst [vmem:[#allocation2 + $0x198] sm:$0x1] %v305
        %v324 = vld [vmem:[#allocation2 + $0xf] sm:$0x1]
        %v325 = vld [vmem:[#allocation2 + $0x27] sm:$0x1]
        %v326 = vld [vmem:[#allocation2 + $0x3f] sm:$0x1]
        %v327 = vld [vmem:[#allocation2 + $0x57] sm:$0x1]
        %v328 = vld [vmem:[#allocation2 + $0x6f] sm:$0x1]
        %v329 = vld [vmem:[#allocation2 + $0x87] sm:$0x1]
        %v330 = vld [vmem:[#allocation2 + $0x9f] sm:$0x1]
        %v331 = vld [vmem:[#allocation2 + $0xb7] sm:$0x1]
        %v332 = vld [vmem:[#allocation2 + $0xcf] sm:$0x1]
        %v333 = vld [vmem:[#allocation2 + $0xe7] sm:$0x1]
        %v334 = vld [vmem:[#allocation2 + $0xff] sm:$0x1]
        %v335 = vld [vmem:[#allocation2 + $0x117] sm:$0x1]
        %v336 = vld [vmem:[#allocation2 + $0x12f] sm:$0x1]
        %v337 = vld [vmem:[#allocation2 + $0x147] sm:$0x1]
        %v338 = vld [vmem:[#allocation2 + $0x15f] sm:$0x1]
        %v339 = vld [vmem:[#allocation2 + $0x177] sm:$0x1]
        %v340 = vld [vmem:[#allocation2 + $0x18f] sm:$0x1]
        %v341 = vld [vmem:[#allocation2 + $0x1a7] sm:$0x1]
        %342 = vst [vmem:[#allocation2 + $0x11] sm:$0x1] %v324
        %343 = vst [vmem:[#allocation2 + $0x29] sm:$0x1] %v325
        %344 = vst [vmem:[#allocation2 + $0x41] sm:$0x1] %v326
        %345 = vst [vmem:[#allocation2 + $0x59] sm:$0x1] %v327
        %346 = vst [vmem:[#allocation2 + $0x71] sm:$0x1] %v328
        %347 = vst [vmem:[#allocation2 + $0x89] sm:$0x1] %v329
        %348 = vst [vmem:[#allocation2 + $0xa1] sm:$0x1] %v330
        %349 = vst [vmem:[#allocation2 + $0xb9] sm:$0x1] %v331
        %350 = vst [vmem:[#allocation2 + $0xd1] sm:$0x1] %v332
        %351 = vst [vmem:[#allocation2 + $0xe9] sm:$0x1] %v333
        %352 = vst [vmem:[#allocation2 + $0x101] sm:$0x1] %v334
        %353 = vst [vmem:[#allocation2 + $0x119] sm:$0x1] %v335
        %354 = vst [vmem:[#allocation2 + $0x131] sm:$0x1] %v336
        %355 = vst [vmem:[#allocation2 + $0x149] sm:$0x1] %v337
        %356 = vst [vmem:[#allocation2 + $0x161] sm:$0x1] %v338
        %357 = vst [vmem:[#allocation2 + $0x179] sm:$0x1] %v339
        %358 = vst [vmem:[#allocation2 + $0x191] sm:$0x1] %v340
        %359 = vst [vmem:[#allocation2 + $0x1a9] sm:$0x1] %v341
        %v360 = vld [vmem:[#allocation2] sm:$0xff]
        %v361 = vld [vmem:[#allocation2 + $0x8] sm:$0xff]
        %v362 = vld [vmem:[#allocation2 + $0x10] sm:$0x3]
        %v363 = vld [vmem:[#allocation2 + $0x18] sm:$0xff]
        %v364 = vld [vmem:[#allocation2 + $0x20] sm:$0xff]
        %v365 = vld [vmem:[#allocation2 + $0x28] sm:$0x3]
        %v366 = vld [vmem:[#allocation2 + $0x30] sm:$0xff]
        %v367 = vld [vmem:[#allocation2 + $0x38] sm:$0xff]
        %v368 = vld [vmem:[#allocation2 + $0x40] sm:$0x3]
        %v369 = vld [vmem:[#allocation2 + $0x48] sm:$0xff]
        %v370 = vld [vmem:[#allocation2 + $0x50] sm:$0xff]
        %v371 = vld [vmem:[#allocation2 + $0x58] sm:$0x3]
        %v372 = vld [vmem:[#allocation2 + $0x60] sm:$0xff]
        %v373 = vld [vmem:[#allocation2 + $0x68] sm:$0xff]
        %v374 = vld [vmem:[#allocation2 + $0x70] sm:$0x3]
        %v375 = vld [vmem:[#allocation2 + $0x78] sm:$0xff]
        %v376 = vld [vmem:[#allocation2 + $0x80] sm:$0xff]
        %v377 = vld [vmem:[#allocation2 + $0x88] sm:$0x3]
        %v378 = vld [vmem:[#allocation2 + $0x90] sm:$0xff]
        %v379 = vld [vmem:[#allocation2 + $0x98] sm:$0xff]
        %v380 = vld [vmem:[#allocation2 + $0xa0] sm:$0x3]
        %v381 = vld [vmem:[#allocation2 + $0xa8] sm:$0xff]
        %v382 = vld [vmem:[#allocation2 + $0xb0] sm:$0xff]
        %v383 = vld [vmem:[#allocation2 + $0xb8] sm:$0x3]
        %v384 = vld [vmem:[#allocation2 + $0xc0] sm:$0xff]
        %v385 = vld [vmem:[#allocation2 + $0xc8] sm:$0xff]
        %v386 = vld [vmem:[#allocation2 + $0xd0] sm:$0x3]
        %v387 = vld [vmem:[#allocation2 + $0xd8] sm:$0xff]
        %v388 = vld [vmem:[#allocation2 + $0xe0] sm:$0xff]
        %v389 = vld [vmem:[#allocation2 + $0xe8] sm:$0x3]
        %v390 = vld [vmem:[#allocation2 + $0xf0] sm:$0xff]
        %v391 = vld [vmem:[#allocation2 + $0xf8] sm:$0xff]
        %v392 = vld [vmem:[#allocation2 + $0x100] sm:$0x3]
        %v393 = vld [vmem:[#allocation2 + $0x108] sm:$0xff]
        %v394 = vld [vmem:[#allocation2 + $0x110] sm:$0xff]
        %v395 = vld [vmem:[#allocation2 + $0x118] sm:$0x3]
        %v396 = vld [vmem:[#allocation2 + $0x120] sm:$0xff]
        %v397 = vld [vmem:[#allocation2 + $0x128] sm:$0xff]
        %v398 = vld [vmem:[#allocation2 + $0x130] sm:$0x3]
        %v399 = vld [vmem:[#allocation2 + $0x138] sm:$0xff]
        %v400 = vld [vmem:[#allocation2 + $0x140] sm:$0xff]
        %v401 = vld [vmem:[#allocation2 + $0x148] sm:$0x3]
        %v402 = vld [vmem:[#allocation2 + $0x150] sm:$0xff]
        %v403 = vld [vmem:[#allocation2 + $0x158] sm:$0xff]
        %v404 = vld [vmem:[#allocation2 + $0x160] sm:$0x3]
        %v405 = vld [vmem:[#allocation2 + $0x168] sm:$0xff]
        %v406 = vld [vmem:[#allocation2 + $0x170] sm:$0xff]
        %v407 = vld [vmem:[#allocation2 + $0x178] sm:$0x3]
        %v408 = vld [vmem:[#allocation2 + $0x180] sm:$0xff]
        %v409 = vld [vmem:[#allocation2 + $0x188] sm:$0xff]
        %v410 = vld [vmem:[#allocation2 + $0x190] sm:$0x3]
        %v411 = vld [vmem:[#allocation2 + $0x198] sm:$0xff]
        %v412 = vld [vmem:[#allocation2 + $0x1a0] sm:$0xff]
        %v413 = vld [vmem:[#allocation2 + $0x1a8] sm:$0x3]
        %v414 = vld [vmem:[#allocation7] sm:$0xff]
        %v415 = vld [vmem:[#allocation7 + $0x8] sm:$0xff]
        %v416 = vld [vmem:[#allocation7 + $0x10] sm:$0xff]
        %v417 = vld [vmem:[#allocation7 + $0x18] sm:$0xff]
        %v418 = vld [vmem:[#allocation7 + $0x20] sm:$0xff]
        %v419 = vld [vmem:[#allocation7 + $0x28] sm:$0xff]
        %v420 = vld [vmem:[#allocation7 + $0x30] sm:$0xff]
        %v421 = vld [vmem:[#allocation7 + $0x38] sm:$0xff]
        %v422 = vld [vmem:[#allocation7 + $0x40] sm:$0xff]
        %v423 = vld [vmem:[#allocation7 + $0x48] sm:$0xff]
        %v424 = vld [vmem:[#allocation7 + $0x50] sm:$0xff]
        %v425 = vld [vmem:[#allocation7 + $0x58] sm:$0xff]
        %v426 = vld [vmem:[#allocation7 + $0x60] sm:$0xff]
        %v427 = vld [vmem:[#allocation7 + $0x68] sm:$0xff]
        %v428 = vld [vmem:[#allocation7 + $0x70] sm:$0xff]
        %v429 = vld [vmem:[#allocation7 + $0x78] sm:$0xff]
        %v430 = vld [vmem:[#allocation7 + $0x80] sm:$0xff]
        %v431 = vld [vmem:[#allocation7 + $0x88] sm:$0xff]
        %v432 = vld [vmem:[#allocation7 + $0x90] sm:$0xff]
        %v433 = vld [vmem:[#allocation7 + $0x98] sm:$0xff]
        %v434 = vld [vmem:[#allocation7 + $0xa0] sm:$0xff]
        %v435 = vld [vmem:[#allocation7 + $0xa8] sm:$0xff]
        %v436 = vld [vmem:[#allocation7 + $0xb0] sm:$0xff]
        %v437 = vld [vmem:[#allocation7 + $0xb8] sm:$0xff]
        %v438 = vld [vmem:[#allocation7 + $0xc0] sm:$0xff]
        %v439 = vld [vmem:[#allocation7 + $0xc8] sm:$0xff]
        %v440 = vld [vmem:[#allocation7 + $0xd0] sm:$0xff]
        %v441 = vld [vmem:[#allocation7 + $0xd8] sm:$0xff]
        %v442 = vld [vmem:[#allocation7 + $0xe0] sm:$0xff]
        %v443 = vld [vmem:[#allocation7 + $0xe8] sm:$0xff]
        %v444 = vld [vmem:[#allocation7 + $0xf0] sm:$0xff]
        %v445 = vld [vmem:[#allocation7 + $0xf8] sm:$0xff]
        %v446 = vld [vmem:[#allocation7 + $0x100] sm:$0xff]
        %v447 = vld [vmem:[#allocation7 + $0x108] sm:$0xff]
        %v448 = vld [vmem:[#allocation7 + $0x110] sm:$0xff]
        %v449 = vld [vmem:[#allocation7 + $0x118] sm:$0xff]
        %v450 = vld [vmem:[#allocation7 + $0x120] sm:$0xff]
        %v451 = vld [vmem:[#allocation7 + $0x128] sm:$0xff]
        %v452 = vld [vmem:[#allocation7 + $0x130] sm:$0xff]
        %v453 = vld [vmem:[#allocation7 + $0x138] sm:$0xff]
        %v454 = vld [vmem:[#allocation7 + $0x140] sm:$0xff]
        %v455 = vld [vmem:[#allocation7 + $0x148] sm:$0xff]
        %v456 = vld [vmem:[#allocation7 + $0x150] sm:$0xff]
        %v457 = vld [vmem:[#allocation7 + $0x158] sm:$0xff]
        %v458 = vld [vmem:[#allocation7 + $0x160] sm:$0xff]
        %v459 = vld [vmem:[#allocation7 + $0x168] sm:$0xff]
        %v460 = vld [vmem:[#allocation7 + $0x170] sm:$0xff]
        %v461 = vld [vmem:[#allocation7 + $0x178] sm:$0xff]
        %vm516 = vcmask 1046528
        %v517 = vrot.slane %v360, 1
        %v518 = vrot.slane %v361, 1
        %v519 = vsel %vm516, %v517, %v518
        %v520 = vrot.slane %v363, 1
        %v521 = vrot.slane %v364, 1
        %v522 = vsel %vm516, %v520, %v521
        %v523 = vrot.slane %v366, 1
        %v524 = vrot.slane %v367, 1
        %v525 = vsel %vm516, %v523, %v524
        %v526 = vrot.slane %v362, 1
        %v527 = vsel %vm516, %v518, %v526
        %v528 = vrot.slane %v365, 1
        %v529 = vsel %vm516, %v521, %v528
        %v530 = vrot.slane %v368, 1
        %v531 = vsel %vm516, %v524, %v530
        %v532 = vrot.slane %v369, 1
        %v533 = vrot.slane %v370, 1
        %v534 = vsel %vm516, %v532, %v533
        %v535 = vrot.slane %v371, 1
        %v536 = vsel %vm516, %v533, %v535
        %v537 = vrot.slane %v372, 1
        %v538 = vrot.slane %v373, 1
        %v539 = vsel %vm516, %v537, %v538
        %v540 = vrot.slane %v374, 1
        %v541 = vsel %vm516, %v538, %v540
        %v542 = vrot.slane %v375, 1
        %v543 = vrot.slane %v376, 1
        %v544 = vsel %vm516, %v542, %v543
        %v545 = vrot.slane %v377, 1
        %v546 = vsel %vm516, %v543, %v545
        %v547 = vrot.slane %v378, 1
        %v548 = vrot.slane %v379, 1
        %v549 = vsel %vm516, %v547, %v548
        %v550 = vrot.slane %v380, 1
        %v551 = vsel %vm516, %v548, %v550
        %v552 = vrot.slane %v381, 1
        %v553 = vrot.slane %v382, 1
        %v554 = vsel %vm516, %v552, %v553
        %v555 = vrot.slane %v383, 1
        %v556 = vsel %vm516, %v553, %v555
        %v557 = vrot.slane %v384, 1
        %v558 = vrot.slane %v385, 1
        %v559 = vsel %vm516, %v557, %v558
        %v560 = vrot.slane %v386, 1
        %v561 = vsel %vm516, %v558, %v560
        %v562 = vrot.slane %v387, 1
        %v563 = vrot.slane %v388, 1
        %v564 = vsel %vm516, %v562, %v563
        %v565 = vrot.slane %v389, 1
        %v566 = vsel %vm516, %v563, %v565
        %v567 = vrot.slane %v390, 1
        %v568 = vrot.slane %v391, 1
        %v569 = vsel %vm516, %v567, %v568
        %v570 = vrot.slane %v392, 1
        %v571 = vsel %vm516, %v568, %v570
        %v572 = vrot.slane %v393, 1
        %v573 = vrot.slane %v394, 1
        %v574 = vsel %vm516, %v572, %v573
        %v575 = vrot.slane %v395, 1
        %v576 = vsel %vm516, %v573, %v575
        %v577 = vrot.slane %v396, 1
        %v578 = vrot.slane %v397, 1
        %v579 = vsel %vm516, %v577, %v578
        %v580 = vrot.slane %v398, 1
        %v581 = vsel %vm516, %v578, %v580
        %v582 = vrot.slane %v399, 1
        %v583 = vrot.slane %v400, 1
        %v584 = vsel %vm516, %v582, %v583
        %v585 = vrot.slane %v401, 1
        %v586 = vsel %vm516, %v583, %v585
        %v587 = vrot.slane %v402, 1
        %v588 = vrot.slane %v403, 1
        %v589 = vsel %vm516, %v587, %v588
        %v590 = vrot.slane %v404, 1
        %v591 = vsel %vm516, %v588, %v590
        %v592 = vrot.slane %v405, 1
        %v593 = vrot.slane %v406, 1
        %v594 = vsel %vm516, %v592, %v593
        %v595 = vrot.slane %v407, 1
        %v596 = vsel %vm516, %v593, %v595
        %v597 = vrot.slane %v408, 1
        %v598 = vrot.slane %v409, 1
        %v599 = vsel %vm516, %v597, %v598
        %v600 = vrot.slane %v410, 1
        %v601 = vsel %vm516, %v598, %v600
        %v602 = vrot.slane %v411, 1
        %v603 = vrot.slane %v412, 1
        %v604 = vsel %vm516, %v602, %v603
        %v605 = vrot.slane %v413, 1
        %v606 = vsel %vm516, %v603, %v605
        %s643 = scalar_lea.vmem [#allocation7], 384
        %v644 = vld [vmem:[%s643] sm:$0xff]
        %v645 = vld [vmem:[%s643 + $0x8] sm:$0xff]
        %v646 = vld [vmem:[%s643 + $0x10] sm:$0xff]
        %v647 = vld [vmem:[%s643 + $0x18] sm:$0xff]
        %v648 = vld [vmem:[%s643 + $0x20] sm:$0xff]
        %v649 = vld [vmem:[%s643 + $0x28] sm:$0xff]
        %v650 = vld [vmem:[%s643 + $0x30] sm:$0xff]
        %v651 = vld [vmem:[%s643 + $0x38] sm:$0xff]
        %v652 = vld [vmem:[%s643 + $0x40] sm:$0xff]
        %v653 = vld [vmem:[%s643 + $0x48] sm:$0xff]
        %v654 = vld [vmem:[%s643 + $0x50] sm:$0xff]
        %v655 = vld [vmem:[%s643 + $0x58] sm:$0xff]
        %v656 = vld [vmem:[%s643 + $0x60] sm:$0xff]
        %v657 = vld [vmem:[%s643 + $0x68] sm:$0xff]
        %v658 = vld [vmem:[%s643 + $0x70] sm:$0xff]
        %v659 = vld [vmem:[%s643 + $0x78] sm:$0xff]
        %v660 = vld [vmem:[%s643 + $0x80] sm:$0xff]
        %v661 = vld [vmem:[%s643 + $0x88] sm:$0xff]
        %v662 = vld [vmem:[%s643 + $0x90] sm:$0xff]
        %v663 = vld [vmem:[%s643 + $0x98] sm:$0xff]
        %v664 = vld [vmem:[%s643 + $0xa0] sm:$0xff]
        %v665 = vld [vmem:[%s643 + $0xa8] sm:$0xff]
        %v666 = vld [vmem:[%s643 + $0xb0] sm:$0xff]
        %v667 = vld [vmem:[%s643 + $0xb8] sm:$0xff]
        %v668 = vld [vmem:[%s643 + $0xc0] sm:$0xff]
        %v669 = vld [vmem:[%s643 + $0xc8] sm:$0xff]
        %v670 = vld [vmem:[%s643 + $0xd0] sm:$0xff]
        %v671 = vld [vmem:[%s643 + $0xd8] sm:$0xff]
        %v672 = vld [vmem:[%s643 + $0xe0] sm:$0xff]
        %v673 = vld [vmem:[%s643 + $0xe8] sm:$0xff]
        %v674 = vld [vmem:[%s643 + $0xf0] sm:$0xff]
        %v675 = vld [vmem:[%s643 + $0xf8] sm:$0xff]
        %v676 = vld [vmem:[%s643 + $0x100] sm:$0xff]
        %v677 = vld [vmem:[%s643 + $0x108] sm:$0xff]
        %v678 = vld [vmem:[%s643 + $0x110] sm:$0xff]
        %v679 = vld [vmem:[%s643 + $0x118] sm:$0xff]
        %v680 = vld [vmem:[%s643 + $0x120] sm:$0xff]
        %v681 = vld [vmem:[%s643 + $0x128] sm:$0xff]
        %v682 = vld [vmem:[%s643 + $0x130] sm:$0xff]
        %v683 = vld [vmem:[%s643 + $0x138] sm:$0xff]
        %v684 = vld [vmem:[%s643 + $0x140] sm:$0xff]
        %v685 = vld [vmem:[%s643 + $0x148] sm:$0xff]
        %v686 = vld [vmem:[%s643 + $0x150] sm:$0xff]
        %v687 = vld [vmem:[%s643 + $0x158] sm:$0xff]
        %v688 = vld [vmem:[%s643 + $0x160] sm:$0xff]
        %v689 = vld [vmem:[%s643 + $0x168] sm:$0xff]
        %v690 = vld [vmem:[%s643 + $0x170] sm:$0xff]
        %v691 = vld [vmem:[%s643 + $0x178] sm:$0xff]
        %692 = vmatprep.subr.mxu0 0.0
        %693 = vmatpush1.msra.mxu0 %v644
        %694 = vmatprep.subr.mxu0 0.0
        %695 = vmatpush1.msra.mxu0 %v645
        %696 = vmatprep.subr.mxu0 0.0
        %697 = vmatpush1.msra.mxu0 %v646
        %698 = vmatprep.subr.mxu0 0.0
        %699 = vmatpush1.msra.mxu0 %v647
        %700 = vmatprep.subr.mxu0 0.0
        %701 = vmatpush1.msra.mxu0 %v648
        %702 = vmatprep.subr.mxu0 0.0
        %703 = vmatpush1.msra.mxu0 %v649
        %704 = vmatprep.subr.mxu0 0.0
        %705 = vmatpush1.msra.mxu0 %v650
        %706 = vmatprep.subr.mxu0 0.0
        %707 = vmatpush1.msra.mxu0 %v651
        %708 = vmatprep.subr.mxu0 0.0
        %709 = vmatpush1.msra.mxu0 %v652
        %710 = vmatprep.subr.mxu0 0.0
        %711 = vmatpush1.msra.mxu0 %v653
        %712 = vmatprep.subr.mxu0 0.0
        %713 = vmatpush1.msra.mxu0 %v654
        %714 = vmatprep.subr.mxu0 0.0
        %715 = vmatpush1.msra.mxu0 %v655
        %716 = vmatprep.subr.mxu0 0.0
        %717 = vmatpush1.msra.mxu0 %v656
        %718 = vmatprep.subr.mxu0 0.0
        %719 = vmatpush1.msra.mxu0 %v657
        %720 = vmatprep.subr.mxu0 0.0
        %721 = vmatpush1.msra.mxu0 %v658
        %722 = vmatprep.subr.mxu0 0.0
        %723 = vmatpush1.msra.mxu0 %v659
        %724 = vmatprep.subr.mxu0 0.0
        %725 = vmatpush1.msra.mxu0 %v660
        %726 = vmatprep.subr.mxu0 0.0
        %727 = vmatpush1.msra.mxu0 %v661
        %728 = vmatprep.subr.mxu0 0.0
        %729 = vmatpush1.msra.mxu0 %v662
        %730 = vmatprep.subr.mxu0 0.0
        %731 = vmatpush1.msra.mxu0 %v663
        %732 = vmatprep.subr.mxu0 0.0
        %733 = vmatpush1.msra.mxu0 %v664
        %734 = vmatprep.subr.mxu0 0.0
        %735 = vmatpush1.msra.mxu0 %v665
        %736 = vmatprep.subr.mxu0 0.0
        %737 = vmatpush1.msra.mxu0 %v666
        %738 = vmatprep.subr.mxu0 0.0
        %739 = vmatpush1.msra.mxu0 %v667
        %740 = vmatprep.subr.mxu0 0.0
        %741 = vmatpush1.msra.mxu0 %v668
        %742 = vmatprep.subr.mxu0 0.0
        %743 = vmatpush1.msra.mxu0 %v669
        %744 = vmatprep.subr.mxu0 0.0
        %745 = vmatpush1.msra.mxu0 %v670
        %746 = vmatprep.subr.mxu0 0.0
        %747 = vmatpush1.msra.mxu0 %v671
        %748 = vmatprep.subr.mxu0 0.0
        %749 = vmatpush1.msra.mxu0 %v672
        %750 = vmatprep.subr.mxu0 0.0
        %751 = vmatpush1.msra.mxu0 %v673
        %752 = vmatprep.subr.mxu0 0.0
        %753 = vmatpush1.msra.mxu0 %v674
        %754 = vmatprep.subr.mxu0 0.0
        %755 = vmatpush1.msra.mxu0 %v675
        %756 = vmatprep.mubr.f32.mxu0 %v522
        %757 = vmatmul.mubr.f32.gmra.mrb[0].mxu0 %v519
        %v758 = vpop.f32.mrb[0].mxu0
        %v759 = vadd.f32 0.0, %v758
        %v760 = vpop.f32.mrb[0].mxu0
        %761 = vmatprep.mubr.f32.mxu0 %v529
        %762 = vmatmul.mubr.f32.gmra.mrb[0].mxu0 %v527
        %v763 = vpop.f32.mrb[0].mxu0
        %v764 = vadd.f32 0.0, %v763
        %v765 = vpop.f32.mrb[0].mxu0
        %766 = vmatprep.mubr.f32.mxu0 %v525
        %767 = vmatmul.mubr.f32.gmra.mrb[0].mxu0 %v522
        %v768 = vpop.f32.mrb[0].mxu0
        %v769 = vadd.f32 0.0, %v768
        %v770 = vpop.f32.mrb[0].mxu0
        %771 = vmatprep.mubr.f32.mxu0 %v531
        %772 = vmatmul.mubr.f32.gmra.mrb[0].mxu0 %v529
        %v773 = vpop.f32.mrb[0].mxu0
        %v774 = vadd.f32 0.0, %v773
        %v775 = vpop.f32.mrb[0].mxu0
        %776 = vmatprep.mubr.f32.mxu0 %v534
        %777 = vmatmul.mubr.f32.gmra.mrb[0].mxu0 %v525
        %v778 = vpop.f32.mrb[0].mxu0
        %v779 = vadd.f32 0.0, %v778
        %v780 = vpop.f32.mrb[0].mxu0
        %781 = vmatprep.mubr.f32.mxu0 %v536
        %782 = vmatmul.mubr.f32.gmra.mrb[0].mxu0 %v531
        %v783 = vpop.f32.mrb[0].mxu0
        %v784 = vadd.f32 0.0, %v783
        %v785 = vpop.f32.mrb[0].mxu0
        %786 = vmatprep.mubr.f32.mxu0 %v539
        %787 = vmatmul.mubr.f32.gmra.mrb[0].mxu0 %v534
        %v788 = vpop.f32.mrb[0].mxu0
        %v789 = vadd.f32 0.0, %v788
        %v790 = vpop.f32.mrb[0].mxu0
        %791 = vmatprep.mubr.f32.mxu0 %v541
        %792 = vmatmul.mubr.f32.gmra.mrb[0].mxu0 %v536
        %v793 = vpop.f32.mrb[0].mxu0
        %v794 = vadd.f32 0.0, %v793
        %v795 = vpop.f32.mrb[0].mxu0
        %796 = vmatprep.mubr.f32.mxu0 %v544
        %797 = vmatmul.mubr.f32.gmra.mrb[0].mxu0 %v539
        %v798 = vpop.f32.mrb[0].mxu0
        %v799 = vadd.f32 0.0, %v798
        %v800 = vpop.f32.mrb[0].mxu0
        %801 = vmatprep.mubr.f32.mxu0 %v546
        %802 = vmatmul.mubr.f32.gmra.mrb[0].mxu0 %v541
        %v803 = vpop.f32.mrb[0].mxu0
        %v804 = vadd.f32 0.0, %v803
        %v805 = vpop.f32.mrb[0].mxu0
        %806 = vmatprep.mubr.f32.mxu0 %v549
        %807 = vmatmul.mubr.f32.gmra.mrb[0].mxu0 %v544
        %v808 = vpop.f32.mrb[0].mxu0
        %v809 = vadd.f32 0.0, %v808
        %v810 = vpop.f32.mrb[0].mxu0
        %811 = vmatprep.mubr.f32.mxu0 %v551
        %812 = vmatmul.mubr.f32.gmra.mrb[0].mxu0 %v546
        %v813 = vpop.f32.mrb[0].mxu0
        %v814 = vadd.f32 0.0, %v813
        %v815 = vpop.f32.mrb[0].mxu0
        %816 = vmatprep.mubr.f32.mxu0 %v554
        %817 = vmatmul.mubr.f32.gmra.mrb[0].mxu0 %v549
        %v818 = vpop.f32.mrb[0].mxu0
        %v819 = vadd.f32 0.0, %v818
        %v820 = vpop.f32.mrb[0].mxu0
        %821 = vmatprep.mubr.f32.mxu0 %v556
        %822 = vmatmul.mubr.f32.gmra.mrb[0].mxu0 %v551
        %v823 = vpop.f32.mrb[0].mxu0
        %v824 = vadd.f32 0.0, %v823
        %v825 = vpop.f32.mrb[0].mxu0
        %826 = vmatprep.mubr.f32.mxu0 %v559
        %827 = vmatmul.mubr.f32.gmra.mrb[0].mxu0 %v554
        %v828 = vpop.f32.mrb[0].mxu0
        %v829 = vadd.f32 0.0, %v828
        %v830 = vpop.f32.mrb[0].mxu0
        %831 = vmatprep.mubr.f32.mxu0 %v561
        %832 = vmatmul.mubr.f32.gmra.mrb[0].mxu0 %v556
        %v833 = vpop.f32.mrb[0].mxu0
        %v834 = vadd.f32 0.0, %v833
        %v835 = vpop.f32.mrb[0].mxu0
        %836 = vmatprep.mubr.f32.mxu0 %v564
        %837 = vmatmul.mubr.f32.gmra.mrb[0].mxu0 %v559
        %v838 = vpop.f32.mrb[0].mxu0
        %v839 = vadd.f32 0.0, %v838
        %v840 = vpop.f32.mrb[0].mxu0
        %841 = vmatprep.mubr.f32.mxu0 %v566
        %842 = vmatmul.mubr.f32.gmra.mrb[0].mxu0 %v561
        %v843 = vpop.f32.mrb[0].mxu0
        %v844 = vadd.f32 0.0, %v843
        %v845 = vpop.f32.mrb[0].mxu0
        %846 = vmatprep.mubr.f32.mxu0 %v569
        %847 = vmatmul.mubr.f32.gmra.mrb[0].mxu0 %v564
        %v848 = vpop.f32.mrb[0].mxu0
        %v849 = vadd.f32 0.0, %v848
        %v850 = vpop.f32.mrb[0].mxu0
        %851 = vmatprep.mubr.f32.mxu0 %v571
        %852 = vmatmul.mubr.f32.gmra.mrb[0].mxu0 %v566
        %v853 = vpop.f32.mrb[0].mxu0
        %v854 = vadd.f32 0.0, %v853
        %v855 = vpop.f32.mrb[0].mxu0
        %856 = vmatprep.mubr.f32.mxu0 %v574
        %857 = vmatmul.mubr.f32.gmra.mrb[0].mxu0 %v569
        %v858 = vpop.f32.mrb[0].mxu0
        %v859 = vadd.f32 0.0, %v858
        %v860 = vpop.f32.mrb[0].mxu0
        %861 = vmatprep.mubr.f32.mxu0 %v576
        %862 = vmatmul.mubr.f32.gmra.mrb[0].mxu0 %v571
        %v863 = vpop.f32.mrb[0].mxu0
        %v864 = vadd.f32 0.0, %v863
        %v865 = vpop.f32.mrb[0].mxu0
        %866 = vmatprep.mubr.f32.mxu0 %v579
        %867 = vmatmul.mubr.f32.gmra.mrb[0].mxu0 %v574
        %v868 = vpop.f32.mrb[0].mxu0
        %v869 = vadd.f32 0.0, %v868
        %v870 = vpop.f32.mrb[0].mxu0
        %871 = vmatprep.mubr.f32.mxu0 %v581
        %872 = vmatmul.mubr.f32.gmra.mrb[0].mxu0 %v576
        %v873 = vpop.f32.mrb[0].mxu0
        %v874 = vadd.f32 0.0, %v873
        %v875 = vpop.f32.mrb[0].mxu0
        %876 = vmatprep.mubr.f32.mxu0 %v584
        %877 = vmatmul.mubr.f32.gmra.mrb[0].mxu0 %v579
        %v878 = vpop.f32.mrb[0].mxu0
        %v879 = vadd.f32 0.0, %v878
        %v880 = vpop.f32.mrb[0].mxu0
        %881 = vmatprep.mubr.f32.mxu0 %v586
        %882 = vmatmul.mubr.f32.gmra.mrb[0].mxu0 %v581
        %v883 = vpop.f32.mrb[0].mxu0
        %v884 = vadd.f32 0.0, %v883
        %v885 = vpop.f32.mrb[0].mxu0
        %886 = vmatprep.mubr.f32.mxu0 %v589
        %887 = vmatmul.mubr.f32.gmra.mrb[0].mxu0 %v584
        %v888 = vpop.f32.mrb[0].mxu0
        %v889 = vadd.f32 0.0, %v888
        %v890 = vpop.f32.mrb[0].mxu0
        %891 = vmatprep.mubr.f32.mxu0 %v591
        %892 = vmatmul.mubr.f32.gmra.mrb[0].mxu0 %v586
        %v893 = vpop.f32.mrb[0].mxu0
        %v894 = vadd.f32 0.0, %v893
        %v895 = vpop.f32.mrb[0].mxu0
        %896 = vmatprep.mubr.f32.mxu0 %v594
        %897 = vmatmul.mubr.f32.gmra.mrb[0].mxu0 %v589
        %v898 = vpop.f32.mrb[0].mxu0
        %v899 = vadd.f32 0.0, %v898
        %v900 = vpop.f32.mrb[0].mxu0
        %901 = vmatprep.mubr.f32.mxu0 %v596
        %902 = vmatmul.mubr.f32.gmra.mrb[0].mxu0 %v591
        %v903 = vpop.f32.mrb[0].mxu0
        %v904 = vadd.f32 0.0, %v903
        %v905 = vpop.f32.mrb[0].mxu0
        %906 = vmatprep.mubr.f32.mxu0 %v599
        %907 = vmatmul.mubr.f32.gmra.mrb[0].mxu0 %v594
        %v908 = vpop.f32.mrb[0].mxu0
        %v909 = vadd.f32 0.0, %v908
        %v910 = vpop.f32.mrb[0].mxu0
        %911 = vmatprep.mubr.f32.mxu0 %v601
        %912 = vmatmul.mubr.f32.gmra.mrb[0].mxu0 %v596
        %v913 = vpop.f32.mrb[0].mxu0
        %v914 = vadd.f32 0.0, %v913
        %v915 = vpop.f32.mrb[0].mxu0
        %916 = vdwg.mxu0
        %917 = vmatprep.subr.mxu0 0.0
        %918 = vmatpush1.msra.mxu0 %v676
        %919 = vmatprep.subr.mxu0 0.0
        %920 = vmatpush1.msra.mxu0 %v677
        %921 = vmatprep.subr.mxu0 0.0
        %922 = vmatpush1.msra.mxu0 %v678
        %923 = vmatprep.subr.mxu0 0.0
        %924 = vmatpush1.msra.mxu0 %v679
        %925 = vmatprep.subr.mxu0 0.0
        %926 = vmatpush1.msra.mxu0 %v680
        %927 = vmatprep.subr.mxu0 0.0
        %928 = vmatpush1.msra.mxu0 %v681
        %929 = vmatprep.subr.mxu0 0.0
        %930 = vmatpush1.msra.mxu0 %v682
        %931 = vmatprep.subr.mxu0 0.0
        %932 = vmatpush1.msra.mxu0 %v683
        %933 = vmatprep.subr.mxu0 0.0
        %934 = vmatpush1.msra.mxu0 %v684
        %935 = vmatprep.subr.mxu0 0.0
        %936 = vmatpush1.msra.mxu0 %v685
        %937 = vmatprep.subr.mxu0 0.0
        %938 = vmatpush1.msra.mxu0 %v686
        %939 = vmatprep.subr.mxu0 0.0
        %940 = vmatpush1.msra.mxu0 %v687
        %941 = vmatprep.subr.mxu0 0.0
        %942 = vmatpush1.msra.mxu0 %v688
        %943 = vmatprep.subr.mxu0 0.0
        %944 = vmatpush1.msra.mxu0 %v689
        %945 = vmatprep.subr.mxu0 0.0
        %946 = vmatpush1.msra.mxu0 %v690
        %947 = vmatprep.subr.mxu0 0.0
        %948 = vmatpush1.msra.mxu0 %v691
        %949 = vmatprep.subr.mxu0 0.0
        %950 = vmatpush1.msra.mxu0 0.0
        %951 = vmatprep.subr.mxu0 0.0
        %952 = vmatpush1.msra.mxu0 0.0
        %953 = vmatprep.subr.mxu0 0.0
        %954 = vmatpush1.msra.mxu0 0.0
        %955 = vmatprep.subr.mxu0 0.0
        %956 = vmatpush1.msra.mxu0 0.0
        %957 = vmatprep.subr.mxu0 0.0
        %958 = vmatpush1.msra.mxu0 0.0
        %959 = vmatprep.subr.mxu0 0.0
        %960 = vmatpush1.msra.mxu0 0.0
        %961 = vmatprep.subr.mxu0 0.0
        %962 = vmatpush1.msra.mxu0 0.0
        %963 = vmatprep.subr.mxu0 0.0
        %964 = vmatpush1.msra.mxu0 0.0
        %965 = vmatprep.subr.mxu0 0.0
        %966 = vmatpush1.msra.mxu0 0.0
        %967 = vmatprep.subr.mxu0 0.0
        %968 = vmatpush1.msra.mxu0 0.0
        %969 = vmatprep.subr.mxu0 0.0
        %970 = vmatpush1.msra.mxu0 0.0
        %971 = vmatprep.subr.mxu0 0.0
        %972 = vmatpush1.msra.mxu0 0.0
        %973 = vmatprep.subr.mxu0 0.0
        %974 = vmatpush1.msra.mxu0 0.0
        %975 = vmatprep.subr.mxu0 0.0
        %976 = vmatpush1.msra.mxu0 0.0
        %977 = vmatprep.subr.mxu0 0.0
        %978 = vmatpush1.msra.mxu0 0.0
        %979 = vmatprep.subr.mxu0 0.0
        %980 = vmatpush1.msra.mxu0 0.0
        %981 = vmatprep.mubr.f32.mxu0 0.0
        %982 = vmatmul.mubr.f32.gmra.mrb[0].mxu0 %v525
        %v983 = vpop.f32.mrb[0].mxu0
        %v984 = vadd.f32 %v759, %v983
        %v985 = vpop.f32.mrb[0].mxu0
        %986 = vmatprep.mubr.f32.mxu0 0.0
        %987 = vmatmul.mubr.f32.gmra.mrb[0].mxu0 %v531
        %v988 = vpop.f32.mrb[0].mxu0
        %v989 = vadd.f32 %v764, %v988
        %v990 = vpop.f32.mrb[0].mxu0
        %991 = vmatprep.mubr.f32.mxu0 0.0
        %992 = vmatmul.mubr.f32.gmra.mrb[0].mxu0 %v534
        %v993 = vpop.f32.mrb[0].mxu0
        %v994 = vadd.f32 %v769, %v993
        %v995 = vpop.f32.mrb[0].mxu0
        %996 = vmatprep.mubr.f32.mxu0 0.0
        %997 = vmatmul.mubr.f32.gmra.mrb[0].mxu0 %v536
        %v998 = vpop.f32.mrb[0].mxu0
        %v999 = vadd.f32 %v774, %v998
        %v1000 = vpop.f32.mrb[0].mxu0
        %1001 = vmatprep.mubr.f32.mxu0 0.0
        %1002 = vmatmul.mubr.f32.gmra.mrb[0].mxu0 %v539
        %v1003 = vpop.f32.mrb[0].mxu0
        %v1004 = vadd.f32 %v779, %v1003
        %v1005 = vpop.f32.mrb[0].mxu0
        %1006 = vmatprep.mubr.f32.mxu0 0.0
        %1007 = vmatmul.mubr.f32.gmra.mrb[0].mxu0 %v541
        %v1008 = vpop.f32.mrb[0].mxu0
        %v1009 = vadd.f32 %v784, %v1008
        %v1010 = vpop.f32.mrb[0].mxu0
        %1011 = vmatprep.mubr.f32.mxu0 0.0
        %1012 = vmatmul.mubr.f32.gmra.mrb[0].mxu0 %v544
        %v1013 = vpop.f32.mrb[0].mxu0
        %v1014 = vadd.f32 %v789, %v1013
        %v1015 = vpop.f32.mrb[0].mxu0
        %1016 = vmatprep.mubr.f32.mxu0 0.0
        %1017 = vmatmul.mubr.f32.gmra.mrb[0].mxu0 %v546
        %v1018 = vpop.f32.mrb[0].mxu0
        %v1019 = vadd.f32 %v794, %v1018
        %v1020 = vpop.f32.mrb[0].mxu0
        %1021 = vmatprep.mubr.f32.mxu0 0.0
        %1022 = vmatmul.mubr.f32.gmra.mrb[0].mxu0 %v549
        %v1023 = vpop.f32.mrb[0].mxu0
        %v1024 = vadd.f32 %v799, %v1023
        %v1025 = vpop.f32.mrb[0].mxu0
        %1026 = vmatprep.mubr.f32.mxu0 0.0
        %1027 = vmatmul.mubr.f32.gmra.mrb[0].mxu0 %v551
        %v1028 = vpop.f32.mrb[0].mxu0
        %v1029 = vadd.f32 %v804, %v1028
        %v1030 = vpop.f32.mrb[0].mxu0
        %1031 = vmatprep.mubr.f32.mxu0 0.0
        %1032 = vmatmul.mubr.f32.gmra.mrb[0].mxu0 %v554
        %v1033 = vpop.f32.mrb[0].mxu0
        %v1034 = vadd.f32 %v809, %v1033
        %v1035 = vpop.f32.mrb[0].mxu0
        %1036 = vmatprep.mubr.f32.mxu0 0.0
        %1037 = vmatmul.mubr.f32.gmra.mrb[0].mxu0 %v556
        %v1038 = vpop.f32.mrb[0].mxu0
        %v1039 = vadd.f32 %v814, %v1038
        %v1040 = vpop.f32.mrb[0].mxu0
        %1041 = vmatprep.mubr.f32.mxu0 0.0
        %1042 = vmatmul.mubr.f32.gmra.mrb[0].mxu0 %v559
        %v1043 = vpop.f32.mrb[0].mxu0
        %v1044 = vadd.f32 %v819, %v1043
        %v1045 = vpop.f32.mrb[0].mxu0
        %1046 = vmatprep.mubr.f32.mxu0 0.0
        %1047 = vmatmul.mubr.f32.gmra.mrb[0].mxu0 %v561
        %v1048 = vpop.f32.mrb[0].mxu0
        %v1049 = vadd.f32 %v824, %v1048
        %v1050 = vpop.f32.mrb[0].mxu0
        %1051 = vmatprep.mubr.f32.mxu0 0.0
        %1052 = vmatmul.mubr.f32.gmra.mrb[0].mxu0 %v564
        %v1053 = vpop.f32.mrb[0].mxu0
        %v1054 = vadd.f32 %v829, %v1053
        %v1055 = vpop.f32.mrb[0].mxu0
        %1056 = vmatprep.mubr.f32.mxu0 0.0
        %1057 = vmatmul.mubr.f32.gmra.mrb[0].mxu0 %v566
        %v1058 = vpop.f32.mrb[0].mxu0
        %v1059 = vadd.f32 %v834, %v1058
        %v1060 = vpop.f32.mrb[0].mxu0
        %1061 = vmatprep.mubr.f32.mxu0 0.0
        %1062 = vmatmul.mubr.f32.gmra.mrb[0].mxu0 %v569
        %v1063 = vpop.f32.mrb[0].mxu0
        %v1064 = vadd.f32 %v839, %v1063
        %v1065 = vpop.f32.mrb[0].mxu0
        %1066 = vmatprep.mubr.f32.mxu0 0.0
        %1067 = vmatmul.mubr.f32.gmra.mrb[0].mxu0 %v571
        %v1068 = vpop.f32.mrb[0].mxu0
        %v1069 = vadd.f32 %v844, %v1068
        %v1070 = vpop.f32.mrb[0].mxu0
        %1071 = vmatprep.mubr.f32.mxu0 0.0
        %1072 = vmatmul.mubr.f32.gmra.mrb[0].mxu0 %v574
        %v1073 = vpop.f32.mrb[0].mxu0
        %v1074 = vadd.f32 %v849, %v1073
        %v1075 = vpop.f32.mrb[0].mxu0
        %1076 = vmatprep.mubr.f32.mxu0 0.0
        %1077 = vmatmul.mubr.f32.gmra.mrb[0].mxu0 %v576
        %v1078 = vpop.f32.mrb[0].mxu0
        %v1079 = vadd.f32 %v854, %v1078
        %v1080 = vpop.f32.mrb[0].mxu0
        %1081 = vmatprep.mubr.f32.mxu0 0.0
        %1082 = vmatmul.mubr.f32.gmra.mrb[0].mxu0 %v579
        %v1083 = vpop.f32.mrb[0].mxu0
        %v1084 = vadd.f32 %v859, %v1083
        %v1085 = vpop.f32.mrb[0].mxu0
        %1086 = vmatprep.mubr.f32.mxu0 0.0
        %1087 = vmatmul.mubr.f32.gmra.mrb[0].mxu0 %v581
        %v1088 = vpop.f32.mrb[0].mxu0
        %v1089 = vadd.f32 %v864, %v1088
        %v1090 = vpop.f32.mrb[0].mxu0
        %1091 = vmatprep.mubr.f32.mxu0 0.0
        %1092 = vmatmul.mubr.f32.gmra.mrb[0].mxu0 %v584
        %v1093 = vpop.f32.mrb[0].mxu0
        %v1094 = vadd.f32 %v869, %v1093
        %v1095 = vpop.f32.mrb[0].mxu0
        %1096 = vmatprep.mubr.f32.mxu0 0.0
        %1097 = vmatmul.mubr.f32.gmra.mrb[0].mxu0 %v586
        %v1098 = vpop.f32.mrb[0].mxu0
        %v1099 = vadd.f32 %v874, %v1098
        %v1100 = vpop.f32.mrb[0].mxu0
        %1101 = vmatprep.mubr.f32.mxu0 0.0
        %1102 = vmatmul.mubr.f32.gmra.mrb[0].mxu0 %v589
        %v1103 = vpop.f32.mrb[0].mxu0
        %v1104 = vadd.f32 %v879, %v1103
        %v1105 = vpop.f32.mrb[0].mxu0
        %1106 = vmatprep.mubr.f32.mxu0 0.0
        %1107 = vmatmul.mubr.f32.gmra.mrb[0].mxu0 %v591
        %v1108 = vpop.f32.mrb[0].mxu0
        %v1109 = vadd.f32 %v884, %v1108
        %v1110 = vpop.f32.mrb[0].mxu0
        %1111 = vmatprep.mubr.f32.mxu0 0.0
        %1112 = vmatmul.mubr.f32.gmra.mrb[0].mxu0 %v594
        %v1113 = vpop.f32.mrb[0].mxu0
        %v1114 = vadd.f32 %v889, %v1113
        %v1115 = vpop.f32.mrb[0].mxu0
        %1116 = vmatprep.mubr.f32.mxu0 0.0
        %1117 = vmatmul.mubr.f32.gmra.mrb[0].mxu0 %v596
        %v1118 = vpop.f32.mrb[0].mxu0
        %v1119 = vadd.f32 %v894, %v1118
        %v1120 = vpop.f32.mrb[0].mxu0
        %1121 = vmatprep.mubr.f32.mxu0 0.0
        %1122 = vmatmul.mubr.f32.gmra.mrb[0].mxu0 %v599
        %v1123 = vpop.f32.mrb[0].mxu0
        %v1124 = vadd.f32 %v899, %v1123
        %v1125 = vpop.f32.mrb[0].mxu0
        %1126 = vmatprep.mubr.f32.mxu0 0.0
        %1127 = vmatmul.mubr.f32.gmra.mrb[0].mxu0 %v601
        %v1128 = vpop.f32.mrb[0].mxu0
        %v1129 = vadd.f32 %v904, %v1128
        %v1130 = vpop.f32.mrb[0].mxu0
        %1131 = vmatprep.mubr.f32.mxu0 0.0
        %1132 = vmatmul.mubr.f32.gmra.mrb[0].mxu0 %v604
        %v1133 = vpop.f32.mrb[0].mxu0
        %v1134 = vadd.f32 %v909, %v1133
        %v1135 = vpop.f32.mrb[0].mxu0
        %1136 = vmatprep.mubr.f32.mxu0 0.0
        %1137 = vmatmul.mubr.f32.gmra.mrb[0].mxu0 %v606
        %v1138 = vpop.f32.mrb[0].mxu0
        %v1139 = vadd.f32 %v914, %v1138
        %v1140 = vpop.f32.mrb[0].mxu0
        %1141 = vdwg.mxu0
        %1142 = vmatprep.subr.mxu0 0.0
        %1143 = vmatpush1.msra.mxu0 %v414
        %1144 = vmatprep.subr.mxu0 0.0
        %1145 = vmatpush1.msra.mxu0 %v415
        %1146 = vmatprep.subr.mxu0 0.0
        %1147 = vmatpush1.msra.mxu0 %v416
        %1148 = vmatprep.subr.mxu0 0.0
        %1149 = vmatpush1.msra.mxu0 %v417
        %1150 = vmatprep.subr.mxu0 0.0
        %1151 = vmatpush1.msra.mxu0 %v418
        %1152 = vmatprep.subr.mxu0 0.0
        %1153 = vmatpush1.msra.mxu0 %v419
        %1154 = vmatprep.subr.mxu0 0.0
        %1155 = vmatpush1.msra.mxu0 %v420
        %1156 = vmatprep.subr.mxu0 0.0
        %1157 = vmatpush1.msra.mxu0 %v421
        %1158 = vmatprep.subr.mxu0 0.0
        %1159 = vmatpush1.msra.mxu0 %v422
        %1160 = vmatprep.subr.mxu0 0.0
        %1161 = vmatpush1.msra.mxu0 %v423
        %1162 = vmatprep.subr.mxu0 0.0
        %1163 = vmatpush1.msra.mxu0 %v424
        %1164 = vmatprep.subr.mxu0 0.0
        %1165 = vmatpush1.msra.mxu0 %v425
        %1166 = vmatprep.subr.mxu0 0.0
        %1167 = vmatpush1.msra.mxu0 %v426
        %1168 = vmatprep.subr.mxu0 0.0
        %1169 = vmatpush1.msra.mxu0 %v427
        %1170 = vmatprep.subr.mxu0 0.0
        %1171 = vmatpush1.msra.mxu0 %v428
        %1172 = vmatprep.subr.mxu0 0.0
        %1173 = vmatpush1.msra.mxu0 %v429
        %1174 = vmatprep.subr.mxu0 0.0
        %1175 = vmatpush1.msra.mxu0 %v430
        %1176 = vmatprep.subr.mxu0 0.0
        %1177 = vmatpush1.msra.mxu0 %v431
        %1178 = vmatprep.subr.mxu0 0.0
        %1179 = vmatpush1.msra.mxu0 %v432
        %1180 = vmatprep.subr.mxu0 0.0
        %1181 = vmatpush1.msra.mxu0 %v433
        %1182 = vmatprep.subr.mxu0 0.0
        %1183 = vmatpush1.msra.mxu0 %v434
        %1184 = vmatprep.subr.mxu0 0.0
        %1185 = vmatpush1.msra.mxu0 %v435
        %1186 = vmatprep.subr.mxu0 0.0
        %1187 = vmatpush1.msra.mxu0 %v436
        %1188 = vmatprep.subr.mxu0 0.0
        %1189 = vmatpush1.msra.mxu0 %v437
        %1190 = vmatprep.subr.mxu0 0.0
        %1191 = vmatpush1.msra.mxu0 %v438
        %1192 = vmatprep.subr.mxu0 0.0
        %1193 = vmatpush1.msra.mxu0 %v439
        %1194 = vmatprep.subr.mxu0 0.0
        %1195 = vmatpush1.msra.mxu0 %v440
        %1196 = vmatprep.subr.mxu0 0.0
        %1197 = vmatpush1.msra.mxu0 %v441
        %1198 = vmatprep.subr.mxu0 0.0
        %1199 = vmatpush1.msra.mxu0 %v442
        %1200 = vmatprep.subr.mxu0 0.0
        %1201 = vmatpush1.msra.mxu0 %v443
        %1202 = vmatprep.subr.mxu0 0.0
        %1203 = vmatpush1.msra.mxu0 %v444
        %1204 = vmatprep.subr.mxu0 0.0
        %1205 = vmatpush1.msra.mxu0 %v445
        %1206 = vmatprep.mubr.f32.mxu0 %v363
        %1207 = vmatmul.mubr.f32.gmra.mrb[0].mxu0 %v360
        %v1208 = vpop.f32.mrb[0].mxu0
        %v1209 = vadd.f32 %v984, %v1208
        %v1210 = vpop.f32.mrb[0].mxu0
        %1211 = vmatprep.mubr.f32.mxu0 %v364
        %1212 = vmatmul.mubr.f32.gmra.mrb[0].mxu0 %v361
        %v1213 = vpop.f32.mrb[0].mxu0
        %v1214 = vadd.f32 %v989, %v1213
        %v1215 = vpop.f32.mrb[0].mxu0
        %1216 = vmatprep.mubr.f32.mxu0 %v366
        %1217 = vmatmul.mubr.f32.gmra.mrb[0].mxu0 %v363
        %v1218 = vpop.f32.mrb[0].mxu0
        %v1219 = vadd.f32 %v994, %v1218
        %v1220 = vpop.f32.mrb[0].mxu0
        %1221 = vmatprep.mubr.f32.mxu0 %v367
        %1222 = vmatmul.mubr.f32.gmra.mrb[0].mxu0 %v364
        %v1223 = vpop.f32.mrb[0].mxu0
        %v1224 = vadd.f32 %v999, %v1223
        %v1225 = vpop.f32.mrb[0].mxu0
        %1226 = vmatprep.mubr.f32.mxu0 %v369
        %1227 = vmatmul.mubr.f32.gmra.mrb[0].mxu0 %v366
        %v1228 = vpop.f32.mrb[0].mxu0
        %v1229 = vadd.f32 %v1004, %v1228
        %v1230 = vpop.f32.mrb[0].mxu0
        %1231 = vmatprep.mubr.f32.mxu0 %v370
        %1232 = vmatmul.mubr.f32.gmra.mrb[0].mxu0 %v367
        %v1233 = vpop.f32.mrb[0].mxu0
        %v1234 = vadd.f32 %v1009, %v1233
        %v1235 = vpop.f32.mrb[0].mxu0
        %1236 = vmatprep.mubr.f32.mxu0 %v372
        %1237 = vmatmul.mubr.f32.gmra.mrb[0].mxu0 %v369
        %v1238 = vpop.f32.mrb[0].mxu0
        %v1239 = vadd.f32 %v1014, %v1238
        %v1240 = vpop.f32.mrb[0].mxu0
        %1241 = vmatprep.mubr.f32.mxu0 %v373
        %1242 = vmatmul.mubr.f32.gmra.mrb[0].mxu0 %v370
        %v1243 = vpop.f32.mrb[0].mxu0
        %v1244 = vadd.f32 %v1019, %v1243
        %v1245 = vpop.f32.mrb[0].mxu0
        %1246 = vmatprep.mubr.f32.mxu0 %v375
        %1247 = vmatmul.mubr.f32.gmra.mrb[0].mxu0 %v372
        %v1248 = vpop.f32.mrb[0].mxu0
        %v1249 = vadd.f32 %v1024, %v1248
        %v1250 = vpop.f32.mrb[0].mxu0
        %1251 = vmatprep.mubr.f32.mxu0 %v376
        %1252 = vmatmul.mubr.f32.gmra.mrb[0].mxu0 %v373
        %v1253 = vpop.f32.mrb[0].mxu0
        %v1254 = vadd.f32 %v1029, %v1253
        %v1255 = vpop.f32.mrb[0].mxu0
        %1256 = vmatprep.mubr.f32.mxu0 %v378
        %1257 = vmatmul.mubr.f32.gmra.mrb[0].mxu0 %v375
        %v1258 = vpop.f32.mrb[0].mxu0
        %v1259 = vadd.f32 %v1034, %v1258
        %v1260 = vpop.f32.mrb[0].mxu0
        %1261 = vmatprep.mubr.f32.mxu0 %v379
        %1262 = vmatmul.mubr.f32.gmra.mrb[0].mxu0 %v376
        %v1263 = vpop.f32.mrb[0].mxu0
        %v1264 = vadd.f32 %v1039, %v1263
        %v1265 = vpop.f32.mrb[0].mxu0
        %1266 = vmatprep.mubr.f32.mxu0 %v381
        %1267 = vmatmul.mubr.f32.gmra.mrb[0].mxu0 %v378
        %v1268 = vpop.f32.mrb[0].mxu0
        %v1269 = vadd.f32 %v1044, %v1268
        %v1270 = vpop.f32.mrb[0].mxu0
        %1271 = vmatprep.mubr.f32.mxu0 %v382
        %1272 = vmatmul.mubr.f32.gmra.mrb[0].mxu0 %v379
        %v1273 = vpop.f32.mrb[0].mxu0
        %v1274 = vadd.f32 %v1049, %v1273
        %v1275 = vpop.f32.mrb[0].mxu0
        %1276 = vmatprep.mubr.f32.mxu0 %v384
        %1277 = vmatmul.mubr.f32.gmra.mrb[0].mxu0 %v381
        %v1278 = vpop.f32.mrb[0].mxu0
        %v1279 = vadd.f32 %v1054, %v1278
        %v1280 = vpop.f32.mrb[0].mxu0
        %1281 = vmatprep.mubr.f32.mxu0 %v385
        %1282 = vmatmul.mubr.f32.gmra.mrb[0].mxu0 %v382
        %v1283 = vpop.f32.mrb[0].mxu0
        %v1284 = vadd.f32 %v1059, %v1283
        %v1285 = vpop.f32.mrb[0].mxu0
        %1286 = vmatprep.mubr.f32.mxu0 %v387
        %1287 = vmatmul.mubr.f32.gmra.mrb[0].mxu0 %v384
        %v1288 = vpop.f32.mrb[0].mxu0
        %v1289 = vadd.f32 %v1064, %v1288
        %v1290 = vpop.f32.mrb[0].mxu0
        %1291 = vmatprep.mubr.f32.mxu0 %v388
        %1292 = vmatmul.mubr.f32.gmra.mrb[0].mxu0 %v385
        %v1293 = vpop.f32.mrb[0].mxu0
        %v1294 = vadd.f32 %v1069, %v1293
        %v1295 = vpop.f32.mrb[0].mxu0
        %1296 = vmatprep.mubr.f32.mxu0 %v390
        %1297 = vmatmul.mubr.f32.gmra.mrb[0].mxu0 %v387
        %v1298 = vpop.f32.mrb[0].mxu0
        %v1299 = vadd.f32 %v1074, %v1298
        %v1300 = vpop.f32.mrb[0].mxu0
        %1301 = vmatprep.mubr.f32.mxu0 %v391
        %1302 = vmatmul.mubr.f32.gmra.mrb[0].mxu0 %v388
        %v1303 = vpop.f32.mrb[0].mxu0
        %v1304 = vadd.f32 %v1079, %v1303
        %v1305 = vpop.f32.mrb[0].mxu0
        %1306 = vmatprep.mubr.f32.mxu0 %v393
        %1307 = vmatmul.mubr.f32.gmra.mrb[0].mxu0 %v390
        %v1308 = vpop.f32.mrb[0].mxu0
        %v1309 = vadd.f32 %v1084, %v1308
        %v1310 = vpop.f32.mrb[0].mxu0
        %1311 = vmatprep.mubr.f32.mxu0 %v394
        %1312 = vmatmul.mubr.f32.gmra.mrb[0].mxu0 %v391
        %v1313 = vpop.f32.mrb[0].mxu0
        %v1314 = vadd.f32 %v1089, %v1313
        %v1315 = vpop.f32.mrb[0].mxu0
        %1316 = vmatprep.mubr.f32.mxu0 %v396
        %1317 = vmatmul.mubr.f32.gmra.mrb[0].mxu0 %v393
        %v1318 = vpop.f32.mrb[0].mxu0
        %v1319 = vadd.f32 %v1094, %v1318
        %v1320 = vpop.f32.mrb[0].mxu0
        %1321 = vmatprep.mubr.f32.mxu0 %v397
        %1322 = vmatmul.mubr.f32.gmra.mrb[0].mxu0 %v394
        %v1323 = vpop.f32.mrb[0].mxu0
        %v1324 = vadd.f32 %v1099, %v1323
        %v1325 = vpop.f32.mrb[0].mxu0
        %1326 = vmatprep.mubr.f32.mxu0 %v399
        %1327 = vmatmul.mubr.f32.gmra.mrb[0].mxu0 %v396
        %v1328 = vpop.f32.mrb[0].mxu0
        %v1329 = vadd.f32 %v1104, %v1328
        %v1330 = vpop.f32.mrb[0].mxu0
        %1331 = vmatprep.mubr.f32.mxu0 %v400
        %1332 = vmatmul.mubr.f32.gmra.mrb[0].mxu0 %v397
        %v1333 = vpop.f32.mrb[0].mxu0
        %v1334 = vadd.f32 %v1109, %v1333
        %v1335 = vpop.f32.mrb[0].mxu0
        %1336 = vmatprep.mubr.f32.mxu0 %v402
        %1337 = vmatmul.mubr.f32.gmra.mrb[0].mxu0 %v399
        %v1338 = vpop.f32.mrb[0].mxu0
        %v1339 = vadd.f32 %v1114, %v1338
        %v1340 = vpop.f32.mrb[0].mxu0
        %1341 = vmatprep.mubr.f32.mxu0 %v403
        %1342 = vmatmul.mubr.f32.gmra.mrb[0].mxu0 %v400
        %v1343 = vpop.f32.mrb[0].mxu0
        %v1344 = vadd.f32 %v1119, %v1343
        %v1345 = vpop.f32.mrb[0].mxu0
        %1346 = vmatprep.mubr.f32.mxu0 %v405
        %1347 = vmatmul.mubr.f32.gmra.mrb[0].mxu0 %v402
        %v1348 = vpop.f32.mrb[0].mxu0
        %v1349 = vadd.f32 %v1124, %v1348
        %v1350 = vpop.f32.mrb[0].mxu0
        %1351 = vmatprep.mubr.f32.mxu0 %v406
        %1352 = vmatmul.mubr.f32.gmra.mrb[0].mxu0 %v403
        %v1353 = vpop.f32.mrb[0].mxu0
        %v1354 = vadd.f32 %v1129, %v1353
        %v1355 = vpop.f32.mrb[0].mxu0
        %1356 = vmatprep.mubr.f32.mxu0 %v408
        %1357 = vmatmul.mubr.f32.gmra.mrb[0].mxu0 %v405
        %v1358 = vpop.f32.mrb[0].mxu0
        %v1359 = vadd.f32 %v1134, %v1358
        %v1360 = vpop.f32.mrb[0].mxu0
        %1361 = vmatprep.mubr.f32.mxu0 %v409
        %1362 = vmatmul.mubr.f32.gmra.mrb[0].mxu0 %v406
        %v1363 = vpop.f32.mrb[0].mxu0
        %v1364 = vadd.f32 %v1139, %v1363
        %v1365 = vpop.f32.mrb[0].mxu0
        %1366 = vdwg.mxu0
        %1367 = vmatprep.subr.mxu0 0.0
        %1368 = vmatpush1.msra.mxu0 %v446
        %1369 = vmatprep.subr.mxu0 0.0
        %1370 = vmatpush1.msra.mxu0 %v447
        %1371 = vmatprep.subr.mxu0 0.0
        %1372 = vmatpush1.msra.mxu0 %v448
        %1373 = vmatprep.subr.mxu0 0.0
        %1374 = vmatpush1.msra.mxu0 %v449
        %1375 = vmatprep.subr.mxu0 0.0
        %1376 = vmatpush1.msra.mxu0 %v450
        %1377 = vmatprep.subr.mxu0 0.0
        %1378 = vmatpush1.msra.mxu0 %v451
        %1379 = vmatprep.subr.mxu0 0.0
        %1380 = vmatpush1.msra.mxu0 %v452
        %1381 = vmatprep.subr.mxu0 0.0
        %1382 = vmatpush1.msra.mxu0 %v453
        %1383 = vmatprep.subr.mxu0 0.0
        %1384 = vmatpush1.msra.mxu0 %v454
        %1385 = vmatprep.subr.mxu0 0.0
        %1386 = vmatpush1.msra.mxu0 %v455
        %1387 = vmatprep.subr.mxu0 0.0
        %1388 = vmatpush1.msra.mxu0 %v456
        %1389 = vmatprep.subr.mxu0 0.0
        %1390 = vmatpush1.msra.mxu0 %v457
        %1391 = vmatprep.subr.mxu0 0.0
        %1392 = vmatpush1.msra.mxu0 %v458
        %1393 = vmatprep.subr.mxu0 0.0
        %1394 = vmatpush1.msra.mxu0 %v459
        %1395 = vmatprep.subr.mxu0 0.0
        %1396 = vmatpush1.msra.mxu0 %v460
        %1397 = vmatprep.subr.mxu0 0.0
        %1398 = vmatpush1.msra.mxu0 %v461
        %1399 = vmatprep.subr.mxu0 0.0
        %1400 = vmatpush1.msra.mxu0 0.0
        %1401 = vmatprep.subr.mxu0 0.0
        %1402 = vmatpush1.msra.mxu0 0.0
        %1403 = vmatprep.subr.mxu0 0.0
        %1404 = vmatpush1.msra.mxu0 0.0
        %1405 = vmatprep.subr.mxu0 0.0
        %1406 = vmatpush1.msra.mxu0 0.0
        %1407 = vmatprep.subr.mxu0 0.0
        %1408 = vmatpush1.msra.mxu0 0.0
        %1409 = vmatprep.subr.mxu0 0.0
        %1410 = vmatpush1.msra.mxu0 0.0
        %1411 = vmatprep.subr.mxu0 0.0
        %1412 = vmatpush1.msra.mxu0 0.0
        %1413 = vmatprep.subr.mxu0 0.0
        %1414 = vmatpush1.msra.mxu0 0.0
        %1415 = vmatprep.subr.mxu0 0.0
        %1416 = vmatpush1.msra.mxu0 0.0
        %1417 = vmatprep.subr.mxu0 0.0
        %1418 = vmatpush1.msra.mxu0 0.0
        %1419 = vmatprep.subr.mxu0 0.0
        %1420 = vmatpush1.msra.mxu0 0.0
        %1421 = vmatprep.subr.mxu0 0.0
        %1422 = vmatpush1.msra.mxu0 0.0
        %1423 = vmatprep.subr.mxu0 0.0
        %1424 = vmatpush1.msra.mxu0 0.0
        %1425 = vmatprep.subr.mxu0 0.0
        %1426 = vmatpush1.msra.mxu0 0.0
        %1427 = vmatprep.subr.mxu0 0.0
        %1428 = vmatpush1.msra.mxu0 0.0
        %1429 = vmatprep.subr.mxu0 0.0
        %1430 = vmatpush1.msra.mxu0 0.0
        %1431 = vmatprep.mubr.f32.mxu0 0.0
        %1432 = vmatmul.mubr.f32.gmra.mrb[0].mxu0 %v366
        %v1433 = vpop.f32.mrb[0].mxu0
        %v1434 = vadd.f32 %v1209, %v1433
        %v1435 = vpop.f32.mrb[0].mxu0
        %1436 = vmatprep.mubr.f32.mxu0 0.0
        %1437 = vmatmul.mubr.f32.gmra.mrb[0].mxu0 %v367
        %v1438 = vpop.f32.mrb[0].mxu0
        %v1439 = vadd.f32 %v1214, %v1438
        %v1440 = vpop.f32.mrb[0].mxu0
        %1441 = vmatprep.mubr.f32.mxu0 0.0
        %1442 = vmatmul.mubr.f32.gmra.mrb[0].mxu0 %v369
        %v1443 = vpop.f32.mrb[0].mxu0
        %v1444 = vadd.f32 %v1219, %v1443
        %v1445 = vpop.f32.mrb[0].mxu0
        %1446 = vmatprep.mubr.f32.mxu0 0.0
        %1447 = vmatmul.mubr.f32.gmra.mrb[0].mxu0 %v370
        %v1448 = vpop.f32.mrb[0].mxu0
        %v1449 = vadd.f32 %v1224, %v1448
        %v1450 = vpop.f32.mrb[0].mxu0
        %1451 = vmatprep.mubr.f32.mxu0 0.0
        %1452 = vmatmul.mubr.f32.gmra.mrb[0].mxu0 %v372
        %v1453 = vpop.f32.mrb[0].mxu0
        %v1454 = vadd.f32 %v1229, %v1453
        %v1455 = vpop.f32.mrb[0].mxu0
        %1456 = vmatprep.mubr.f32.mxu0 0.0
        %1457 = vmatmul.mubr.f32.gmra.mrb[0].mxu0 %v373
        %v1458 = vpop.f32.mrb[0].mxu0
        %v1459 = vadd.f32 %v1234, %v1458
        %v1460 = vpop.f32.mrb[0].mxu0
        %1461 = vmatprep.mubr.f32.mxu0 0.0
        %1462 = vmatmul.mubr.f32.gmra.mrb[0].mxu0 %v375
        %v1463 = vpop.f32.mrb[0].mxu0
        %v1464 = vadd.f32 %v1239, %v1463
        %v1465 = vpop.f32.mrb[0].mxu0
        %1466 = vmatprep.mubr.f32.mxu0 0.0
        %1467 = vmatmul.mubr.f32.gmra.mrb[0].mxu0 %v376
        %v1468 = vpop.f32.mrb[0].mxu0
        %v1469 = vadd.f32 %v1244, %v1468
        %v1470 = vpop.f32.mrb[0].mxu0
        %1471 = vmatprep.mubr.f32.mxu0 0.0
        %1472 = vmatmul.mubr.f32.gmra.mrb[0].mxu0 %v378
        %v1473 = vpop.f32.mrb[0].mxu0
        %v1474 = vadd.f32 %v1249, %v1473
        %v1475 = vpop.f32.mrb[0].mxu0
        %1476 = vmatprep.mubr.f32.mxu0 0.0
        %1477 = vmatmul.mubr.f32.gmra.mrb[0].mxu0 %v379
        %v1478 = vpop.f32.mrb[0].mxu0
        %v1479 = vadd.f32 %v1254, %v1478
        %v1480 = vpop.f32.mrb[0].mxu0
        %1481 = vmatprep.mubr.f32.mxu0 0.0
        %1482 = vmatmul.mubr.f32.gmra.mrb[0].mxu0 %v381
        %v1483 = vpop.f32.mrb[0].mxu0
        %v1484 = vadd.f32 %v1259, %v1483
        %v1485 = vpop.f32.mrb[0].mxu0
        %1486 = vmatprep.mubr.f32.mxu0 0.0
        %1487 = vmatmul.mubr.f32.gmra.mrb[0].mxu0 %v382
        %v1488 = vpop.f32.mrb[0].mxu0
        %v1489 = vadd.f32 %v1264, %v1488
        %v1490 = vpop.f32.mrb[0].mxu0
        %1491 = vmatprep.mubr.f32.mxu0 0.0
        %1492 = vmatmul.mubr.f32.gmra.mrb[0].mxu0 %v384
        %v1493 = vpop.f32.mrb[0].mxu0
        %v1494 = vadd.f32 %v1269, %v1493
        %v1495 = vpop.f32.mrb[0].mxu0
        %1496 = vmatprep.mubr.f32.mxu0 0.0
        %1497 = vmatmul.mubr.f32.gmra.mrb[0].mxu0 %v385
        %v1498 = vpop.f32.mrb[0].mxu0
        %v1499 = vadd.f32 %v1274, %v1498
        %v1500 = vpop.f32.mrb[0].mxu0
        %1501 = vmatprep.mubr.f32.mxu0 0.0
        %1502 = vmatmul.mubr.f32.gmra.mrb[0].mxu0 %v387
        %v1503 = vpop.f32.mrb[0].mxu0
        %v1504 = vadd.f32 %v1279, %v1503
        %v1505 = vpop.f32.mrb[0].mxu0
        %1506 = vmatprep.mubr.f32.mxu0 0.0
        %1507 = vmatmul.mubr.f32.gmra.mrb[0].mxu0 %v388
        %v1508 = vpop.f32.mrb[0].mxu0
        %v1509 = vadd.f32 %v1284, %v1508
        %v1510 = vpop.f32.mrb[0].mxu0
        %1511 = vmatprep.mubr.f32.mxu0 0.0
        %1512 = vmatmul.mubr.f32.gmra.mrb[0].mxu0 %v390
        %v1513 = vpop.f32.mrb[0].mxu0
        %v1514 = vadd.f32 %v1289, %v1513
        %v1515 = vpop.f32.mrb[0].mxu0
        %1516 = vmatprep.mubr.f32.mxu0 0.0
        %1517 = vmatmul.mubr.f32.gmra.mrb[0].mxu0 %v391
        %v1518 = vpop.f32.mrb[0].mxu0
        %v1519 = vadd.f32 %v1294, %v1518
        %v1520 = vpop.f32.mrb[0].mxu0
        %1521 = vmatprep.mubr.f32.mxu0 0.0
        %1522 = vmatmul.mubr.f32.gmra.mrb[0].mxu0 %v393
        %v1523 = vpop.f32.mrb[0].mxu0
        %v1524 = vadd.f32 %v1299, %v1523
        %v1525 = vpop.f32.mrb[0].mxu0
        %1526 = vmatprep.mubr.f32.mxu0 0.0
        %1527 = vmatmul.mubr.f32.gmra.mrb[0].mxu0 %v394
        %v1528 = vpop.f32.mrb[0].mxu0
        %v1529 = vadd.f32 %v1304, %v1528
        %v1530 = vpop.f32.mrb[0].mxu0
        %1531 = vmatprep.mubr.f32.mxu0 0.0
        %1532 = vmatmul.mubr.f32.gmra.mrb[0].mxu0 %v396
        %v1533 = vpop.f32.mrb[0].mxu0
        %v1534 = vadd.f32 %v1309, %v1533
        %v1535 = vpop.f32.mrb[0].mxu0
        %1536 = vmatprep.mubr.f32.mxu0 0.0
        %1537 = vmatmul.mubr.f32.gmra.mrb[0].mxu0 %v397
        %v1538 = vpop.f32.mrb[0].mxu0
        %v1539 = vadd.f32 %v1314, %v1538
        %v1540 = vpop.f32.mrb[0].mxu0
        %1541 = vmatprep.mubr.f32.mxu0 0.0
        %1542 = vmatmul.mubr.f32.gmra.mrb[0].mxu0 %v399
        %v1543 = vpop.f32.mrb[0].mxu0
        %v1544 = vadd.f32 %v1319, %v1543
        %v1545 = vpop.f32.mrb[0].mxu0
        %1546 = vmatprep.mubr.f32.mxu0 0.0
        %1547 = vmatmul.mubr.f32.gmra.mrb[0].mxu0 %v400
        %v1548 = vpop.f32.mrb[0].mxu0
        %v1549 = vadd.f32 %v1324, %v1548
        %v1550 = vpop.f32.mrb[0].mxu0
        %1551 = vmatprep.mubr.f32.mxu0 0.0
        %1552 = vmatmul.mubr.f32.gmra.mrb[0].mxu0 %v402
        %v1553 = vpop.f32.mrb[0].mxu0
        %v1554 = vadd.f32 %v1329, %v1553
        %v1555 = vpop.f32.mrb[0].mxu0
        %1556 = vmatprep.mubr.f32.mxu0 0.0
        %1557 = vmatmul.mubr.f32.gmra.mrb[0].mxu0 %v403
        %v1558 = vpop.f32.mrb[0].mxu0
        %v1559 = vadd.f32 %v1334, %v1558
        %v1560 = vpop.f32.mrb[0].mxu0
        %1561 = vmatprep.mubr.f32.mxu0 0.0
        %1562 = vmatmul.mubr.f32.gmra.mrb[0].mxu0 %v405
        %v1563 = vpop.f32.mrb[0].mxu0
        %v1564 = vadd.f32 %v1339, %v1563
        %v1565 = vpop.f32.mrb[0].mxu0
        %1566 = vmatprep.mubr.f32.mxu0 0.0
        %1567 = vmatmul.mubr.f32.gmra.mrb[0].mxu0 %v406
        %v1568 = vpop.f32.mrb[0].mxu0
        %v1569 = vadd.f32 %v1344, %v1568
        %v1570 = vpop.f32.mrb[0].mxu0
        %1571 = vmatprep.mubr.f32.mxu0 0.0
        %1572 = vmatmul.mubr.f32.gmra.mrb[0].mxu0 %v408
        %v1573 = vpop.f32.mrb[0].mxu0
        %v1574 = vadd.f32 %v1349, %v1573
        %v1575 = vpop.f32.mrb[0].mxu0
        %1576 = vmatprep.mubr.f32.mxu0 0.0
        %1577 = vmatmul.mubr.f32.gmra.mrb[0].mxu0 %v409
        %v1578 = vpop.f32.mrb[0].mxu0
        %v1579 = vadd.f32 %v1354, %v1578
        %v1580 = vpop.f32.mrb[0].mxu0
        %1581 = vmatprep.mubr.f32.mxu0 0.0
        %1582 = vmatmul.mubr.f32.gmra.mrb[0].mxu0 %v411
        %v1583 = vpop.f32.mrb[0].mxu0
        %v1584 = vadd.f32 %v1359, %v1583
        %v1585 = vpop.f32.mrb[0].mxu0
        %1586 = vmatprep.mubr.f32.mxu0 0.0
        %1587 = vmatmul.mubr.f32.gmra.mrb[0].mxu0 %v412
        %v1588 = vpop.f32.mrb[0].mxu0
        %v1589 = vadd.f32 %v1364, %v1588
        %v1590 = vpop.f32.mrb[0].mxu0
        %1591 = vdwg.mxu0
        %vm1592 = vcmask 1045504
        %v1593 = vrot.slane %v360, 2
        %v1594 = vrot.slane %v361, 2
        %v1595 = vsel %vm1592, %v1593, %v1594
        %v1596 = vrot.slane %v363, 2
        %v1597 = vrot.slane %v364, 2
        %v1598 = vsel %vm1592, %v1596, %v1597
        %v1599 = vrot.slane %v366, 2
        %v1600 = vrot.slane %v367, 2
        %v1601 = vsel %vm1592, %v1599, %v1600
        %v1602 = vrot.slane %v362, 2
        %v1603 = vsel %vm1592, %v1594, %v1602
        %v1604 = vrot.slane %v365, 2
        %v1605 = vsel %vm1592, %v1597, %v1604
        %v1606 = vrot.slane %v368, 2
        %v1607 = vsel %vm1592, %v1600, %v1606
        %v1608 = vrot.slane %v369, 2
        %v1609 = vrot.slane %v370, 2
        %v1610 = vsel %vm1592, %v1608, %v1609
        %v1611 = vrot.slane %v371, 2
        %v1612 = vsel %vm1592, %v1609, %v1611
        %v1613 = vrot.slane %v372, 2
        %v1614 = vrot.slane %v373, 2
        %v1615 = vsel %vm1592, %v1613, %v1614
        %v1616 = vrot.slane %v374, 2
        %v1617 = vsel %vm1592, %v1614, %v1616
        %v1618 = vrot.slane %v375, 2
        %v1619 = vrot.slane %v376, 2
        %v1620 = vsel %vm1592, %v1618, %v1619
        %v1621 = vrot.slane %v377, 2
        %v1622 = vsel %vm1592, %v1619, %v1621
        %v1623 = vrot.slane %v378, 2
        %v1624 = vrot.slane %v379, 2
        %v1625 = vsel %vm1592, %v1623, %v1624
        %v1626 = vrot.slane %v380, 2
        %v1627 = vsel %vm1592, %v1624, %v1626
        %v1628 = vrot.slane %v381, 2
        %v1629 = vrot.slane %v382, 2
        %v1630 = vsel %vm1592, %v1628, %v1629
        %v1631 = vrot.slane %v383, 2
        %v1632 = vsel %vm1592, %v1629, %v1631
        %v1633 = vrot.slane %v384, 2
        %v1634 = vrot.slane %v385, 2
        %v1635 = vsel %vm1592, %v1633, %v1634
        %v1636 = vrot.slane %v386, 2
        %v1637 = vsel %vm1592, %v1634, %v1636
        %v1638 = vrot.slane %v387, 2
        %v1639 = vrot.slane %v388, 2
        %v1640 = vsel %vm1592, %v1638, %v1639
        %v1641 = vrot.slane %v389, 2
        %v1642 = vsel %vm1592, %v1639, %v1641
        %v1643 = vrot.slane %v390, 2
        %v1644 = vrot.slane %v391, 2
        %v1645 = vsel %vm1592, %v1643, %v1644
        %v1646 = vrot.slane %v392, 2
        %v1647 = vsel %vm1592, %v1644, %v1646
        %v1648 = vrot.slane %v393, 2
        %v1649 = vrot.slane %v394, 2
        %v1650 = vsel %vm1592, %v1648, %v1649
        %v1651 = vrot.slane %v395, 2
        %v1652 = vsel %vm1592, %v1649, %v1651
        %v1653 = vrot.slane %v396, 2
        %v1654 = vrot.slane %v397, 2
        %v1655 = vsel %vm1592, %v1653, %v1654
        %v1656 = vrot.slane %v398, 2
        %v1657 = vsel %vm1592, %v1654, %v1656
        %v1658 = vrot.slane %v399, 2
        %v1659 = vrot.slane %v400, 2
        %v1660 = vsel %vm1592, %v1658, %v1659
        %v1661 = vrot.slane %v401, 2
        %v1662 = vsel %vm1592, %v1659, %v1661
        %v1663 = vrot.slane %v402, 2
        %v1664 = vrot.slane %v403, 2
        %v1665 = vsel %vm1592, %v1663, %v1664
        %v1666 = vrot.slane %v404, 2
        %v1667 = vsel %vm1592, %v1664, %v1666
        %v1668 = vrot.slane %v405, 2
        %v1669 = vrot.slane %v406, 2
        %v1670 = vsel %vm1592, %v1668, %v1669
        %v1671 = vrot.slane %v407, 2
        %v1672 = vsel %vm1592, %v1669, %v1671
        %v1673 = vrot.slane %v408, 2
        %v1674 = vrot.slane %v409, 2
        %v1675 = vsel %vm1592, %v1673, %v1674
        %v1676 = vrot.slane %v410, 2
        %v1677 = vsel %vm1592, %v1674, %v1676
        %v1678 = vrot.slane %v411, 2
        %v1679 = vrot.slane %v412, 2
        %v1680 = vsel %vm1592, %v1678, %v1679
        %v1681 = vrot.slane %v413, 2
        %v1682 = vsel %vm1592, %v1679, %v1681
        %s1719 = scalar_lea.vmem [#allocation7], 768
        %v1720 = vld [vmem:[%s1719] sm:$0xff]
        %v1721 = vld [vmem:[%s1719 + $0x8] sm:$0xff]
        %v1722 = vld [vmem:[%s1719 + $0x10] sm:$0xff]
        %v1723 = vld [vmem:[%s1719 + $0x18] sm:$0xff]
        %v1724 = vld [vmem:[%s1719 + $0x20] sm:$0xff]
        %v1725 = vld [vmem:[%s1719 + $0x28] sm:$0xff]
        %v1726 = vld [vmem:[%s1719 + $0x30] sm:$0xff]
        %v1727 = vld [vmem:[%s1719 + $0x38] sm:$0xff]
        %v1728 = vld [vmem:[%s1719 + $0x40] sm:$0xff]
        %v1729 = vld [vmem:[%s1719 + $0x48] sm:$0xff]
        %v1730 = vld [vmem:[%s1719 + $0x50] sm:$0xff]
        %v1731 = vld [vmem:[%s1719 + $0x58] sm:$0xff]
        %v1732 = vld [vmem:[%s1719 + $0x60] sm:$0xff]
        %v1733 = vld [vmem:[%s1719 + $0x68] sm:$0xff]
        %v1734 = vld [vmem:[%s1719 + $0x70] sm:$0xff]
        %v1735 = vld [vmem:[%s1719 + $0x78] sm:$0xff]
        %v1736 = vld [vmem:[%s1719 + $0x80] sm:$0xff]
        %v1737 = vld [vmem:[%s1719 + $0x88] sm:$0xff]
        %v1738 = vld [vmem:[%s1719 + $0x90] sm:$0xff]
        %v1739 = vld [vmem:[%s1719 + $0x98] sm:$0xff]
        %v1740 = vld [vmem:[%s1719 + $0xa0] sm:$0xff]
        %v1741 = vld [vmem:[%s1719 + $0xa8] sm:$0xff]
        %v1742 = vld [vmem:[%s1719 + $0xb0] sm:$0xff]
        %v1743 = vld [vmem:[%s1719 + $0xb8] sm:$0xff]
        %v1744 = vld [vmem:[%s1719 + $0xc0] sm:$0xff]
        %v1745 = vld [vmem:[%s1719 + $0xc8] sm:$0xff]
        %v1746 = vld [vmem:[%s1719 + $0xd0] sm:$0xff]
        %v1747 = vld [vmem:[%s1719 + $0xd8] sm:$0xff]
        %v1748 = vld [vmem:[%s1719 + $0xe0] sm:$0xff]
        %v1749 = vld [vmem:[%s1719 + $0xe8] sm:$0xff]
        %v1750 = vld [vmem:[%s1719 + $0xf0] sm:$0xff]
        %v1751 = vld [vmem:[%s1719 + $0xf8] sm:$0xff]
        %v1752 = vld [vmem:[%s1719 + $0x100] sm:$0xff]
        %v1753 = vld [vmem:[%s1719 + $0x108] sm:$0xff]
        %v1754 = vld [vmem:[%s1719 + $0x110] sm:$0xff]
        %v1755 = vld [vmem:[%s1719 + $0x118] sm:$0xff]
        %v1756 = vld [vmem:[%s1719 + $0x120] sm:$0xff]
        %v1757 = vld [vmem:[%s1719 + $0x128] sm:$0xff]
        %v1758 = vld [vmem:[%s1719 + $0x130] sm:$0xff]
        %v1759 = vld [vmem:[%s1719 + $0x138] sm:$0xff]
        %v1760 = vld [vmem:[%s1719 + $0x140] sm:$0xff]
        %v1761 = vld [vmem:[%s1719 + $0x148] sm:$0xff]
        %v1762 = vld [vmem:[%s1719 + $0x150] sm:$0xff]
        %v1763 = vld [vmem:[%s1719 + $0x158] sm:$0xff]
        %v1764 = vld [vmem:[%s1719 + $0x160] sm:$0xff]
        %v1765 = vld [vmem:[%s1719 + $0x168] sm:$0xff]
        %v1766 = vld [vmem:[%s1719 + $0x170] sm:$0xff]
        %v1767 = vld [vmem:[%s1719 + $0x178] sm:$0xff]
        %1768 = vmatprep.subr.mxu0 0.0
        %1769 = vmatpush1.msra.mxu0 %v1720
        %1770 = vmatprep.subr.mxu0 0.0
        %1771 = vmatpush1.msra.mxu0 %v1721
        %1772 = vmatprep.subr.mxu0 0.0
        %1773 = vmatpush1.msra.mxu0 %v1722
        %1774 = vmatprep.subr.mxu0 0.0
        %1775 = vmatpush1.msra.mxu0 %v1723
        %1776 = vmatprep.subr.mxu0 0.0
        %1777 = vmatpush1.msra.mxu0 %v1724
        %1778 = vmatprep.subr.mxu0 0.0
        %1779 = vmatpush1.msra.mxu0 %v1725
        %1780 = vmatprep.subr.mxu0 0.0
        %1781 = vmatpush1.msra.mxu0 %v1726
        %1782 = vmatprep.subr.mxu0 0.0
        %1783 = vmatpush1.msra.mxu0 %v1727
        %1784 = vmatprep.subr.mxu0 0.0
        %1785 = vmatpush1.msra.mxu0 %v1728
        %1786 = vmatprep.subr.mxu0 0.0
        %1787 = vmatpush1.msra.mxu0 %v1729
        %1788 = vmatprep.subr.mxu0 0.0
        %1789 = vmatpush1.msra.mxu0 %v1730
        %1790 = vmatprep.subr.mxu0 0.0
        %1791 = vmatpush1.msra.mxu0 %v1731
        %1792 = vmatprep.subr.mxu0 0.0
        %1793 = vmatpush1.msra.mxu0 %v1732
        %1794 = vmatprep.subr.mxu0 0.0
        %1795 = vmatpush1.msra.mxu0 %v1733
        %1796 = vmatprep.subr.mxu0 0.0
        %1797 = vmatpush1.msra.mxu0 %v1734
        %1798 = vmatprep.subr.mxu0 0.0
        %1799 = vmatpush1.msra.mxu0 %v1735
        %1800 = vmatprep.subr.mxu0 0.0
        %1801 = vmatpush1.msra.mxu0 %v1736
        %1802 = vmatprep.subr.mxu0 0.0
        %1803 = vmatpush1.msra.mxu0 %v1737
        %1804 = vmatprep.subr.mxu0 0.0
        %1805 = vmatpush1.msra.mxu0 %v1738
        %1806 = vmatprep.subr.mxu0 0.0
        %1807 = vmatpush1.msra.mxu0 %v1739
        %1808 = vmatprep.subr.mxu0 0.0
        %1809 = vmatpush1.msra.mxu0 %v1740
        %1810 = vmatprep.subr.mxu0 0.0
        %1811 = vmatpush1.msra.mxu0 %v1741
        %1812 = vmatprep.subr.mxu0 0.0
        %1813 = vmatpush1.msra.mxu0 %v1742
        %1814 = vmatprep.subr.mxu0 0.0
        %1815 = vmatpush1.msra.mxu0 %v1743
        %1816 = vmatprep.subr.mxu0 0.0
        %1817 = vmatpush1.msra.mxu0 %v1744
        %1818 = vmatprep.subr.mxu0 0.0
        %1819 = vmatpush1.msra.mxu0 %v1745
        %1820 = vmatprep.subr.mxu0 0.0
        %1821 = vmatpush1.msra.mxu0 %v1746
        %1822 = vmatprep.subr.mxu0 0.0
        %1823 = vmatpush1.msra.mxu0 %v1747
        %1824 = vmatprep.subr.mxu0 0.0
        %1825 = vmatpush1.msra.mxu0 %v1748
        %1826 = vmatprep.subr.mxu0 0.0
        %1827 = vmatpush1.msra.mxu0 %v1749
        %1828 = vmatprep.subr.mxu0 0.0
        %1829 = vmatpush1.msra.mxu0 %v1750
        %1830 = vmatprep.subr.mxu0 0.0
        %1831 = vmatpush1.msra.mxu0 %v1751
        %1832 = vmatprep.mubr.f32.mxu0 %v1598
        %1833 = vmatmul.mubr.f32.gmra.mrb[0].mxu0 %v1595
        %v1834 = vpop.f32.mrb[0].mxu0
        %v1835 = vadd.f32 0.0, %v1834
        %v1836 = vpop.f32.mrb[0].mxu0
        %1837 = vmatprep.mubr.f32.mxu0 %v1605
        %1838 = vmatmul.mubr.f32.gmra.mrb[0].mxu0 %v1603
        %v1839 = vpop.f32.mrb[0].mxu0
        %v1840 = vadd.f32 0.0, %v1839
        %v1841 = vpop.f32.mrb[0].mxu0
        %1842 = vmatprep.mubr.f32.mxu0 %v1601
        %1843 = vmatmul.mubr.f32.gmra.mrb[0].mxu0 %v1598
        %v1844 = vpop.f32.mrb[0].mxu0
        %v1845 = vadd.f32 0.0, %v1844
        %v1846 = vpop.f32.mrb[0].mxu0
        %1847 = vmatprep.mubr.f32.mxu0 %v1607
        %1848 = vmatmul.mubr.f32.gmra.mrb[0].mxu0 %v1605
        %v1849 = vpop.f32.mrb[0].mxu0
        %v1850 = vadd.f32 0.0, %v1849
        %v1851 = vpop.f32.mrb[0].mxu0
        %1852 = vmatprep.mubr.f32.mxu0 %v1610
        %1853 = vmatmul.mubr.f32.gmra.mrb[0].mxu0 %v1601
        %v1854 = vpop.f32.mrb[0].mxu0
        %v1855 = vadd.f32 0.0, %v1854
        %v1856 = vpop.f32.mrb[0].mxu0
        %1857 = vmatprep.mubr.f32.mxu0 %v1612
        %1858 = vmatmul.mubr.f32.gmra.mrb[0].mxu0 %v1607
        %v1859 = vpop.f32.mrb[0].mxu0
        %v1860 = vadd.f32 0.0, %v1859
        %v1861 = vpop.f32.mrb[0].mxu0
        %1862 = vmatprep.mubr.f32.mxu0 %v1615
        %1863 = vmatmul.mubr.f32.gmra.mrb[0].mxu0 %v1610
        %v1864 = vpop.f32.mrb[0].mxu0
        %v1865 = vadd.f32 0.0, %v1864
        %v1866 = vpop.f32.mrb[0].mxu0
        %1867 = vmatprep.mubr.f32.mxu0 %v1617
        %1868 = vmatmul.mubr.f32.gmra.mrb[0].mxu0 %v1612
        %v1869 = vpop.f32.mrb[0].mxu0
        %v1870 = vadd.f32 0.0, %v1869
        %v1871 = vpop.f32.mrb[0].mxu0
        %1872 = vmatprep.mubr.f32.mxu0 %v1620
        %1873 = vmatmul.mubr.f32.gmra.mrb[0].mxu0 %v1615
        %v1874 = vpop.f32.mrb[0].mxu0
        %v1875 = vadd.f32 0.0, %v1874
        %v1876 = vpop.f32.mrb[0].mxu0
        %1877 = vmatprep.mubr.f32.mxu0 %v1622
        %1878 = vmatmul.mubr.f32.gmra.mrb[0].mxu0 %v1617
        %v1879 = vpop.f32.mrb[0].mxu0
        %v1880 = vadd.f32 0.0, %v1879
        %v1881 = vpop.f32.mrb[0].mxu0
        %1882 = vmatprep.mubr.f32.mxu0 %v1625
        %1883 = vmatmul.mubr.f32.gmra.mrb[0].mxu0 %v1620
        %v1884 = vpop.f32.mrb[0].mxu0
        %v1885 = vadd.f32 0.0, %v1884
        %v1886 = vpop.f32.mrb[0].mxu0
        %1887 = vmatprep.mubr.f32.mxu0 %v1627
        %1888 = vmatmul.mubr.f32.gmra.mrb[0].mxu0 %v1622
        %v1889 = vpop.f32.mrb[0].mxu0
        %v1890 = vadd.f32 0.0, %v1889
        %v1891 = vpop.f32.mrb[0].mxu0
        %1892 = vmatprep.mubr.f32.mxu0 %v1630
        %1893 = vmatmul.mubr.f32.gmra.mrb[0].mxu0 %v1625
        %v1894 = vpop.f32.mrb[0].mxu0
        %v1895 = vadd.f32 0.0, %v1894
        %v1896 = vpop.f32.mrb[0].mxu0
        %1897 = vmatprep.mubr.f32.mxu0 %v1632
        %1898 = vmatmul.mubr.f32.gmra.mrb[0].mxu0 %v1627
        %v1899 = vpop.f32.mrb[0].mxu0
        %v1900 = vadd.f32 0.0, %v1899
        %v1901 = vpop.f32.mrb[0].mxu0
        %1902 = vmatprep.mubr.f32.mxu0 %v1635
        %1903 = vmatmul.mubr.f32.gmra.mrb[0].mxu0 %v1630
        %v1904 = vpop.f32.mrb[0].mxu0
        %v1905 = vadd.f32 0.0, %v1904
        %v1906 = vpop.f32.mrb[0].mxu0
        %1907 = vmatprep.mubr.f32.mxu0 %v1637
        %1908 = vmatmul.mubr.f32.gmra.mrb[0].mxu0 %v1632
        %v1909 = vpop.f32.mrb[0].mxu0
        %v1910 = vadd.f32 0.0, %v1909
        %v1911 = vpop.f32.mrb[0].mxu0
        %1912 = vmatprep.mubr.f32.mxu0 %v1640
        %1913 = vmatmul.mubr.f32.gmra.mrb[0].mxu0 %v1635
        %v1914 = vpop.f32.mrb[0].mxu0
        %v1915 = vadd.f32 0.0, %v1914
        %v1916 = vpop.f32.mrb[0].mxu0
        %1917 = vmatprep.mubr.f32.mxu0 %v1642
        %1918 = vmatmul.mubr.f32.gmra.mrb[0].mxu0 %v1637
        %v1919 = vpop.f32.mrb[0].mxu0
        %v1920 = vadd.f32 0.0, %v1919
        %v1921 = vpop.f32.mrb[0].mxu0
        %1922 = vmatprep.mubr.f32.mxu0 %v1645
        %1923 = vmatmul.mubr.f32.gmra.mrb[0].mxu0 %v1640
        %v1924 = vpop.f32.mrb[0].mxu0
        %v1925 = vadd.f32 0.0, %v1924
        %v1926 = vpop.f32.mrb[0].mxu0
        %1927 = vmatprep.mubr.f32.mxu0 %v1647
        %1928 = vmatmul.mubr.f32.gmra.mrb[0].mxu0 %v1642
        %v1929 = vpop.f32.mrb[0].mxu0
        %v1930 = vadd.f32 0.0, %v1929
        %v1931 = vpop.f32.mrb[0].mxu0
        %1932 = vmatprep.mubr.f32.mxu0 %v1650
        %1933 = vmatmul.mubr.f32.gmra.mrb[0].mxu0 %v1645
        %v1934 = vpop.f32.mrb[0].mxu0
        %v1935 = vadd.f32 0.0, %v1934
        %v1936 = vpop.f32.mrb[0].mxu0
        %1937 = vmatprep.mubr.f32.mxu0 %v1652
        %1938 = vmatmul.mubr.f32.gmra.mrb[0].mxu0 %v1647
        %v1939 = vpop.f32.mrb[0].mxu0
        %v1940 = vadd.f32 0.0, %v1939
        %v1941 = vpop.f32.mrb[0].mxu0
        %1942 = vmatprep.mubr.f32.mxu0 %v1655
        %1943 = vmatmul.mubr.f32.gmra.mrb[0].mxu0 %v1650
        %v1944 = vpop.f32.mrb[0].mxu0
        %v1945 = vadd.f32 0.0, %v1944
        %v1946 = vpop.f32.mrb[0].mxu0
        %1947 = vmatprep.mubr.f32.mxu0 %v1657
        %1948 = vmatmul.mubr.f32.gmra.mrb[0].mxu0 %v1652
        %v1949 = vpop.f32.mrb[0].mxu0
        %v1950 = vadd.f32 0.0, %v1949
        %v1951 = vpop.f32.mrb[0].mxu0
        %1952 = vmatprep.mubr.f32.mxu0 %v1660
        %1953 = vmatmul.mubr.f32.gmra.mrb[0].mxu0 %v1655
        %v1954 = vpop.f32.mrb[0].mxu0
        %v1955 = vadd.f32 0.0, %v1954
        %v1956 = vpop.f32.mrb[0].mxu0
        %1957 = vmatprep.mubr.f32.mxu0 %v1662
        %1958 = vmatmul.mubr.f32.gmra.mrb[0].mxu0 %v1657
        %v1959 = vpop.f32.mrb[0].mxu0
        %v1960 = vadd.f32 0.0, %v1959
        %v1961 = vpop.f32.mrb[0].mxu0
        %1962 = vmatprep.mubr.f32.mxu0 %v1665
        %1963 = vmatmul.mubr.f32.gmra.mrb[0].mxu0 %v1660
        %v1964 = vpop.f32.mrb[0].mxu0
        %v1965 = vadd.f32 0.0, %v1964
        %v1966 = vpop.f32.mrb[0].mxu0
        %1967 = vmatprep.mubr.f32.mxu0 %v1667
        %1968 = vmatmul.mubr.f32.gmra.mrb[0].mxu0 %v1662
        %v1969 = vpop.f32.mrb[0].mxu0
        %v1970 = vadd.f32 0.0, %v1969
        %v1971 = vpop.f32.mrb[0].mxu0
        %1972 = vmatprep.mubr.f32.mxu0 %v1670
        %1973 = vmatmul.mubr.f32.gmra.mrb[0].mxu0 %v1665
        %v1974 = vpop.f32.mrb[0].mxu0
        %v1975 = vadd.f32 0.0, %v1974
        %v1976 = vpop.f32.mrb[0].mxu0
        %1977 = vmatprep.mubr.f32.mxu0 %v1672
        %1978 = vmatmul.mubr.f32.gmra.mrb[0].mxu0 %v1667
        %v1979 = vpop.f32.mrb[0].mxu0
        %v1980 = vadd.f32 0.0, %v1979
        %v1981 = vpop.f32.mrb[0].mxu0
        %1982 = vmatprep.mubr.f32.mxu0 %v1675
        %1983 = vmatmul.mubr.f32.gmra.mrb[0].mxu0 %v1670
        %v1984 = vpop.f32.mrb[0].mxu0
        %v1985 = vadd.f32 0.0, %v1984
        %v1986 = vpop.f32.mrb[0].mxu0
        %1987 = vmatprep.mubr.f32.mxu0 %v1677
        %1988 = vmatmul.mubr.f32.gmra.mrb[0].mxu0 %v1672
        %v1989 = vpop.f32.mrb[0].mxu0
        %v1990 = vadd.f32 0.0, %v1989
        %v1991 = vpop.f32.mrb[0].mxu0
        %1992 = vdwg.mxu0
        %1993 = vmatprep.subr.mxu0 0.0
        %1994 = vmatpush1.msra.mxu0 %v1752
        %1995 = vmatprep.subr.mxu0 0.0
        %1996 = vmatpush1.msra.mxu0 %v1753
        %1997 = vmatprep.subr.mxu0 0.0
        %1998 = vmatpush1.msra.mxu0 %v1754
        %1999 = vmatprep.subr.mxu0 0.0
        %2000 = vmatpush1.msra.mxu0 %v1755
        %2001 = vmatprep.subr.mxu0 0.0
        %2002 = vmatpush1.msra.mxu0 %v1756
        %2003 = vmatprep.subr.mxu0 0.0
        %2004 = vmatpush1.msra.mxu0 %v1757
        %2005 = vmatprep.subr.mxu0 0.0
        %2006 = vmatpush1.msra.mxu0 %v1758
        %2007 = vmatprep.subr.mxu0 0.0
        %2008 = vmatpush1.msra.mxu0 %v1759
        %2009 = vmatprep.subr.mxu0 0.0
        %2010 = vmatpush1.msra.mxu0 %v1760
        %2011 = vmatprep.subr.mxu0 0.0
        %2012 = vmatpush1.msra.mxu0 %v1761
        %2013 = vmatprep.subr.mxu0 0.0
        %2014 = vmatpush1.msra.mxu0 %v1762
        %2015 = vmatprep.subr.mxu0 0.0
        %2016 = vmatpush1.msra.mxu0 %v1763
        %2017 = vmatprep.subr.mxu0 0.0
        %2018 = vmatpush1.msra.mxu0 %v1764
        %2019 = vmatprep.subr.mxu0 0.0
        %2020 = vmatpush1.msra.mxu0 %v1765
        %2021 = vmatprep.subr.mxu0 0.0
        %2022 = vmatpush1.msra.mxu0 %v1766
        %2023 = vmatprep.subr.mxu0 0.0
        %2024 = vmatpush1.msra.mxu0 %v1767
        %2025 = vmatprep.subr.mxu0 0.0
        %2026 = vmatpush1.msra.mxu0 0.0
        %2027 = vmatprep.subr.mxu0 0.0
        %2028 = vmatpush1.msra.mxu0 0.0
        %2029 = vmatprep.subr.mxu0 0.0
        %2030 = vmatpush1.msra.mxu0 0.0
        %2031 = vmatprep.subr.mxu0 0.0
        %2032 = vmatpush1.msra.mxu0 0.0
        %2033 = vmatprep.subr.mxu0 0.0
        %2034 = vmatpush1.msra.mxu0 0.0
        %2035 = vmatprep.subr.mxu0 0.0
        %2036 = vmatpush1.msra.mxu0 0.0
        %2037 = vmatprep.subr.mxu0 0.0
        %2038 = vmatpush1.msra.mxu0 0.0
        %2039 = vmatprep.subr.mxu0 0.0
        %2040 = vmatpush1.msra.mxu0 0.0
        %2041 = vmatprep.subr.mxu0 0.0
        %2042 = vmatpush1.msra.mxu0 0.0
        %2043 = vmatprep.subr.mxu0 0.0
        %2044 = vmatpush1.msra.mxu0 0.0
        %2045 = vmatprep.subr.mxu0 0.0
        %2046 = vmatpush1.msra.mxu0 0.0
        %2047 = vmatprep.subr.mxu0 0.0
        %2048 = vmatpush1.msra.mxu0 0.0
        %2049 = vmatprep.subr.mxu0 0.0
        %2050 = vmatpush1.msra.mxu0 0.0
        %2051 = vmatprep.subr.mxu0 0.0
        %2052 = vmatpush1.msra.mxu0 0.0
        %2053 = vmatprep.subr.mxu0 0.0
        %2054 = vmatpush1.msra.mxu0 0.0
        %2055 = vmatprep.subr.mxu0 0.0
        %2056 = vmatpush1.msra.mxu0 0.0
        %2057 = vmatprep.mubr.f32.mxu0 0.0
        %2058 = vmatmul.mubr.f32.gmra.mrb[0].mxu0 %v1601
        %v2059 = vpop.f32.mrb[0].mxu0
        %v2060 = vadd.f32 %v1835, %v2059
        %v2061 = vpop.f32.mrb[0].mxu0
        %2062 = vmatprep.mubr.f32.mxu0 0.0
        %2063 = vmatmul.mubr.f32.gmra.mrb[0].mxu0 %v1607
        %v2064 = vpop.f32.mrb[0].mxu0
        %v2065 = vadd.f32 %v1840, %v2064
        %v2066 = vpop.f32.mrb[0].mxu0
        %2067 = vmatprep.mubr.f32.mxu0 0.0
        %2068 = vmatmul.mubr.f32.gmra.mrb[0].mxu0 %v1610
        %v2069 = vpop.f32.mrb[0].mxu0
        %v2070 = vadd.f32 %v1845, %v2069
        %v2071 = vpop.f32.mrb[0].mxu0
        %2072 = vmatprep.mubr.f32.mxu0 0.0
        %2073 = vmatmul.mubr.f32.gmra.mrb[0].mxu0 %v1612
        %v2074 = vpop.f32.mrb[0].mxu0
        %v2075 = vadd.f32 %v1850, %v2074
        %v2076 = vpop.f32.mrb[0].mxu0
        %2077 = vmatprep.mubr.f32.mxu0 0.0
        %2078 = vmatmul.mubr.f32.gmra.mrb[0].mxu0 %v1615
        %v2079 = vpop.f32.mrb[0].mxu0
        %v2080 = vadd.f32 %v1855, %v2079
        %v2081 = vpop.f32.mrb[0].mxu0
        %2082 = vmatprep.mubr.f32.mxu0 0.0
        %2083 = vmatmul.mubr.f32.gmra.mrb[0].mxu0 %v1617
        %v2084 = vpop.f32.mrb[0].mxu0
        %v2085 = vadd.f32 %v1860, %v2084
        %v2086 = vpop.f32.mrb[0].mxu0
        %2087 = vmatprep.mubr.f32.mxu0 0.0
        %2088 = vmatmul.mubr.f32.gmra.mrb[0].mxu0 %v1620
        %v2089 = vpop.f32.mrb[0].mxu0
        %v2090 = vadd.f32 %v1865, %v2089
        %v2091 = vpop.f32.mrb[0].mxu0
        %2092 = vmatprep.mubr.f32.mxu0 0.0
        %2093 = vmatmul.mubr.f32.gmra.mrb[0].mxu0 %v1622
        %v2094 = vpop.f32.mrb[0].mxu0
        %v2095 = vadd.f32 %v1870, %v2094
        %v2096 = vpop.f32.mrb[0].mxu0
        %2097 = vmatprep.mubr.f32.mxu0 0.0
        %2098 = vmatmul.mubr.f32.gmra.mrb[0].mxu0 %v1625
        %v2099 = vpop.f32.mrb[0].mxu0
        %v2100 = vadd.f32 %v1875, %v2099
        %v2101 = vpop.f32.mrb[0].mxu0
        %2102 = vmatprep.mubr.f32.mxu0 0.0
        %2103 = vmatmul.mubr.f32.gmra.mrb[0].mxu0 %v1627
        %v2104 = vpop.f32.mrb[0].mxu0
        %v2105 = vadd.f32 %v1880, %v2104
        %v2106 = vpop.f32.mrb[0].mxu0
        %2107 = vmatprep.mubr.f32.mxu0 0.0
        %2108 = vmatmul.mubr.f32.gmra.mrb[0].mxu0 %v1630
        %v2109 = vpop.f32.mrb[0].mxu0
        %v2110 = vadd.f32 %v1885, %v2109
        %v2111 = vpop.f32.mrb[0].mxu0
        %2112 = vmatprep.mubr.f32.mxu0 0.0
        %2113 = vmatmul.mubr.f32.gmra.mrb[0].mxu0 %v1632
        %v2114 = vpop.f32.mrb[0].mxu0
        %v2115 = vadd.f32 %v1890, %v2114
        %v2116 = vpop.f32.mrb[0].mxu0
        %2117 = vmatprep.mubr.f32.mxu0 0.0
        %2118 = vmatmul.mubr.f32.gmra.mrb[0].mxu0 %v1635
        %v2119 = vpop.f32.mrb[0].mxu0
        %v2120 = vadd.f32 %v1895, %v2119
        %v2121 = vpop.f32.mrb[0].mxu0
        %2122 = vmatprep.mubr.f32.mxu0 0.0
        %2123 = vmatmul.mubr.f32.gmra.mrb[0].mxu0 %v1637
        %v2124 = vpop.f32.mrb[0].mxu0
        %v2125 = vadd.f32 %v1900, %v2124
        %v2126 = vpop.f32.mrb[0].mxu0
        %2127 = vmatprep.mubr.f32.mxu0 0.0
        %2128 = vmatmul.mubr.f32.gmra.mrb[0].mxu0 %v1640
        %v2129 = vpop.f32.mrb[0].mxu0
        %v2130 = vadd.f32 %v1905, %v2129
        %v2131 = vpop.f32.mrb[0].mxu0
        %2132 = vmatprep.mubr.f32.mxu0 0.0
        %2133 = vmatmul.mubr.f32.gmra.mrb[0].mxu0 %v1642
        %v2134 = vpop.f32.mrb[0].mxu0
        %v2135 = vadd.f32 %v1910, %v2134
        %v2136 = vpop.f32.mrb[0].mxu0
        %2137 = vmatprep.mubr.f32.mxu0 0.0
        %2138 = vmatmul.mubr.f32.gmra.mrb[0].mxu0 %v1645
        %v2139 = vpop.f32.mrb[0].mxu0
        %v2140 = vadd.f32 %v1915, %v2139
        %v2141 = vpop.f32.mrb[0].mxu0
        %2142 = vmatprep.mubr.f32.mxu0 0.0
        %2143 = vmatmul.mubr.f32.gmra.mrb[0].mxu0 %v1647
        %v2144 = vpop.f32.mrb[0].mxu0
        %v2145 = vadd.f32 %v1920, %v2144
        %v2146 = vpop.f32.mrb[0].mxu0
        %2147 = vmatprep.mubr.f32.mxu0 0.0
        %2148 = vmatmul.mubr.f32.gmra.mrb[0].mxu0 %v1650
        %v2149 = vpop.f32.mrb[0].mxu0
        %v2150 = vadd.f32 %v1925, %v2149
        %v2151 = vpop.f32.mrb[0].mxu0
        %2152 = vmatprep.mubr.f32.mxu0 0.0
        %2153 = vmatmul.mubr.f32.gmra.mrb[0].mxu0 %v1652
        %v2154 = vpop.f32.mrb[0].mxu0
        %v2155 = vadd.f32 %v1930, %v2154
        %v2156 = vpop.f32.mrb[0].mxu0
        %2157 = vmatprep.mubr.f32.mxu0 0.0
        %2158 = vmatmul.mubr.f32.gmra.mrb[0].mxu0 %v1655
        %v2159 = vpop.f32.mrb[0].mxu0
        %v2160 = vadd.f32 %v1935, %v2159
        %v2161 = vpop.f32.mrb[0].mxu0
        %2162 = vmatprep.mubr.f32.mxu0 0.0
        %2163 = vmatmul.mubr.f32.gmra.mrb[0].mxu0 %v1657
        %v2164 = vpop.f32.mrb[0].mxu0
        %v2165 = vadd.f32 %v1940, %v2164
        %v2166 = vpop.f32.mrb[0].mxu0
        %2167 = vmatprep.mubr.f32.mxu0 0.0
        %2168 = vmatmul.mubr.f32.gmra.mrb[0].mxu0 %v1660
        %v2169 = vpop.f32.mrb[0].mxu0
        %v2170 = vadd.f32 %v1945, %v2169
        %v2171 = vpop.f32.mrb[0].mxu0
        %2172 = vmatprep.mubr.f32.mxu0 0.0
        %2173 = vmatmul.mubr.f32.gmra.mrb[0].mxu0 %v1662
        %v2174 = vpop.f32.mrb[0].mxu0
        %v2175 = vadd.f32 %v1950, %v2174
        %v2176 = vpop.f32.mrb[0].mxu0
        %2177 = vmatprep.mubr.f32.mxu0 0.0
        %2178 = vmatmul.mubr.f32.gmra.mrb[0].mxu0 %v1665
        %v2179 = vpop.f32.mrb[0].mxu0
        %v2180 = vadd.f32 %v1955, %v2179
        %v2181 = vpop.f32.mrb[0].mxu0
        %2182 = vmatprep.mubr.f32.mxu0 0.0
        %2183 = vmatmul.mubr.f32.gmra.mrb[0].mxu0 %v1667
        %v2184 = vpop.f32.mrb[0].mxu0
        %v2185 = vadd.f32 %v1960, %v2184
        %v2186 = vpop.f32.mrb[0].mxu0
        %2187 = vmatprep.mubr.f32.mxu0 0.0
        %2188 = vmatmul.mubr.f32.gmra.mrb[0].mxu0 %v1670
        %v2189 = vpop.f32.mrb[0].mxu0
        %v2190 = vadd.f32 %v1965, %v2189
        %v2191 = vpop.f32.mrb[0].mxu0
        %2192 = vmatprep.mubr.f32.mxu0 0.0
        %2193 = vmatmul.mubr.f32.gmra.mrb[0].mxu0 %v1672
        %v2194 = vpop.f32.mrb[0].mxu0
        %v2195 = vadd.f32 %v1970, %v2194
        %v2196 = vpop.f32.mrb[0].mxu0
        %2197 = vmatprep.mubr.f32.mxu0 0.0
        %2198 = vmatmul.mubr.f32.gmra.mrb[0].mxu0 %v1675
        %v2199 = vpop.f32.mrb[0].mxu0
        %v2200 = vadd.f32 %v1975, %v2199
        %v2201 = vpop.f32.mrb[0].mxu0
        %2202 = vmatprep.mubr.f32.mxu0 0.0
        %2203 = vmatmul.mubr.f32.gmra.mrb[0].mxu0 %v1677
        %v2204 = vpop.f32.mrb[0].mxu0
        %v2205 = vadd.f32 %v1980, %v2204
        %v2206 = vpop.f32.mrb[0].mxu0
        %2207 = vmatprep.mubr.f32.mxu0 0.0
        %2208 = vmatmul.mubr.f32.gmra.mrb[0].mxu0 %v1680
        %v2209 = vpop.f32.mrb[0].mxu0
        %v2210 = vadd.f32 %v1985, %v2209
        %v2211 = vpop.f32.mrb[0].mxu0
        %2212 = vmatprep.mubr.f32.mxu0 0.0
        %2213 = vmatmul.mubr.f32.gmra.mrb[0].mxu0 %v1682
        %v2214 = vpop.f32.mrb[0].mxu0
        %v2215 = vadd.f32 %v1990, %v2214
        %v2216 = vpop.f32.mrb[0].mxu0
        %2217 = vdwg.mxu0
        %v2218 = vadd.f32 %v1434, %v2060
        %v2219 = vadd.f32 %v1439, %v2065
        %v2220 = vadd.f32 %v1444, %v2070
        %v2221 = vadd.f32 %v1449, %v2075
        %v2222 = vadd.f32 %v1454, %v2080
        %v2223 = vadd.f32 %v1459, %v2085
        %v2224 = vadd.f32 %v1464, %v2090
        %v2225 = vadd.f32 %v1469, %v2095
        %v2226 = vadd.f32 %v1474, %v2100
        %v2227 = vadd.f32 %v1479, %v2105
        %v2228 = vadd.f32 %v1484, %v2110
        %v2229 = vadd.f32 %v1489, %v2115
        %v2230 = vadd.f32 %v1494, %v2120
        %v2231 = vadd.f32 %v1499, %v2125
        %v2232 = vadd.f32 %v1504, %v2130
        %v2233 = vadd.f32 %v1509, %v2135
        %v2234 = vadd.f32 %v1514, %v2140
        %v2235 = vadd.f32 %v1519, %v2145
        %v2236 = vadd.f32 %v1524, %v2150
        %v2237 = vadd.f32 %v1529, %v2155
        %v2238 = vadd.f32 %v1534, %v2160
        %v2239 = vadd.f32 %v1539, %v2165
        %v2240 = vadd.f32 %v1544, %v2170
        %v2241 = vadd.f32 %v1549, %v2175
        %v2242 = vadd.f32 %v1554, %v2180
        %v2243 = vadd.f32 %v1559, %v2185
        %v2244 = vadd.f32 %v1564, %v2190
        %v2245 = vadd.f32 %v1569, %v2195
        %v2246 = vadd.f32 %v1574, %v2200
        %v2247 = vadd.f32 %v1579, %v2205
        %v2248 = vadd.f32 %v1584, %v2210
        %v2249 = vadd.f32 %v1589, %v2215
        %2250 = vst [vmem:[#allocation3] sm:$0xff] %v2218
        %2251 = vst [vmem:[#allocation3 + $0x8] sm:$0xff] %v2219
        %2252 = vst [vmem:[#allocation3 + $0x10] sm:$0xff] %v2220
        %2253 = vst [vmem:[#allocation3 + $0x18] sm:$0xff] %v2221
        %2254 = vst [vmem:[#allocation3 + $0x20] sm:$0xff] %v2222
        %2255 = vst [vmem:[#allocation3 + $0x28] sm:$0xff] %v2223
        %2256 = vst [vmem:[#allocation3 + $0x30] sm:$0xff] %v2224
        %2257 = vst [vmem:[#allocation3 + $0x38] sm:$0xff] %v2225
        %2258 = vst [vmem:[#allocation3 + $0x40] sm:$0xff] %v2226
        %2259 = vst [vmem:[#allocation3 + $0x48] sm:$0xff] %v2227
        %2260 = vst [vmem:[#allocation3 + $0x50] sm:$0xff] %v2228
        %2261 = vst [vmem:[#allocation3 + $0x58] sm:$0xff] %v2229
        %2262 = vst [vmem:[#allocation3 + $0x60] sm:$0xff] %v2230
        %2263 = vst [vmem:[#allocation3 + $0x68] sm:$0xff] %v2231
        %2264 = vst [vmem:[#allocation3 + $0x70] sm:$0xff] %v2232
        %2265 = vst [vmem:[#allocation3 + $0x78] sm:$0xff] %v2233
        %2266 = vst [vmem:[#allocation3 + $0x80] sm:$0xff] %v2234
        %2267 = vst [vmem:[#allocation3 + $0x88] sm:$0xff] %v2235
        %2268 = vst [vmem:[#allocation3 + $0x90] sm:$0xff] %v2236
        %2269 = vst [vmem:[#allocation3 + $0x98] sm:$0xff] %v2237
        %2270 = vst [vmem:[#allocation3 + $0xa0] sm:$0xff] %v2238
        %2271 = vst [vmem:[#allocation3 + $0xa8] sm:$0xff] %v2239
        %2272 = vst [vmem:[#allocation3 + $0xb0] sm:$0xff] %v2240
        %2273 = vst [vmem:[#allocation3 + $0xb8] sm:$0xff] %v2241
        %2274 = vst [vmem:[#allocation3 + $0xc0] sm:$0xff] %v2242
        %2275 = vst [vmem:[#allocation3 + $0xc8] sm:$0xff] %v2243
        %2276 = vst [vmem:[#allocation3 + $0xd0] sm:$0xff] %v2244
        %2277 = vst [vmem:[#allocation3 + $0xd8] sm:$0xff] %v2245
        %2278 = vst [vmem:[#allocation3 + $0xe0] sm:$0xff] %v2246
        %2279 = vst [vmem:[#allocation3 + $0xe8] sm:$0xff] %v2247
        %2280 = vst [vmem:[#allocation3 + $0xf0] sm:$0xff] %v2248
        %2281 = vst [vmem:[#allocation3 + $0xf8] sm:$0xff] %v2249
        %v2282 = vld [vmem:[#allocation3] sm:$0xff]
        %v2283 = vld [vmem:[#allocation3 + $0x8] sm:$0xff]
        %v2284 = vld [vmem:[#allocation3 + $0x10] sm:$0xff]
        %v2285 = vld [vmem:[#allocation3 + $0x18] sm:$0xff]
        %v2286 = vld [vmem:[#allocation3 + $0x20] sm:$0xff]
        %v2287 = vld [vmem:[#allocation3 + $0x28] sm:$0xff]
        %v2288 = vld [vmem:[#allocation3 + $0x30] sm:$0xff]
        %v2289 = vld [vmem:[#allocation3 + $0x38] sm:$0xff]
        %v2290 = vld [vmem:[#allocation3 + $0x40] sm:$0xff]
        %v2291 = vld [vmem:[#allocation3 + $0x48] sm:$0xff]
        %v2292 = vld [vmem:[#allocation3 + $0x50] sm:$0xff]
        %v2293 = vld [vmem:[#allocation3 + $0x58] sm:$0xff]
        %v2294 = vld [vmem:[#allocation3 + $0x60] sm:$0xff]
        %v2295 = vld [vmem:[#allocation3 + $0x68] sm:$0xff]
        %v2296 = vld [vmem:[#allocation3 + $0x70] sm:$0xff]
        %v2297 = vld [vmem:[#allocation3 + $0x78] sm:$0xff]
        %v2298 = vld [vmem:[#allocation3 + $0x80] sm:$0xff]
        %v2299 = vld [vmem:[#allocation3 + $0x88] sm:$0xff]
        %v2300 = vld [vmem:[#allocation3 + $0x90] sm:$0xff]
        %v2301 = vld [vmem:[#allocation3 + $0x98] sm:$0xff]
        %v2302 = vld [vmem:[#allocation3 + $0xa0] sm:$0xff]
        %v2303 = vld [vmem:[#allocation3 + $0xa8] sm:$0xff]
        %v2304 = vld [vmem:[#allocation3 + $0xb0] sm:$0xff]
        %v2305 = vld [vmem:[#allocation3 + $0xb8] sm:$0xff]
        %v2306 = vld [vmem:[#allocation3 + $0xc0] sm:$0xff]
        %v2307 = vld [vmem:[#allocation3 + $0xc8] sm:$0xff]
        %v2308 = vld [vmem:[#allocation3 + $0xd0] sm:$0xff]
        %v2309 = vld [vmem:[#allocation3 + $0xd8] sm:$0xff]
        %v2310 = vld [vmem:[#allocation3 + $0xe0] sm:$0xff]
        %v2311 = vld [vmem:[#allocation3 + $0xe8] sm:$0xff]
        %v2312 = vld [vmem:[#allocation3 + $0xf0] sm:$0xff]
        %v2313 = vld [vmem:[#allocation3 + $0xf8] sm:$0xff]
        %v2314 = vadd.f32 %v2282, %v2283
        %v2315 = vadd.f32 %v2314, %v2284
        %v2316 = vadd.f32 %v2315, %v2285
        %v2317 = vadd.f32 %v2316, %v2286
        %v2318 = vadd.f32 %v2317, %v2287
        %v2319 = vadd.f32 %v2318, %v2288
        %v2320 = vadd.f32 %v2319, %v2289
        %v2321 = vadd.f32 %v2320, %v2290
        %v2322 = vadd.f32 %v2321, %v2291
        %v2323 = vadd.f32 %v2322, %v2292
        %v2324 = vadd.f32 %v2323, %v2293
        %v2325 = vadd.f32 %v2324, %v2294
        %v2326 = vadd.f32 %v2325, %v2295
        %v2327 = vadd.f32 %v2326, %v2296
        %v2328 = vadd.f32 %v2327, %v2297
        %v2329 = vadd.f32 %v2328, %v2298
        %v2330 = vadd.f32 %v2329, %v2299
        %v2331 = vadd.f32 %v2330, %v2300
        %v2332 = vadd.f32 %v2331, %v2301
        %v2333 = vadd.f32 %v2332, %v2302
        %v2334 = vadd.f32 %v2333, %v2303
        %v2335 = vadd.f32 %v2334, %v2304
        %v2336 = vadd.f32 %v2335, %v2305
        %v2337 = vadd.f32 %v2336, %v2306
        %v2338 = vadd.f32 %v2337, %v2307
        %v2339 = vadd.f32 %v2338, %v2308
        %v2340 = vadd.f32 %v2339, %v2309
        %v2341 = vadd.f32 %v2340, %v2310
        %v2342 = vadd.f32 %v2341, %v2311
        %v2343 = vadd.f32 %v2342, %v2312
        %v2344 = vadd.f32 %v2343, %v2313
        %v2345 = vrot.slane %v2344, 4
        %v2346 = vadd.f32 %v2344, %v2345
        %v2347 = vrot.slane %v2346, 2
        %v2348 = vadd.f32 %v2346, %v2347
        %v2349 = vrot.slane %v2348, 1
        %v2350 = vadd.f32 %v2348, %v2349
        %v2351 = vmul.f32 %v2350, 0.00390625
        %v2352 = vsub.f32 %v2282, %v2351
        %v2353 = vsub.f32 %v2283, %v2351
        %v2354 = vsub.f32 %v2284, %v2351
        %v2355 = vsub.f32 %v2285, %v2351
        %v2356 = vsub.f32 %v2286, %v2351
        %v2357 = vsub.f32 %v2287, %v2351
        %v2358 = vsub.f32 %v2288, %v2351
        %v2359 = vsub.f32 %v2289, %v2351
        %v2360 = vsub.f32 %v2290, %v2351
        %v2361 = vsub.f32 %v2291, %v2351
        %v2362 = vsub.f32 %v2292, %v2351
        %v2363 = vsub.f32 %v2293, %v2351
        %v2364 = vsub.f32 %v2294, %v2351
        %v2365 = vsub.f32 %v2295, %v2351
        %v2366 = vsub.f32 %v2296, %v2351
        %v2367 = vsub.f32 %v2297, %v2351
        %v2368 = vsub.f32 %v2298, %v2351
        %v2369 = vsub.f32 %v2299, %v2351
        %v2370 = vsub.f32 %v2300, %v2351
        %v2371 = vsub.f32 %v2301, %v2351
        %v2372 = vsub.f32 %v2302, %v2351
        %v2373 = vsub.f32 %v2303, %v2351
        %v2374 = vsub.f32 %v2304, %v2351
        %v2375 = vsub.f32 %v2305, %v2351
        %v2376 = vsub.f32 %v2306, %v2351
        %v2377 = vsub.f32 %v2307, %v2351
        %v2378 = vsub.f32 %v2308, %v2351
        %v2379 = vsub.f32 %v2309, %v2351
        %v2380 = vsub.f32 %v2310, %v2351
        %v2381 = vsub.f32 %v2311, %v2351
        %v2382 = vsub.f32 %v2312, %v2351
        %v2383 = vsub.f32 %v2313, %v2351
        %v2384 = vmul.f32 %v2352, %v2352
        %v2385 = vmul.f32 %v2353, %v2353
        %v2386 = vmul.f32 %v2354, %v2354
        %v2387 = vmul.f32 %v2355, %v2355
        %v2388 = vmul.f32 %v2356, %v2356
        %v2389 = vmul.f32 %v2357, %v2357
        %v2390 = vmul.f32 %v2358, %v2358
        %v2391 = vmul.f32 %v2359, %v2359
        %v2392 = vmul.f32 %v2360, %v2360
        %v2393 = vmul.f32 %v2361, %v2361
        %v2394 = vmul.f32 %v2362, %v2362
        %v2395 = vmul.f32 %v2363, %v2363
        %v2396 = vmul.f32 %v2364, %v2364
        %v2397 = vmul.f32 %v2365, %v2365
        %v2398 = vmul.f32 %v2366, %v2366
        %v2399 = vmul.f32 %v2367, %v2367
        %v2400 = vmul.f32 %v2368, %v2368
        %v2401 = vmul.f32 %v2369, %v2369
        %v2402 = vmul.f32 %v2370, %v2370
        %v2403 = vmul.f32 %v2371, %v2371
        %v2404 = vmul.f32 %v2372, %v2372
        %v2405 = vmul.f32 %v2373, %v2373
        %v2406 = vmul.f32 %v2374, %v2374
        %v2407 = vmul.f32 %v2375, %v2375
        %v2408 = vmul.f32 %v2376, %v2376
        %v2409 = vmul.f32 %v2377, %v2377
        %v2410 = vmul.f32 %v2378, %v2378
        %v2411 = vmul.f32 %v2379, %v2379
        %v2412 = vmul.f32 %v2380, %v2380
        %v2413 = vmul.f32 %v2381, %v2381
        %v2414 = vmul.f32 %v2382, %v2382
        %v2415 = vmul.f32 %v2383, %v2383
        %v2416 = vadd.f32 %v2384, %v2385
        %v2417 = vadd.f32 %v2416, %v2386
        %v2418 = vadd.f32 %v2417, %v2387
        %v2419 = vadd.f32 %v2418, %v2388
        %v2420 = vadd.f32 %v2419, %v2389
        %v2421 = vadd.f32 %v2420, %v2390
        %v2422 = vadd.f32 %v2421, %v2391
        %v2423 = vadd.f32 %v2422, %v2392
        %v2424 = vadd.f32 %v2423, %v2393
        %v2425 = vadd.f32 %v2424, %v2394
        %v2426 = vadd.f32 %v2425, %v2395
        %v2427 = vadd.f32 %v2426, %v2396
        %v2428 = vadd.f32 %v2427, %v2397
        %v2429 = vadd.f32 %v2428, %v2398
        %v2430 = vadd.f32 %v2429, %v2399
        %v2431 = vadd.f32 %v2430, %v2400
        %v2432 = vadd.f32 %v2431, %v2401
        %v2433 = vadd.f32 %v2432, %v2402
        %v2434 = vadd.f32 %v2433, %v2403
        %v2435 = vadd.f32 %v2434, %v2404
        %v2436 = vadd.f32 %v2435, %v2405
        %v2437 = vadd.f32 %v2436, %v2406
        %v2438 = vadd.f32 %v2437, %v2407
        %v2439 = vadd.f32 %v2438, %v2408
        %v2440 = vadd.f32 %v2439, %v2409
        %v2441 = vadd.f32 %v2440, %v2410
        %v2442 = vadd.f32 %v2441, %v2411
        %v2443 = vadd.f32 %v2442, %v2412
        %v2444 = vadd.f32 %v2443, %v2413
        %v2445 = vadd.f32 %v2444, %v2414
        %v2446 = vadd.f32 %v2445, %v2415
        %v2447 = vrot.slane %v2446, 4
        %v2448 = vadd.f32 %v2446, %v2447
        %v2449 = vrot.slane %v2448, 2
        %v2450 = vadd.f32 %v2448, %v2449
        %v2451 = vrot.slane %v2450, 1
        %v2452 = vadd.f32 %v2450, %v2451
        %v2453 = vmul.f32 %v2452, 0.00390625
        %v2454 = vadd.f32 %v2453, 1e-05
        %v2455 = vrsqrt.pop %v2454
        %v2456 = vsub.f32 0.0, %v2351
        %v2457 = vmul.f32 %v2456, %v2455
        %v2458 = vmul.f32 %v2282, %v2455
        %v2459 = vmul.f32 %v2283, %v2455
        %v2460 = vmul.f32 %v2284, %v2455
        %v2461 = vmul.f32 %v2285, %v2455
        %v2462 = vmul.f32 %v2286, %v2455
        %v2463 = vmul.f32 %v2287, %v2455
        %v2464 = vmul.f32 %v2288, %v2455
        %v2465 = vmul.f32 %v2289, %v2455
        %v2466 = vmul.f32 %v2290, %v2455
        %v2467 = vmul.f32 %v2291, %v2455
        %v2468 = vmul.f32 %v2292, %v2455
        %v2469 = vmul.f32 %v2293, %v2455
        %v2470 = vmul.f32 %v2294, %v2455
        %v2471 = vmul.f32 %v2295, %v2455
        %v2472 = vmul.f32 %v2296, %v2455
        %v2473 = vmul.f32 %v2297, %v2455
        %v2474 = vmul.f32 %v2298, %v2455
        %v2475 = vmul.f32 %v2299, %v2455
        %v2476 = vmul.f32 %v2300, %v2455
        %v2477 = vmul.f32 %v2301, %v2455
        %v2478 = vmul.f32 %v2302, %v2455
        %v2479 = vmul.f32 %v2303, %v2455
        %v2480 = vmul.f32 %v2304, %v2455
        %v2481 = vmul.f32 %v2305, %v2455
        %v2482 = vmul.f32 %v2306, %v2455
        %v2483 = vmul.f32 %v2307, %v2455
        %v2484 = vmul.f32 %v2308, %v2455
        %v2485 = vmul.f32 %v2309, %v2455
        %v2486 = vmul.f32 %v2310, %v2455
        %v2487 = vmul.f32 %v2311, %v2455
        %v2488 = vmul.f32 %v2312, %v2455
        %v2489 = vmul.f32 %v2313, %v2455
        %v2490 = vadd.f32 %v2458, %v2457
        %v2491 = vadd.f32 %v2459, %v2457
        %v2492 = vadd.f32 %v2460, %v2457
        %v2493 = vadd.f32 %v2461, %v2457
        %v2494 = vadd.f32 %v2462, %v2457
        %v2495 = vadd.f32 %v2463, %v2457
        %v2496 = vadd.f32 %v2464, %v2457
        %v2497 = vadd.f32 %v2465, %v2457
        %v2498 = vadd.f32 %v2466, %v2457
        %v2499 = vadd.f32 %v2467, %v2457
        %v2500 = vadd.f32 %v2468, %v2457
        %v2501 = vadd.f32 %v2469, %v2457
        %v2502 = vadd.f32 %v2470, %v2457
        %v2503 = vadd.f32 %v2471, %v2457
        %v2504 = vadd.f32 %v2472, %v2457
        %v2505 = vadd.f32 %v2473, %v2457
        %v2506 = vadd.f32 %v2474, %v2457
        %v2507 = vadd.f32 %v2475, %v2457
        %v2508 = vadd.f32 %v2476, %v2457
        %v2509 = vadd.f32 %v2477, %v2457
        %v2510 = vadd.f32 %v2478, %v2457
        %v2511 = vadd.f32 %v2479, %v2457
        %v2512 = vadd.f32 %v2480, %v2457
        %v2513 = vadd.f32 %v2481, %v2457
        %v2514 = vadd.f32 %v2482, %v2457
        %v2515 = vadd.f32 %v2483, %v2457
        %v2516 = vadd.f32 %v2484, %v2457
        %v2517 = vadd.f32 %v2485, %v2457
        %v2518 = vadd.f32 %v2486, %v2457
        %v2519 = vadd.f32 %v2487, %v2457
        %v2520 = vadd.f32 %v2488, %v2457
        %v2521 = vadd.f32 %v2489, %v2457
        %v2522 = vmax.f32 %v2490, 0.0
        %v2523 = vmax.f32 %v2491, 0.0
        %v2524 = vmax.f32 %v2492, 0.0
        %v2525 = vmax.f32 %v2493, 0.0
        %v2526 = vmax.f32 %v2494, 0.0
        %v2527 = vmax.f32 %v2495, 0.0
        %v2528 = vmax.f32 %v2496, 0.0
        %v2529 = vmax.f32 %v2497, 0.0
        %v2530 = vmax.f32 %v2498, 0.0
        %v2531 = vmax.f32 %v2499, 0.0
        %v2532 = vmax.f32 %v2500, 0.0
        %v2533 = vmax.f32 %v2501, 0.0
        %v2534 = vmax.f32 %v2502, 0.0
        %v2535 = vmax.f32 %v2503, 0.0
        %v2536 = vmax.f32 %v2504, 0.0
        %v2537 = vmax.f32 %v2505, 0.0
        %v2538 = vmax.f32 %v2506, 0.0
        %v2539 = vmax.f32 %v2507, 0.0
        %v2540 = vmax.f32 %v2508, 0.0
        %v2541 = vmax.f32 %v2509, 0.0
        %v2542 = vmax.f32 %v2510, 0.0
        %v2543 = vmax.f32 %v2511, 0.0
        %v2544 = vmax.f32 %v2512, 0.0
        %v2545 = vmax.f32 %v2513, 0.0
        %v2546 = vmax.f32 %v2514, 0.0
        %v2547 = vmax.f32 %v2515, 0.0
        %v2548 = vmax.f32 %v2516, 0.0
        %v2549 = vmax.f32 %v2517, 0.0
        %v2550 = vmax.f32 %v2518, 0.0
        %v2551 = vmax.f32 %v2519, 0.0
        %v2552 = vmax.f32 %v2520, 0.0
        %v2553 = vmax.f32 %v2521, 0.0
        %2554 = vst [vmem:[%s250 + $0x1] sm:$0xff] %v2522
        %2555 = vst [vmem:[%s250 + $0x9] sm:$0xff] %v2523
        %2556 = vst [vmem:[%s250 + $0x19] sm:$0xff] %v2524
        %2557 = vst [vmem:[%s250 + $0x21] sm:$0xff] %v2525
        %2558 = vst [vmem:[%s250 + $0x31] sm:$0xff] %v2526
        %2559 = vst [vmem:[%s250 + $0x39] sm:$0xff] %v2527
        %2560 = vst [vmem:[%s250 + $0x49] sm:$0xff] %v2528
        %2561 = vst [vmem:[%s250 + $0x51] sm:$0xff] %v2529
        %2562 = vst [vmem:[%s250 + $0x61] sm:$0xff] %v2530
        %2563 = vst [vmem:[%s250 + $0x69] sm:$0xff] %v2531
        %2564 = vst [vmem:[%s250 + $0x79] sm:$0xff] %v2532
        %2565 = vst [vmem:[%s250 + $0x81] sm:$0xff] %v2533
        %2566 = vst [vmem:[%s250 + $0x91] sm:$0xff] %v2534
        %2567 = vst [vmem:[%s250 + $0x99] sm:$0xff] %v2535
        %2568 = vst [vmem:[%s250 + $0xa9] sm:$0xff] %v2536
        %2569 = vst [vmem:[%s250 + $0xb1] sm:$0xff] %v2537
        %2570 = vst [vmem:[%s250 + $0xc1] sm:$0xff] %v2538
        %2571 = vst [vmem:[%s250 + $0xc9] sm:$0xff] %v2539
        %2572 = vst [vmem:[%s250 + $0xd9] sm:$0xff] %v2540
        %2573 = vst [vmem:[%s250 + $0xe1] sm:$0xff] %v2541
        %2574 = vst [vmem:[%s250 + $0xf1] sm:$0xff] %v2542
        %2575 = vst [vmem:[%s250 + $0xf9] sm:$0xff] %v2543
        %2576 = vst [vmem:[%s250 + $0x109] sm:$0xff] %v2544
        %2577 = vst [vmem:[%s250 + $0x111] sm:$0xff] %v2545
        %2578 = vst [vmem:[%s250 + $0x121] sm:$0xff] %v2546
        %2579 = vst [vmem:[%s250 + $0x129] sm:$0xff] %v2547
        %2580 = vst [vmem:[%s250 + $0x139] sm:$0xff] %v2548
        %2581 = vst [vmem:[%s250 + $0x141] sm:$0xff] %v2549
        %2582 = vst [vmem:[%s250 + $0x151] sm:$0xff] %v2550
        %2583 = vst [vmem:[%s250 + $0x159] sm:$0xff] %v2551
        %2584 = vst [vmem:[%s250 + $0x169] sm:$0xff] %v2552
        %2585 = vst [vmem:[%s250 + $0x171] sm:$0xff] %v2553
        %2586 = vst [vmem:[#allocation2 + $0x1] sm:$0xff] %v2524
        %2587 = vst [vmem:[#allocation2 + $0x9] sm:$0xff] %v2525
        %2588 = vst [vmem:[%s285 + $0x1] sm:$0xff] %v2550
        %2589 = vst [vmem:[%s285 + $0x9] sm:$0xff] %v2551
        %v2590 = vld [vmem:[#allocation2 + $0x2] sm:$0x1]
        %v2591 = vld [vmem:[#allocation2 + $0x1a] sm:$0x1]
        %v2592 = vld [vmem:[#allocation2 + $0x32] sm:$0x1]
        %v2593 = vld [vmem:[#allocation2 + $0x4a] sm:$0x1]
        %v2594 = vld [vmem:[#allocation2 + $0x62] sm:$0x1]
        %v2595 = vld [vmem:[#allocation2 + $0x7a] sm:$0x1]
        %v2596 = vld [vmem:[#allocation2 + $0x92] sm:$0x1]
        %v2597 = vld [vmem:[#allocation2 + $0xaa] sm:$0x1]
        %v2598 = vld [vmem:[#allocation2 + $0xc2] sm:$0x1]
        %v2599 = vld [vmem:[#allocation2 + $0xda] sm:$0x1]
        %v2600 = vld [vmem:[#allocation2 + $0xf2] sm:$0x1]
        %v2601 = vld [vmem:[#allocation2 + $0x10a] sm:$0x1]
        %v2602 = vld [vmem:[#allocation2 + $0x122] sm:$0x1]
        %v2603 = vld [vmem:[#allocation2 + $0x13a] sm:$0x1]
        %v2604 = vld [vmem:[#allocation2 + $0x152] sm:$0x1]
        %v2605 = vld [vmem:[#allocation2 + $0x16a] sm:$0x1]
        %v2606 = vld [vmem:[#allocation2 + $0x182] sm:$0x1]
        %v2607 = vld [vmem:[#allocation2 + $0x19a] sm:$0x1]
        %2608 = vst [vmem:[#allocation2] sm:$0x1] %v2590
        %2609 = vst [vmem:[#allocation2 + $0x18] sm:$0x1] %v2591
        %2610 = vst [vmem:[#allocation2 + $0x30] sm:$0x1] %v2592
        %2611 = vst [vmem:[#allocation2 + $0x48] sm:$0x1] %v2593
        %2612 = vst [vmem:[#allocation2 + $0x60] sm:$0x1] %v2594
        %2613 = vst [vmem:[#allocation2 + $0x78] sm:$0x1] %v2595
        %2614 = vst [vmem:[#allocation2 + $0x90] sm:$0x1] %v2596
        %2615 = vst [vmem:[#allocation2 + $0xa8] sm:$0x1] %v2597
        %2616 = vst [vmem:[#allocation2 + $0xc0] sm:$0x1] %v2598
        %2617 = vst [vmem:[#allocation2 + $0xd8] sm:$0x1] %v2599
        %2618 = vst [vmem:[#allocation2 + $0xf0] sm:$0x1] %v2600
        %2619 = vst [vmem:[#allocation2 + $0x108] sm:$0x1] %v2601
        %2620 = vst [vmem:[#allocation2 + $0x120] sm:$0x1] %v2602
        %2621 = vst [vmem:[#allocation2 + $0x138] sm:$0x1] %v2603
        %2622 = vst [vmem:[#allocation2 + $0x150] sm:$0x1] %v2604
        %2623 = vst [vmem:[#allocation2 + $0x168] sm:$0x1] %v2605
        %2624 = vst [vmem:[#allocation2 + $0x180] sm:$0x1] %v2606
        %2625 = vst [vmem:[#allocation2 + $0x198] sm:$0x1] %v2607
        %v2626 = vld [vmem:[#allocation2 + $0xf] sm:$0x1]
        %v2627 = vld [vmem:[#allocation2 + $0x27] sm:$0x1]
        %v2628 = vld [vmem:[#allocation2 + $0x3f] sm:$0x1]
        %v2629 = vld [vmem:[#allocation2 + $0x57] sm:$0x1]
        %v2630 = vld [vmem:[#allocation2 + $0x6f] sm:$0x1]
        %v2631 = vld [vmem:[#allocation2 + $0x87] sm:$0x1]
        %v2632 = vld [vmem:[#allocation2 + $0x9f] sm:$0x1]
        %v2633 = vld [vmem:[#allocation2 + $0xb7] sm:$0x1]
        %v2634 = vld [vmem:[#allocation2 + $0xcf] sm:$0x1]
        %v2635 = vld [vmem:[#allocation2 + $0xe7] sm:$0x1]
        %v2636 = vld [vmem:[#allocation2 + $0xff] sm:$0x1]
        %v2637 = vld [vmem:[#allocation2 + $0x117] sm:$0x1]
        %v2638 = vld [vmem:[#allocation2 + $0x12f] sm:$0x1]
        %v2639 = vld [vmem:[#allocation2 + $0x147] sm:$0x1]
        %v2640 = vld [vmem:[#allocation2 + $0x15f] sm:$0x1]
        %v2641 = vld [vmem:[#allocation2 + $0x177] sm:$0x1]
        %v2642 = vld [vmem:[#allocation2 + $0x18f] sm:$0x1]
        %v2643 = vld [vmem:[#allocation2 + $0x1a7] sm:$0x1]
        %2644 = vst [vmem:[#allocation2 + $0x11] sm:$0x1] %v2626
        %2645 = vst [vmem:[#allocation2 + $0x29] sm:$0x1] %v2627
        %2646 = vst [vmem:[#allocation2 + $0x41] sm:$0x1] %v2628
        %2647 = vst [vmem:[#allocation2 + $0x59] sm:$0x1] %v2629
        %2648 = vst [vmem:[#allocation2 + $0x71] sm:$0x1] %v2630
        %2649 = vst [vmem:[#allocation2 + $0x89] sm:$0x1] %v2631
        %2650 = vst [vmem:[#allocation2 + $0xa1] sm:$0x1] %v2632
        %2651 = vst [vmem:[#allocation2 + $0xb9] sm:$0x1] %v2633
        %2652 = vst [vmem:[#allocation2 + $0xd1] sm:$0x1] %v2634
        %2653 = vst [vmem:[#allocation2 + $0xe9] sm:$0x1] %v2635
        %2654 = vst [vmem:[#allocation2 + $0x101] sm:$0x1] %v2636
        %2655 = vst [vmem:[#allocation2 + $0x119] sm:$0x1] %v2637
        %2656 = vst [vmem:[#allocation2 + $0x131] sm:$0x1] %v2638
        %2657 = vst [vmem:[#allocation2 + $0x149] sm:$0x1] %v2639
        %2658 = vst [vmem:[#allocation2 + $0x161] sm:$0x1] %v2640
        %2659 = vst [vmem:[#allocation2 + $0x179] sm:$0x1] %v2641
        %2660 = vst [vmem:[#allocation2 + $0x191] sm:$0x1] %v2642
        %2661 = vst [vmem:[#allocation2 + $0x1a9] sm:$0x1] %v2643
        %v2662 = vld [vmem:[#allocation2] sm:$0xff]
        %v2663 = vld [vmem:[#allocation2 + $0x8] sm:$0xff]
        %v2664 = vld [vmem:[#allocation2 + $0x10] sm:$0x3]
        %v2665 = vld [vmem:[#allocation2 + $0x18] sm:$0xff]
        %v2666 = vld [vmem:[#allocation2 + $0x20] sm:$0xff]
        %v2667 = vld [vmem:[#allocation2 + $0x28] sm:$0x3]
        %v2668 = vld [vmem:[#allocation2 + $0x30] sm:$0xff]
        %v2669 = vld [vmem:[#allocation2 + $0x38] sm:$0xff]
        %v2670 = vld [vmem:[#allocation2 + $0x40] sm:$0x3]
        %v2671 = vld [vmem:[#allocation2 + $0x48] sm:$0xff]
        %v2672 = vld [vmem:[#allocation2 + $0x50] sm:$0xff]
        %v2673 = vld [vmem:[#allocation2 + $0x58] sm:$0x3]
        %v2674 = vld [vmem:[#allocation2 + $0x60] sm:$0xff]
        %v2675 = vld [vmem:[#allocation2 + $0x68] sm:$0xff]
        %v2676 = vld [vmem:[#allocation2 + $0x70] sm:$0x3]
        %v2677 = vld [vmem:[#allocation2 + $0x78] sm:$0xff]
        %v2678 = vld [vmem:[#allocation2 + $0x80] sm:$0xff]
        %v2679 = vld [vmem:[#allocation2 + $0x88] sm:$0x3]
        %v2680 = vld [vmem:[#allocation2 + $0x90] sm:$0xff]
        %v2681 = vld [vmem:[#allocation2 + $0x98] sm:$0xff]
        %v2682 = vld [vmem:[#allocation2 + $0xa0] sm:$0x3]
        %v2683 = vld [vmem:[#allocation2 + $0xa8] sm:$0xff]
        %v2684 = vld [vmem:[#allocation2 + $0xb0] sm:$0xff]
        %v2685 = vld [vmem:[#allocation2 + $0xb8] sm:$0x3]
        %v2686 = vld [vmem:[#allocation2 + $0xc0] sm:$0xff]
        %v2687 = vld [vmem:[#allocation2 + $0xc8] sm:$0xff]
        %v2688 = vld [vmem:[#allocation2 + $0xd0] sm:$0x3]
        %v2689 = vld [vmem:[#allocation2 + $0xd8] sm:$0xff]
        %v2690 = vld [vmem:[#allocation2 + $0xe0] sm:$0xff]
        %v2691 = vld [vmem:[#allocation2 + $0xe8] sm:$0x3]
        %v2692 = vld [vmem:[#allocation2 + $0xf0] sm:$0xff]
        %v2693 = vld [vmem:[#allocation2 + $0xf8] sm:$0xff]
        %v2694 = vld [vmem:[#allocation2 + $0x100] sm:$0x3]
        %v2695 = vld [vmem:[#allocation2 + $0x108] sm:$0xff]
        %v2696 = vld [vmem:[#allocation2 + $0x110] sm:$0xff]
        %v2697 = vld [vmem:[#allocation2 + $0x118] sm:$0x3]
        %v2698 = vld [vmem:[#allocation2 + $0x120] sm:$0xff]
        %v2699 = vld [vmem:[#allocation2 + $0x128] sm:$0xff]
        %v2700 = vld [vmem:[#allocation2 + $0x130] sm:$0x3]
        %v2701 = vld [vmem:[#allocation2 + $0x138] sm:$0xff]
        %v2702 = vld [vmem:[#allocation2 + $0x140] sm:$0xff]
        %v2703 = vld [vmem:[#allocation2 + $0x148] sm:$0x3]
        %v2704 = vld [vmem:[#allocation2 + $0x150] sm:$0xff]
        %v2705 = vld [vmem:[#allocation2 + $0x158] sm:$0xff]
        %v2706 = vld [vmem:[#allocation2 + $0x160] sm:$0x3]
        %v2707 = vld [vmem:[#allocation2 + $0x168] sm:$0xff]
        %v2708 = vld [vmem:[#allocation2 + $0x170] sm:$0xff]
        %v2709 = vld [vmem:[#allocation2 + $0x178] sm:$0x3]
        %v2710 = vld [vmem:[#allocation2 + $0x180] sm:$0xff]
        %v2711 = vld [vmem:[#allocation2 + $0x188] sm:$0xff]
        %v2712 = vld [vmem:[#allocation2 + $0x190] sm:$0x3]
        %v2713 = vld [vmem:[#allocation2 + $0x198] sm:$0xff]
        %v2714 = vld [vmem:[#allocation2 + $0x1a0] sm:$0xff]
        %v2715 = vld [vmem:[#allocation2 + $0x1a8] sm:$0x3]
        %v2716 = vld [vmem:[#allocation9] sm:$0xff]
        %v2717 = vld [vmem:[#allocation9 + $0x8] sm:$0xff]
        %v2718 = vld [vmem:[#allocation9 + $0x10] sm:$0xff]
        %v2719 = vld [vmem:[#allocation9 + $0x18] sm:$0xff]
        %v2720 = vld [vmem:[#allocation9 + $0x20] sm:$0xff]
        %v2721 = vld [vmem:[#allocation9 + $0x28] sm:$0xff]
        %v2722 = vld [vmem:[#allocation9 + $0x30] sm:$0xff]
        %v2723 = vld [vmem:[#allocation9 + $0x38] sm:$0xff]
        %v2724 = vld [vmem:[#allocation9 + $0x40] sm:$0xff]
        %v2725 = vld [vmem:[#allocation9 + $0x48] sm:$0xff]
        %v2726 = vld [vmem:[#allocation9 + $0x50] sm:$0xff]
        %v2727 = vld [vmem:[#allocation9 + $0x58] sm:$0xff]
        %v2728 = vld [vmem:[#allocation9 + $0x60] sm:$0xff]
        %v2729 = vld [vmem:[#allocation9 + $0x68] sm:$0xff]
        %v2730 = vld [vmem:[#allocation9 + $0x70] sm:$0xff]
        %v2731 = vld [vmem:[#allocation9 + $0x78] sm:$0xff]
        %v2732 = vld [vmem:[#allocation9 + $0x80] sm:$0xff]
        %v2733 = vld [vmem:[#allocation9 + $0x88] sm:$0xff]
        %v2734 = vld [vmem:[#allocation9 + $0x90] sm:$0xff]
        %v2735 = vld [vmem:[#allocation9 + $0x98] sm:$0xff]
        %v2736 = vld [vmem:[#allocation9 + $0xa0] sm:$0xff]
        %v2737 = vld [vmem:[#allocation9 + $0xa8] sm:$0xff]
        %v2738 = vld [vmem:[#allocation9 + $0xb0] sm:$0xff]
        %v2739 = vld [vmem:[#allocation9 + $0xb8] sm:$0xff]
        %v2740 = vld [vmem:[#allocation9 + $0xc0] sm:$0xff]
        %v2741 = vld [vmem:[#allocation9 + $0xc8] sm:$0xff]
        %v2742 = vld [vmem:[#allocation9 + $0xd0] sm:$0xff]
        %v2743 = vld [vmem:[#allocation9 + $0xd8] sm:$0xff]
        %v2744 = vld [vmem:[#allocation9 + $0xe0] sm:$0xff]
        %v2745 = vld [vmem:[#allocation9 + $0xe8] sm:$0xff]
        %v2746 = vld [vmem:[#allocation9 + $0xf0] sm:$0xff]
        %v2747 = vld [vmem:[#allocation9 + $0xf8] sm:$0xff]
        %v2748 = vld [vmem:[#allocation9 + $0x100] sm:$0xff]
        %v2749 = vld [vmem:[#allocation9 + $0x108] sm:$0xff]
        %v2750 = vld [vmem:[#allocation9 + $0x110] sm:$0xff]
        %v2751 = vld [vmem:[#allocation9 + $0x118] sm:$0xff]
        %v2752 = vld [vmem:[#allocation9 + $0x120] sm:$0xff]
        %v2753 = vld [vmem:[#allocation9 + $0x128] sm:$0xff]
        %v2754 = vld [vmem:[#allocation9 + $0x130] sm:$0xff]
        %v2755 = vld [vmem:[#allocation9 + $0x138] sm:$0xff]
        %v2756 = vld [vmem:[#allocation9 + $0x140] sm:$0xff]
        %v2757 = vld [vmem:[#allocation9 + $0x148] sm:$0xff]
        %v2758 = vld [vmem:[#allocation9 + $0x150] sm:$0xff]
        %v2759 = vld [vmem:[#allocation9 + $0x158] sm:$0xff]
        %v2760 = vld [vmem:[#allocation9 + $0x160] sm:$0xff]
        %v2761 = vld [vmem:[#allocation9 + $0x168] sm:$0xff]
        %v2762 = vld [vmem:[#allocation9 + $0x170] sm:$0xff]
        %v2763 = vld [vmem:[#allocation9 + $0x178] sm:$0xff]
        %v2818 = vrot.slane %v2662, 1
        %v2819 = vrot.slane %v2663, 1
        %v2820 = vsel %vm516, %v2818, %v2819
        %v2821 = vrot.slane %v2665, 1
        %v2822 = vrot.slane %v2666, 1
        %v2823 = vsel %vm516, %v2821, %v2822
        %v2824 = vrot.slane %v2668, 1
        %v2825 = vrot.slane %v2669, 1
        %v2826 = vsel %vm516, %v2824, %v2825
        %v2827 = vrot.slane %v2664, 1
        %v2828 = vsel %vm516, %v2819, %v2827
        %v2829 = vrot.slane %v2667, 1
        %v2830 = vsel %vm516, %v2822, %v2829
        %v2831 = vrot.slane %v2670, 1
        %v2832 = vsel %vm516, %v2825, %v2831
        %v2833 = vrot.slane %v2671, 1
        %v2834 = vrot.slane %v2672, 1
        %v2835 = vsel %vm516, %v2833, %v2834
        %v2836 = vrot.slane %v2673, 1
        %v2837 = vsel %vm516, %v2834, %v2836
        %v2838 = vrot.slane %v2674, 1
        %v2839 = vrot.slane %v2675, 1
        %v2840 = vsel %vm516, %v2838, %v2839
        %v2841 = vrot.slane %v2676, 1
        %v2842 = vsel %vm516, %v2839, %v2841
        %v2843 = vrot.slane %v2677, 1
        %v2844 = vrot.slane %v2678, 1
        %v2845 = vsel %vm516, %v2843, %v2844
        %v2846 = vrot.slane %v2679, 1
        %v2847 = vsel %vm516, %v2844, %v2846
        %v2848 = vrot.slane %v2680, 1
        %v2849 = vrot.slane %v2681, 1
        %v2850 = vsel %vm516, %v2848, %v2849
        %v2851 = vrot.slane %v2682, 1
        %v2852 = vsel %vm516, %v2849, %v2851
        %v2853 = vrot.slane %v2683, 1
        %v2854 = vrot.slane %v2684, 1
        %v2855 = vsel %vm516, %v2853, %v2854
        %v2856 = vrot.slane %v2685, 1
        %v2857 = vsel %vm516, %v2854, %v2856
        %v2858 = vrot.slane %v2686, 1
        %v2859 = vrot.slane %v2687, 1
        %v2860 = vsel %vm516, %v2858, %v2859
        %v2861 = vrot.slane %v2688, 1
        %v2862 = vsel %vm516, %v2859, %v2861
        %v2863 = vrot.slane %v2689, 1
        %v2864 = vrot.slane %v2690, 1
        %v2865 = vsel %vm516, %v2863, %v2864
        %v2866 = vrot.slane %v2691, 1
        %v2867 = vsel %vm516, %v2864, %v2866
        %v2868 = vrot.slane %v2692, 1
        %v2869 = vrot.slane %v2693, 1
        %v2870 = vsel %vm516, %v2868, %v2869
        %v2871 = vrot.slane %v2694, 1
        %v2872 = vsel %vm516, %v2869, %v2871
        %v2873 = vrot.slane %v2695, 1
        %v2874 = vrot.slane %v2696, 1
        %v2875 = vsel %vm516, %v2873, %v2874
        %v2876 = vrot.slane %v2697, 1
        %v2877 = vsel %vm516, %v2874, %v2876
        %v2878 = vrot.slane %v2698, 1
        %v2879 = vrot.slane %v2699, 1
        %v2880 = vsel %vm516, %v2878, %v2879
        %v2881 = vrot.slane %v2700, 1
        %v2882 = vsel %vm516, %v2879, %v2881
        %v2883 = vrot.slane %v2701, 1
        %v2884 = vrot.slane %v2702, 1
        %v2885 = vsel %vm516, %v2883, %v2884
        %v2886 = vrot.slane %v2703, 1
        %v2887 = vsel %vm516, %v2884, %v2886
        %v2888 = vrot.slane %v2704, 1
        %v2889 = vrot.slane %v2705, 1
        %v2890 = vsel %vm516, %v2888, %v2889
        %v2891 = vrot.slane %v2706, 1
        %v2892 = vsel %vm516, %v2889, %v2891
        %v2893 = vrot.slane %v2707, 1
        %v2894 = vrot.slane %v2708, 1
        %v2895 = vsel %vm516, %v2893, %v2894
        %v2896 = vrot.slane %v2709, 1
        %v2897 = vsel %vm516, %v2894, %v2896
        %v2898 = vrot.slane %v2710, 1
        %v2899 = vrot.slane %v2711, 1
        %v2900 = vsel %vm516, %v2898, %v2899
        %v2901 = vrot.slane %v2712, 1
        %v2902 = vsel %vm516, %v2899, %v2901
        %v2903 = vrot.slane %v2713, 1
        %v2904 = vrot.slane %v2714, 1
        %v2905 = vsel %vm516, %v2903, %v2904
        %v2906 = vrot.slane %v2715, 1
        %v2907 = vsel %vm516, %v2904, %v2906
        %s2944 = scalar_lea.vmem [#allocation9], 384
        %v2945 = vld [vmem:[%s2944] sm:$0xff]
        %v2946 = vld [vmem:[%s2944 + $0x8] sm:$0xff]
        %v2947 = vld [vmem:[%s2944 + $0x10] sm:$0xff]
        %v2948 = vld [vmem:[%s2944 + $0x18] sm:$0xff]
        %v2949 = vld [vmem:[%s2944 + $0x20] sm:$0xff]
        %v2950 = vld [vmem:[%s2944 + $0x28] sm:$0xff]
        %v2951 = vld [vmem:[%s2944 + $0x30] sm:$0xff]
        %v2952 = vld [vmem:[%s2944 + $0x38] sm:$0xff]
        %v2953 = vld [vmem:[%s2944 + $0x40] sm:$0xff]
        %v2954 = vld [vmem:[%s2944 + $0x48] sm:$0xff]
        %v2955 = vld [vmem:[%s2944 + $0x50] sm:$0xff]
        %v2956 = vld [vmem:[%s2944 + $0x58] sm:$0xff]
        %v2957 = vld [vmem:[%s2944 + $0x60] sm:$0xff]
        %v2958 = vld [vmem:[%s2944 + $0x68] sm:$0xff]
        %v2959 = vld [vmem:[%s2944 + $0x70] sm:$0xff]
        %v2960 = vld [vmem:[%s2944 + $0x78] sm:$0xff]
        %v2961 = vld [vmem:[%s2944 + $0x80] sm:$0xff]
        %v2962 = vld [vmem:[%s2944 + $0x88] sm:$0xff]
        %v2963 = vld [vmem:[%s2944 + $0x90] sm:$0xff]
        %v2964 = vld [vmem:[%s2944 + $0x98] sm:$0xff]
        %v2965 = vld [vmem:[%s2944 + $0xa0] sm:$0xff]
        %v2966 = vld [vmem:[%s2944 + $0xa8] sm:$0xff]
        %v2967 = vld [vmem:[%s2944 + $0xb0] sm:$0xff]
        %v2968 = vld [vmem:[%s2944 + $0xb8] sm:$0xff]
        %v2969 = vld [vmem:[%s2944 + $0xc0] sm:$0xff]
        %v2970 = vld [vmem:[%s2944 + $0xc8] sm:$0xff]
        %v2971 = vld [vmem:[%s2944 + $0xd0] sm:$0xff]
        %v2972 = vld [vmem:[%s2944 + $0xd8] sm:$0xff]
        %v2973 = vld [vmem:[%s2944 + $0xe0] sm:$0xff]
        %v2974 = vld [vmem:[%s2944 + $0xe8] sm:$0xff]
        %v2975 = vld [vmem:[%s2944 + $0xf0] sm:$0xff]
        %v2976 = vld [vmem:[%s2944 + $0xf8] sm:$0xff]
        %v2977 = vld [vmem:[%s2944 + $0x100] sm:$0xff]
        %v2978 = vld [vmem:[%s2944 + $0x108] sm:$0xff]
        %v2979 = vld [vmem:[%s2944 + $0x110] sm:$0xff]
        %v2980 = vld [vmem:[%s2944 + $0x118] sm:$0xff]
        %v2981 = vld [vmem:[%s2944 + $0x120] sm:$0xff]
        %v2982 = vld [vmem:[%s2944 + $0x128] sm:$0xff]
        %v2983 = vld [vmem:[%s2944 + $0x130] sm:$0xff]
        %v2984 = vld [vmem:[%s2944 + $0x138] sm:$0xff]
        %v2985 = vld [vmem:[%s2944 + $0x140] sm:$0xff]
        %v2986 = vld [vmem:[%s2944 + $0x148] sm:$0xff]
        %v2987 = vld [vmem:[%s2944 + $0x150] sm:$0xff]
        %v2988 = vld [vmem:[%s2944 + $0x158] sm:$0xff]
        %v2989 = vld [vmem:[%s2944 + $0x160] sm:$0xff]
        %v2990 = vld [vmem:[%s2944 + $0x168] sm:$0xff]
        %v2991 = vld [vmem:[%s2944 + $0x170] sm:$0xff]
        %v2992 = vld [vmem:[%s2944 + $0x178] sm:$0xff]
        %2993 = vmatprep.subr.mxu0 0.0
        %2994 = vmatpush1.msra.mxu0 %v2945
        %2995 = vmatprep.subr.mxu0 0.0
        %2996 = vmatpush1.msra.mxu0 %v2946
        %2997 = vmatprep.subr.mxu0 0.0
        %2998 = vmatpush1.msra.mxu0 %v2947
        %2999 = vmatprep.subr.mxu0 0.0
        %3000 = vmatpush1.msra.mxu0 %v2948
        %3001 = vmatprep.subr.mxu0 0.0
        %3002 = vmatpush1.msra.mxu0 %v2949
        %3003 = vmatprep.subr.mxu0 0.0
        %3004 = vmatpush1.msra.mxu0 %v2950
        %3005 = vmatprep.subr.mxu0 0.0
        %3006 = vmatpush1.msra.mxu0 %v2951
        %3007 = vmatprep.subr.mxu0 0.0
        %3008 = vmatpush1.msra.mxu0 %v2952
        %3009 = vmatprep.subr.mxu0 0.0
        %3010 = vmatpush1.msra.mxu0 %v2953
        %3011 = vmatprep.subr.mxu0 0.0
        %3012 = vmatpush1.msra.mxu0 %v2954
        %3013 = vmatprep.subr.mxu0 0.0
        %3014 = vmatpush1.msra.mxu0 %v2955
        %3015 = vmatprep.subr.mxu0 0.0
        %3016 = vmatpush1.msra.mxu0 %v2956
        %3017 = vmatprep.subr.mxu0 0.0
        %3018 = vmatpush1.msra.mxu0 %v2957
        %3019 = vmatprep.subr.mxu0 0.0
        %3020 = vmatpush1.msra.mxu0 %v2958
        %3021 = vmatprep.subr.mxu0 0.0
        %3022 = vmatpush1.msra.mxu0 %v2959
        %3023 = vmatprep.subr.mxu0 0.0
        %3024 = vmatpush1.msra.mxu0 %v2960
        %3025 = vmatprep.subr.mxu0 0.0
        %3026 = vmatpush1.msra.mxu0 %v2961
        %3027 = vmatprep.subr.mxu0 0.0
        %3028 = vmatpush1.msra.mxu0 %v2962
        %3029 = vmatprep.subr.mxu0 0.0
        %3030 = vmatpush1.msra.mxu0 %v2963
        %3031 = vmatprep.subr.mxu0 0.0
        %3032 = vmatpush1.msra.mxu0 %v2964
        %3033 = vmatprep.subr.mxu0 0.0
        %3034 = vmatpush1.msra.mxu0 %v2965
        %3035 = vmatprep.subr.mxu0 0.0
        %3036 = vmatpush1.msra.mxu0 %v2966
        %3037 = vmatprep.subr.mxu0 0.0
        %3038 = vmatpush1.msra.mxu0 %v2967
        %3039 = vmatprep.subr.mxu0 0.0
        %3040 = vmatpush1.msra.mxu0 %v2968
        %3041 = vmatprep.subr.mxu0 0.0
        %3042 = vmatpush1.msra.mxu0 %v2969
        %3043 = vmatprep.subr.mxu0 0.0
        %3044 = vmatpush1.msra.mxu0 %v2970
        %3045 = vmatprep.subr.mxu0 0.0
        %3046 = vmatpush1.msra.mxu0 %v2971
        %3047 = vmatprep.subr.mxu0 0.0
        %3048 = vmatpush1.msra.mxu0 %v2972
        %3049 = vmatprep.subr.mxu0 0.0
        %3050 = vmatpush1.msra.mxu0 %v2973
        %3051 = vmatprep.subr.mxu0 0.0
        %3052 = vmatpush1.msra.mxu0 %v2974
        %3053 = vmatprep.subr.mxu0 0.0
        %3054 = vmatpush1.msra.mxu0 %v2975
        %3055 = vmatprep.subr.mxu0 0.0
        %3056 = vmatpush1.msra.mxu0 %v2976
        %3057 = vmatprep.mubr.f32.mxu0 %v2823
        %3058 = vmatmul.mubr.f32.gmra.mrb[0].mxu0 %v2820
        %v3059 = vpop.f32.mrb[0].mxu0
        %v3060 = vadd.f32 0.0, %v3059
        %v3061 = vpop.f32.mrb[0].mxu0
        %3062 = vmatprep.mubr.f32.mxu0 %v2830
        %3063 = vmatmul.mubr.f32.gmra.mrb[0].mxu0 %v2828
        %v3064 = vpop.f32.mrb[0].mxu0
        %v3065 = vadd.f32 0.0, %v3064
        %v3066 = vpop.f32.mrb[0].mxu0
        %3067 = vmatprep.mubr.f32.mxu0 %v2826
        %3068 = vmatmul.mubr.f32.gmra.mrb[0].mxu0 %v2823
        %v3069 = vpop.f32.mrb[0].mxu0
        %v3070 = vadd.f32 0.0, %v3069
        %v3071 = vpop.f32.mrb[0].mxu0
        %3072 = vmatprep.mubr.f32.mxu0 %v2832
        %3073 = vmatmul.mubr.f32.gmra.mrb[0].mxu0 %v2830
        %v3074 = vpop.f32.mrb[0].mxu0
        %v3075 = vadd.f32 0.0, %v3074
        %v3076 = vpop.f32.mrb[0].mxu0
        %3077 = vmatprep.mubr.f32.mxu0 %v2835
        %3078 = vmatmul.mubr.f32.gmra.mrb[0].mxu0 %v2826
        %v3079 = vpop.f32.mrb[0].mxu0
        %v3080 = vadd.f32 0.0, %v3079
        %v3081 = vpop.f32.mrb[0].mxu0
        %3082 = vmatprep.mubr.f32.mxu0 %v2837
        %3083 = vmatmul.mubr.f32.gmra.mrb[0].mxu0 %v2832
        %v3084 = vpop.f32.mrb[0].mxu0
        %v3085 = vadd.f32 0.0, %v3084
        %v3086 = vpop.f32.mrb[0].mxu0
        %3087 = vmatprep.mubr.f32.mxu0 %v2840
        %3088 = vmatmul.mubr.f32.gmra.mrb[0].mxu0 %v2835
        %v3089 = vpop.f32.mrb[0].mxu0
        %v3090 = vadd.f32 0.0, %v3089
        %v3091 = vpop.f32.mrb[0].mxu0
        %3092 = vmatprep.mubr.f32.mxu0 %v2842
        %3093 = vmatmul.mubr.f32.gmra.mrb[0].mxu0 %v2837
        %v3094 = vpop.f32.mrb[0].mxu0
        %v3095 = vadd.f32 0.0, %v3094
        %v3096 = vpop.f32.mrb[0].mxu0
        %3097 = vmatprep.mubr.f32.mxu0 %v2845
        %3098 = vmatmul.mubr.f32.gmra.mrb[0].mxu0 %v2840
        %v3099 = vpop.f32.mrb[0].mxu0
        %v3100 = vadd.f32 0.0, %v3099
        %v3101 = vpop.f32.mrb[0].mxu0
        %3102 = vmatprep.mubr.f32.mxu0 %v2847
        %3103 = vmatmul.mubr.f32.gmra.mrb[0].mxu0 %v2842
        %v3104 = vpop.f32.mrb[0].mxu0
        %v3105 = vadd.f32 0.0, %v3104
        %v3106 = vpop.f32.mrb[0].mxu0
        %3107 = vmatprep.mubr.f32.mxu0 %v2850
        %3108 = vmatmul.mubr.f32.gmra.mrb[0].mxu0 %v2845
        %v3109 = vpop.f32.mrb[0].mxu0
        %v3110 = vadd.f32 0.0, %v3109
        %v3111 = vpop.f32.mrb[0].mxu0
        %3112 = vmatprep.mubr.f32.mxu0 %v2852
        %3113 = vmatmul.mubr.f32.gmra.mrb[0].mxu0 %v2847
        %v3114 = vpop.f32.mrb[0].mxu0
        %v3115 = vadd.f32 0.0, %v3114
        %v3116 = vpop.f32.mrb[0].mxu0
        %3117 = vmatprep.mubr.f32.mxu0 %v2855
        %3118 = vmatmul.mubr.f32.gmra.mrb[0].mxu0 %v2850
        %v3119 = vpop.f32.mrb[0].mxu0
        %v3120 = vadd.f32 0.0, %v3119
        %v3121 = vpop.f32.mrb[0].mxu0
        %3122 = vmatprep.mubr.f32.mxu0 %v2857
        %3123 = vmatmul.mubr.f32.gmra.mrb[0].mxu0 %v2852
        %v3124 = vpop.f32.mrb[0].mxu0
        %v3125 = vadd.f32 0.0, %v3124
        %v3126 = vpop.f32.mrb[0].mxu0
        %3127 = vmatprep.mubr.f32.mxu0 %v2860
        %3128 = vmatmul.mubr.f32.gmra.mrb[0].mxu0 %v2855
        %v3129 = vpop.f32.mrb[0].mxu0
        %v3130 = vadd.f32 0.0, %v3129
        %v3131 = vpop.f32.mrb[0].mxu0
        %3132 = vmatprep.mubr.f32.mxu0 %v2862
        %3133 = vmatmul.mubr.f32.gmra.mrb[0].mxu0 %v2857
        %v3134 = vpop.f32.mrb[0].mxu0
        %v3135 = vadd.f32 0.0, %v3134
        %v3136 = vpop.f32.mrb[0].mxu0
        %3137 = vmatprep.mubr.f32.mxu0 %v2865
        %3138 = vmatmul.mubr.f32.gmra.mrb[0].mxu0 %v2860
        %v3139 = vpop.f32.mrb[0].mxu0
        %v3140 = vadd.f32 0.0, %v3139
        %v3141 = vpop.f32.mrb[0].mxu0
        %3142 = vmatprep.mubr.f32.mxu0 %v2867
        %3143 = vmatmul.mubr.f32.gmra.mrb[0].mxu0 %v2862
        %v3144 = vpop.f32.mrb[0].mxu0
        %v3145 = vadd.f32 0.0, %v3144
        %v3146 = vpop.f32.mrb[0].mxu0
        %3147 = vmatprep.mubr.f32.mxu0 %v2870
        %3148 = vmatmul.mubr.f32.gmra.mrb[0].mxu0 %v2865
        %v3149 = vpop.f32.mrb[0].mxu0
        %v3150 = vadd.f32 0.0, %v3149
        %v3151 = vpop.f32.mrb[0].mxu0
        %3152 = vmatprep.mubr.f32.mxu0 %v2872
        %3153 = vmatmul.mubr.f32.gmra.mrb[0].mxu0 %v2867
        %v3154 = vpop.f32.mrb[0].mxu0
        %v3155 = vadd.f32 0.0, %v3154
        %v3156 = vpop.f32.mrb[0].mxu0
        %3157 = vmatprep.mubr.f32.mxu0 %v2875
        %3158 = vmatmul.mubr.f32.gmra.mrb[0].mxu0 %v2870
        %v3159 = vpop.f32.mrb[0].mxu0
        %v3160 = vadd.f32 0.0, %v3159
        %v3161 = vpop.f32.mrb[0].mxu0
        %3162 = vmatprep.mubr.f32.mxu0 %v2877
        %3163 = vmatmul.mubr.f32.gmra.mrb[0].mxu0 %v2872
        %v3164 = vpop.f32.mrb[0].mxu0
        %v3165 = vadd.f32 0.0, %v3164
        %v3166 = vpop.f32.mrb[0].mxu0
        %3167 = vmatprep.mubr.f32.mxu0 %v2880
        %3168 = vmatmul.mubr.f32.gmra.mrb[0].mxu0 %v2875
        %v3169 = vpop.f32.mrb[0].mxu0
        %v3170 = vadd.f32 0.0, %v3169
        %v3171 = vpop.f32.mrb[0].mxu0
        %3172 = vmatprep.mubr.f32.mxu0 %v2882
        %3173 = vmatmul.mubr.f32.gmra.mrb[0].mxu0 %v2877
        %v3174 = vpop.f32.mrb[0].mxu0
        %v3175 = vadd.f32 0.0, %v3174
        %v3176 = vpop.f32.mrb[0].mxu0
        %3177 = vmatprep.mubr.f32.mxu0 %v2885
        %3178 = vmatmul.mubr.f32.gmra.mrb[0].mxu0 %v2880
        %v3179 = vpop.f32.mrb[0].mxu0
        %v3180 = vadd.f32 0.0, %v3179
        %v3181 = vpop.f32.mrb[0].mxu0
        %3182 = vmatprep.mubr.f32.mxu0 %v2887
        %3183 = vmatmul.mubr.f32.gmra.mrb[0].mxu0 %v2882
        %v3184 = vpop.f32.mrb[0].mxu0
        %v3185 = vadd.f32 0.0, %v3184
        %v3186 = vpop.f32.mrb[0].mxu0
        %3187 = vmatprep.mubr.f32.mxu0 %v2890
        %3188 = vmatmul.mubr.f32.gmra.mrb[0].mxu0 %v2885
        %v3189 = vpop.f32.mrb[0].mxu0
        %v3190 = vadd.f32 0.0, %v3189
        %v3191 = vpop.f32.mrb[0].mxu0
        %3192 = vmatprep.mubr.f32.mxu0 %v2892
        %3193 = vmatmul.mubr.f32.gmra.mrb[0].mxu0 %v2887
        %v3194 = vpop.f32.mrb[0].mxu0
        %v3195 = vadd.f32 0.0, %v3194
        %v3196 = vpop.f32.mrb[0].mxu0
        %3197 = vmatprep.mubr.f32.mxu0 %v2895
        %3198 = vmatmul.mubr.f32.gmra.mrb[0].mxu0 %v2890
        %v3199 = vpop.f32.mrb[0].mxu0
        %v3200 = vadd.f32 0.0, %v3199
        %v3201 = vpop.f32.mrb[0].mxu0
        %3202 = vmatprep.mubr.f32.mxu0 %v2897
        %3203 = vmatmul.mubr.f32.gmra.mrb[0].mxu0 %v2892
        %v3204 = vpop.f32.mrb[0].mxu0
        %v3205 = vadd.f32 0.0, %v3204
        %v3206 = vpop.f32.mrb[0].mxu0
        %3207 = vmatprep.mubr.f32.mxu0 %v2900
        %3208 = vmatmul.mubr.f32.gmra.mrb[0].mxu0 %v2895
        %v3209 = vpop.f32.mrb[0].mxu0
        %v3210 = vadd.f32 0.0, %v3209
        %v3211 = vpop.f32.mrb[0].mxu0
        %3212 = vmatprep.mubr.f32.mxu0 %v2902
        %3213 = vmatmul.mubr.f32.gmra.mrb[0].mxu0 %v2897
        %v3214 = vpop.f32.mrb[0].mxu0
        %v3215 = vadd.f32 0.0, %v3214
        %v3216 = vpop.f32.mrb[0].mxu0
        %3217 = vdwg.mxu0
        %3218 = vmatprep.subr.mxu0 0.0
        %3219 = vmatpush1.msra.mxu0 %v2977
        %3220 = vmatprep.subr.mxu0 0.0
        %3221 = vmatpush1.msra.mxu0 %v2978
        %3222 = vmatprep.subr.mxu0 0.0
        %3223 = vmatpush1.msra.mxu0 %v2979
        %3224 = vmatprep.subr.mxu0 0.0
        %3225 = vmatpush1.msra.mxu0 %v2980
        %3226 = vmatprep.subr.mxu0 0.0
        %3227 = vmatpush1.msra.mxu0 %v2981
        %3228 = vmatprep.subr.mxu0 0.0
        %3229 = vmatpush1.msra.mxu0 %v2982
        %3230 = vmatprep.subr.mxu0 0.0
        %3231 = vmatpush1.msra.mxu0 %v2983
        %3232 = vmatprep.subr.mxu0 0.0
        %3233 = vmatpush1.msra.mxu0 %v2984
        %3234 = vmatprep.subr.mxu0 0.0
        %3235 = vmatpush1.msra.mxu0 %v2985
        %3236 = vmatprep.subr.mxu0 0.0
        %3237 = vmatpush1.msra.mxu0 %v2986
        %3238 = vmatprep.subr.mxu0 0.0
        %3239 = vmatpush1.msra.mxu0 %v2987
        %3240 = vmatprep.subr.mxu0 0.0
        %3241 = vmatpush1.msra.mxu0 %v2988
        %3242 = vmatprep.subr.mxu0 0.0
        %3243 = vmatpush1.msra.mxu0 %v2989
        %3244 = vmatprep.subr.mxu0 0.0
        %3245 = vmatpush1.msra.mxu0 %v2990
        %3246 = vmatprep.subr.mxu0 0.0
        %3247 = vmatpush1.msra.mxu0 %v2991
        %3248 = vmatprep.subr.mxu0 0.0
        %3249 = vmatpush1.msra.mxu0 %v2992
        %3250 = vmatprep.subr.mxu0 0.0
        %3251 = vmatpush1.msra.mxu0 0.0
        %3252 = vmatprep.subr.mxu0 0.0
        %3253 = vmatpush1.msra.mxu0 0.0
        %3254 = vmatprep.subr.mxu0 0.0
        %3255 = vmatpush1.msra.mxu0 0.0
        %3256 = vmatprep.subr.mxu0 0.0
        %3257 = vmatpush1.msra.mxu0 0.0
        %3258 = vmatprep.subr.mxu0 0.0
        %3259 = vmatpush1.msra.mxu0 0.0
        %3260 = vmatprep.subr.mxu0 0.0
        %3261 = vmatpush1.msra.mxu0 0.0
        %3262 = vmatprep.subr.mxu0 0.0
        %3263 = vmatpush1.msra.mxu0 0.0
        %3264 = vmatprep.subr.mxu0 0.0
        %3265 = vmatpush1.msra.mxu0 0.0
        %3266 = vmatprep.subr.mxu0 0.0
        %3267 = vmatpush1.msra.mxu0 0.0
        %3268 = vmatprep.subr.mxu0 0.0
        %3269 = vmatpush1.msra.mxu0 0.0
        %3270 = vmatprep.subr.mxu0 0.0
        %3271 = vmatpush1.msra.mxu0 0.0
        %3272 = vmatprep.subr.mxu0 0.0
        %3273 = vmatpush1.msra.mxu0 0.0
        %3274 = vmatprep.subr.mxu0 0.0
        %3275 = vmatpush1.msra.mxu0 0.0
        %3276 = vmatprep.subr.mxu0 0.0
        %3277 = vmatpush1.msra.mxu0 0.0
        %3278 = vmatprep.subr.mxu0 0.0
        %3279 = vmatpush1.msra.mxu0 0.0
        %3280 = vmatprep.subr.mxu0 0.0
        %3281 = vmatpush1.msra.mxu0 0.0
        %3282 = vmatprep.mubr.f32.mxu0 0.0
        %3283 = vmatmul.mubr.f32.gmra.mrb[0].mxu0 %v2826
        %v3284 = vpop.f32.mrb[0].mxu0
        %v3285 = vadd.f32 %v3060, %v3284
        %v3286 = vpop.f32.mrb[0].mxu0
        %3287 = vmatprep.mubr.f32.mxu0 0.0
        %3288 = vmatmul.mubr.f32.gmra.mrb[0].mxu0 %v2832
        %v3289 = vpop.f32.mrb[0].mxu0
        %v3290 = vadd.f32 %v3065, %v3289
        %v3291 = vpop.f32.mrb[0].mxu0
        %3292 = vmatprep.mubr.f32.mxu0 0.0
        %3293 = vmatmul.mubr.f32.gmra.mrb[0].mxu0 %v2835
        %v3294 = vpop.f32.mrb[0].mxu0
        %v3295 = vadd.f32 %v3070, %v3294
        %v3296 = vpop.f32.mrb[0].mxu0
        %3297 = vmatprep.mubr.f32.mxu0 0.0
        %3298 = vmatmul.mubr.f32.gmra.mrb[0].mxu0 %v2837
        %v3299 = vpop.f32.mrb[0].mxu0
        %v3300 = vadd.f32 %v3075, %v3299
        %v3301 = vpop.f32.mrb[0].mxu0
        %3302 = vmatprep.mubr.f32.mxu0 0.0
        %3303 = vmatmul.mubr.f32.gmra.mrb[0].mxu0 %v2840
        %v3304 = vpop.f32.mrb[0].mxu0
        %v3305 = vadd.f32 %v3080, %v3304
        %v3306 = vpop.f32.mrb[0].mxu0
        %3307 = vmatprep.mubr.f32.mxu0 0.0
        %3308 = vmatmul.mubr.f32.gmra.mrb[0].mxu0 %v2842
        %v3309 = vpop.f32.mrb[0].mxu0
        %v3310 = vadd.f32 %v3085, %v3309
        %v3311 = vpop.f32.mrb[0].mxu0
        %3312 = vmatprep.mubr.f32.mxu0 0.0
        %3313 = vmatmul.mubr.f32.gmra.mrb[0].mxu0 %v2845
        %v3314 = vpop.f32.mrb[0].mxu0
        %v3315 = vadd.f32 %v3090, %v3314
        %v3316 = vpop.f32.mrb[0].mxu0
        %3317 = vmatprep.mubr.f32.mxu0 0.0
        %3318 = vmatmul.mubr.f32.gmra.mrb[0].mxu0 %v2847
        %v3319 = vpop.f32.mrb[0].mxu0
        %v3320 = vadd.f32 %v3095, %v3319
        %v3321 = vpop.f32.mrb[0].mxu0
        %3322 = vmatprep.mubr.f32.mxu0 0.0
        %3323 = vmatmul.mubr.f32.gmra.mrb[0].mxu0 %v2850
        %v3324 = vpop.f32.mrb[0].mxu0
        %v3325 = vadd.f32 %v3100, %v3324
        %v3326 = vpop.f32.mrb[0].mxu0
        %3327 = vmatprep.mubr.f32.mxu0 0.0
        %3328 = vmatmul.mubr.f32.gmra.mrb[0].mxu0 %v2852
        %v3329 = vpop.f32.mrb[0].mxu0
        %v3330 = vadd.f32 %v3105, %v3329
        %v3331 = vpop.f32.mrb[0].mxu0
        %3332 = vmatprep.mubr.f32.mxu0 0.0
        %3333 = vmatmul.mubr.f32.gmra.mrb[0].mxu0 %v2855
        %v3334 = vpop.f32.mrb[0].mxu0
        %v3335 = vadd.f32 %v3110, %v3334
        %v3336 = vpop.f32.mrb[0].mxu0
        %3337 = vmatprep.mubr.f32.mxu0 0.0
        %3338 = vmatmul.mubr.f32.gmra.mrb[0].mxu0 %v2857
        %v3339 = vpop.f32.mrb[0].mxu0
        %v3340 = vadd.f32 %v3115, %v3339
        %v3341 = vpop.f32.mrb[0].mxu0
        %3342 = vmatprep.mubr.f32.mxu0 0.0
        %3343 = vmatmul.mubr.f32.gmra.mrb[0].mxu0 %v2860
        %v3344 = vpop.f32.mrb[0].mxu0
        %v3345 = vadd.f32 %v3120, %v3344
        %v3346 = vpop.f32.mrb[0].mxu0
        %3347 = vmatprep.mubr.f32.mxu0 0.0
        %3348 = vmatmul.mubr.f32.gmra.mrb[0].mxu0 %v2862
        %v3349 = vpop.f32.mrb[0].mxu0
        %v3350 = vadd.f32 %v3125, %v3349
        %v3351 = vpop.f32.mrb[0].mxu0
        %3352 = vmatprep.mubr.f32.mxu0 0.0
        %3353 = vmatmul.mubr.f32.gmra.mrb[0].mxu0 %v2865
        %v3354 = vpop.f32.mrb[0].mxu0
        %v3355 = vadd.f32 %v3130, %v3354
        %v3356 = vpop.f32.mrb[0].mxu0
        %3357 = vmatprep.mubr.f32.mxu0 0.0
        %3358 = vmatmul.mubr.f32.gmra.mrb[0].mxu0 %v2867
        %v3359 = vpop.f32.mrb[0].mxu0
        %v3360 = vadd.f32 %v3135, %v3359
        %v3361 = vpop.f32.mrb[0].mxu0
        %3362 = vmatprep.mubr.f32.mxu0 0.0
        %3363 = vmatmul.mubr.f32.gmra.mrb[0].mxu0 %v2870
        %v3364 = vpop.f32.mrb[0].mxu0
        %v3365 = vadd.f32 %v3140, %v3364
        %v3366 = vpop.f32.mrb[0].mxu0
        %3367 = vmatprep.mubr.f32.mxu0 0.0
        %3368 = vmatmul.mubr.f32.gmra.mrb[0].mxu0 %v2872
        %v3369 = vpop.f32.mrb[0].mxu0
        %v3370 = vadd.f32 %v3145, %v3369
        %v3371 = vpop.f32.mrb[0].mxu0
        %3372 = vmatprep.mubr.f32.mxu0 0.0
        %3373 = vmatmul.mubr.f32.gmra.mrb[0].mxu0 %v2875
        %v3374 = vpop.f32.mrb[0].mxu0
        %v3375 = vadd.f32 %v3150, %v3374
        %v3376 = vpop.f32.mrb[0].mxu0
        %3377 = vmatprep.mubr.f32.mxu0 0.0
        %3378 = vmatmul.mubr.f32.gmra.mrb[0].mxu0 %v2877
        %v3379 = vpop.f32.mrb[0].mxu0
        %v3380 = vadd.f32 %v3155, %v3379
        %v3381 = vpop.f32.mrb[0].mxu0
        %3382 = vmatprep.mubr.f32.mxu0 0.0
        %3383 = vmatmul.mubr.f32.gmra.mrb[0].mxu0 %v2880
        %v3384 = vpop.f32.mrb[0].mxu0
        %v3385 = vadd.f32 %v3160, %v3384
        %v3386 = vpop.f32.mrb[0].mxu0
        %3387 = vmatprep.mubr.f32.mxu0 0.0
        %3388 = vmatmul.mubr.f32.gmra.mrb[0].mxu0 %v2882
        %v3389 = vpop.f32.mrb[0].mxu0
        %v3390 = vadd.f32 %v3165, %v3389
        %v3391 = vpop.f32.mrb[0].mxu0
        %3392 = vmatprep.mubr.f32.mxu0 0.0
        %3393 = vmatmul.mubr.f32.gmra.mrb[0].mxu0 %v2885
        %v3394 = vpop.f32.mrb[0].mxu0
        %v3395 = vadd.f32 %v3170, %v3394
        %v3396 = vpop.f32.mrb[0].mxu0
        %3397 = vmatprep.mubr.f32.mxu0 0.0
        %3398 = vmatmul.mubr.f32.gmra.mrb[0].mxu0 %v2887
        %v3399 = vpop.f32.mrb[0].mxu0
        %v3400 = vadd.f32 %v3175, %v3399
        %v3401 = vpop.f32.mrb[0].mxu0
        %3402 = vmatprep.mubr.f32.mxu0 0.0
        %3403 = vmatmul.mubr.f32.gmra.mrb[0].mxu0 %v2890
        %v3404 = vpop.f32.mrb[0].mxu0
        %v3405 = vadd.f32 %v3180, %v3404
        %v3406 = vpop.f32.mrb[0].mxu0
        %3407 = vmatprep.mubr.f32.mxu0 0.0
        %3408 = vmatmul.mubr.f32.gmra.mrb[0].mxu0 %v2892
        %v3409 = vpop.f32.mrb[0].mxu0
        %v3410 = vadd.f32 %v3185, %v3409
        %v3411 = vpop.f32.mrb[0].mxu0
        %3412 = vmatprep.mubr.f32.mxu0 0.0
        %3413 = vmatmul.mubr.f32.gmra.mrb[0].mxu0 %v2895
        %v3414 = vpop.f32.mrb[0].mxu0
        %v3415 = vadd.f32 %v3190, %v3414
        %v3416 = vpop.f32.mrb[0].mxu0
        %3417 = vmatprep.mubr.f32.mxu0 0.0
        %3418 = vmatmul.mubr.f32.gmra.mrb[0].mxu0 %v2897
        %v3419 = vpop.f32.mrb[0].mxu0
        %v3420 = vadd.f32 %v3195, %v3419
        %v3421 = vpop.f32.mrb[0].mxu0
        %3422 = vmatprep.mubr.f32.mxu0 0.0
        %3423 = vmatmul.mubr.f32.gmra.mrb[0].mxu0 %v2900
        %v3424 = vpop.f32.mrb[0].mxu0
        %v3425 = vadd.f32 %v3200, %v3424
        %v3426 = vpop.f32.mrb[0].mxu0
        %3427 = vmatprep.mubr.f32.mxu0 0.0
        %3428 = vmatmul.mubr.f32.gmra.mrb[0].mxu0 %v2902
        %v3429 = vpop.f32.mrb[0].mxu0
        %v3430 = vadd.f32 %v3205, %v3429
        %v3431 = vpop.f32.mrb[0].mxu0
        %3432 = vmatprep.mubr.f32.mxu0 0.0
        %3433 = vmatmul.mubr.f32.gmra.mrb[0].mxu0 %v2905
        %v3434 = vpop.f32.mrb[0].mxu0
        %v3435 = vadd.f32 %v3210, %v3434
        %v3436 = vpop.f32.mrb[0].mxu0
        %3437 = vmatprep.mubr.f32.mxu0 0.0
        %3438 = vmatmul.mubr.f32.gmra.mrb[0].mxu0 %v2907
        %v3439 = vpop.f32.mrb[0].mxu0
        %v3440 = vadd.f32 %v3215, %v3439
        %v3441 = vpop.f32.mrb[0].mxu0
        %3442 = vdwg.mxu0
        %3443 = vmatprep.subr.mxu0 0.0
        %3444 = vmatpush1.msra.mxu0 %v2716
        %3445 = vmatprep.subr.mxu0 0.0
        %3446 = vmatpush1.msra.mxu0 %v2717
        %3447 = vmatprep.subr.mxu0 0.0
        %3448 = vmatpush1.msra.mxu0 %v2718
        %3449 = vmatprep.subr.mxu0 0.0
        %3450 = vmatpush1.msra.mxu0 %v2719
        %3451 = vmatprep.subr.mxu0 0.0
        %3452 = vmatpush1.msra.mxu0 %v2720
        %3453 = vmatprep.subr.mxu0 0.0
        %3454 = vmatpush1.msra.mxu0 %v2721
        %3455 = vmatprep.subr.mxu0 0.0
        %3456 = vmatpush1.msra.mxu0 %v2722
        %3457 = vmatprep.subr.mxu0 0.0
        %3458 = vmatpush1.msra.mxu0 %v2723
        %3459 = vmatprep.subr.mxu0 0.0
        %3460 = vmatpush1.msra.mxu0 %v2724
        %3461 = vmatprep.subr.mxu0 0.0
        %3462 = vmatpush1.msra.mxu0 %v2725
        %3463 = vmatprep.subr.mxu0 0.0
        %3464 = vmatpush1.msra.mxu0 %v2726
        %3465 = vmatprep.subr.mxu0 0.0
        %3466 = vmatpush1.msra.mxu0 %v2727
        %3467 = vmatprep.subr.mxu0 0.0
        %3468 = vmatpush1.msra.mxu0 %v2728
        %3469 = vmatprep.subr.mxu0 0.0
        %3470 = vmatpush1.msra.mxu0 %v2729
        %3471 = vmatprep.subr.mxu0 0.0
        %3472 = vmatpush1.msra.mxu0 %v2730
        %3473 = vmatprep.subr.mxu0 0.0
        %3474 = vmatpush1.msra.mxu0 %v2731
        %3475 = vmatprep.subr.mxu0 0.0
        %3476 = vmatpush1.msra.mxu0 %v2732
        %3477 = vmatprep.subr.mxu0 0.0
        %3478 = vmatpush1.msra.mxu0 %v2733
        %3479 = vmatprep.subr.mxu0 0.0
        %3480 = vmatpush1.msra.mxu0 %v2734
        %3481 = vmatprep.subr.mxu0 0.0
        %3482 = vmatpush1.msra.mxu0 %v2735
        %3483 = vmatprep.subr.mxu0 0.0
        %3484 = vmatpush1.msra.mxu0 %v2736
        %3485 = vmatprep.subr.mxu0 0.0
        %3486 = vmatpush1.msra.mxu0 %v2737
        %3487 = vmatprep.subr.mxu0 0.0
        %3488 = vmatpush1.msra.mxu0 %v2738
        %3489 = vmatprep.subr.mxu0 0.0
        %3490 = vmatpush1.msra.mxu0 %v2739
        %3491 = vmatprep.subr.mxu0 0.0
        %3492 = vmatpush1.msra.mxu0 %v2740
        %3493 = vmatprep.subr.mxu0 0.0
        %3494 = vmatpush1.msra.mxu0 %v2741
        %3495 = vmatprep.subr.mxu0 0.0
        %3496 = vmatpush1.msra.mxu0 %v2742
        %3497 = vmatprep.subr.mxu0 0.0
        %3498 = vmatpush1.msra.mxu0 %v2743
        %3499 = vmatprep.subr.mxu0 0.0
        %3500 = vmatpush1.msra.mxu0 %v2744
        %3501 = vmatprep.subr.mxu0 0.0
        %3502 = vmatpush1.msra.mxu0 %v2745
        %3503 = vmatprep.subr.mxu0 0.0
        %3504 = vmatpush1.msra.mxu0 %v2746
        %3505 = vmatprep.subr.mxu0 0.0
        %3506 = vmatpush1.msra.mxu0 %v2747
        %3507 = vmatprep.mubr.f32.mxu0 %v2665
        %3508 = vmatmul.mubr.f32.gmra.mrb[0].mxu0 %v2662
        %v3509 = vpop.f32.mrb[0].mxu0
        %v3510 = vadd.f32 %v3285, %v3509
        %v3511 = vpop.f32.mrb[0].mxu0
        %3512 = vmatprep.mubr.f32.mxu0 %v2666
        %3513 = vmatmul.mubr.f32.gmra.mrb[0].mxu0 %v2663
        %v3514 = vpop.f32.mrb[0].mxu0
        %v3515 = vadd.f32 %v3290, %v3514
        %v3516 = vpop.f32.mrb[0].mxu0
        %3517 = vmatprep.mubr.f32.mxu0 %v2668
        %3518 = vmatmul.mubr.f32.gmra.mrb[0].mxu0 %v2665
        %v3519 = vpop.f32.mrb[0].mxu0
        %v3520 = vadd.f32 %v3295, %v3519
        %v3521 = vpop.f32.mrb[0].mxu0
        %3522 = vmatprep.mubr.f32.mxu0 %v2669
        %3523 = vmatmul.mubr.f32.gmra.mrb[0].mxu0 %v2666
        %v3524 = vpop.f32.mrb[0].mxu0
        %v3525 = vadd.f32 %v3300, %v3524
        %v3526 = vpop.f32.mrb[0].mxu0
        %3527 = vmatprep.mubr.f32.mxu0 %v2671
        %3528 = vmatmul.mubr.f32.gmra.mrb[0].mxu0 %v2668
        %v3529 = vpop.f32.mrb[0].mxu0
        %v3530 = vadd.f32 %v3305, %v3529
        %v3531 = vpop.f32.mrb[0].mxu0
        %3532 = vmatprep.mubr.f32.mxu0 %v2672
        %3533 = vmatmul.mubr.f32.gmra.mrb[0].mxu0 %v2669
        %v3534 = vpop.f32.mrb[0].mxu0
        %v3535 = vadd.f32 %v3310, %v3534
        %v3536 = vpop.f32.mrb[0].mxu0
        %3537 = vmatprep.mubr.f32.mxu0 %v2674
        %3538 = vmatmul.mubr.f32.gmra.mrb[0].mxu0 %v2671
        %v3539 = vpop.f32.mrb[0].mxu0
        %v3540 = vadd.f32 %v3315, %v3539
        %v3541 = vpop.f32.mrb[0].mxu0
        %3542 = vmatprep.mubr.f32.mxu0 %v2675
        %3543 = vmatmul.mubr.f32.gmra.mrb[0].mxu0 %v2672
        %v3544 = vpop.f32.mrb[0].mxu0
        %v3545 = vadd.f32 %v3320, %v3544
        %v3546 = vpop.f32.mrb[0].mxu0
        %3547 = vmatprep.mubr.f32.mxu0 %v2677
        %3548 = vmatmul.mubr.f32.gmra.mrb[0].mxu0 %v2674
        %v3549 = vpop.f32.mrb[0].mxu0
        %v3550 = vadd.f32 %v3325, %v3549
        %v3551 = vpop.f32.mrb[0].mxu0
        %3552 = vmatprep.mubr.f32.mxu0 %v2678
        %3553 = vmatmul.mubr.f32.gmra.mrb[0].mxu0 %v2675
        %v3554 = vpop.f32.mrb[0].mxu0
        %v3555 = vadd.f32 %v3330, %v3554
        %v3556 = vpop.f32.mrb[0].mxu0
        %3557 = vmatprep.mubr.f32.mxu0 %v2680
        %3558 = vmatmul.mubr.f32.gmra.mrb[0].mxu0 %v2677
        %v3559 = vpop.f32.mrb[0].mxu0
        %v3560 = vadd.f32 %v3335, %v3559
        %v3561 = vpop.f32.mrb[0].mxu0
        %3562 = vmatprep.mubr.f32.mxu0 %v2681
        %3563 = vmatmul.mubr.f32.gmra.mrb[0].mxu0 %v2678
        %v3564 = vpop.f32.mrb[0].mxu0
        %v3565 = vadd.f32 %v3340, %v3564
        %v3566 = vpop.f32.mrb[0].mxu0
        %3567 = vmatprep.mubr.f32.mxu0 %v2683
        %3568 = vmatmul.mubr.f32.gmra.mrb[0].mxu0 %v2680
        %v3569 = vpop.f32.mrb[0].mxu0
        %v3570 = vadd.f32 %v3345, %v3569
        %v3571 = vpop.f32.mrb[0].mxu0
        %3572 = vmatprep.mubr.f32.mxu0 %v2684
        %3573 = vmatmul.mubr.f32.gmra.mrb[0].mxu0 %v2681
        %v3574 = vpop.f32.mrb[0].mxu0
        %v3575 = vadd.f32 %v3350, %v3574
        %v3576 = vpop.f32.mrb[0].mxu0
        %3577 = vmatprep.mubr.f32.mxu0 %v2686
        %3578 = vmatmul.mubr.f32.gmra.mrb[0].mxu0 %v2683
        %v3579 = vpop.f32.mrb[0].mxu0
        %v3580 = vadd.f32 %v3355, %v3579
        %v3581 = vpop.f32.mrb[0].mxu0
        %3582 = vmatprep.mubr.f32.mxu0 %v2687
        %3583 = vmatmul.mubr.f32.gmra.mrb[0].mxu0 %v2684
        %v3584 = vpop.f32.mrb[0].mxu0
        %v3585 = vadd.f32 %v3360, %v3584
        %v3586 = vpop.f32.mrb[0].mxu0
        %3587 = vmatprep.mubr.f32.mxu0 %v2689
        %3588 = vmatmul.mubr.f32.gmra.mrb[0].mxu0 %v2686
        %v3589 = vpop.f32.mrb[0].mxu0
        %v3590 = vadd.f32 %v3365, %v3589
        %v3591 = vpop.f32.mrb[0].mxu0
        %3592 = vmatprep.mubr.f32.mxu0 %v2690
        %3593 = vmatmul.mubr.f32.gmra.mrb[0].mxu0 %v2687
        %v3594 = vpop.f32.mrb[0].mxu0
        %v3595 = vadd.f32 %v3370, %v3594
        %v3596 = vpop.f32.mrb[0].mxu0
        %3597 = vmatprep.mubr.f32.mxu0 %v2692
        %3598 = vmatmul.mubr.f32.gmra.mrb[0].mxu0 %v2689
        %v3599 = vpop.f32.mrb[0].mxu0
        %v3600 = vadd.f32 %v3375, %v3599
        %v3601 = vpop.f32.mrb[0].mxu0
        %3602 = vmatprep.mubr.f32.mxu0 %v2693
        %3603 = vmatmul.mubr.f32.gmra.mrb[0].mxu0 %v2690
        %v3604 = vpop.f32.mrb[0].mxu0
        %v3605 = vadd.f32 %v3380, %v3604
        %v3606 = vpop.f32.mrb[0].mxu0
        %3607 = vmatprep.mubr.f32.mxu0 %v2695
        %3608 = vmatmul.mubr.f32.gmra.mrb[0].mxu0 %v2692
        %v3609 = vpop.f32.mrb[0].mxu0
        %v3610 = vadd.f32 %v3385, %v3609
        %v3611 = vpop.f32.mrb[0].mxu0
        %3612 = vmatprep.mubr.f32.mxu0 %v2696
        %3613 = vmatmul.mubr.f32.gmra.mrb[0].mxu0 %v2693
        %v3614 = vpop.f32.mrb[0].mxu0
        %v3615 = vadd.f32 %v3390, %v3614
        %v3616 = vpop.f32.mrb[0].mxu0
        %3617 = vmatprep.mubr.f32.mxu0 %v2698
        %3618 = vmatmul.mubr.f32.gmra.mrb[0].mxu0 %v2695
        %v3619 = vpop.f32.mrb[0].mxu0
        %v3620 = vadd.f32 %v3395, %v3619
        %v3621 = vpop.f32.mrb[0].mxu0
        %3622 = vmatprep.mubr.f32.mxu0 %v2699
        %3623 = vmatmul.mubr.f32.gmra.mrb[0].mxu0 %v2696
        %v3624 = vpop.f32.mrb[0].mxu0
        %v3625 = vadd.f32 %v3400, %v3624
        %v3626 = vpop.f32.mrb[0].mxu0
        %3627 = vmatprep.mubr.f32.mxu0 %v2701
        %3628 = vmatmul.mubr.f32.gmra.mrb[0].mxu0 %v2698
        %v3629 = vpop.f32.mrb[0].mxu0
        %v3630 = vadd.f32 %v3405, %v3629
        %v3631 = vpop.f32.mrb[0].mxu0
        %3632 = vmatprep.mubr.f32.mxu0 %v2702
        %3633 = vmatmul.mubr.f32.gmra.mrb[0].mxu0 %v2699
        %v3634 = vpop.f32.mrb[0].mxu0
        %v3635 = vadd.f32 %v3410, %v3634
        %v3636 = vpop.f32.mrb[0].mxu0
        %3637 = vmatprep.mubr.f32.mxu0 %v2704
        %3638 = vmatmul.mubr.f32.gmra.mrb[0].mxu0 %v2701
        %v3639 = vpop.f32.mrb[0].mxu0
        %v3640 = vadd.f32 %v3415, %v3639
        %v3641 = vpop.f32.mrb[0].mxu0
        %3642 = vmatprep.mubr.f32.mxu0 %v2705
        %3643 = vmatmul.mubr.f32.gmra.mrb[0].mxu0 %v2702
        %v3644 = vpop.f32.mrb[0].mxu0
        %v3645 = vadd.f32 %v3420, %v3644
        %v3646 = vpop.f32.mrb[0].mxu0
        %3647 = vmatprep.mubr.f32.mxu0 %v2707
        %3648 = vmatmul.mubr.f32.gmra.mrb[0].mxu0 %v2704
        %v3649 = vpop.f32.mrb[0].mxu0
        %v3650 = vadd.f32 %v3425, %v3649
        %v3651 = vpop.f32.mrb[0].mxu0
        %3652 = vmatprep.mubr.f32.mxu0 %v2708
        %3653 = vmatmul.mubr.f32.gmra.mrb[0].mxu0 %v2705
        %v3654 = vpop.f32.mrb[0].mxu0
        %v3655 = vadd.f32 %v3430, %v3654
        %v3656 = vpop.f32.mrb[0].mxu0
        %3657 = vmatprep.mubr.f32.mxu0 %v2710
        %3658 = vmatmul.mubr.f32.gmra.mrb[0].mxu0 %v2707
        %v3659 = vpop.f32.mrb[0].mxu0
        %v3660 = vadd.f32 %v3435, %v3659
        %v3661 = vpop.f32.mrb[0].mxu0
        %3662 = vmatprep.mubr.f32.mxu0 %v2711
        %3663 = vmatmul.mubr.f32.gmra.mrb[0].mxu0 %v2708
        %v3664 = vpop.f32.mrb[0].mxu0
        %v3665 = vadd.f32 %v3440, %v3664
        %v3666 = vpop.f32.mrb[0].mxu0
        %3667 = vdwg.mxu0
        %3668 = vmatprep.subr.mxu0 0.0
        %3669 = vmatpush1.msra.mxu0 %v2748
        %3670 = vmatprep.subr.mxu0 0.0
        %3671 = vmatpush1.msra.mxu0 %v2749
        %3672 = vmatprep.subr.mxu0 0.0
        %3673 = vmatpush1.msra.mxu0 %v2750
        %3674 = vmatprep.subr.mxu0 0.0
        %3675 = vmatpush1.msra.mxu0 %v2751
        %3676 = vmatprep.subr.mxu0 0.0
        %3677 = vmatpush1.msra.mxu0 %v2752
        %3678 = vmatprep.subr.mxu0 0.0
        %3679 = vmatpush1.msra.mxu0 %v2753
        %3680 = vmatprep.subr.mxu0 0.0
        %3681 = vmatpush1.msra.mxu0 %v2754
        %3682 = vmatprep.subr.mxu0 0.0
        %3683 = vmatpush1.msra.mxu0 %v2755
        %3684 = vmatprep.subr.mxu0 0.0
        %3685 = vmatpush1.msra.mxu0 %v2756
        %3686 = vmatprep.subr.mxu0 0.0
        %3687 = vmatpush1.msra.mxu0 %v2757
        %3688 = vmatprep.subr.mxu0 0.0
        %3689 = vmatpush1.msra.mxu0 %v2758
        %3690 = vmatprep.subr.mxu0 0.0
        %3691 = vmatpush1.msra.mxu0 %v2759
        %3692 = vmatprep.subr.mxu0 0.0
        %3693 = vmatpush1.msra.mxu0 %v2760
        %3694 = vmatprep.subr.mxu0 0.0
        %3695 = vmatpush1.msra.mxu0 %v2761
        %3696 = vmatprep.subr.mxu0 0.0
        %3697 = vmatpush1.msra.mxu0 %v2762
        %3698 = vmatprep.subr.mxu0 0.0
        %3699 = vmatpush1.msra.mxu0 %v2763
        %3700 = vmatprep.subr.mxu0 0.0
        %3701 = vmatpush1.msra.mxu0 0.0
        %3702 = vmatprep.subr.mxu0 0.0
        %3703 = vmatpush1.msra.mxu0 0.0
        %3704 = vmatprep.subr.mxu0 0.0
        %3705 = vmatpush1.msra.mxu0 0.0
        %3706 = vmatprep.subr.mxu0 0.0
        %3707 = vmatpush1.msra.mxu0 0.0
        %3708 = vmatprep.subr.mxu0 0.0
        %3709 = vmatpush1.msra.mxu0 0.0
        %3710 = vmatprep.subr.mxu0 0.0
        %3711 = vmatpush1.msra.mxu0 0.0
        %3712 = vmatprep.subr.mxu0 0.0
        %3713 = vmatpush1.msra.mxu0 0.0
        %3714 = vmatprep.subr.mxu0 0.0
        %3715 = vmatpush1.msra.mxu0 0.0
        %3716 = vmatprep.subr.mxu0 0.0
        %3717 = vmatpush1.msra.mxu0 0.0
        %3718 = vmatprep.subr.mxu0 0.0
        %3719 = vmatpush1.msra.mxu0 0.0
        %3720 = vmatprep.subr.mxu0 0.0
        %3721 = vmatpush1.msra.mxu0 0.0
        %3722 = vmatprep.subr.mxu0 0.0
        %3723 = vmatpush1.msra.mxu0 0.0
        %3724 = vmatprep.subr.mxu0 0.0
        %3725 = vmatpush1.msra.mxu0 0.0
        %3726 = vmatprep.subr.mxu0 0.0
        %3727 = vmatpush1.msra.mxu0 0.0
        %3728 = vmatprep.subr.mxu0 0.0
        %3729 = vmatpush1.msra.mxu0 0.0
        %3730 = vmatprep.subr.mxu0 0.0
        %3731 = vmatpush1.msra.mxu0 0.0
        %3732 = vmatprep.mubr.f32.mxu0 0.0
        %3733 = vmatmul.mubr.f32.gmra.mrb[0].mxu0 %v2668
        %v3734 = vpop.f32.mrb[0].mxu0
        %v3735 = vadd.f32 %v3510, %v3734
        %v3736 = vpop.f32.mrb[0].mxu0
        %3737 = vmatprep.mubr.f32.mxu0 0.0
        %3738 = vmatmul.mubr.f32.gmra.mrb[0].mxu0 %v2669
        %v3739 = vpop.f32.mrb[0].mxu0
        %v3740 = vadd.f32 %v3515, %v3739
        %v3741 = vpop.f32.mrb[0].mxu0
        %3742 = vmatprep.mubr.f32.mxu0 0.0
        %3743 = vmatmul.mubr.f32.gmra.mrb[0].mxu0 %v2671
        %v3744 = vpop.f32.mrb[0].mxu0
        %v3745 = vadd.f32 %v3520, %v3744
        %v3746 = vpop.f32.mrb[0].mxu0
        %3747 = vmatprep.mubr.f32.mxu0 0.0
        %3748 = vmatmul.mubr.f32.gmra.mrb[0].mxu0 %v2672
        %v3749 = vpop.f32.mrb[0].mxu0
        %v3750 = vadd.f32 %v3525, %v3749
        %v3751 = vpop.f32.mrb[0].mxu0
        %3752 = vmatprep.mubr.f32.mxu0 0.0
        %3753 = vmatmul.mubr.f32.gmra.mrb[0].mxu0 %v2674
        %v3754 = vpop.f32.mrb[0].mxu0
        %v3755 = vadd.f32 %v3530, %v3754
        %v3756 = vpop.f32.mrb[0].mxu0
        %3757 = vmatprep.mubr.f32.mxu0 0.0
        %3758 = vmatmul.mubr.f32.gmra.mrb[0].mxu0 %v2675
        %v3759 = vpop.f32.mrb[0].mxu0
        %v3760 = vadd.f32 %v3535, %v3759
        %v3761 = vpop.f32.mrb[0].mxu0
        %3762 = vmatprep.mubr.f32.mxu0 0.0
        %3763 = vmatmul.mubr.f32.gmra.mrb[0].mxu0 %v2677
        %v3764 = vpop.f32.mrb[0].mxu0
        %v3765 = vadd.f32 %v3540, %v3764
        %v3766 = vpop.f32.mrb[0].mxu0
        %3767 = vmatprep.mubr.f32.mxu0 0.0
        %3768 = vmatmul.mubr.f32.gmra.mrb[0].mxu0 %v2678
        %v3769 = vpop.f32.mrb[0].mxu0
        %v3770 = vadd.f32 %v3545, %v3769
        %v3771 = vpop.f32.mrb[0].mxu0
        %3772 = vmatprep.mubr.f32.mxu0 0.0
        %3773 = vmatmul.mubr.f32.gmra.mrb[0].mxu0 %v2680
        %v3774 = vpop.f32.mrb[0].mxu0
        %v3775 = vadd.f32 %v3550, %v3774
        %v3776 = vpop.f32.mrb[0].mxu0
        %3777 = vmatprep.mubr.f32.mxu0 0.0
        %3778 = vmatmul.mubr.f32.gmra.mrb[0].mxu0 %v2681
        %v3779 = vpop.f32.mrb[0].mxu0
        %v3780 = vadd.f32 %v3555, %v3779
        %v3781 = vpop.f32.mrb[0].mxu0
        %3782 = vmatprep.mubr.f32.mxu0 0.0
        %3783 = vmatmul.mubr.f32.gmra.mrb[0].mxu0 %v2683
        %v3784 = vpop.f32.mrb[0].mxu0
        %v3785 = vadd.f32 %v3560, %v3784
        %v3786 = vpop.f32.mrb[0].mxu0
        %3787 = vmatprep.mubr.f32.mxu0 0.0
        %3788 = vmatmul.mubr.f32.gmra.mrb[0].mxu0 %v2684
        %v3789 = vpop.f32.mrb[0].mxu0
        %v3790 = vadd.f32 %v3565, %v3789
        %v3791 = vpop.f32.mrb[0].mxu0
        %3792 = vmatprep.mubr.f32.mxu0 0.0
        %3793 = vmatmul.mubr.f32.gmra.mrb[0].mxu0 %v2686
        %v3794 = vpop.f32.mrb[0].mxu0
        %v3795 = vadd.f32 %v3570, %v3794
        %v3796 = vpop.f32.mrb[0].mxu0
        %3797 = vmatprep.mubr.f32.mxu0 0.0
        %3798 = vmatmul.mubr.f32.gmra.mrb[0].mxu0 %v2687
        %v3799 = vpop.f32.mrb[0].mxu0
        %v3800 = vadd.f32 %v3575, %v3799
        %v3801 = vpop.f32.mrb[0].mxu0
        %3802 = vmatprep.mubr.f32.mxu0 0.0
        %3803 = vmatmul.mubr.f32.gmra.mrb[0].mxu0 %v2689
        %v3804 = vpop.f32.mrb[0].mxu0
        %v3805 = vadd.f32 %v3580, %v3804
        %v3806 = vpop.f32.mrb[0].mxu0
        %3807 = vmatprep.mubr.f32.mxu0 0.0
        %3808 = vmatmul.mubr.f32.gmra.mrb[0].mxu0 %v2690
        %v3809 = vpop.f32.mrb[0].mxu0
        %v3810 = vadd.f32 %v3585, %v3809
        %v3811 = vpop.f32.mrb[0].mxu0
        %3812 = vmatprep.mubr.f32.mxu0 0.0
        %3813 = vmatmul.mubr.f32.gmra.mrb[0].mxu0 %v2692
        %v3814 = vpop.f32.mrb[0].mxu0
        %v3815 = vadd.f32 %v3590, %v3814
        %v3816 = vpop.f32.mrb[0].mxu0
        %3817 = vmatprep.mubr.f32.mxu0 0.0
        %3818 = vmatmul.mubr.f32.gmra.mrb[0].mxu0 %v2693
        %v3819 = vpop.f32.mrb[0].mxu0
        %v3820 = vadd.f32 %v3595, %v3819
        %v3821 = vpop.f32.mrb[0].mxu0
        %3822 = vmatprep.mubr.f32.mxu0 0.0
        %3823 = vmatmul.mubr.f32.gmra.mrb[0].mxu0 %v2695
        %v3824 = vpop.f32.mrb[0].mxu0
        %v3825 = vadd.f32 %v3600, %v3824
        %v3826 = vpop.f32.mrb[0].mxu0
        %3827 = vmatprep.mubr.f32.mxu0 0.0
        %3828 = vmatmul.mubr.f32.gmra.mrb[0].mxu0 %v2696
        %v3829 = vpop.f32.mrb[0].mxu0
        %v3830 = vadd.f32 %v3605, %v3829
        %v3831 = vpop.f32.mrb[0].mxu0
        %3832 = vmatprep.mubr.f32.mxu0 0.0
        %3833 = vmatmul.mubr.f32.gmra.mrb[0].mxu0 %v2698
        %v3834 = vpop.f32.mrb[0].mxu0
        %v3835 = vadd.f32 %v3610, %v3834
        %v3836 = vpop.f32.mrb[0].mxu0
        %3837 = vmatprep.mubr.f32.mxu0 0.0
        %3838 = vmatmul.mubr.f32.gmra.mrb[0].mxu0 %v2699
        %v3839 = vpop.f32.mrb[0].mxu0
        %v3840 = vadd.f32 %v3615, %v3839
        %v3841 = vpop.f32.mrb[0].mxu0
        %3842 = vmatprep.mubr.f32.mxu0 0.0
        %3843 = vmatmul.mubr.f32.gmra.mrb[0].mxu0 %v2701
        %v3844 = vpop.f32.mrb[0].mxu0
        %v3845 = vadd.f32 %v3620, %v3844
        %v3846 = vpop.f32.mrb[0].mxu0
        %3847 = vmatprep.mubr.f32.mxu0 0.0
        %3848 = vmatmul.mubr.f32.gmra.mrb[0].mxu0 %v2702
        %v3849 = vpop.f32.mrb[0].mxu0
        %v3850 = vadd.f32 %v3625, %v3849
        %v3851 = vpop.f32.mrb[0].mxu0
        %3852 = vmatprep.mubr.f32.mxu0 0.0
        %3853 = vmatmul.mubr.f32.gmra.mrb[0].mxu0 %v2704
        %v3854 = vpop.f32.mrb[0].mxu0
        %v3855 = vadd.f32 %v3630, %v3854
        %v3856 = vpop.f32.mrb[0].mxu0
        %3857 = vmatprep.mubr.f32.mxu0 0.0
        %3858 = vmatmul.mubr.f32.gmra.mrb[0].mxu0 %v2705
        %v3859 = vpop.f32.mrb[0].mxu0
        %v3860 = vadd.f32 %v3635, %v3859
        %v3861 = vpop.f32.mrb[0].mxu0
        %3862 = vmatprep.mubr.f32.mxu0 0.0
        %3863 = vmatmul.mubr.f32.gmra.mrb[0].mxu0 %v2707
        %v3864 = vpop.f32.mrb[0].mxu0
        %v3865 = vadd.f32 %v3640, %v3864
        %v3866 = vpop.f32.mrb[0].mxu0
        %3867 = vmatprep.mubr.f32.mxu0 0.0
        %3868 = vmatmul.mubr.f32.gmra.mrb[0].mxu0 %v2708
        %v3869 = vpop.f32.mrb[0].mxu0
        %v3870 = vadd.f32 %v3645, %v3869
        %v3871 = vpop.f32.mrb[0].mxu0
        %3872 = vmatprep.mubr.f32.mxu0 0.0
        %3873 = vmatmul.mubr.f32.gmra.mrb[0].mxu0 %v2710
        %v3874 = vpop.f32.mrb[0].mxu0
        %v3875 = vadd.f32 %v3650, %v3874
        %v3876 = vpop.f32.mrb[0].mxu0
        %3877 = vmatprep.mubr.f32.mxu0 0.0
        %3878 = vmatmul.mubr.f32.gmra.mrb[0].mxu0 %v2711
        %v3879 = vpop.f32.mrb[0].mxu0
        %v3880 = vadd.f32 %v3655, %v3879
        %v3881 = vpop.f32.mrb[0].mxu0
        %3882 = vmatprep.mubr.f32.mxu0 0.0
        %3883 = vmatmul.mubr.f32.gmra.mrb[0].mxu0 %v2713
        %v3884 = vpop.f32.mrb[0].mxu0
        %v3885 = vadd.f32 %v3660, %v3884
        %v3886 = vpop.f32.mrb[0].mxu0
        %3887 = vmatprep.mubr.f32.mxu0 0.0
        %3888 = vmatmul.mubr.f32.gmra.mrb[0].mxu0 %v2714
        %v3889 = vpop.f32.mrb[0].mxu0
        %v3890 = vadd.f32 %v3665, %v3889
        %v3891 = vpop.f32.mrb[0].mxu0
        %3892 = vdwg.mxu0
        %v3893 = vrot.slane %v2662, 2
        %v3894 = vrot.slane %v2663, 2
        %v3895 = vsel %vm1592, %v3893, %v3894
        %v3896 = vrot.slane %v2665, 2
        %v3897 = vrot.slane %v2666, 2
        %v3898 = vsel %vm1592, %v3896, %v3897
        %v3899 = vrot.slane %v2668, 2
        %v3900 = vrot.slane %v2669, 2
        %v3901 = vsel %vm1592, %v3899, %v3900
        %v3902 = vrot.slane %v2664, 2
        %v3903 = vsel %vm1592, %v3894, %v3902
        %v3904 = vrot.slane %v2667, 2
        %v3905 = vsel %vm1592, %v3897, %v3904
        %v3906 = vrot.slane %v2670, 2
        %v3907 = vsel %vm1592, %v3900, %v3906
        %v3908 = vrot.slane %v2671, 2
        %v3909 = vrot.slane %v2672, 2
        %v3910 = vsel %vm1592, %v3908, %v3909
        %v3911 = vrot.slane %v2673, 2
        %v3912 = vsel %vm1592, %v3909, %v3911
        %v3913 = vrot.slane %v2674, 2
        %v3914 = vrot.slane %v2675, 2
        %v3915 = vsel %vm1592, %v3913, %v3914
        %v3916 = vrot.slane %v2676, 2
        %v3917 = vsel %vm1592, %v3914, %v3916
        %v3918 = vrot.slane %v2677, 2
        %v3919 = vrot.slane %v2678, 2
        %v3920 = vsel %vm1592, %v3918, %v3919
        %v3921 = vrot.slane %v2679, 2
        %v3922 = vsel %vm1592, %v3919, %v3921
        %v3923 = vrot.slane %v2680, 2
        %v3924 = vrot.slane %v2681, 2
        %v3925 = vsel %vm1592, %v3923, %v3924
        %v3926 = vrot.slane %v2682, 2
        %v3927 = vsel %vm1592, %v3924, %v3926
        %v3928 = vrot.slane %v2683, 2
        %v3929 = vrot.slane %v2684, 2
        %v3930 = vsel %vm1592, %v3928, %v3929
        %v3931 = vrot.slane %v2685, 2
        %v3932 = vsel %vm1592, %v3929, %v3931
        %v3933 = vrot.slane %v2686, 2
        %v3934 = vrot.slane %v2687, 2
        %v3935 = vsel %vm1592, %v3933, %v3934
        %v3936 = vrot.slane %v2688, 2
        %v3937 = vsel %vm1592, %v3934, %v3936
        %v3938 = vrot.slane %v2689, 2
        %v3939 = vrot.slane %v2690, 2
        %v3940 = vsel %vm1592, %v3938, %v3939
        %v3941 = vrot.slane %v2691, 2
        %v3942 = vsel %vm1592, %v3939, %v3941
        %v3943 = vrot.slane %v2692, 2
        %v3944 = vrot.slane %v2693, 2
        %v3945 = vsel %vm1592, %v3943, %v3944
        %v3946 = vrot.slane %v2694, 2
        %v3947 = vsel %vm1592, %v3944, %v3946
        %v3948 = vrot.slane %v2695, 2
        %v3949 = vrot.slane %v2696, 2
        %v3950 = vsel %vm1592, %v3948, %v3949
        %v3951 = vrot.slane %v2697, 2
        %v3952 = vsel %vm1592, %v3949, %v3951
        %v3953 = vrot.slane %v2698, 2
        %v3954 = vrot.slane %v2699, 2
        %v3955 = vsel %vm1592, %v3953, %v3954
        %v3956 = vrot.slane %v2700, 2
        %v3957 = vsel %vm1592, %v3954, %v3956
        %v3958 = vrot.slane %v2701, 2
        %v3959 = vrot.slane %v2702, 2
        %v3960 = vsel %vm1592, %v3958, %v3959
        %v3961 = vrot.slane %v2703, 2
        %v3962 = vsel %vm1592, %v3959, %v3961
        %v3963 = vrot.slane %v2704, 2
        %v3964 = vrot.slane %v2705, 2
        %v3965 = vsel %vm1592, %v3963, %v3964
        %v3966 = vrot.slane %v2706, 2
        %v3967 = vsel %vm1592, %v3964, %v3966
        %v3968 = vrot.slane %v2707, 2
        %v3969 = vrot.slane %v2708, 2
        %v3970 = vsel %vm1592, %v3968, %v3969
        %v3971 = vrot.slane %v2709, 2
        %v3972 = vsel %vm1592, %v3969, %v3971
        %v3973 = vrot.slane %v2710, 2
        %v3974 = vrot.slane %v2711, 2
        %v3975 = vsel %vm1592, %v3973, %v3974
        %v3976 = vrot.slane %v2712, 2
        %v3977 = vsel %vm1592, %v3974, %v3976
        %v3978 = vrot.slane %v2713, 2
        %v3979 = vrot.slane %v2714, 2
        %v3980 = vsel %vm1592, %v3978, %v3979
        %v3981 = vrot.slane %v2715, 2
        %v3982 = vsel %vm1592, %v3979, %v3981
        %s4019 = scalar_lea.vmem [#allocation9], 768
        %v4020 = vld [vmem:[%s4019] sm:$0xff]
        %v4021 = vld [vmem:[%s4019 + $0x8] sm:$0xff]
        %v4022 = vld [vmem:[%s4019 + $0x10] sm:$0xff]
        %v4023 = vld [vmem:[%s4019 + $0x18] sm:$0xff]
        %v4024 = vld [vmem:[%s4019 + $0x20] sm:$0xff]
        %v4025 = vld [vmem:[%s4019 + $0x28] sm:$0xff]
        %v4026 = vld [vmem:[%s4019 + $0x30] sm:$0xff]
        %v4027 = vld [vmem:[%s4019 + $0x38] sm:$0xff]
        %v4028 = vld [vmem:[%s4019 + $0x40] sm:$0xff]
        %v4029 = vld [vmem:[%s4019 + $0x48] sm:$0xff]
        %v4030 = vld [vmem:[%s4019 + $0x50] sm:$0xff]
        %v4031 = vld [vmem:[%s4019 + $0x58] sm:$0xff]
        %v4032 = vld [vmem:[%s4019 + $0x60] sm:$0xff]
        %v4033 = vld [vmem:[%s4019 + $0x68] sm:$0xff]
        %v4034 = vld [vmem:[%s4019 + $0x70] sm:$0xff]
        %v4035 = vld [vmem:[%s4019 + $0x78] sm:$0xff]
        %v4036 = vld [vmem:[%s4019 + $0x80] sm:$0xff]
        %v4037 = vld [vmem:[%s4019 + $0x88] sm:$0xff]
        %v4038 = vld [vmem:[%s4019 + $0x90] sm:$0xff]
        %v4039 = vld [vmem:[%s4019 + $0x98] sm:$0xff]
        %v4040 = vld [vmem:[%s4019 + $0xa0] sm:$0xff]
        %v4041 = vld [vmem:[%s4019 + $0xa8] sm:$0xff]
        %v4042 = vld [vmem:[%s4019 + $0xb0] sm:$0xff]
        %v4043 = vld [vmem:[%s4019 + $0xb8] sm:$0xff]
        %v4044 = vld [vmem:[%s4019 + $0xc0] sm:$0xff]
        %v4045 = vld [vmem:[%s4019 + $0xc8] sm:$0xff]
        %v4046 = vld [vmem:[%s4019 + $0xd0] sm:$0xff]
        %v4047 = vld [vmem:[%s4019 + $0xd8] sm:$0xff]
        %v4048 = vld [vmem:[%s4019 + $0xe0] sm:$0xff]
        %v4049 = vld [vmem:[%s4019 + $0xe8] sm:$0xff]
        %v4050 = vld [vmem:[%s4019 + $0xf0] sm:$0xff]
        %v4051 = vld [vmem:[%s4019 + $0xf8] sm:$0xff]
        %v4052 = vld [vmem:[%s4019 + $0x100] sm:$0xff]
        %v4053 = vld [vmem:[%s4019 + $0x108] sm:$0xff]
        %v4054 = vld [vmem:[%s4019 + $0x110] sm:$0xff]
        %v4055 = vld [vmem:[%s4019 + $0x118] sm:$0xff]
        %v4056 = vld [vmem:[%s4019 + $0x120] sm:$0xff]
        %v4057 = vld [vmem:[%s4019 + $0x128] sm:$0xff]
        %v4058 = vld [vmem:[%s4019 + $0x130] sm:$0xff]
        %v4059 = vld [vmem:[%s4019 + $0x138] sm:$0xff]
        %v4060 = vld [vmem:[%s4019 + $0x140] sm:$0xff]
        %v4061 = vld [vmem:[%s4019 + $0x148] sm:$0xff]
        %v4062 = vld [vmem:[%s4019 + $0x150] sm:$0xff]
        %v4063 = vld [vmem:[%s4019 + $0x158] sm:$0xff]
        %v4064 = vld [vmem:[%s4019 + $0x160] sm:$0xff]
        %v4065 = vld [vmem:[%s4019 + $0x168] sm:$0xff]
        %v4066 = vld [vmem:[%s4019 + $0x170] sm:$0xff]
        %v4067 = vld [vmem:[%s4019 + $0x178] sm:$0xff]
        %4068 = vmatprep.subr.mxu0 0.0
        %4069 = vmatpush1.msra.mxu0 %v4020
        %4070 = vmatprep.subr.mxu0 0.0
        %4071 = vmatpush1.msra.mxu0 %v4021
        %4072 = vmatprep.subr.mxu0 0.0
        %4073 = vmatpush1.msra.mxu0 %v4022
        %4074 = vmatprep.subr.mxu0 0.0
        %4075 = vmatpush1.msra.mxu0 %v4023
        %4076 = vmatprep.subr.mxu0 0.0
        %4077 = vmatpush1.msra.mxu0 %v4024
        %4078 = vmatprep.subr.mxu0 0.0
        %4079 = vmatpush1.msra.mxu0 %v4025
        %4080 = vmatprep.subr.mxu0 0.0
        %4081 = vmatpush1.msra.mxu0 %v4026
        %4082 = vmatprep.subr.mxu0 0.0
        %4083 = vmatpush1.msra.mxu0 %v4027
        %4084 = vmatprep.subr.mxu0 0.0
        %4085 = vmatpush1.msra.mxu0 %v4028
        %4086 = vmatprep.subr.mxu0 0.0
        %4087 = vmatpush1.msra.mxu0 %v4029
        %4088 = vmatprep.subr.mxu0 0.0
        %4089 = vmatpush1.msra.mxu0 %v4030
        %4090 = vmatprep.subr.mxu0 0.0
        %4091 = vmatpush1.msra.mxu0 %v4031
        %4092 = vmatprep.subr.mxu0 0.0
        %4093 = vmatpush1.msra.mxu0 %v4032
        %4094 = vmatprep.subr.mxu0 0.0
        %4095 = vmatpush1.msra.mxu0 %v4033
        %4096 = vmatprep.subr.mxu0 0.0
        %4097 = vmatpush1.msra.mxu0 %v4034
        %4098 = vmatprep.subr.mxu0 0.0
        %4099 = vmatpush1.msra.mxu0 %v4035
        %4100 = vmatprep.subr.mxu0 0.0
        %4101 = vmatpush1.msra.mxu0 %v4036
        %4102 = vmatprep.subr.mxu0 0.0
        %4103 = vmatpush1.msra.mxu0 %v4037
        %4104 = vmatprep.subr.mxu0 0.0
        %4105 = vmatpush1.msra.mxu0 %v4038
        %4106 = vmatprep.subr.mxu0 0.0
        %4107 = vmatpush1.msra.mxu0 %v4039
        %4108 = vmatprep.subr.mxu0 0.0
        %4109 = vmatpush1.msra.mxu0 %v4040
        %4110 = vmatprep.subr.mxu0 0.0
        %4111 = vmatpush1.msra.mxu0 %v4041
        %4112 = vmatprep.subr.mxu0 0.0
        %4113 = vmatpush1.msra.mxu0 %v4042
        %4114 = vmatprep.subr.mxu0 0.0
        %4115 = vmatpush1.msra.mxu0 %v4043
        %4116 = vmatprep.subr.mxu0 0.0
        %4117 = vmatpush1.msra.mxu0 %v4044
        %4118 = vmatprep.subr.mxu0 0.0
        %4119 = vmatpush1.msra.mxu0 %v4045
        %4120 = vmatprep.subr.mxu0 0.0
        %4121 = vmatpush1.msra.mxu0 %v4046
        %4122 = vmatprep.subr.mxu0 0.0
        %4123 = vmatpush1.msra.mxu0 %v4047
        %4124 = vmatprep.subr.mxu0 0.0
        %4125 = vmatpush1.msra.mxu0 %v4048
        %4126 = vmatprep.subr.mxu0 0.0
        %4127 = vmatpush1.msra.mxu0 %v4049
        %4128 = vmatprep.subr.mxu0 0.0
        %4129 = vmatpush1.msra.mxu0 %v4050
        %4130 = vmatprep.subr.mxu0 0.0
        %4131 = vmatpush1.msra.mxu0 %v4051
        %4132 = vmatprep.mubr.f32.mxu0 %v3898
        %4133 = vmatmul.mubr.f32.gmra.mrb[0].mxu0 %v3895
        %v4134 = vpop.f32.mrb[0].mxu0
        %v4135 = vadd.f32 0.0, %v4134
        %v4136 = vpop.f32.mrb[0].mxu0
        %4137 = vmatprep.mubr.f32.mxu0 %v3905
        %4138 = vmatmul.mubr.f32.gmra.mrb[0].mxu0 %v3903
        %v4139 = vpop.f32.mrb[0].mxu0
        %v4140 = vadd.f32 0.0, %v4139
        %v4141 = vpop.f32.mrb[0].mxu0
        %4142 = vmatprep.mubr.f32.mxu0 %v3901
        %4143 = vmatmul.mubr.f32.gmra.mrb[0].mxu0 %v3898
        %v4144 = vpop.f32.mrb[0].mxu0
        %v4145 = vadd.f32 0.0, %v4144
        %v4146 = vpop.f32.mrb[0].mxu0
        %4147 = vmatprep.mubr.f32.mxu0 %v3907
        %4148 = vmatmul.mubr.f32.gmra.mrb[0].mxu0 %v3905
        %v4149 = vpop.f32.mrb[0].mxu0
        %v4150 = vadd.f32 0.0, %v4149
        %v4151 = vpop.f32.mrb[0].mxu0
        %4152 = vmatprep.mubr.f32.mxu0 %v3910
        %4153 = vmatmul.mubr.f32.gmra.mrb[0].mxu0 %v3901
        %v4154 = vpop.f32.mrb[0].mxu0
        %v4155 = vadd.f32 0.0, %v4154
        %v4156 = vpop.f32.mrb[0].mxu0
        %4157 = vmatprep.mubr.f32.mxu0 %v3912
        %4158 = vmatmul.mubr.f32.gmra.mrb[0].mxu0 %v3907
        %v4159 = vpop.f32.mrb[0].mxu0
        %v4160 = vadd.f32 0.0, %v4159
        %v4161 = vpop.f32.mrb[0].mxu0
        %4162 = vmatprep.mubr.f32.mxu0 %v3915
        %4163 = vmatmul.mubr.f32.gmra.mrb[0].mxu0 %v3910
        %v4164 = vpop.f32.mrb[0].mxu0
        %v4165 = vadd.f32 0.0, %v4164
        %v4166 = vpop.f32.mrb[0].mxu0
        %4167 = vmatprep.mubr.f32.mxu0 %v3917
        %4168 = vmatmul.mubr.f32.gmra.mrb[0].mxu0 %v3912
        %v4169 = vpop.f32.mrb[0].mxu0
        %v4170 = vadd.f32 0.0, %v4169
        %v4171 = vpop.f32.mrb[0].mxu0
        %4172 = vmatprep.mubr.f32.mxu0 %v3920
        %4173 = vmatmul.mubr.f32.gmra.mrb[0].mxu0 %v3915
        %v4174 = vpop.f32.mrb[0].mxu0
        %v4175 = vadd.f32 0.0, %v4174
        %v4176 = vpop.f32.mrb[0].mxu0
        %4177 = vmatprep.mubr.f32.mxu0 %v3922
        %4178 = vmatmul.mubr.f32.gmra.mrb[0].mxu0 %v3917
        %v4179 = vpop.f32.mrb[0].mxu0
        %v4180 = vadd.f32 0.0, %v4179
        %v4181 = vpop.f32.mrb[0].mxu0
        %4182 = vmatprep.mubr.f32.mxu0 %v3925
        %4183 = vmatmul.mubr.f32.gmra.mrb[0].mxu0 %v3920
        %v4184 = vpop.f32.mrb[0].mxu0
        %v4185 = vadd.f32 0.0, %v4184
        %v4186 = vpop.f32.mrb[0].mxu0
        %4187 = vmatprep.mubr.f32.mxu0 %v3927
        %4188 = vmatmul.mubr.f32.gmra.mrb[0].mxu0 %v3922
        %v4189 = vpop.f32.mrb[0].mxu0
        %v4190 = vadd.f32 0.0, %v4189
        %v4191 = vpop.f32.mrb[0].mxu0
        %4192 = vmatprep.mubr.f32.mxu0 %v3930
        %4193 = vmatmul.mubr.f32.gmra.mrb[0].mxu0 %v3925
        %v4194 = vpop.f32.mrb[0].mxu0
        %v4195 = vadd.f32 0.0, %v4194
        %v4196 = vpop.f32.mrb[0].mxu0
        %4197 = vmatprep.mubr.f32.mxu0 %v3932
        %4198 = vmatmul.mubr.f32.gmra.mrb[0].mxu0 %v3927
        %v4199 = vpop.f32.mrb[0].mxu0
        %v4200 = vadd.f32 0.0, %v4199
        %v4201 = vpop.f32.mrb[0].mxu0
        %4202 = vmatprep.mubr.f32.mxu0 %v3935
        %4203 = vmatmul.mubr.f32.gmra.mrb[0].mxu0 %v3930
        %v4204 = vpop.f32.mrb[0].mxu0
        %v4205 = vadd.f32 0.0, %v4204
        %v4206 = vpop.f32.mrb[0].mxu0
        %4207 = vmatprep.mubr.f32.mxu0 %v3937
        %4208 = vmatmul.mubr.f32.gmra.mrb[0].mxu0 %v3932
        %v4209 = vpop.f32.mrb[0].mxu0
        %v4210 = vadd.f32 0.0, %v4209
        %v4211 = vpop.f32.mrb[0].mxu0
        %4212 = vmatprep.mubr.f32.mxu0 %v3940
        %4213 = vmatmul.mubr.f32.gmra.mrb[0].mxu0 %v3935
        %v4214 = vpop.f32.mrb[0].mxu0
        %v4215 = vadd.f32 0.0, %v4214
        %v4216 = vpop.f32.mrb[0].mxu0
        %4217 = vmatprep.mubr.f32.mxu0 %v3942
        %4218 = vmatmul.mubr.f32.gmra.mrb[0].mxu0 %v3937
        %v4219 = vpop.f32.mrb[0].mxu0
        %v4220 = vadd.f32 0.0, %v4219
        %v4221 = vpop.f32.mrb[0].mxu0
        %4222 = vmatprep.mubr.f32.mxu0 %v3945
        %4223 = vmatmul.mubr.f32.gmra.mrb[0].mxu0 %v3940
        %v4224 = vpop.f32.mrb[0].mxu0
        %v4225 = vadd.f32 0.0, %v4224
        %v4226 = vpop.f32.mrb[0].mxu0
        %4227 = vmatprep.mubr.f32.mxu0 %v3947
        %4228 = vmatmul.mubr.f32.gmra.mrb[0].mxu0 %v3942
        %v4229 = vpop.f32.mrb[0].mxu0
        %v4230 = vadd.f32 0.0, %v4229
        %v4231 = vpop.f32.mrb[0].mxu0
        %4232 = vmatprep.mubr.f32.mxu0 %v3950
        %4233 = vmatmul.mubr.f32.gmra.mrb[0].mxu0 %v3945
        %v4234 = vpop.f32.mrb[0].mxu0
        %v4235 = vadd.f32 0.0, %v4234
        %v4236 = vpop.f32.mrb[0].mxu0
        %4237 = vmatprep.mubr.f32.mxu0 %v3952
        %4238 = vmatmul.mubr.f32.gmra.mrb[0].mxu0 %v3947
        %v4239 = vpop.f32.mrb[0].mxu0
        %v4240 = vadd.f32 0.0, %v4239
        %v4241 = vpop.f32.mrb[0].mxu0
        %4242 = vmatprep.mubr.f32.mxu0 %v3955
        %4243 = vmatmul.mubr.f32.gmra.mrb[0].mxu0 %v3950
        %v4244 = vpop.f32.mrb[0].mxu0
        %v4245 = vadd.f32 0.0, %v4244
        %v4246 = vpop.f32.mrb[0].mxu0
        %4247 = vmatprep.mubr.f32.mxu0 %v3957
        %4248 = vmatmul.mubr.f32.gmra.mrb[0].mxu0 %v3952
        %v4249 = vpop.f32.mrb[0].mxu0
        %v4250 = vadd.f32 0.0, %v4249
        %v4251 = vpop.f32.mrb[0].mxu0
        %4252 = vmatprep.mubr.f32.mxu0 %v3960
        %4253 = vmatmul.mubr.f32.gmra.mrb[0].mxu0 %v3955
        %v4254 = vpop.f32.mrb[0].mxu0
        %v4255 = vadd.f32 0.0, %v4254
        %v4256 = vpop.f32.mrb[0].mxu0
        %4257 = vmatprep.mubr.f32.mxu0 %v3962
        %4258 = vmatmul.mubr.f32.gmra.mrb[0].mxu0 %v3957
        %v4259 = vpop.f32.mrb[0].mxu0
        %v4260 = vadd.f32 0.0, %v4259
        %v4261 = vpop.f32.mrb[0].mxu0
        %4262 = vmatprep.mubr.f32.mxu0 %v3965
        %4263 = vmatmul.mubr.f32.gmra.mrb[0].mxu0 %v3960
        %v4264 = vpop.f32.mrb[0].mxu0
        %v4265 = vadd.f32 0.0, %v4264
        %v4266 = vpop.f32.mrb[0].mxu0
        %4267 = vmatprep.mubr.f32.mxu0 %v3967
        %4268 = vmatmul.mubr.f32.gmra.mrb[0].mxu0 %v3962
        %v4269 = vpop.f32.mrb[0].mxu0
        %v4270 = vadd.f32 0.0, %v4269
        %v4271 = vpop.f32.mrb[0].mxu0
        %4272 = vmatprep.mubr.f32.mxu0 %v3970
        %4273 = vmatmul.mubr.f32.gmra.mrb[0].mxu0 %v3965
        %v4274 = vpop.f32.mrb[0].mxu0
        %v4275 = vadd.f32 0.0, %v4274
        %v4276 = vpop.f32.mrb[0].mxu0
        %4277 = vmatprep.mubr.f32.mxu0 %v3972
        %4278 = vmatmul.mubr.f32.gmra.mrb[0].mxu0 %v3967
        %v4279 = vpop.f32.mrb[0].mxu0
        %v4280 = vadd.f32 0.0, %v4279
        %v4281 = vpop.f32.mrb[0].mxu0
        %4282 = vmatprep.mubr.f32.mxu0 %v3975
        %4283 = vmatmul.mubr.f32.gmra.mrb[0].mxu0 %v3970
        %v4284 = vpop.f32.mrb[0].mxu0
        %v4285 = vadd.f32 0.0, %v4284
        %v4286 = vpop.f32.mrb[0].mxu0
        %4287 = vmatprep.mubr.f32.mxu0 %v3977
        %4288 = vmatmul.mubr.f32.gmra.mrb[0].mxu0 %v3972
        %v4289 = vpop.f32.mrb[0].mxu0
        %v4290 = vadd.f32 0.0, %v4289
        %v4291 = vpop.f32.mrb[0].mxu0
        %4292 = vdwg.mxu0
        %4293 = vmatprep.subr.mxu0 0.0
        %4294 = vmatpush1.msra.mxu0 %v4052
        %4295 = vmatprep.subr.mxu0 0.0
        %4296 = vmatpush1.msra.mxu0 %v4053
        %4297 = vmatprep.subr.mxu0 0.0
        %4298 = vmatpush1.msra.mxu0 %v4054
        %4299 = vmatprep.subr.mxu0 0.0
        %4300 = vmatpush1.msra.mxu0 %v4055
        %4301 = vmatprep.subr.mxu0 0.0
        %4302 = vmatpush1.msra.mxu0 %v4056
        %4303 = vmatprep.subr.mxu0 0.0
        %4304 = vmatpush1.msra.mxu0 %v4057
        %4305 = vmatprep.subr.mxu0 0.0
        %4306 = vmatpush1.msra.mxu0 %v4058
        %4307 = vmatprep.subr.mxu0 0.0
        %4308 = vmatpush1.msra.mxu0 %v4059
        %4309 = vmatprep.subr.mxu0 0.0
        %4310 = vmatpush1.msra.mxu0 %v4060
        %4311 = vmatprep.subr.mxu0 0.0
        %4312 = vmatpush1.msra.mxu0 %v4061
        %4313 = vmatprep.subr.mxu0 0.0
        %4314 = vmatpush1.msra.mxu0 %v4062
        %4315 = vmatprep.subr.mxu0 0.0
        %4316 = vmatpush1.msra.mxu0 %v4063
        %4317 = vmatprep.subr.mxu0 0.0
        %4318 = vmatpush1.msra.mxu0 %v4064
        %4319 = vmatprep.subr.mxu0 0.0
        %4320 = vmatpush1.msra.mxu0 %v4065
        %4321 = vmatprep.subr.mxu0 0.0
        %4322 = vmatpush1.msra.mxu0 %v4066
        %4323 = vmatprep.subr.mxu0 0.0
        %4324 = vmatpush1.msra.mxu0 %v4067
        %4325 = vmatprep.subr.mxu0 0.0
        %4326 = vmatpush1.msra.mxu0 0.0
        %4327 = vmatprep.subr.mxu0 0.0
        %4328 = vmatpush1.msra.mxu0 0.0
        %4329 = vmatprep.subr.mxu0 0.0
        %4330 = vmatpush1.msra.mxu0 0.0
        %4331 = vmatprep.subr.mxu0 0.0
        %4332 = vmatpush1.msra.mxu0 0.0
        %4333 = vmatprep.subr.mxu0 0.0
        %4334 = vmatpush1.msra.mxu0 0.0
        %4335 = vmatprep.subr.mxu0 0.0
        %4336 = vmatpush1.msra.mxu0 0.0
        %4337 = vmatprep.subr.mxu0 0.0
        %4338 = vmatpush1.msra.mxu0 0.0
        %4339 = vmatprep.subr.mxu0 0.0
        %4340 = vmatpush1.msra.mxu0 0.0
        %4341 = vmatprep.subr.mxu0 0.0
        %4342 = vmatpush1.msra.mxu0 0.0
        %4343 = vmatprep.subr.mxu0 0.0
        %4344 = vmatpush1.msra.mxu0 0.0
        %4345 = vmatprep.subr.mxu0 0.0
        %4346 = vmatpush1.msra.mxu0 0.0
        %4347 = vmatprep.subr.mxu0 0.0
        %4348 = vmatpush1.msra.mxu0 0.0
        %4349 = vmatprep.subr.mxu0 0.0
        %4350 = vmatpush1.msra.mxu0 0.0
        %4351 = vmatprep.subr.mxu0 0.0
        %4352 = vmatpush1.msra.mxu0 0.0
        %4353 = vmatprep.subr.mxu0 0.0
        %4354 = vmatpush1.msra.mxu0 0.0
        %4355 = vmatprep.subr.mxu0 0.0
        %4356 = vmatpush1.msra.mxu0 0.0
        %4357 = vmatprep.mubr.f32.mxu0 0.0
        %4358 = vmatmul.mubr.f32.gmra.mrb[0].mxu0 %v3901
        %v4359 = vpop.f32.mrb[0].mxu0
        %v4360 = vadd.f32 %v4135, %v4359
        %v4361 = vpop.f32.mrb[0].mxu0
        %4362 = vmatprep.mubr.f32.mxu0 0.0
        %4363 = vmatmul.mubr.f32.gmra.mrb[0].mxu0 %v3907
        %v4364 = vpop.f32.mrb[0].mxu0
        %v4365 = vadd.f32 %v4140, %v4364
        %v4366 = vpop.f32.mrb[0].mxu0
        %4367 = vmatprep.mubr.f32.mxu0 0.0
        %4368 = vmatmul.mubr.f32.gmra.mrb[0].mxu0 %v3910
        %v4369 = vpop.f32.mrb[0].mxu0
        %v4370 = vadd.f32 %v4145, %v4369
        %v4371 = vpop.f32.mrb[0].mxu0
        %4372 = vmatprep.mubr.f32.mxu0 0.0
        %4373 = vmatmul.mubr.f32.gmra.mrb[0].mxu0 %v3912
        %v4374 = vpop.f32.mrb[0].mxu0
        %v4375 = vadd.f32 %v4150, %v4374
        %v4376 = vpop.f32.mrb[0].mxu0
        %4377 = vmatprep.mubr.f32.mxu0 0.0
        %4378 = vmatmul.mubr.f32.gmra.mrb[0].mxu0 %v3915
        %v4379 = vpop.f32.mrb[0].mxu0
        %v4380 = vadd.f32 %v4155, %v4379
        %v4381 = vpop.f32.mrb[0].mxu0
        %4382 = vmatprep.mubr.f32.mxu0 0.0
        %4383 = vmatmul.mubr.f32.gmra.mrb[0].mxu0 %v3917
        %v4384 = vpop.f32.mrb[0].mxu0
        %v4385 = vadd.f32 %v4160, %v4384
        %v4386 = vpop.f32.mrb[0].mxu0
        %4387 = vmatprep.mubr.f32.mxu0 0.0
        %4388 = vmatmul.mubr.f32.gmra.mrb[0].mxu0 %v3920
        %v4389 = vpop.f32.mrb[0].mxu0
        %v4390 = vadd.f32 %v4165, %v4389
        %v4391 = vpop.f32.mrb[0].mxu0
        %4392 = vmatprep.mubr.f32.mxu0 0.0
        %4393 = vmatmul.mubr.f32.gmra.mrb[0].mxu0 %v3922
        %v4394 = vpop.f32.mrb[0].mxu0
        %v4395 = vadd.f32 %v4170, %v4394
        %v4396 = vpop.f32.mrb[0].mxu0
        %4397 = vmatprep.mubr.f32.mxu0 0.0
        %4398 = vmatmul.mubr.f32.gmra.mrb[0].mxu0 %v3925
        %v4399 = vpop.f32.mrb[0].mxu0
        %v4400 = vadd.f32 %v4175, %v4399
        %v4401 = vpop.f32.mrb[0].mxu0
        %4402 = vmatprep.mubr.f32.mxu0 0.0
        %4403 = vmatmul.mubr.f32.gmra.mrb[0].mxu0 %v3927
        %v4404 = vpop.f32.mrb[0].mxu0
        %v4405 = vadd.f32 %v4180, %v4404
        %v4406 = vpop.f32.mrb[0].mxu0
        %4407 = vmatprep.mubr.f32.mxu0 0.0
        %4408 = vmatmul.mubr.f32.gmra.mrb[0].mxu0 %v3930
        %v4409 = vpop.f32.mrb[0].mxu0
        %v4410 = vadd.f32 %v4185, %v4409
        %v4411 = vpop.f32.mrb[0].mxu0
        %4412 = vmatprep.mubr.f32.mxu0 0.0
        %4413 = vmatmul.mubr.f32.gmra.mrb[0].mxu0 %v3932
        %v4414 = vpop.f32.mrb[0].mxu0
        %v4415 = vadd.f32 %v4190, %v4414
        %v4416 = vpop.f32.mrb[0].mxu0
        %4417 = vmatprep.mubr.f32.mxu0 0.0
        %4418 = vmatmul.mubr.f32.gmra.mrb[0].mxu0 %v3935
        %v4419 = vpop.f32.mrb[0].mxu0
        %v4420 = vadd.f32 %v4195, %v4419
        %v4421 = vpop.f32.mrb[0].mxu0
        %4422 = vmatprep.mubr.f32.mxu0 0.0
        %4423 = vmatmul.mubr.f32.gmra.mrb[0].mxu0 %v3937
        %v4424 = vpop.f32.mrb[0].mxu0
        %v4425 = vadd.f32 %v4200, %v4424
        %v4426 = vpop.f32.mrb[0].mxu0
        %4427 = vmatprep.mubr.f32.mxu0 0.0
        %4428 = vmatmul.mubr.f32.gmra.mrb[0].mxu0 %v3940
        %v4429 = vpop.f32.mrb[0].mxu0
        %v4430 = vadd.f32 %v4205, %v4429
        %v4431 = vpop.f32.mrb[0].mxu0
        %4432 = vmatprep.mubr.f32.mxu0 0.0
        %4433 = vmatmul.mubr.f32.gmra.mrb[0].mxu0 %v3942
        %v4434 = vpop.f32.mrb[0].mxu0
        %v4435 = vadd.f32 %v4210, %v4434
        %v4436 = vpop.f32.mrb[0].mxu0
        %4437 = vmatprep.mubr.f32.mxu0 0.0
        %4438 = vmatmul.mubr.f32.gmra.mrb[0].mxu0 %v3945
        %v4439 = vpop.f32.mrb[0].mxu0
        %v4440 = vadd.f32 %v4215, %v4439
        %v4441 = vpop.f32.mrb[0].mxu0
        %4442 = vmatprep.mubr.f32.mxu0 0.0
        %4443 = vmatmul.mubr.f32.gmra.mrb[0].mxu0 %v3947
        %v4444 = vpop.f32.mrb[0].mxu0
        %v4445 = vadd.f32 %v4220, %v4444
        %v4446 = vpop.f32.mrb[0].mxu0
        %4447 = vmatprep.mubr.f32.mxu0 0.0
        %4448 = vmatmul.mubr.f32.gmra.mrb[0].mxu0 %v3950
        %v4449 = vpop.f32.mrb[0].mxu0
        %v4450 = vadd.f32 %v4225, %v4449
        %v4451 = vpop.f32.mrb[0].mxu0
        %4452 = vmatprep.mubr.f32.mxu0 0.0
        %4453 = vmatmul.mubr.f32.gmra.mrb[0].mxu0 %v3952
        %v4454 = vpop.f32.mrb[0].mxu0
        %v4455 = vadd.f32 %v4230, %v4454
        %v4456 = vpop.f32.mrb[0].mxu0
        %4457 = vmatprep.mubr.f32.mxu0 0.0
        %4458 = vmatmul.mubr.f32.gmra.mrb[0].mxu0 %v3955
        %v4459 = vpop.f32.mrb[0].mxu0
        %v4460 = vadd.f32 %v4235, %v4459
        %v4461 = vpop.f32.mrb[0].mxu0
        %4462 = vmatprep.mubr.f32.mxu0 0.0
        %4463 = vmatmul.mubr.f32.gmra.mrb[0].mxu0 %v3957
        %v4464 = vpop.f32.mrb[0].mxu0
        %v4465 = vadd.f32 %v4240, %v4464
        %v4466 = vpop.f32.mrb[0].mxu0
        %4467 = vmatprep.mubr.f32.mxu0 0.0
        %4468 = vmatmul.mubr.f32.gmra.mrb[0].mxu0 %v3960
        %v4469 = vpop.f32.mrb[0].mxu0
        %v4470 = vadd.f32 %v4245, %v4469
        %v4471 = vpop.f32.mrb[0].mxu0
        %4472 = vmatprep.mubr.f32.mxu0 0.0
        %4473 = vmatmul.mubr.f32.gmra.mrb[0].mxu0 %v3962
        %v4474 = vpop.f32.mrb[0].mxu0
        %v4475 = vadd.f32 %v4250, %v4474
        %v4476 = vpop.f32.mrb[0].mxu0
        %4477 = vmatprep.mubr.f32.mxu0 0.0
        %4478 = vmatmul.mubr.f32.gmra.mrb[0].mxu0 %v3965
        %v4479 = vpop.f32.mrb[0].mxu0
        %v4480 = vadd.f32 %v4255, %v4479
        %v4481 = vpop.f32.mrb[0].mxu0
        %4482 = vmatprep.mubr.f32.mxu0 0.0
        %4483 = vmatmul.mubr.f32.gmra.mrb[0].mxu0 %v3967
        %v4484 = vpop.f32.mrb[0].mxu0
        %v4485 = vadd.f32 %v4260, %v4484
        %v4486 = vpop.f32.mrb[0].mxu0
        %4487 = vmatprep.mubr.f32.mxu0 0.0
        %4488 = vmatmul.mubr.f32.gmra.mrb[0].mxu0 %v3970
        %v4489 = vpop.f32.mrb[0].mxu0
        %v4490 = vadd.f32 %v4265, %v4489
        %v4491 = vpop.f32.mrb[0].mxu0
        %4492 = vmatprep.mubr.f32.mxu0 0.0
        %4493 = vmatmul.mubr.f32.gmra.mrb[0].mxu0 %v3972
        %v4494 = vpop.f32.mrb[0].mxu0
        %v4495 = vadd.f32 %v4270, %v4494
        %v4496 = vpop.f32.mrb[0].mxu0
        %4497 = vmatprep.mubr.f32.mxu0 0.0
        %4498 = vmatmul.mubr.f32.gmra.mrb[0].mxu0 %v3975
        %v4499 = vpop.f32.mrb[0].mxu0
        %v4500 = vadd.f32 %v4275, %v4499
        %v4501 = vpop.f32.mrb[0].mxu0
        %4502 = vmatprep.mubr.f32.mxu0 0.0
        %4503 = vmatmul.mubr.f32.gmra.mrb[0].mxu0 %v3977
        %v4504 = vpop.f32.mrb[0].mxu0
        %v4505 = vadd.f32 %v4280, %v4504
        %v4506 = vpop.f32.mrb[0].mxu0
        %4507 = vmatprep.mubr.f32.mxu0 0.0
        %4508 = vmatmul.mubr.f32.gmra.mrb[0].mxu0 %v3980
        %v4509 = vpop.f32.mrb[0].mxu0
        %v4510 = vadd.f32 %v4285, %v4509
        %v4511 = vpop.f32.mrb[0].mxu0
        %4512 = vmatprep.mubr.f32.mxu0 0.0
        %4513 = vmatmul.mubr.f32.gmra.mrb[0].mxu0 %v3982
        %v4514 = vpop.f32.mrb[0].mxu0
        %v4515 = vadd.f32 %v4290, %v4514
        %v4516 = vpop.f32.mrb[0].mxu0
        %4517 = vdwg.mxu0
        %v4518 = vadd.f32 %v3735, %v4360
        %v4519 = vadd.f32 %v3740, %v4365
        %v4520 = vadd.f32 %v3745, %v4370
        %v4521 = vadd.f32 %v3750, %v4375
        %v4522 = vadd.f32 %v3755, %v4380
        %v4523 = vadd.f32 %v3760, %v4385
        %v4524 = vadd.f32 %v3765, %v4390
        %v4525 = vadd.f32 %v3770, %v4395
        %v4526 = vadd.f32 %v3775, %v4400
        %v4527 = vadd.f32 %v3780, %v4405
        %v4528 = vadd.f32 %v3785, %v4410
        %v4529 = vadd.f32 %v3790, %v4415
        %v4530 = vadd.f32 %v3795, %v4420
        %v4531 = vadd.f32 %v3800, %v4425
        %v4532 = vadd.f32 %v3805, %v4430
        %v4533 = vadd.f32 %v3810, %v4435
        %v4534 = vadd.f32 %v3815, %v4440
        %v4535 = vadd.f32 %v3820, %v4445
        %v4536 = vadd.f32 %v3825, %v4450
        %v4537 = vadd.f32 %v3830, %v4455
        %v4538 = vadd.f32 %v3835, %v4460
        %v4539 = vadd.f32 %v3840, %v4465
        %v4540 = vadd.f32 %v3845, %v4470
        %v4541 = vadd.f32 %v3850, %v4475
        %v4542 = vadd.f32 %v3855, %v4480
        %v4543 = vadd.f32 %v3860, %v4485
        %v4544 = vadd.f32 %v3865, %v4490
        %v4545 = vadd.f32 %v3870, %v4495
        %v4546 = vadd.f32 %v3875, %v4500
        %v4547 = vadd.f32 %v3880, %v4505
        %v4548 = vadd.f32 %v3885, %v4510
        %v4549 = vadd.f32 %v3890, %v4515
        %4550 = vst [vmem:[#allocation3] sm:$0xff] %v4518
        %4551 = vst [vmem:[#allocation3 + $0x8] sm:$0xff] %v4519
        %4552 = vst [vmem:[#allocation3 + $0x10] sm:$0xff] %v4520
        %4553 = vst [vmem:[#allocation3 + $0x18] sm:$0xff] %v4521
        %4554 = vst [vmem:[#allocation3 + $0x20] sm:$0xff] %v4522
        %4555 = vst [vmem:[#allocation3 + $0x28] sm:$0xff] %v4523
        %4556 = vst [vmem:[#allocation3 + $0x30] sm:$0xff] %v4524
        %4557 = vst [vmem:[#allocation3 + $0x38] sm:$0xff] %v4525
        %4558 = vst [vmem:[#allocation3 + $0x40] sm:$0xff] %v4526
        %4559 = vst [vmem:[#allocation3 + $0x48] sm:$0xff] %v4527
        %4560 = vst [vmem:[#allocation3 + $0x50] sm:$0xff] %v4528
        %4561 = vst [vmem:[#allocation3 + $0x58] sm:$0xff] %v4529
        %4562 = vst [vmem:[#allocation3 + $0x60] sm:$0xff] %v4530
        %4563 = vst [vmem:[#allocation3 + $0x68] sm:$0xff] %v4531
        %4564 = vst [vmem:[#allocation3 + $0x70] sm:$0xff] %v4532
        %4565 = vst [vmem:[#allocation3 + $0x78] sm:$0xff] %v4533
        %4566 = vst [vmem:[#allocation3 + $0x80] sm:$0xff] %v4534
        %4567 = vst [vmem:[#allocation3 + $0x88] sm:$0xff] %v4535
        %4568 = vst [vmem:[#allocation3 + $0x90] sm:$0xff] %v4536
        %4569 = vst [vmem:[#allocation3 + $0x98] sm:$0xff] %v4537
        %4570 = vst [vmem:[#allocation3 + $0xa0] sm:$0xff] %v4538
        %4571 = vst [vmem:[#allocation3 + $0xa8] sm:$0xff] %v4539
        %4572 = vst [vmem:[#allocation3 + $0xb0] sm:$0xff] %v4540
        %4573 = vst [vmem:[#allocation3 + $0xb8] sm:$0xff] %v4541
        %4574 = vst [vmem:[#allocation3 + $0xc0] sm:$0xff] %v4542
        %4575 = vst [vmem:[#allocation3 + $0xc8] sm:$0xff] %v4543
        %4576 = vst [vmem:[#allocation3 + $0xd0] sm:$0xff] %v4544
        %4577 = vst [vmem:[#allocation3 + $0xd8] sm:$0xff] %v4545
        %4578 = vst [vmem:[#allocation3 + $0xe0] sm:$0xff] %v4546
        %4579 = vst [vmem:[#allocation3 + $0xe8] sm:$0xff] %v4547
        %4580 = vst [vmem:[#allocation3 + $0xf0] sm:$0xff] %v4548
        %4581 = vst [vmem:[#allocation3 + $0xf8] sm:$0xff] %v4549
        %v4582 = vld [vmem:[#allocation3] sm:$0xff]
        %v4583 = vld [vmem:[#allocation3 + $0x8] sm:$0xff]
        %v4584 = vld [vmem:[#allocation3 + $0x10] sm:$0xff]
        %v4585 = vld [vmem:[#allocation3 + $0x18] sm:$0xff]
        %v4586 = vld [vmem:[#allocation3 + $0x20] sm:$0xff]
        %v4587 = vld [vmem:[#allocation3 + $0x28] sm:$0xff]
        %v4588 = vld [vmem:[#allocation3 + $0x30] sm:$0xff]
        %v4589 = vld [vmem:[#allocation3 + $0x38] sm:$0xff]
        %v4590 = vld [vmem:[#allocation3 + $0x40] sm:$0xff]
        %v4591 = vld [vmem:[#allocation3 + $0x48] sm:$0xff]
        %v4592 = vld [vmem:[#allocation3 + $0x50] sm:$0xff]
        %v4593 = vld [vmem:[#allocation3 + $0x58] sm:$0xff]
        %v4594 = vld [vmem:[#allocation3 + $0x60] sm:$0xff]
        %v4595 = vld [vmem:[#allocation3 + $0x68] sm:$0xff]
        %v4596 = vld [vmem:[#allocation3 + $0x70] sm:$0xff]
        %v4597 = vld [vmem:[#allocation3 + $0x78] sm:$0xff]
        %v4598 = vld [vmem:[#allocation3 + $0x80] sm:$0xff]
        %v4599 = vld [vmem:[#allocation3 + $0x88] sm:$0xff]
        %v4600 = vld [vmem:[#allocation3 + $0x90] sm:$0xff]
        %v4601 = vld [vmem:[#allocation3 + $0x98] sm:$0xff]
        %v4602 = vld [vmem:[#allocation3 + $0xa0] sm:$0xff]
        %v4603 = vld [vmem:[#allocation3 + $0xa8] sm:$0xff]
        %v4604 = vld [vmem:[#allocation3 + $0xb0] sm:$0xff]
        %v4605 = vld [vmem:[#allocation3 + $0xb8] sm:$0xff]
        %v4606 = vld [vmem:[#allocation3 + $0xc0] sm:$0xff]
        %v4607 = vld [vmem:[#allocation3 + $0xc8] sm:$0xff]
        %v4608 = vld [vmem:[#allocation3 + $0xd0] sm:$0xff]
        %v4609 = vld [vmem:[#allocation3 + $0xd8] sm:$0xff]
        %v4610 = vld [vmem:[#allocation3 + $0xe0] sm:$0xff]
        %v4611 = vld [vmem:[#allocation3 + $0xe8] sm:$0xff]
        %v4612 = vld [vmem:[#allocation3 + $0xf0] sm:$0xff]
        %v4613 = vld [vmem:[#allocation3 + $0xf8] sm:$0xff]
        %v4614 = vadd.f32 %v4582, %v4583
        %v4615 = vadd.f32 %v4614, %v4584
        %v4616 = vadd.f32 %v4615, %v4585
        %v4617 = vadd.f32 %v4616, %v4586
        %v4618 = vadd.f32 %v4617, %v4587
        %v4619 = vadd.f32 %v4618, %v4588
        %v4620 = vadd.f32 %v4619, %v4589
        %v4621 = vadd.f32 %v4620, %v4590
        %v4622 = vadd.f32 %v4621, %v4591
        %v4623 = vadd.f32 %v4622, %v4592
        %v4624 = vadd.f32 %v4623, %v4593
        %v4625 = vadd.f32 %v4624, %v4594
        %v4626 = vadd.f32 %v4625, %v4595
        %v4627 = vadd.f32 %v4626, %v4596
        %v4628 = vadd.f32 %v4627, %v4597
        %v4629 = vadd.f32 %v4628, %v4598
        %v4630 = vadd.f32 %v4629, %v4599
        %v4631 = vadd.f32 %v4630, %v4600
        %v4632 = vadd.f32 %v4631, %v4601
        %v4633 = vadd.f32 %v4632, %v4602
        %v4634 = vadd.f32 %v4633, %v4603
        %v4635 = vadd.f32 %v4634, %v4604
        %v4636 = vadd.f32 %v4635, %v4605
        %v4637 = vadd.f32 %v4636, %v4606
        %v4638 = vadd.f32 %v4637, %v4607
        %v4639 = vadd.f32 %v4638, %v4608
        %v4640 = vadd.f32 %v4639, %v4609
        %v4641 = vadd.f32 %v4640, %v4610
        %v4642 = vadd.f32 %v4641, %v4611
        %v4643 = vadd.f32 %v4642, %v4612
        %v4644 = vadd.f32 %v4643, %v4613
        %v4645 = vrot.slane %v4644, 4
        %v4646 = vadd.f32 %v4644, %v4645
        %v4647 = vrot.slane %v4646, 2
        %v4648 = vadd.f32 %v4646, %v4647
        %v4649 = vrot.slane %v4648, 1
        %v4650 = vadd.f32 %v4648, %v4649
        %v4651 = vmul.f32 %v4650, 0.00390625
        %v4652 = vsub.f32 %v4582, %v4651
        %v4653 = vsub.f32 %v4583, %v4651
        %v4654 = vsub.f32 %v4584, %v4651
        %v4655 = vsub.f32 %v4585, %v4651
        %v4656 = vsub.f32 %v4586, %v4651
        %v4657 = vsub.f32 %v4587, %v4651
        %v4658 = vsub.f32 %v4588, %v4651
        %v4659 = vsub.f32 %v4589, %v4651
        %v4660 = vsub.f32 %v4590, %v4651
        %v4661 = vsub.f32 %v4591, %v4651
        %v4662 = vsub.f32 %v4592, %v4651
        %v4663 = vsub.f32 %v4593, %v4651
        %v4664 = vsub.f32 %v4594, %v4651
        %v4665 = vsub.f32 %v4595, %v4651
        %v4666 = vsub.f32 %v4596, %v4651
        %v4667 = vsub.f32 %v4597, %v4651
        %v4668 = vsub.f32 %v4598, %v4651
        %v4669 = vsub.f32 %v4599, %v4651
        %v4670 = vsub.f32 %v4600, %v4651
        %v4671 = vsub.f32 %v4601, %v4651
        %v4672 = vsub.f32 %v4602, %v4651
        %v4673 = vsub.f32 %v4603, %v4651
        %v4674 = vsub.f32 %v4604, %v4651
        %v4675 = vsub.f32 %v4605, %v4651
        %v4676 = vsub.f32 %v4606, %v4651
        %v4677 = vsub.f32 %v4607, %v4651
        %v4678 = vsub.f32 %v4608, %v4651
        %v4679 = vsub.f32 %v4609, %v4651
        %v4680 = vsub.f32 %v4610, %v4651
        %v4681 = vsub.f32 %v4611, %v4651
        %v4682 = vsub.f32 %v4612, %v4651
        %v4683 = vsub.f32 %v4613, %v4651
        %v4684 = vmul.f32 %v4652, %v4652
        %v4685 = vmul.f32 %v4653, %v4653
        %v4686 = vmul.f32 %v4654, %v4654
        %v4687 = vmul.f32 %v4655, %v4655
        %v4688 = vmul.f32 %v4656, %v4656
        %v4689 = vmul.f32 %v4657, %v4657
        %v4690 = vmul.f32 %v4658, %v4658
        %v4691 = vmul.f32 %v4659, %v4659
        %v4692 = vmul.f32 %v4660, %v4660
        %v4693 = vmul.f32 %v4661, %v4661
        %v4694 = vmul.f32 %v4662, %v4662
        %v4695 = vmul.f32 %v4663, %v4663
        %v4696 = vmul.f32 %v4664, %v4664
        %v4697 = vmul.f32 %v4665, %v4665
        %v4698 = vmul.f32 %v4666, %v4666
        %v4699 = vmul.f32 %v4667, %v4667
        %v4700 = vmul.f32 %v4668, %v4668
        %v4701 = vmul.f32 %v4669, %v4669
        %v4702 = vmul.f32 %v4670, %v4670
        %v4703 = vmul.f32 %v4671, %v4671
        %v4704 = vmul.f32 %v4672, %v4672
        %v4705 = vmul.f32 %v4673, %v4673
        %v4706 = vmul.f32 %v4674, %v4674
        %v4707 = vmul.f32 %v4675, %v4675
        %v4708 = vmul.f32 %v4676, %v4676
        %v4709 = vmul.f32 %v4677, %v4677
        %v4710 = vmul.f32 %v4678, %v4678
        %v4711 = vmul.f32 %v4679, %v4679
        %v4712 = vmul.f32 %v4680, %v4680
        %v4713 = vmul.f32 %v4681, %v4681
        %v4714 = vmul.f32 %v4682, %v4682
        %v4715 = vmul.f32 %v4683, %v4683
        %v4716 = vadd.f32 %v4684, %v4685
        %v4717 = vadd.f32 %v4716, %v4686
        %v4718 = vadd.f32 %v4717, %v4687
        %v4719 = vadd.f32 %v4718, %v4688
        %v4720 = vadd.f32 %v4719, %v4689
        %v4721 = vadd.f32 %v4720, %v4690
        %v4722 = vadd.f32 %v4721, %v4691
        %v4723 = vadd.f32 %v4722, %v4692
        %v4724 = vadd.f32 %v4723, %v4693
        %v4725 = vadd.f32 %v4724, %v4694
        %v4726 = vadd.f32 %v4725, %v4695
        %v4727 = vadd.f32 %v4726, %v4696
        %v4728 = vadd.f32 %v4727, %v4697
        %v4729 = vadd.f32 %v4728, %v4698
        %v4730 = vadd.f32 %v4729, %v4699
        %v4731 = vadd.f32 %v4730, %v4700
        %v4732 = vadd.f32 %v4731, %v4701
        %v4733 = vadd.f32 %v4732, %v4702
        %v4734 = vadd.f32 %v4733, %v4703
        %v4735 = vadd.f32 %v4734, %v4704
        %v4736 = vadd.f32 %v4735, %v4705
        %v4737 = vadd.f32 %v4736, %v4706
        %v4738 = vadd.f32 %v4737, %v4707
        %v4739 = vadd.f32 %v4738, %v4708
        %v4740 = vadd.f32 %v4739, %v4709
        %v4741 = vadd.f32 %v4740, %v4710
        %v4742 = vadd.f32 %v4741, %v4711
        %v4743 = vadd.f32 %v4742, %v4712
        %v4744 = vadd.f32 %v4743, %v4713
        %v4745 = vadd.f32 %v4744, %v4714
        %v4746 = vadd.f32 %v4745, %v4715
        %v4747 = vrot.slane %v4746, 4
        %v4748 = vadd.f32 %v4746, %v4747
        %v4749 = vrot.slane %v4748, 2
        %v4750 = vadd.f32 %v4748, %v4749
        %v4751 = vrot.slane %v4750, 1
        %v4752 = vadd.f32 %v4750, %v4751
        %v4753 = vmul.f32 %v4752, 0.00390625
        %v4754 = vadd.f32 %v4753, 1e-05
        %v4755 = vrsqrt.pop %v4754
        %v4756 = vsub.f32 0.0, %v4651
        %v4757 = vmul.f32 %v4756, %v4755
        %v4758 = vld [vmem:[%s187] sm:$0xff]
        %v4759 = vld [vmem:[%s187 + $0x8] sm:$0xff]
        %v4760 = vld [vmem:[%s187 + $0x10] sm:$0xff]
        %v4761 = vld [vmem:[%s187 + $0x18] sm:$0xff]
        %v4762 = vld [vmem:[%s187 + $0x20] sm:$0xff]
        %v4763 = vld [vmem:[%s187 + $0x28] sm:$0xff]
        %v4764 = vld [vmem:[%s187 + $0x30] sm:$0xff]
        %v4765 = vld [vmem:[%s187 + $0x38] sm:$0xff]
        %v4766 = vld [vmem:[%s187 + $0x40] sm:$0xff]
        %v4767 = vld [vmem:[%s187 + $0x48] sm:$0xff]
        %v4768 = vld [vmem:[%s187 + $0x50] sm:$0xff]
        %v4769 = vld [vmem:[%s187 + $0x58] sm:$0xff]
        %v4770 = vld [vmem:[%s187 + $0x60] sm:$0xff]
        %v4771 = vld [vmem:[%s187 + $0x68] sm:$0xff]
        %v4772 = vld [vmem:[%s187 + $0x70] sm:$0xff]
        %v4773 = vld [vmem:[%s187 + $0x78] sm:$0xff]
        %v4774 = vld [vmem:[%s187 + $0x80] sm:$0xff]
        %v4775 = vld [vmem:[%s187 + $0x88] sm:$0xff]
        %v4776 = vld [vmem:[%s187 + $0x90] sm:$0xff]
        %v4777 = vld [vmem:[%s187 + $0x98] sm:$0xff]
        %v4778 = vld [vmem:[%s187 + $0xa0] sm:$0xff]
        %v4779 = vld [vmem:[%s187 + $0xa8] sm:$0xff]
        %v4780 = vld [vmem:[%s187 + $0xb0] sm:$0xff]
        %v4781 = vld [vmem:[%s187 + $0xb8] sm:$0xff]
        %v4782 = vld [vmem:[%s187 + $0xc0] sm:$0xff]
        %v4783 = vld [vmem:[%s187 + $0xc8] sm:$0xff]
        %v4784 = vld [vmem:[%s187 + $0xd0] sm:$0xff]
        %v4785 = vld [vmem:[%s187 + $0xd8] sm:$0xff]
        %v4786 = vld [vmem:[%s187 + $0xe0] sm:$0xff]
        %v4787 = vld [vmem:[%s187 + $0xe8] sm:$0xff]
        %v4788 = vld [vmem:[%s187 + $0xf0] sm:$0xff]
        %v4789 = vld [vmem:[%s187 + $0xf8] sm:$0xff]
        %v4790 = vmul.f32 %v4582, %v4755
        %v4791 = vmul.f32 %v4583, %v4755
        %v4792 = vmul.f32 %v4584, %v4755
        %v4793 = vmul.f32 %v4585, %v4755
        %v4794 = vmul.f32 %v4586, %v4755
        %v4795 = vmul.f32 %v4587, %v4755
        %v4796 = vmul.f32 %v4588, %v4755
        %v4797 = vmul.f32 %v4589, %v4755
        %v4798 = vmul.f32 %v4590, %v4755
        %v4799 = vmul.f32 %v4591, %v4755
        %v4800 = vmul.f32 %v4592, %v4755
        %v4801 = vmul.f32 %v4593, %v4755
        %v4802 = vmul.f32 %v4594, %v4755
        %v4803 = vmul.f32 %v4595, %v4755
        %v4804 = vmul.f32 %v4596, %v4755
        %v4805 = vmul.f32 %v4597, %v4755
        %v4806 = vmul.f32 %v4598, %v4755
        %v4807 = vmul.f32 %v4599, %v4755
        %v4808 = vmul.f32 %v4600, %v4755
        %v4809 = vmul.f32 %v4601, %v4755
        %v4810 = vmul.f32 %v4602, %v4755
        %v4811 = vmul.f32 %v4603, %v4755
        %v4812 = vmul.f32 %v4604, %v4755
        %v4813 = vmul.f32 %v4605, %v4755
        %v4814 = vmul.f32 %v4606, %v4755
        %v4815 = vmul.f32 %v4607, %v4755
        %v4816 = vmul.f32 %v4608, %v4755
        %v4817 = vmul.f32 %v4609, %v4755
        %v4818 = vmul.f32 %v4610, %v4755
        %v4819 = vmul.f32 %v4611, %v4755
        %v4820 = vmul.f32 %v4612, %v4755
        %v4821 = vmul.f32 %v4613, %v4755
        %v4822 = vadd.f32 %v4758, %v4790
        %v4823 = vadd.f32 %v4759, %v4791
        %v4824 = vadd.f32 %v4760, %v4792
        %v4825 = vadd.f32 %v4761, %v4793
        %v4826 = vadd.f32 %v4762, %v4794
        %v4827 = vadd.f32 %v4763, %v4795
        %v4828 = vadd.f32 %v4764, %v4796
        %v4829 = vadd.f32 %v4765, %v4797
        %v4830 = vadd.f32 %v4766, %v4798
        %v4831 = vadd.f32 %v4767, %v4799
        %v4832 = vadd.f32 %v4768, %v4800
        %v4833 = vadd.f32 %v4769, %v4801
        %v4834 = vadd.f32 %v4770, %v4802
        %v4835 = vadd.f32 %v4771, %v4803
        %v4836 = vadd.f32 %v4772, %v4804
        %v4837 = vadd.f32 %v4773, %v4805
        %v4838 = vadd.f32 %v4774, %v4806
        %v4839 = vadd.f32 %v4775, %v4807
        %v4840 = vadd.f32 %v4776, %v4808
        %v4841 = vadd.f32 %v4777, %v4809
        %v4842 = vadd.f32 %v4778, %v4810
        %v4843 = vadd.f32 %v4779, %v4811
        %v4844 = vadd.f32 %v4780, %v4812
        %v4845 = vadd.f32 %v4781, %v4813
        %v4846 = vadd.f32 %v4782, %v4814
        %v4847 = vadd.f32 %v4783, %v4815
        %v4848 = vadd.f32 %v4784, %v4816
        %v4849 = vadd.f32 %v4785, %v4817
        %v4850 = vadd.f32 %v4786, %v4818
        %v4851 = vadd.f32 %v4787, %v4819
        %v4852 = vadd.f32 %v4788, %v4820
        %v4853 = vadd.f32 %v4789, %v4821
        %v4854 = vadd.f32 %v4822, %v4757
        %v4855 = vadd.f32 %v4823, %v4757
        %v4856 = vadd.f32 %v4824, %v4757
        %v4857 = vadd.f32 %v4825, %v4757
        %v4858 = vadd.f32 %v4826, %v4757
        %v4859 = vadd.f32 %v4827, %v4757
        %v4860 = vadd.f32 %v4828, %v4757
        %v4861 = vadd.f32 %v4829, %v4757
        %v4862 = vadd.f32 %v4830, %v4757
        %v4863 = vadd.f32 %v4831, %v4757
        %v4864 = vadd.f32 %v4832, %v4757
        %v4865 = vadd.f32 %v4833, %v4757
        %v4866 = vadd.f32 %v4834, %v4757
        %v4867 = vadd.f32 %v4835, %v4757
        %v4868 = vadd.f32 %v4836, %v4757
        %v4869 = vadd.f32 %v4837, %v4757
        %v4870 = vadd.f32 %v4838, %v4757
        %v4871 = vadd.f32 %v4839, %v4757
        %v4872 = vadd.f32 %v4840, %v4757
        %v4873 = vadd.f32 %v4841, %v4757
        %v4874 = vadd.f32 %v4842, %v4757
        %v4875 = vadd.f32 %v4843, %v4757
        %v4876 = vadd.f32 %v4844, %v4757
        %v4877 = vadd.f32 %v4845, %v4757
        %v4878 = vadd.f32 %v4846, %v4757
        %v4879 = vadd.f32 %v4847, %v4757
        %v4880 = vadd.f32 %v4848, %v4757
        %v4881 = vadd.f32 %v4849, %v4757
        %v4882 = vadd.f32 %v4850, %v4757
        %v4883 = vadd.f32 %v4851, %v4757
        %v4884 = vadd.f32 %v4852, %v4757
        %v4885 = vadd.f32 %v4853, %v4757
        %4886 = vst [vmem:[%s217] sm:$0xff] %v4854
        %4887 = vst [vmem:[%s217 + $0x8] sm:$0xff] %v4855
        %4888 = vst [vmem:[%s217 + $0x10] sm:$0xff] %v4856
        %4889 = vst [vmem:[%s217 + $0x18] sm:$0xff] %v4857
        %4890 = vst [vmem:[%s217 + $0x20] sm:$0xff] %v4858
        %4891 = vst [vmem:[%s217 + $0x28] sm:$0xff] %v4859
        %4892 = vst [vmem:[%s217 + $0x30] sm:$0xff] %v4860
        %4893 = vst [vmem:[%s217 + $0x38] sm:$0xff] %v4861
        %4894 = vst [vmem:[%s217 + $0x40] sm:$0xff] %v4862
        %4895 = vst [vmem:[%s217 + $0x48] sm:$0xff] %v4863
        %4896 = vst [vmem:[%s217 + $0x50] sm:$0xff] %v4864
        %4897 = vst [vmem:[%s217 + $0x58] sm:$0xff] %v4865
        %4898 = vst [vmem:[%s217 + $0x60] sm:$0xff] %v4866
        %4899 = vst [vmem:[%s217 + $0x68] sm:$0xff] %v4867
        %4900 = vst [vmem:[%s217 + $0x70] sm:$0xff] %v4868
        %4901 = vst [vmem:[%s217 + $0x78] sm:$0xff] %v4869
        %4902 = vst [vmem:[%s217 + $0x80] sm:$0xff] %v4870
        %4903 = vst [vmem:[%s217 + $0x88] sm:$0xff] %v4871
        %4904 = vst [vmem:[%s217 + $0x90] sm:$0xff] %v4872
        %4905 = vst [vmem:[%s217 + $0x98] sm:$0xff] %v4873
        %4906 = vst [vmem:[%s217 + $0xa0] sm:$0xff] %v4874
        %4907 = vst [vmem:[%s217 + $0xa8] sm:$0xff] %v4875
        %4908 = vst [vmem:[%s217 + $0xb0] sm:$0xff] %v4876
        %4909 = vst [vmem:[%s217 + $0xb8] sm:$0xff] %v4877
        %4910 = vst [vmem:[%s217 + $0xc0] sm:$0xff] %v4878
        %4911 = vst [vmem:[%s217 + $0xc8] sm:$0xff] %v4879
        %4912 = vst [vmem:[%s217 + $0xd0] sm:$0xff] %v4880
        %4913 = vst [vmem:[%s217 + $0xd8] sm:$0xff] %v4881
        %4914 = vst [vmem:[%s217 + $0xe0] sm:$0xff] %v4882
        %4915 = vst [vmem:[%s217 + $0xe8] sm:$0xff] %v4883
        %4916 = vst [vmem:[%s217 + $0xf0] sm:$0xff] %v4884
        %4917 = vst [vmem:[%s217 + $0xf8] sm:$0xff] %v4885
        %s4918 = sand.u32 %s97, 1
        %s4919 = scalar_lea.sflag [#allocation6], %s4918
        %s4920 = sand.u32 %s97, 1
        %s4921 = smul.addr %s4920, 256
        %s4922 = scalar_lea.vmem [#allocation10], %s4921
        // Predicated region
        $region45: #{tpu_custom_call.1} parent=31 // pred_check
          %p4923 = pneg %p107
        $region46: #{tpu_custom_call.1} parent=31 // pred_check_branch
          %4925 = sbr.rel (%p4923) target = $region48
        $region47: #{tpu_custom_call.1} parent=31 // pred_region
          %s4927 = ssub.s32 4096, 4096
          %4928 = vsyncadd %s4919, %s4927
          %s4929 = smul.addr %s21, 32
          %s4930 = smul.addr %s4929, 128
          %s4931 = scalar_lea.hbm %s3, %s4930
          %s4932 = sshll.u32 %s4922, 4
          %s4933 = int_to_ptr.vmem [resolvable:$true] %s4932
          %4938 = dma.vmem_to_hbm [thread:$0]  %s4933, 4096, %s4931, %s4919, 128, 128, 8
        $region48: #{tpu_custom_call.1} parent=31 // pred_fallthru
          _
      $region32: #{tpu_custom_call.1} parent=5 // pred_fallthru
        _
      %p4939 = scmp.le.s32.totalorder 2, %s16
      // Predicated region
      $region49: #{tpu_custom_call.1} parent=5 // pred_check
        %p4940 = pneg %p4939
      $region50: #{tpu_custom_call.1} parent=5 // pred_check_branch
        %4942 = sbr.rel (%p4940) target = $region52
      $region51: #{tpu_custom_call.1} parent=5 // pred_region
        %s4943 = ssub.s32 %s16, 2
        // Predicated region
        $region53: #{tpu_custom_call.1} parent=51 // pred_check
          %p4944 = pneg %p113
        $region54: #{tpu_custom_call.1} parent=51 // pred_check_branch
          %4946 = sbr.rel (%p4944) target = $region56
        $region55: #{tpu_custom_call.1} parent=51 // pred_region
          %s4947 = sand.u32 %s98, 1
          %s4948 = scalar_lea.sflag [#allocation6], %s4947
          %s4949 = sand.u32 %s98, 1
          %s4950 = smul.addr %s4949, 256
          %s4951 = scalar_lea.vmem [#allocation10], %s4950
          %4952 = dma.done %s4948, 4096
        $region56: #{tpu_custom_call.1} parent=51 // pred_fallthru
          _
      $region52: #{tpu_custom_call.1} parent=5 // pred_fallthru
        _
    $region6: #{tpu_custom_call.1} parent=1 // loop_footer
      %s20 = sadd.s32 1, %s16
    $region7: #{tpu_custom_call.1} parent=1 // loop_footer_branch
      %15 = sbr.rel target = $region3
    $region8: #{tpu_custom_call.1} parent=1 // loop_exit
      _
    %4953 = vsyncpa [#allocation5], 1
    %s4954 = scalar_lea.sflag [#allocation5], 1
    %4955 = vsyncpa %s4954, 1
    %4956 = vsyncpa [#allocation8], 1
    %4957 = vsyncpa [#allocation6], 1
    %s4958 = scalar_lea.sflag [#allocation6], 1
    %4959 = vsyncpa %s4958, 1

</llo_original>
